<compile_context>
chip_gen: v7x
topology: tpu7x:2x2x1
jax: 0.10.0
libtpu: 0.0.40
codegen_flags: <defaults>
</compile_context>

<pallas_src>
import math

import jax
import jax.numpy as jnp
from jax import lax
from jax.experimental import pallas as pl
from jax.experimental.pallas import tpu as pltpu

IN_FEATURES = 23074      # fixed by the PyTorch module: nn.Linear(23074, hidden)
_MAX_BATCH = 256         # VMEM accounting assumes B <= _MAX_BATCH
_VMEM_BUDGET = 36 << 20  # conservative; fits v7x's 64 MiB physical VMEM


def _round_up(x, m):
    return ((x + m - 1) // m) * m


def _k_tile(hidden):
    """K tile for the fc1 reduction, with lane/sublane-padded VMEM accounting.

    Counts: double-buffered W1 (bf16, lane-padded to 128), double-buffered x
    (f32, B<=_MAX_BATCH), the resident W2 bf16 block, aux, the f32 accumulator
    and the output block.  Capped at 12288 (2 grid steps for K=23074)."""
    lane_h = max(128, _round_up(hidden, 128))   # lane-padded width in VMEM
    sub_h = _round_up(hidden, 16)               # bf16 sublane packing
    fixed = 2 * sub_h * lane_h * 2              # W2 bf16 block, 2 buffers
    fixed += 2 * 8 * lane_h * 4                 # aux (4, hidden) f32, 2 buffers
    fixed += _MAX_BATCH * lane_h * 4            # h1 accumulator (f32 scratch)
    fixed += 2 * _MAX_BATCH * 128 * 4           # output block, 2 buffers
    per_k = 2 * (lane_h * 2 + _MAX_BATCH * 4)   # W1 bf16 + x f32 per K row, 2 bufs
    tk = (_VMEM_BUDGET - fixed) // per_k
    tk = (tk // 512) * 512
    return int(max(512, min(12288, tk)))


def _padded_k(hidden):
    tk = _k_tile(hidden)
    return int(pl.cdiv(IN_FEATURES, tk) * tk)


def _ff_kernel(x_ref, w1_ref, w2_ref, aux_ref, o_ref, h1_acc):
    k = pl.program_id(0)
    tk = x_ref.shape[1]

    @pl.when(k == 0)
    def _init():
        h1_acc[...] = jnp.zeros_like(h1_acc)

    # Mask the ragged tail of the last x tile (the out-of-bounds region of a
    # partial block is undefined; zero W1 pad rows alone don't protect
    # against NaN/Inf garbage there).  On full tiles the mask is all-true.
    valid = IN_FEATURES - k * tk
    col = lax.broadcasted_iota(jnp.int32, (1, tk), 1)
    xb = jnp.where(col < valid, x_ref[...], 0).astype(jnp.bfloat16)

    # fc1 partial sum for this K tile: bf16 MXU matmul, f32 accumulation.
    h1_acc[...] += jnp.dot(xb, w1_ref[...], preferred_element_type=jnp.float32)

    @pl.when(k == pl.num_programs(0) - 1)
    def _finalize():
        aux = aux_ref[...]                       # (4, hidden) f32: b1;b2;w3;b3
        # fc1 bias + ReLU (intermediates never leave VMEM).
        h1 = jnp.maximum(h1_acc[...] + aux[0:1, :], 0.0)
        # fc2 + ReLU.
        h2 = jnp.dot(h1.astype(jnp.bfloat16), w2_ref[...],
                     preferred_element_type=jnp.float32)
        h2 = jnp.maximum(h2 + aux[1:2, :], 0.0)
        # Dropout: module evaluated in inference mode -> identity.
        # TODO(synk): training-mode dropout would use pltpu.prng_seed +
        # pltpu.prng_random_bits for the keep mask and rescale by 1/(1-p).
        # fc3 (out_features == 1): VPU multiply + lane reduction, not an
        # N=1 MXU matmul.
        out = jnp.sum(h2 * aux[2:3, :], axis=-1, keepdims=True)
        o_ref[...] = (out + aux[3:4, 0:1]).astype(o_ref.dtype)


@jax.jit
def baseline_ff_forward(x, params):
    """x: [B, 23074] (f32 or bf16).  params: dict produced by init_params."""
    w1, w2, aux = params["w1"], params["w2"], params["aux"]
    B, K = x.shape
    k_pad, hidden = w1.shape
    tk = _k_tile(hidden)
    assert K == IN_FEATURES, "input feature dim must be 23074"
    assert B <= _MAX_BATCH, "VMEM accounting assumes B <= 256"
    assert k_pad == _padded_k(hidden), "W1 padding does not match the K tile"

    grid = (k_pad // tk,)

    return pl.pallas_call(
        _ff_kernel,
        out_shape=jax.ShapeDtypeStruct((B, 1), jnp.float32),
        grid_spec=pltpu.PrefetchScalarGridSpec(
            num_scalar_prefetch=0,
            grid=grid,
            in_specs=[
                pl.BlockSpec((B, tk), lambda k: (0, k)),           # x (ragged last tile)
                pl.BlockSpec((tk, hidden), lambda k: (k, 0)),      # W1 (bf16, K-padded)
                pl.BlockSpec((hidden, hidden), lambda k: (0, 0)),  # W2 (bf16, resident)
                pl.BlockSpec((4, hidden), lambda k: (0, 0)),       # aux = [b1; b2; w3; b3]
            ],
            out_specs=pl.BlockSpec((B, 1), lambda k: (0, 0)),
            scratch_shapes=[pltpu.VMEM((B, hidden), jnp.float32)],  # fc1 accumulator
        ),
        compiler_params=pltpu.CompilerParams(
            dimension_semantics=("arbitrary",),   # K is a reduction axis
            vmem_limit_bytes=48 << 20,            # headroom on v7x (64 MiB physical)
        ),
    )(x, w1, w2, aux)


def init_params(key, hidden_size):
    """PyTorch-style uniform init.  Returns (kernel_params, f32_ref_params).

    Kernel params: bf16 W1 (zero-padded along K to a multiple of the K tile,
    one-time cost), bf16 W2, and a packed f32 aux = [b1; b2; w3; b3]."""
    k1, k2, k3, k4, k5, k6 = jax.random.split(key, 6)

    def linear(kw, kb, fan_in, fan_out):
        bound = 1.0 / math.sqrt(fan_in)
        w = jax.random.uniform(kw, (fan_in, fan_out), jnp.float32, -bound, bound)
        b = jax.random.uniform(kb, (fan_out,), jnp.float32, -bound, bound)
        return w, b

    w1, b1 = linear(k1, k2, IN_FEATURES, hidden_size)
    w2, b2 = linear(k3, k4, hidden_size, hidden_size)
    w3, b3 = linear(k5, k6, hidden_size, 1)          # (hidden, 1), (1,)

    ref_params = {"w1": w1, "b1": b1, "w2": w2, "b2": b2, "w3": w3, "b3": b3}

    k_pad = _padded_k(hidden_size)
    w1_p = jnp.pad(w1, ((0, k_pad - IN_FEATURES), (0, 0)))   # zero pad rows (finite)

    aux = jnp.zeros((4, hidden_size), jnp.float32)
    aux = aux.at[0].set(b1)
    aux = aux.at[1].set(b2)
    aux = aux.at[2].set(w3[:, 0])
    aux = aux.at[3, 0].set(b3[0])

    kernel_params = {
        "w1": w1_p.astype(jnp.bfloat16),
        "w2": w2.astype(jnp.bfloat16),
        "aux": aux,
    }
    return kernel_params, ref_params


def _reference_bf16(x, kp):
    """Pure-JAX reference matching the kernel's numerics (bf16 matmul inputs,
    f32 accumulation, eval-mode dropout = identity)."""
    w1 = kp["w1"][:IN_FEATURES]
    h1 = jnp.dot(x.astype(jnp.bfloat16), w1, preferred_element_type=jnp.float32)
    h1 = jnp.maximum(h1 + kp["aux"][0:1, :], 0.0)
    h2 = jnp.dot(h1.astype(jnp.bfloat16), kp["w2"],
                 preferred_element_type=jnp.float32)
    h2 = jnp.maximum(h2 + kp["aux"][1:2, :], 0.0)
    out = jnp.sum(h2 * kp["aux"][2:3, :], axis=-1, keepdims=True)
    return out + kp["aux"][3:4, 0:1]


def _reference_f32(x, p):
    """True all-f32 semantics of the PyTorch module (eval-mode dropout)."""
    hi = jax.lax.Precision.HIGHEST
    h1 = jnp.maximum(jnp.dot(x, p["w1"], precision=hi) + p["b1"], 0.0)
    h2 = jnp.maximum(jnp.dot(h1, p["w2"], precision=hi) + p["b2"], 0.0)
    return jnp.dot(h2, p["w3"], precision=hi) + p["b3"]


if __name__ == "__main__":
    key = jax.random.PRNGKey(0)
    kx, kp = jax.random.split(key)

    batch = 8
    hidden_size = 32

    x = jax.random.normal(kx, (batch, IN_FEATURES), dtype=jnp.float32)
    kernel_params, ref_params = init_params(kp, hidden_size)

    out = jax.block_until_ready(baseline_ff_forward(x, kernel_params))
    assert out.shape == (batch, 1)

    # Tight check vs a reference with matching bf16-matmul numerics (only the
    # K-split f32 accumulation order differs).
    ref_b = _reference_bf16(x, kernel_params)
    err_b = float(jnp.max(jnp.abs(out - ref_b)))
    assert jnp.allclose(out, ref_b, atol=1e-3, rtol=1e-3), (
        f"bf16-matched ref max abs err {err_b}")

    # Loose check vs the true all-f32 PyTorch module semantics (bf16 weight
    # storage / matmul inputs is the only deviation).
    ref_f = _reference_f32(x, ref_params)
    err_f = float(jnp.max(jnp.abs(out - ref_f)))
    assert jnp.allclose(out, ref_f, atol=5e-2, rtol=5e-2), (
        f"f32 ref max abs err {err_f}")

    print("KERNEL_OK")
</pallas_src>

<mosaic_0001>
module attributes {stable_mosaic.version = 11 : i64} {
  func.func @_ff_kernel(%arg0: i32, %arg1: memref<8x12288xf32, #tpu.memory_space<vmem>>, %arg2: memref<12288x32xbf16, #tpu.memory_space<vmem>>, %arg3: memref<32x32xbf16, #tpu.memory_space<vmem>>, %arg4: memref<4x32xf32, #tpu.memory_space<vmem>>, %arg5: memref<8x1xf32, #tpu.memory_space<vmem>>, %arg6: memref<8x32xf32, #tpu.memory_space<vmem>>) attributes {dimension_semantics = [#tpu.dimension_semantics<arbitrary>], iteration_bounds = array<i64: 2>, scalar_prefetch = 0 : i64, scratch_operands = 1 : i64, tpu.core_type = #tpu.core_type<tc>, window_params = [{transform_indices = @transform_0, window_bounds = array<i64: 8, 12288>}, {transform_indices = @transform_1, window_bounds = array<i64: 12288, 32>}, {pipeline_mode = #tpu.pipeline_mode<synchronous>, transform_indices = @transform_2, window_bounds = array<i64: 32, 32>}, {pipeline_mode = #tpu.pipeline_mode<synchronous>, transform_indices = @transform_3, window_bounds = array<i64: 4, 32>}, {pipeline_mode = #tpu.pipeline_mode<synchronous>, transform_indices = @transform_4, window_bounds = array<i64: 8, 1>}]} {
    %c0_i32 = arith.constant 0 : i32
    %0 = arith.cmpi eq, %arg0, %c0_i32 : i32
    %1 = arith.extui %0 : i1 to i32
    %c0_i32_0 = arith.constant 0 : i32
    %2 = arith.cmpi ne, %1, %c0_i32_0 : i32
    scf.if %2 {
      %cst_10 = arith.constant 0.000000e+00 : f32
      %23 = vector.broadcast %cst_10 : f32 to vector<8x32xf32>
      %c0_11 = arith.constant 0 : index
      %c0_12 = arith.constant 0 : index
      %24 = vector.load %arg6[%c0_11, %c0_12] : memref<8x32xf32, #tpu.memory_space<vmem>>, vector<8x32xf32>
      tpu.vector_store %arg6[%c0_11, %c0_12], %23 {strides = array<i32>} : memref<8x32xf32, #tpu.memory_space<vmem>>, vector<8x32xf32>,
    } else {
    }
    %c12288_i32 = arith.constant 12288 : i32
    %3 = arith.muli %arg0, %c12288_i32 : i32
    %c23074_i32 = arith.constant 23074 : i32
    %4 = arith.subi %c23074_i32, %3 : i32
    %5 = tpu.iota {dimensions = array<i32: 1>} : vector<1x12288xi32>
    %6 = vector.broadcast %4 : i32 to vector<1x12288xi32>
    %7 = arith.cmpi slt, %5, %6 : vector<1x12288xi32>
    %c0 = arith.constant 0 : index
    %c0_1 = arith.constant 0 : index
    %8 = vector.load %arg1[%c0, %c0_1] : memref<8x12288xf32, #tpu.memory_space<vmem>>, vector<8x12288xf32>
    %c0_i32_2 = arith.constant 0 : i32
    %9 = arith.sitofp %c0_i32_2 : i32 to f32
    %10 = vector.shape_cast %7 : vector<1x12288xi1> to vector<1x12288xi1>
    %11 = vector.broadcast %10 : vector<1x12288xi1> to vector<8x12288xi1>
    %12 = vector.broadcast %9 : f32 to vector<8x12288xf32>
    %13 = arith.select %11, %8, %12 : vector<8x12288xi1>, vector<8x12288xf32>
    %14 = arith.truncf %13 : vector<8x12288xf32> to vector<8x12288xbf16>
    %c0_3 = arith.constant 0 : index
    %c0_4 = arith.constant 0 : index
    %15 = vector.load %arg6[%c0_3, %c0_4] : memref<8x32xf32, #tpu.memory_space<vmem>>, vector<8x32xf32>
    %c0_5 = arith.constant 0 : index
    %c0_6 = arith.constant 0 : index
    %16 = vector.load %arg2[%c0_5, %c0_6] : memref<12288x32xbf16, #tpu.memory_space<vmem>>, vector<12288x32xbf16>
    %cst = arith.constant dense<0.000000e+00> : vector<8x32xf32>
    %17 = tpu.matmul %14, %16, %cst {dimension_numbers = #tpu.dot_dimension_numbers<[1], [0], [0], [1], [0, 0, 1, 1], [], []>} : vector<8x12288xbf16>, vector<12288x32xbf16>, vector<8x32xf32> -> vector<8x32xf32>
    %18 = arith.addf %15, %17 : vector<8x32xf32>
    %c0_7 = arith.constant 0 : index
    %c0_8 = arith.constant 0 : index
    %19 = vector.load %arg6[%c0_7, %c0_8] : memref<8x32xf32, #tpu.memory_space<vmem>>, vector<8x32xf32>
    tpu.vector_store %arg6[%c0_7, %c0_8], %18 {strides = array<i32>} : memref<8x32xf32, #tpu.memory_space<vmem>>, vector<8x32xf32>,
    %c1_i32 = arith.constant 1 : i32
    %20 = arith.cmpi eq, %arg0, %c1_i32 : i32
    %21 = arith.extui %20 : i1 to i32
    %c0_i32_9 = arith.constant 0 : i32
    %22 = arith.cmpi ne, %21, %c0_i32_9 : i32
    scf.if %22 {
      %c0_10 = arith.constant 0 : index
      %c0_11 = arith.constant 0 : index
      %23 = vector.load %arg4[%c0_10, %c0_11] : memref<4x32xf32, #tpu.memory_space<vmem>>, vector<4x32xf32>
      %c0_12 = arith.constant 0 : index
      %c0_13 = arith.constant 0 : index
      %24 = vector.load %arg6[%c0_12, %c0_13] : memref<8x32xf32, #tpu.memory_space<vmem>>, vector<8x32xf32>
      %25 = vector.extract_strided_slice %23 {offsets = [0, 0], sizes = [1, 32], strides = [1, 1]} : vector<4x32xf32> to vector<1x32xf32>
      %26 = vector.broadcast %25 : vector<1x32xf32> to vector<8x32xf32>
      %27 = arith.addf %24, %26 : vector<8x32xf32>
      %cst_14 = arith.constant 0.000000e+00 : f32
      %28 = vector.broadcast %cst_14 : f32 to vector<8x32xf32>
      %29 = arith.maximumf %27, %28 : vector<8x32xf32>
      %30 = arith.truncf %29 : vector<8x32xf32> to vector<8x32xbf16>
      %c0_15 = arith.constant 0 : index
      %c0_16 = arith.constant 0 : index
      %31 = vector.load %arg3[%c0_15, %c0_16] : memref<32x32xbf16, #tpu.memory_space<vmem>>, vector<32x32xbf16>
      %cst_17 = arith.constant dense<0.000000e+00> : vector<8x32xf32>
      %32 = tpu.matmul %30, %31, %cst_17 {dimension_numbers = #tpu.dot_dimension_numbers<[1], [0], [0], [1], [0, 0, 1, 1], [], []>} : vector<8x32xbf16>, vector<32x32xbf16>, vector<8x32xf32> -> vector<8x32xf32>
      %33 = vector.extract_strided_slice %23 {offsets = [1, 0], sizes = [1, 32], strides = [1, 1]} : vector<4x32xf32> to vector<1x32xf32>
      %34 = vector.broadcast %33 : vector<1x32xf32> to vector<8x32xf32>
      %35 = arith.addf %32, %34 : vector<8x32xf32>
      %cst_18 = arith.constant 0.000000e+00 : f32
      %36 = vector.broadcast %cst_18 : f32 to vector<8x32xf32>
      %37 = arith.maximumf %35, %36 : vector<8x32xf32>
      %38 = vector.extract_strided_slice %23 {offsets = [2, 0], sizes = [1, 32], strides = [1, 1]} : vector<4x32xf32> to vector<1x32xf32>
      %39 = vector.broadcast %38 : vector<1x32xf32> to vector<8x32xf32>
      %40 = arith.mulf %37, %39 : vector<8x32xf32>
      %cst_19 = arith.constant dense<0.000000e+00> : vector<8xf32>
      %41 = vector.multi_reduction <add>, %40, %cst_19 [1] : vector<8x32xf32> to vector<8xf32>
      %42 = vector.shape_cast %41 : vector<8xf32> to vector<8x1xf32>
      %43 = vector.extract_strided_slice %23 {offsets = [3, 0], sizes = [1, 1], strides = [1, 1]} : vector<4x32xf32> to vector<1x1xf32>
      %44 = vector.broadcast %43 : vector<1x1xf32> to vector<8x1xf32>
      %45 = arith.addf %42, %44 : vector<8x1xf32>
      %c0_20 = arith.constant 0 : index
      %c0_21 = arith.constant 0 : index
      %46 = vector.load %arg5[%c0_20, %c0_21] : memref<8x1xf32, #tpu.memory_space<vmem>>, vector<8x1xf32>
      tpu.vector_store %arg5[%c0_20, %c0_21], %45 {strides = array<i32>} : memref<8x1xf32, #tpu.memory_space<vmem>>, vector<8x1xf32>,
    } else {
    }
    return
  }
  func.func @transform_0(%arg0: i32) -> (i32, i32) {
    %c0_i32 = arith.constant 0 : i32
    %c0_i32_0 = arith.constant 0 : i32
    return %c0_i32, %arg0 : i32, i32
  }
  func.func @transform_1(%arg0: i32) -> (i32, i32) {
    %c0_i32 = arith.constant 0 : i32
    %c0_i32_0 = arith.constant 0 : i32
    return %arg0, %c0_i32 : i32, i32
  }
  func.func @transform_2(%arg0: i32) -> (i32, i32) {
    %c0_i32 = arith.constant 0 : i32
    %c0_i32_0 = arith.constant 0 : i32
    %c0_i32_1 = arith.constant 0 : i32
    return %c0_i32, %c0_i32_0 : i32, i32
  }
  func.func @transform_3(%arg0: i32) -> (i32, i32) {
    %c0_i32 = arith.constant 0 : i32
    %c0_i32_0 = arith.constant 0 : i32
    %c0_i32_1 = arith.constant 0 : i32
    return %c0_i32, %c0_i32_0 : i32, i32
  }
  func.func @transform_4(%arg0: i32) -> (i32, i32) {
    %c0_i32 = arith.constant 0 : i32
    %c0_i32_0 = arith.constant 0 : i32
    %c0_i32_1 = arith.constant 0 : i32
    return %c0_i32, %c0_i32_0 : i32, i32
  }
}

</mosaic_0001>

<llo_original>
// kernel: baseline_ff_forward.1
$region0: #{baseline_ff_forward.1}
  #allocation0 [shape = 'u32[]', space=smem, size = 0x4, offset = 0x4, fixed_abs, tag = 'smem constant byte address 0x4 - core index']
  #allocation1 [shape = 'u32[144,128]{1,0:T(1,128)}', space=vmem, size = 0x12000, scoped, tag = 'internal scratch']
  #allocation2 [shape = 'f32[8,32]{1,0:T(8,128)}', space=vmem, size = 0x1000, scoped, tag = 'scratch operand']
  %s0 = inlined_call_operand.vmem [shape: f32[8,23074], index: 0, kind: input, shape index: {}]
  %s1 = inlined_call_operand.vmem [shape: bf16[24576,32], index: 1, kind: input, shape index: {}]
  %s2 = inlined_call_operand.vmem [shape: bf16[32,32], index: 2, kind: input, shape index: {}]
  %s3 = inlined_call_operand.vmem [shape: f32[4,32], index: 3, kind: input, shape index: {}]
  %s4 = inlined_call_operand.vmem [shape: f32[8,1], index: 4, kind: output, shape index: {}]
  %s5 = sld [smem:[#allocation0]]
  $region57: #{baseline_ff_forward.1} parent=0
    _
  %s7 = ssub.s32 1, %s5
  %s8 = scalar_select 0, %s7, %s5
  loop: start=0, step=1, limit=4
  $region2: #{baseline_ff_forward.1} parent=0 // loop_pre_header
    _
  $region3: #{baseline_ff_forward.1} parent=0 // loop_header
    %s10 = sphi 0, %s14
    %p11 = scmp.ge.s32.totalorder %s10, 4
    %s20 = sphi 0, %s22
    %s23 = sphi 0, %s20
    %s24 = sphi 0, %s23
    %s40 = sphi 0, %s24
    %s46 = sphi 0, %s48
    %s49 = sphi 0, %s46
    %s50 = sphi 0, %s49
    %s66 = sphi 0, %s50
    %s70 = sphi 0, %s70
    %s72 = sphi 0, %s70
    %s73 = sphi 0, %s72
    %s87 = sphi 0, %s73
    %s91 = sphi 0, %s91
    %s93 = sphi 0, %s91
    %s94 = sphi 0, %s93
    %s108 = sphi 0, %s94
    %s112 = sphi 0, %s112
    %s114 = sphi 0, %s112
    %s115 = sphi 0, %s114
    %s129 = sphi 0, %s115
  $region4: #{baseline_ff_forward.1} parent=0 // loop_header_branch
    %13 = sbr.rel (%p11) target = $region8
  $region5: #{baseline_ff_forward.1} parent=0 // loop_body
    %s15 = ssub.s32 %s10, 1
    %s16 = ssub.s32 %s10, 2
    %s17 = sadd.s32 %s10, 1
    %s18 = ssub.s32 %s10, %s17
    %p19 = scmp.eq.s32.totalorder %s18, 0
    %s21 = sadd.s32 %s20, 1
    %s22 = scalar_select %p19, %s20, %s21
    %p25 = pneg %p19
    %p26 = scmp.eq.s32.totalorder %s10, 1
    %p27 = por %p25, %p26
    %p28 = scmp.ne.s32.totalorder %s20, %s23
    %p29 = scmp.eq.s32.totalorder %s10, 0
    %p30 = por %p28, %p29
    %p31 = scmp.ne.s32.totalorder %s20, %s23
    %p32 = scmp.eq.s32.totalorder %s15, 1
    %p33 = por %p31, %p32
    %p34 = scmp.ne.s32.totalorder %s23, %s24
    %p35 = scmp.eq.s32.totalorder %s15, 0
    %p36 = por %p34, %p35
    %p37 = scmp.ne.s32.totalorder %s23, %s24
    %p38 = scmp.eq.s32.totalorder %s16, 1
    %p39 = por %p37, %p38
    %p41 = scmp.ne.s32.totalorder %s24, %s40
    %p42 = scmp.eq.s32.totalorder %s16, 0
    %p43 = por %p41, %p42
    %s44 = ssub.s32 %s10, %s17
    %p45 = scmp.eq.s32.totalorder %s44, 0
    %s47 = sadd.s32 %s46, 1
    %s48 = scalar_select %p45, %s46, %s47
    %p51 = pneg %p45
    %p52 = scmp.eq.s32.totalorder %s10, 1
    %p53 = por %p51, %p52
    %p54 = scmp.ne.s32.totalorder %s46, %s49
    %p55 = scmp.eq.s32.totalorder %s10, 0
    %p56 = por %p54, %p55
    %p57 = scmp.ne.s32.totalorder %s46, %s49
    %p58 = scmp.eq.s32.totalorder %s15, 1
    %p59 = por %p57, %p58
    %p60 = scmp.ne.s32.totalorder %s49, %s50
    %p61 = scmp.eq.s32.totalorder %s15, 0
    %p62 = por %p60, %p61
    %p63 = scmp.ne.s32.totalorder %s49, %s50
    %p64 = scmp.eq.s32.totalorder %s16, 1
    %p65 = por %p63, %p64
    %p67 = scmp.ne.s32.totalorder %s50, %s66
    %p68 = scmp.eq.s32.totalorder %s16, 0
    %p69 = por %p67, %p68
    %s71 = sadd.s32 %s70, 1
    %p74 = scmp.eq.s32.totalorder %s10, 1
    %p75 = scmp.ne.s32.totalorder %s70, %s72
    %p76 = scmp.eq.s32.totalorder %s10, 0
    %p77 = por %p75, %p76
    %p78 = scmp.ne.s32.totalorder %s70, %s72
    %p79 = scmp.eq.s32.totalorder %s15, 1
    %p80 = por %p78, %p79
    %p81 = scmp.ne.s32.totalorder %s72, %s73
    %p82 = scmp.eq.s32.totalorder %s15, 0
    %p83 = por %p81, %p82
    %p84 = scmp.ne.s32.totalorder %s72, %s73
    %p85 = scmp.eq.s32.totalorder %s16, 1
    %p86 = por %p84, %p85
    %p88 = scmp.ne.s32.totalorder %s73, %s87
    %p89 = scmp.eq.s32.totalorder %s16, 0
    %p90 = por %p88, %p89
    %s92 = sadd.s32 %s91, 1
    %p95 = scmp.eq.s32.totalorder %s10, 1
    %p96 = scmp.ne.s32.totalorder %s91, %s93
    %p97 = scmp.eq.s32.totalorder %s10, 0
    %p98 = por %p96, %p97
    %p99 = scmp.ne.s32.totalorder %s91, %s93
    %p100 = scmp.eq.s32.totalorder %s15, 1
    %p101 = por %p99, %p100
    %p102 = scmp.ne.s32.totalorder %s93, %s94
    %p103 = scmp.eq.s32.totalorder %s15, 0
    %p104 = por %p102, %p103
    %p105 = scmp.ne.s32.totalorder %s93, %s94
    %p106 = scmp.eq.s32.totalorder %s16, 1
    %p107 = por %p105, %p106
    %p109 = scmp.ne.s32.totalorder %s94, %s108
    %p110 = scmp.eq.s32.totalorder %s16, 0
    %p111 = por %p109, %p110
    %s113 = sadd.s32 %s112, 1
    %p116 = scmp.eq.s32.totalorder %s10, 1
    %p117 = scmp.ne.s32.totalorder %s112, %s114
    %p118 = scmp.eq.s32.totalorder %s10, 0
    %p119 = por %p117, %p118
    %p120 = scmp.ne.s32.totalorder %s112, %s114
    %p121 = scmp.eq.s32.totalorder %s15, 1
    %p122 = por %p120, %p121
    %p123 = scmp.ne.s32.totalorder %s114, %s115
    %p124 = scmp.eq.s32.totalorder %s15, 0
    %p125 = por %p123, %p124
    %p126 = scmp.ne.s32.totalorder %s114, %s115
    %p127 = scmp.eq.s32.totalorder %s16, 1
    %p128 = por %p126, %p127
    %p130 = scmp.ne.s32.totalorder %s115, %s129
    %p131 = scmp.eq.s32.totalorder %s16, 0
    %p132 = por %p130, %p131
    %p133 = scmp.le.s32.totalorder 1, %s10
    %p134 = scmp.lt.s32.totalorder %s10, 3
    %p135 = pnand %p133, %p134
    %p136 = pneg %p135
    // Predicated region
    $region9: #{baseline_ff_forward.1} parent=5 // pred_check
      _
    $region10: #{baseline_ff_forward.1} parent=5 // pred_check_branch
      %138 = sbr.rel (%p135) target = $region12
    $region11: #{baseline_ff_forward.1} parent=5 // pred_region
      %s139 = ssub.s32 %s10, 1
      // Predicated region
      $region13: #{baseline_ff_forward.1} parent=11 // pred_check
        %p140 = pneg %p83
      $region14: #{baseline_ff_forward.1} parent=11 // pred_check_branch
        %142 = sbr.rel (%p140) target = $region16
      $region15: #{baseline_ff_forward.1} parent=11 // pred_region
        _
      $region16: #{baseline_ff_forward.1} parent=11 // pred_fallthru
        _
      // Predicated region
      $region17: #{baseline_ff_forward.1} parent=11 // pred_check
        %p143 = pneg %p104
      $region18: #{baseline_ff_forward.1} parent=11 // pred_check_branch
        %145 = sbr.rel (%p143) target = $region20
      $region19: #{baseline_ff_forward.1} parent=11 // pred_region
        _
      $region20: #{baseline_ff_forward.1} parent=11 // pred_fallthru
        _
    $region12: #{baseline_ff_forward.1} parent=5 // pred_fallthru
      _
    %p146 = scmp.lt.s32.totalorder %s10, 2
    // Predicated region
    $region21: #{baseline_ff_forward.1} parent=5 // pred_check
      %p147 = pneg %p146
    $region22: #{baseline_ff_forward.1} parent=5 // pred_check_branch
      %149 = sbr.rel (%p147) target = $region24
    $region23: #{baseline_ff_forward.1} parent=5 // pred_region
      // Predicated region
      $region25: #{baseline_ff_forward.1} parent=23 // pred_check
        %p150 = pneg %p30
      $region26: #{baseline_ff_forward.1} parent=23 // pred_check_branch
        %152 = sbr.rel (%p150) target = $region28
      $region27: #{baseline_ff_forward.1} parent=23 // pred_region
        %s153 = smul.u32 96, %s10
        %s154 = ssub.s32 181, %s153
        %p155 = scmp.lt.s32.totalorder %s154, 96
        %s156 = scalar_select %p155, %s154, 96
        %s157 = smul.u32 128, %s156
        %p158 = scmp.lt.s32.totalorder %s153, 180
        %s159 = scalar_select %p158, %s153, 180
        %s160 = smul.addr %s159, 8
        %s161 = scalar_lea.vmem %s0, %s160
        %s162 = smul.u32 96, %s10
        %s163 = ssub.s32 181, %s162
        %p164 = scmp.lt.s32.totalorder %s163, 96
        %s165 = scalar_select %p164, %s163, 96
        %s166 = smul.u32 128, %s165
      $region28: #{baseline_ff_forward.1} parent=23 // pred_fallthru
        _
      // Predicated region
      $region29: #{baseline_ff_forward.1} parent=23 // pred_check
        %p167 = pneg %p56
      $region30: #{baseline_ff_forward.1} parent=23 // pred_check_branch
        %169 = sbr.rel (%p167) target = $region32
      $region31: #{baseline_ff_forward.1} parent=23 // pred_region
        %s170 = smul.u32 1536, %s10
        %p171 = scmp.lt.s32.totalorder %s170, 3071
        %s172 = scalar_select %p171, %s170, 3071
        %s173 = smul.addr %s172, 4
        %s174 = scalar_lea.vmem %s1, %s173
        %s175 = smul.u32 1536, %s10
      $region32: #{baseline_ff_forward.1} parent=23 // pred_fallthru
        _
    $region24: #{baseline_ff_forward.1} parent=5 // pred_fallthru
      _
    %p176 = scmp.le.s32.totalorder 1, %s10
    %p177 = scmp.lt.s32.totalorder %s10, 3
    %p178 = pnand %p176, %p177
    %p179 = pneg %p178
    // Predicated region
    $region33: #{baseline_ff_forward.1} parent=5 // pred_check
      _
    $region34: #{baseline_ff_forward.1} parent=5 // pred_check_branch
      %181 = sbr.rel (%p178) target = $region36
    $region35: #{baseline_ff_forward.1} parent=5 // pred_region
      %s182 = ssub.s32 %s10, 1
      %s183 = smul.u32 96, %s15
      %s184 = ssub.s32 181, %s183
      %p185 = scmp.lt.s32.totalorder %s184, 96
      %s186 = scalar_select %p185, %s184, 96
      %s187 = smul.u32 128, %s186
      %p188 = scmp.lt.s32.totalorder %s183, 180
      %s189 = scalar_select %p188, %s183, 180
      %s190 = smul.addr %s189, 8
      %s191 = scalar_lea.vmem %s0, %s190
      %p192 = pneg %p36
      %p193 = pneg %p33
      %s194 = smul.u32 1536, %s15
      %p195 = scmp.lt.s32.totalorder %s194, 3071
      %s196 = scalar_select %p195, %s194, 3071
      %s197 = smul.addr %s196, 4
      %s198 = scalar_lea.vmem %s1, %s197
      %p199 = pneg %p62
      %p200 = pneg %p59
      %p201 = pneg %p83
      %p202 = pneg %p80
      %p203 = pneg %p104
      %p204 = pneg %p101
      %p205 = pneg %p125
      %p206 = pneg %p122
      %s207 = smul.u32 96, %s15
      %s208 = ssub.s32 181, %s207
      %p209 = scmp.lt.s32.totalorder %s208, 96
      %s210 = scalar_select %p209, %s208, 96
      %s211 = smul.u32 128, %s210
      %p212 = scmp.lt.s32.totalorder %s207, 180
      %s213 = scalar_select %p212, %s207, 180
      %s214 = smul.addr %s213, 8
      %s215 = scalar_lea.vmem %s0, %s214
      %s216 = smul.u32 96, %s15
      %s217 = ssub.s32 181, %s216
      %p218 = scmp.lt.s32.totalorder %s217, 96
      %s219 = scalar_select %p218, %s217, 96
      %s220 = smul.u32 128, %s219
      %s221 = smul.u32 1536, %s15
      %p222 = scmp.lt.s32.totalorder %s221, 3071
      %s223 = scalar_select %p222, %s221, 3071
      %s224 = smul.addr %s223, 4
      %s225 = scalar_lea.vmem %s1, %s224
      %s226 = smul.u32 1536, %s15
      %p228 = scmp.eq.s32.totalorder %s15, 0
      // Predicated region
      $region37: #{baseline_ff_forward.1} parent=35 // pred_check
        %p229 = pneg %p228
      $region38: #{baseline_ff_forward.1} parent=35 // pred_check_branch
        %231 = sbr.rel (%p229) target = $region40
      $region39: #{baseline_ff_forward.1} parent=35 // pred_region
        %vm232 = vcmask 261120
        %233 = vst.msk [vmem:[#allocation2] sm:$0xff] %vm232, 0.0
      $region40: #{baseline_ff_forward.1} parent=35 // pred_fallthru
        _
      %s234 = smul.u32 %s15, 12288
      %s235 = ssub.s32 23074, %s234
      %v236 = vlaneseq
      %v237 = vand.u32 %v236, 127
      %v238 = vadd.s32 %v237, 128
      %v239 = vadd.s32 %v237, 256
      %v240 = vadd.s32 %v237, 384
      %v241 = vadd.s32 %v237, 512
      %v242 = vadd.s32 %v237, 640
      %v243 = vadd.s32 %v237, 768
      %v244 = vadd.s32 %v237, 896
      %v245 = vadd.s32 %v237, 1024
      %v246 = vadd.s32 %v237, 1152
      %v247 = vadd.s32 %v237, 1280
      %v248 = vadd.s32 %v237, 1408
      %v249 = vadd.s32 %v237, 1536
      %v250 = vadd.s32 %v237, 1664
      %v251 = vadd.s32 %v237, 1792
      %v252 = vadd.s32 %v237, 1920
      %v253 = vadd.s32 %v237, 2048
      %v254 = vadd.s32 %v237, 2176
      %v255 = vadd.s32 %v237, 2304
      %v256 = vadd.s32 %v237, 2432
      %v257 = vadd.s32 %v237, 2560
      %v258 = vadd.s32 %v237, 2688
      %v259 = vadd.s32 %v237, 2816
      %v260 = vadd.s32 %v237, 2944
      %v261 = vadd.s32 %v237, 3072
      %v262 = vadd.s32 %v237, 3200
      %v263 = vadd.s32 %v237, 3328
      %v264 = vadd.s32 %v237, 3456
      %v265 = vadd.s32 %v237, 3584
      %v266 = vadd.s32 %v237, 3712
      %v267 = vadd.s32 %v237, 3840
      %v268 = vadd.s32 %v237, 3968
      %v269 = vadd.s32 %v237, 4096
      %v270 = vadd.s32 %v237, 4224
      %v271 = vadd.s32 %v237, 4352
      %v272 = vadd.s32 %v237, 4480
      %v273 = vadd.s32 %v237, 4608
      %v274 = vadd.s32 %v237, 4736
      %v275 = vadd.s32 %v237, 4864
      %v276 = vadd.s32 %v237, 4992
      %v277 = vadd.s32 %v237, 5120
      %v278 = vadd.s32 %v237, 5248
      %v279 = vadd.s32 %v237, 5376
      %v280 = vadd.s32 %v237, 5504
      %v281 = vadd.s32 %v237, 5632
      %v282 = vadd.s32 %v237, 5760
      %v283 = vadd.s32 %v237, 5888
      %v284 = vadd.s32 %v237, 6016
      %v285 = vadd.s32 %v237, 6144
      %v286 = vadd.s32 %v237, 6272
      %v287 = vadd.s32 %v237, 6400
      %v288 = vadd.s32 %v237, 6528
      %v289 = vadd.s32 %v237, 6656
      %v290 = vadd.s32 %v237, 6784
      %v291 = vadd.s32 %v237, 6912
      %v292 = vadd.s32 %v237, 7040
      %v293 = vadd.s32 %v237, 7168
      %v294 = vadd.s32 %v237, 7296
      %v295 = vadd.s32 %v237, 7424
      %v296 = vadd.s32 %v237, 7552
      %v297 = vadd.s32 %v237, 7680
      %v298 = vadd.s32 %v237, 7808
      %v299 = vadd.s32 %v237, 7936
      %v300 = vadd.s32 %v237, 8064
      %v301 = vadd.s32 %v237, 8192
      %v302 = vadd.s32 %v237, 8320
      %v303 = vadd.s32 %v237, 8448
      %v304 = vadd.s32 %v237, 8576
      %v305 = vadd.s32 %v237, 8704
      %v306 = vadd.s32 %v237, 8832
      %v307 = vadd.s32 %v237, 8960
      %v308 = vadd.s32 %v237, 9088
      %v309 = vadd.s32 %v237, 9216
      %v310 = vadd.s32 %v237, 9344
      %v311 = vadd.s32 %v237, 9472
      %v312 = vadd.s32 %v237, 9600
      %v313 = vadd.s32 %v237, 9728
      %v314 = vadd.s32 %v237, 9856
      %v315 = vadd.s32 %v237, 9984
      %v316 = vadd.s32 %v237, 10112
      %v317 = vadd.s32 %v237, 10240
      %v318 = vadd.s32 %v237, 10368
      %v319 = vadd.s32 %v237, 10496
      %v320 = vadd.s32 %v237, 10624
      %v321 = vadd.s32 %v237, 10752
      %v322 = vadd.s32 %v237, 10880
      %v323 = vadd.s32 %v237, 11008
      %v324 = vadd.s32 %v237, 11136
      %v325 = vadd.s32 %v237, 11264
      %v326 = vadd.s32 %v237, 11392
      %v327 = vadd.s32 %v237, 11520
      %v328 = vadd.s32 %v237, 11648
      %v329 = vadd.s32 %v237, 11776
      %v330 = vadd.s32 %v237, 11904
      %v331 = vadd.s32 %v237, 12032
      %v332 = vadd.s32 %v237, 12160
      %v333 = vstv %s235
      %vm334 = vcmp.lt.s32.totalorder %v237, %v333
      %vm335 = vcmp.lt.s32.totalorder %v238, %v333
      %vm336 = vcmp.lt.s32.totalorder %v239, %v333
      %vm337 = vcmp.lt.s32.totalorder %v240, %v333
      %vm338 = vcmp.lt.s32.totalorder %v241, %v333
      %vm339 = vcmp.lt.s32.totalorder %v242, %v333
      %vm340 = vcmp.lt.s32.totalorder %v243, %v333
      %vm341 = vcmp.lt.s32.totalorder %v244, %v333
      %vm342 = vcmp.lt.s32.totalorder %v245, %v333
      %vm343 = vcmp.lt.s32.totalorder %v246, %v333
      %vm344 = vcmp.lt.s32.totalorder %v247, %v333
      %vm345 = vcmp.lt.s32.totalorder %v248, %v333
      %vm346 = vcmp.lt.s32.totalorder %v249, %v333
      %vm347 = vcmp.lt.s32.totalorder %v250, %v333
      %vm348 = vcmp.lt.s32.totalorder %v251, %v333
      %vm349 = vcmp.lt.s32.totalorder %v252, %v333
      %vm350 = vcmp.lt.s32.totalorder %v253, %v333
      %vm351 = vcmp.lt.s32.totalorder %v254, %v333
      %vm352 = vcmp.lt.s32.totalorder %v255, %v333
      %vm353 = vcmp.lt.s32.totalorder %v256, %v333
      %vm354 = vcmp.lt.s32.totalorder %v257, %v333
      %vm355 = vcmp.lt.s32.totalorder %v258, %v333
      %vm356 = vcmp.lt.s32.totalorder %v259, %v333
      %vm357 = vcmp.lt.s32.totalorder %v260, %v333
      %vm358 = vcmp.lt.s32.totalorder %v261, %v333
      %vm359 = vcmp.lt.s32.totalorder %v262, %v333
      %vm360 = vcmp.lt.s32.totalorder %v263, %v333
      %vm361 = vcmp.lt.s32.totalorder %v264, %v333
      %vm362 = vcmp.lt.s32.totalorder %v265, %v333
      %vm363 = vcmp.lt.s32.totalorder %v266, %v333
      %vm364 = vcmp.lt.s32.totalorder %v267, %v333
      %vm365 = vcmp.lt.s32.totalorder %v268, %v333
      %vm366 = vcmp.lt.s32.totalorder %v269, %v333
      %vm367 = vcmp.lt.s32.totalorder %v270, %v333
      %vm368 = vcmp.lt.s32.totalorder %v271, %v333
      %vm369 = vcmp.lt.s32.totalorder %v272, %v333
      %vm370 = vcmp.lt.s32.totalorder %v273, %v333
      %vm371 = vcmp.lt.s32.totalorder %v274, %v333
      %vm372 = vcmp.lt.s32.totalorder %v275, %v333
      %vm373 = vcmp.lt.s32.totalorder %v276, %v333
      %vm374 = vcmp.lt.s32.totalorder %v277, %v333
      %vm375 = vcmp.lt.s32.totalorder %v278, %v333
      %vm376 = vcmp.lt.s32.totalorder %v279, %v333
      %vm377 = vcmp.lt.s32.totalorder %v280, %v333
      %vm378 = vcmp.lt.s32.totalorder %v281, %v333
      %vm379 = vcmp.lt.s32.totalorder %v282, %v333
      %vm380 = vcmp.lt.s32.totalorder %v283, %v333
      %vm381 = vcmp.lt.s32.totalorder %v284, %v333
      %vm382 = vcmp.lt.s32.totalorder %v285, %v333
      %vm383 = vcmp.lt.s32.totalorder %v286, %v333
      %vm384 = vcmp.lt.s32.totalorder %v287, %v333
      %vm385 = vcmp.lt.s32.totalorder %v288, %v333
      %vm386 = vcmp.lt.s32.totalorder %v289, %v333
      %vm387 = vcmp.lt.s32.totalorder %v290, %v333
      %vm388 = vcmp.lt.s32.totalorder %v291, %v333
      %vm389 = vcmp.lt.s32.totalorder %v292, %v333
      %vm390 = vcmp.lt.s32.totalorder %v293, %v333
      %vm391 = vcmp.lt.s32.totalorder %v294, %v333
      %vm392 = vcmp.lt.s32.totalorder %v295, %v333
      %vm393 = vcmp.lt.s32.totalorder %v296, %v333
      %vm394 = vcmp.lt.s32.totalorder %v297, %v333
      %vm395 = vcmp.lt.s32.totalorder %v298, %v333
      %vm396 = vcmp.lt.s32.totalorder %v299, %v333
      %vm397 = vcmp.lt.s32.totalorder %v300, %v333
      %vm398 = vcmp.lt.s32.totalorder %v301, %v333
      %vm399 = vcmp.lt.s32.totalorder %v302, %v333
      %vm400 = vcmp.lt.s32.totalorder %v303, %v333
      %vm401 = vcmp.lt.s32.totalorder %v304, %v333
      %vm402 = vcmp.lt.s32.totalorder %v305, %v333
      %vm403 = vcmp.lt.s32.totalorder %v306, %v333
      %vm404 = vcmp.lt.s32.totalorder %v307, %v333
      %vm405 = vcmp.lt.s32.totalorder %v308, %v333
      %vm406 = vcmp.lt.s32.totalorder %v309, %v333
      %vm407 = vcmp.lt.s32.totalorder %v310, %v333
      %vm408 = vcmp.lt.s32.totalorder %v311, %v333
      %vm409 = vcmp.lt.s32.totalorder %v312, %v333
      %vm410 = vcmp.lt.s32.totalorder %v313, %v333
      %vm411 = vcmp.lt.s32.totalorder %v314, %v333
      %vm412 = vcmp.lt.s32.totalorder %v315, %v333
      %vm413 = vcmp.lt.s32.totalorder %v316, %v333
      %vm414 = vcmp.lt.s32.totalorder %v317, %v333
      %vm415 = vcmp.lt.s32.totalorder %v318, %v333
      %vm416 = vcmp.lt.s32.totalorder %v319, %v333
      %vm417 = vcmp.lt.s32.totalorder %v320, %v333
      %vm418 = vcmp.lt.s32.totalorder %v321, %v333
      %vm419 = vcmp.lt.s32.totalorder %v322, %v333
      %vm420 = vcmp.lt.s32.totalorder %v323, %v333
      %vm421 = vcmp.lt.s32.totalorder %v324, %v333
      %vm422 = vcmp.lt.s32.totalorder %v325, %v333
      %vm423 = vcmp.lt.s32.totalorder %v326, %v333
      %vm424 = vcmp.lt.s32.totalorder %v327, %v333
      %vm425 = vcmp.lt.s32.totalorder %v328, %v333
      %vm426 = vcmp.lt.s32.totalorder %v329, %v333
      %vm427 = vcmp.lt.s32.totalorder %v330, %v333
      %vm428 = vcmp.lt.s32.totalorder %v331, %v333
      %vm429 = vcmp.lt.s32.totalorder %v332, %v333
      %v430 = vld [vmem:[%s215] sm:$0xff]
      %v431 = vld [vmem:[%s215 + $0x8] sm:$0xff]
      %v432 = vld [vmem:[%s215 + $0x10] sm:$0xff]
      %v433 = vld [vmem:[%s215 + $0x18] sm:$0xff]
      %v434 = vld [vmem:[%s215 + $0x20] sm:$0xff]
      %v435 = vld [vmem:[%s215 + $0x28] sm:$0xff]
      %v436 = vld [vmem:[%s215 + $0x30] sm:$0xff]
      %v437 = vld [vmem:[%s215 + $0x38] sm:$0xff]
      %v438 = vld [vmem:[%s215 + $0x40] sm:$0xff]
      %v439 = vld [vmem:[%s215 + $0x48] sm:$0xff]
      %v440 = vld [vmem:[%s215 + $0x50] sm:$0xff]
      %v441 = vld [vmem:[%s215 + $0x58] sm:$0xff]
      %v442 = vld [vmem:[%s215 + $0x60] sm:$0xff]
      %v443 = vld [vmem:[%s215 + $0x68] sm:$0xff]
      %v444 = vld [vmem:[%s215 + $0x70] sm:$0xff]
      %v445 = vld [vmem:[%s215 + $0x78] sm:$0xff]
      %v446 = vld [vmem:[%s215 + $0x80] sm:$0xff]
      %v447 = vld [vmem:[%s215 + $0x88] sm:$0xff]
      %v448 = vld [vmem:[%s215 + $0x90] sm:$0xff]
      %v449 = vld [vmem:[%s215 + $0x98] sm:$0xff]
      %v450 = vld [vmem:[%s215 + $0xa0] sm:$0xff]
      %v451 = vld [vmem:[%s215 + $0xa8] sm:$0xff]
      %v452 = vld [vmem:[%s215 + $0xb0] sm:$0xff]
      %v453 = vld [vmem:[%s215 + $0xb8] sm:$0xff]
      %v454 = vld [vmem:[%s215 + $0xc0] sm:$0xff]
      %v455 = vld [vmem:[%s215 + $0xc8] sm:$0xff]
      %v456 = vld [vmem:[%s215 + $0xd0] sm:$0xff]
      %v457 = vld [vmem:[%s215 + $0xd8] sm:$0xff]
      %v458 = vld [vmem:[%s215 + $0xe0] sm:$0xff]
      %v459 = vld [vmem:[%s215 + $0xe8] sm:$0xff]
      %v460 = vld [vmem:[%s215 + $0xf0] sm:$0xff]
      %v461 = vld [vmem:[%s215 + $0xf8] sm:$0xff]
      %v462 = vld [vmem:[%s215 + $0x100] sm:$0xff]
      %v463 = vld [vmem:[%s215 + $0x108] sm:$0xff]
      %v464 = vld [vmem:[%s215 + $0x110] sm:$0xff]
      %v465 = vld [vmem:[%s215 + $0x118] sm:$0xff]
      %v466 = vld [vmem:[%s215 + $0x120] sm:$0xff]
      %v467 = vld [vmem:[%s215 + $0x128] sm:$0xff]
      %v468 = vld [vmem:[%s215 + $0x130] sm:$0xff]
      %v469 = vld [vmem:[%s215 + $0x138] sm:$0xff]
      %v470 = vld [vmem:[%s215 + $0x140] sm:$0xff]
      %v471 = vld [vmem:[%s215 + $0x148] sm:$0xff]
      %v472 = vld [vmem:[%s215 + $0x150] sm:$0xff]
      %v473 = vld [vmem:[%s215 + $0x158] sm:$0xff]
      %v474 = vld [vmem:[%s215 + $0x160] sm:$0xff]
      %v475 = vld [vmem:[%s215 + $0x168] sm:$0xff]
      %v476 = vld [vmem:[%s215 + $0x170] sm:$0xff]
      %v477 = vld [vmem:[%s215 + $0x178] sm:$0xff]
      %v478 = vld [vmem:[%s215 + $0x180] sm:$0xff]
      %v479 = vld [vmem:[%s215 + $0x188] sm:$0xff]
      %v480 = vld [vmem:[%s215 + $0x190] sm:$0xff]
      %v481 = vld [vmem:[%s215 + $0x198] sm:$0xff]
      %v482 = vld [vmem:[%s215 + $0x1a0] sm:$0xff]
      %v483 = vld [vmem:[%s215 + $0x1a8] sm:$0xff]
      %v484 = vld [vmem:[%s215 + $0x1b0] sm:$0xff]
      %v485 = vld [vmem:[%s215 + $0x1b8] sm:$0xff]
      %v486 = vld [vmem:[%s215 + $0x1c0] sm:$0xff]
      %v487 = vld [vmem:[%s215 + $0x1c8] sm:$0xff]
      %v488 = vld [vmem:[%s215 + $0x1d0] sm:$0xff]
      %v489 = vld [vmem:[%s215 + $0x1d8] sm:$0xff]
      %v490 = vld [vmem:[%s215 + $0x1e0] sm:$0xff]
      %v491 = vld [vmem:[%s215 + $0x1e8] sm:$0xff]
      %v492 = vld [vmem:[%s215 + $0x1f0] sm:$0xff]
      %v493 = vld [vmem:[%s215 + $0x1f8] sm:$0xff]
      %v494 = vld [vmem:[%s215 + $0x200] sm:$0xff]
      %v495 = vld [vmem:[%s215 + $0x208] sm:$0xff]
      %v496 = vld [vmem:[%s215 + $0x210] sm:$0xff]
      %v497 = vld [vmem:[%s215 + $0x218] sm:$0xff]
      %v498 = vld [vmem:[%s215 + $0x220] sm:$0xff]
      %v499 = vld [vmem:[%s215 + $0x228] sm:$0xff]
      %v500 = vld [vmem:[%s215 + $0x230] sm:$0xff]
      %v501 = vld [vmem:[%s215 + $0x238] sm:$0xff]
      %v502 = vld [vmem:[%s215 + $0x240] sm:$0xff]
      %v503 = vld [vmem:[%s215 + $0x248] sm:$0xff]
      %v504 = vld [vmem:[%s215 + $0x250] sm:$0xff]
      %v505 = vld [vmem:[%s215 + $0x258] sm:$0xff]
      %v506 = vld [vmem:[%s215 + $0x260] sm:$0xff]
      %v507 = vld [vmem:[%s215 + $0x268] sm:$0xff]
      %v508 = vld [vmem:[%s215 + $0x270] sm:$0xff]
      %v509 = vld [vmem:[%s215 + $0x278] sm:$0xff]
      %v510 = vld [vmem:[%s215 + $0x280] sm:$0xff]
      %v511 = vld [vmem:[%s215 + $0x288] sm:$0xff]
      %v512 = vld [vmem:[%s215 + $0x290] sm:$0xff]
      %v513 = vld [vmem:[%s215 + $0x298] sm:$0xff]
      %v514 = vld [vmem:[%s215 + $0x2a0] sm:$0xff]
      %v515 = vld [vmem:[%s215 + $0x2a8] sm:$0xff]
      %v516 = vld [vmem:[%s215 + $0x2b0] sm:$0xff]
      %v517 = vld [vmem:[%s215 + $0x2b8] sm:$0xff]
      %v518 = vld [vmem:[%s215 + $0x2c0] sm:$0xff]
      %v519 = vld [vmem:[%s215 + $0x2c8] sm:$0xff]
      %v520 = vld [vmem:[%s215 + $0x2d0] sm:$0xff]
      %v521 = vld [vmem:[%s215 + $0x2d8] sm:$0xff]
      %v522 = vld [vmem:[%s215 + $0x2e0] sm:$0xff]
      %v523 = vld [vmem:[%s215 + $0x2e8] sm:$0xff]
      %v524 = vld [vmem:[%s215 + $0x2f0] sm:$0xff]
      %v525 = vld [vmem:[%s215 + $0x2f8] sm:$0xff]
      %v526 = vsel %vm334, 1, 0
      %v527 = vsel %vm335, 1, 0
      %v528 = vsel %vm336, 1, 0
      %v529 = vsel %vm337, 1, 0
      %v530 = vsel %vm338, 1, 0
      %v531 = vsel %vm339, 1, 0
      %v532 = vsel %vm340, 1, 0
      %v533 = vsel %vm341, 1, 0
      %v534 = vsel %vm342, 1, 0
      %v535 = vsel %vm343, 1, 0
      %v536 = vsel %vm344, 1, 0
      %v537 = vsel %vm345, 1, 0
      %v538 = vsel %vm346, 1, 0
      %v539 = vsel %vm347, 1, 0
      %v540 = vsel %vm348, 1, 0
      %v541 = vsel %vm349, 1, 0
      %v542 = vsel %vm350, 1, 0
      %v543 = vsel %vm351, 1, 0
      %v544 = vsel %vm352, 1, 0
      %v545 = vsel %vm353, 1, 0
      %v546 = vsel %vm354, 1, 0
      %v547 = vsel %vm355, 1, 0
      %v548 = vsel %vm356, 1, 0
      %v549 = vsel %vm357, 1, 0
      %v550 = vsel %vm358, 1, 0
      %v551 = vsel %vm359, 1, 0
      %v552 = vsel %vm360, 1, 0
      %v553 = vsel %vm361, 1, 0
      %v554 = vsel %vm362, 1, 0
      %v555 = vsel %vm363, 1, 0
      %v556 = vsel %vm364, 1, 0
      %v557 = vsel %vm365, 1, 0
      %v558 = vsel %vm366, 1, 0
      %v559 = vsel %vm367, 1, 0
      %v560 = vsel %vm368, 1, 0
      %v561 = vsel %vm369, 1, 0
      %v562 = vsel %vm370, 1, 0
      %v563 = vsel %vm371, 1, 0
      %v564 = vsel %vm372, 1, 0
      %v565 = vsel %vm373, 1, 0
      %v566 = vsel %vm374, 1, 0
      %v567 = vsel %vm375, 1, 0
      %v568 = vsel %vm376, 1, 0
      %v569 = vsel %vm377, 1, 0
      %v570 = vsel %vm378, 1, 0
      %v571 = vsel %vm379, 1, 0
      %v572 = vsel %vm380, 1, 0
      %v573 = vsel %vm381, 1, 0
      %v574 = vsel %vm382, 1, 0
      %v575 = vsel %vm383, 1, 0
      %v576 = vsel %vm384, 1, 0
      %v577 = vsel %vm385, 1, 0
      %v578 = vsel %vm386, 1, 0
      %v579 = vsel %vm387, 1, 0
      %v580 = vsel %vm388, 1, 0
      %v581 = vsel %vm389, 1, 0
      %v582 = vsel %vm390, 1, 0
      %v583 = vsel %vm391, 1, 0
      %v584 = vsel %vm392, 1, 0
      %v585 = vsel %vm393, 1, 0
      %v586 = vsel %vm394, 1, 0
      %v587 = vsel %vm395, 1, 0
      %v588 = vsel %vm396, 1, 0
      %v589 = vsel %vm397, 1, 0
      %v590 = vsel %vm398, 1, 0
      %v591 = vsel %vm399, 1, 0
      %v592 = vsel %vm400, 1, 0
      %v593 = vsel %vm401, 1, 0
      %v594 = vsel %vm402, 1, 0
      %v595 = vsel %vm403, 1, 0
      %v596 = vsel %vm404, 1, 0
      %v597 = vsel %vm405, 1, 0
      %v598 = vsel %vm406, 1, 0
      %v599 = vsel %vm407, 1, 0
      %v600 = vsel %vm408, 1, 0
      %v601 = vsel %vm409, 1, 0
      %v602 = vsel %vm410, 1, 0
      %v603 = vsel %vm411, 1, 0
      %v604 = vsel %vm412, 1, 0
      %v605 = vsel %vm413, 1, 0
      %v606 = vsel %vm414, 1, 0
      %v607 = vsel %vm415, 1, 0
      %v608 = vsel %vm416, 1, 0
      %v609 = vsel %vm417, 1, 0
      %v610 = vsel %vm418, 1, 0
      %v611 = vsel %vm419, 1, 0
      %v612 = vsel %vm420, 1, 0
      %v613 = vsel %vm421, 1, 0
      %v614 = vsel %vm422, 1, 0
      %v615 = vsel %vm423, 1, 0
      %v616 = vsel %vm424, 1, 0
      %v617 = vsel %vm425, 1, 0
      %v618 = vsel %vm426, 1, 0
      %v619 = vsel %vm427, 1, 0
      %v620 = vsel %vm428, 1, 0
      %v621 = vsel %vm429, 1, 0
      %vm622 = vcmp.eq.s32.totalorder %v526, 1
      %vm623 = vcmp.eq.s32.totalorder %v527, 1
      %vm624 = vcmp.eq.s32.totalorder %v528, 1
      %vm625 = vcmp.eq.s32.totalorder %v529, 1
      %vm626 = vcmp.eq.s32.totalorder %v530, 1
      %vm627 = vcmp.eq.s32.totalorder %v531, 1
      %vm628 = vcmp.eq.s32.totalorder %v532, 1
      %vm629 = vcmp.eq.s32.totalorder %v533, 1
      %vm630 = vcmp.eq.s32.totalorder %v534, 1
      %vm631 = vcmp.eq.s32.totalorder %v535, 1
      %vm632 = vcmp.eq.s32.totalorder %v536, 1
      %vm633 = vcmp.eq.s32.totalorder %v537, 1
      %vm634 = vcmp.eq.s32.totalorder %v538, 1
      %vm635 = vcmp.eq.s32.totalorder %v539, 1
      %vm636 = vcmp.eq.s32.totalorder %v540, 1
      %vm637 = vcmp.eq.s32.totalorder %v541, 1
      %vm638 = vcmp.eq.s32.totalorder %v542, 1
      %vm639 = vcmp.eq.s32.totalorder %v543, 1
      %vm640 = vcmp.eq.s32.totalorder %v544, 1
      %vm641 = vcmp.eq.s32.totalorder %v545, 1
      %vm642 = vcmp.eq.s32.totalorder %v546, 1
      %vm643 = vcmp.eq.s32.totalorder %v547, 1
      %vm644 = vcmp.eq.s32.totalorder %v548, 1
      %vm645 = vcmp.eq.s32.totalorder %v549, 1
      %vm646 = vcmp.eq.s32.totalorder %v550, 1
      %vm647 = vcmp.eq.s32.totalorder %v551, 1
      %vm648 = vcmp.eq.s32.totalorder %v552, 1
      %vm649 = vcmp.eq.s32.totalorder %v553, 1
      %vm650 = vcmp.eq.s32.totalorder %v554, 1
      %vm651 = vcmp.eq.s32.totalorder %v555, 1
      %vm652 = vcmp.eq.s32.totalorder %v556, 1
      %vm653 = vcmp.eq.s32.totalorder %v557, 1
      %vm654 = vcmp.eq.s32.totalorder %v558, 1
      %vm655 = vcmp.eq.s32.totalorder %v559, 1
      %vm656 = vcmp.eq.s32.totalorder %v560, 1
      %vm657 = vcmp.eq.s32.totalorder %v561, 1
      %vm658 = vcmp.eq.s32.totalorder %v562, 1
      %vm659 = vcmp.eq.s32.totalorder %v563, 1
      %vm660 = vcmp.eq.s32.totalorder %v564, 1
      %vm661 = vcmp.eq.s32.totalorder %v565, 1
      %vm662 = vcmp.eq.s32.totalorder %v566, 1
      %vm663 = vcmp.eq.s32.totalorder %v567, 1
      %vm664 = vcmp.eq.s32.totalorder %v568, 1
      %vm665 = vcmp.eq.s32.totalorder %v569, 1
      %vm666 = vcmp.eq.s32.totalorder %v570, 1
      %vm667 = vcmp.eq.s32.totalorder %v571, 1
      %vm668 = vcmp.eq.s32.totalorder %v572, 1
      %vm669 = vcmp.eq.s32.totalorder %v573, 1
      %vm670 = vcmp.eq.s32.totalorder %v574, 1
      %vm671 = vcmp.eq.s32.totalorder %v575, 1
      %vm672 = vcmp.eq.s32.totalorder %v576, 1
      %vm673 = vcmp.eq.s32.totalorder %v577, 1
      %vm674 = vcmp.eq.s32.totalorder %v578, 1
      %vm675 = vcmp.eq.s32.totalorder %v579, 1
      %vm676 = vcmp.eq.s32.totalorder %v580, 1
      %vm677 = vcmp.eq.s32.totalorder %v581, 1
      %vm678 = vcmp.eq.s32.totalorder %v582, 1
      %vm679 = vcmp.eq.s32.totalorder %v583, 1
      %vm680 = vcmp.eq.s32.totalorder %v584, 1
      %vm681 = vcmp.eq.s32.totalorder %v585, 1
      %vm682 = vcmp.eq.s32.totalorder %v586, 1
      %vm683 = vcmp.eq.s32.totalorder %v587, 1
      %vm684 = vcmp.eq.s32.totalorder %v588, 1
      %vm685 = vcmp.eq.s32.totalorder %v589, 1
      %vm686 = vcmp.eq.s32.totalorder %v590, 1
      %vm687 = vcmp.eq.s32.totalorder %v591, 1
      %vm688 = vcmp.eq.s32.totalorder %v592, 1
      %vm689 = vcmp.eq.s32.totalorder %v593, 1
      %vm690 = vcmp.eq.s32.totalorder %v594, 1
      %vm691 = vcmp.eq.s32.totalorder %v595, 1
      %vm692 = vcmp.eq.s32.totalorder %v596, 1
      %vm693 = vcmp.eq.s32.totalorder %v597, 1
      %vm694 = vcmp.eq.s32.totalorder %v598, 1
      %vm695 = vcmp.eq.s32.totalorder %v599, 1
      %vm696 = vcmp.eq.s32.totalorder %v600, 1
      %vm697 = vcmp.eq.s32.totalorder %v601, 1
      %vm698 = vcmp.eq.s32.totalorder %v602, 1
      %vm699 = vcmp.eq.s32.totalorder %v603, 1
      %vm700 = vcmp.eq.s32.totalorder %v604, 1
      %vm701 = vcmp.eq.s32.totalorder %v605, 1
      %vm702 = vcmp.eq.s32.totalorder %v606, 1
      %vm703 = vcmp.eq.s32.totalorder %v607, 1
      %vm704 = vcmp.eq.s32.totalorder %v608, 1
      %vm705 = vcmp.eq.s32.totalorder %v609, 1
      %vm706 = vcmp.eq.s32.totalorder %v610, 1
      %vm707 = vcmp.eq.s32.totalorder %v611, 1
      %vm708 = vcmp.eq.s32.totalorder %v612, 1
      %vm709 = vcmp.eq.s32.totalorder %v613, 1
      %vm710 = vcmp.eq.s32.totalorder %v614, 1
      %vm711 = vcmp.eq.s32.totalorder %v615, 1
      %vm712 = vcmp.eq.s32.totalorder %v616, 1
      %vm713 = vcmp.eq.s32.totalorder %v617, 1
      %vm714 = vcmp.eq.s32.totalorder %v618, 1
      %vm715 = vcmp.eq.s32.totalorder %v619, 1
      %vm716 = vcmp.eq.s32.totalorder %v620, 1
      %vm717 = vcmp.eq.s32.totalorder %v621, 1
      %v718 = vsel %vm622, %v430, 0.0
      %v719 = vsel %vm623, %v431, 0.0
      %v720 = vsel %vm624, %v432, 0.0
      %v721 = vsel %vm625, %v433, 0.0
      %v722 = vsel %vm626, %v434, 0.0
      %v723 = vsel %vm627, %v435, 0.0
      %v724 = vsel %vm628, %v436, 0.0
      %v725 = vsel %vm629, %v437, 0.0
      %v726 = vsel %vm630, %v438, 0.0
      %v727 = vsel %vm631, %v439, 0.0
      %v728 = vsel %vm632, %v440, 0.0
      %v729 = vsel %vm633, %v441, 0.0
      %v730 = vsel %vm634, %v442, 0.0
      %v731 = vsel %vm635, %v443, 0.0
      %v732 = vsel %vm636, %v444, 0.0
      %v733 = vsel %vm637, %v445, 0.0
      %v734 = vsel %vm638, %v446, 0.0
      %v735 = vsel %vm639, %v447, 0.0
      %v736 = vsel %vm640, %v448, 0.0
      %v737 = vsel %vm641, %v449, 0.0
      %v738 = vsel %vm642, %v450, 0.0
      %v739 = vsel %vm643, %v451, 0.0
      %v740 = vsel %vm644, %v452, 0.0
      %v741 = vsel %vm645, %v453, 0.0
      %v742 = vsel %vm646, %v454, 0.0
      %v743 = vsel %vm647, %v455, 0.0
      %v744 = vsel %vm648, %v456, 0.0
      %v745 = vsel %vm649, %v457, 0.0
      %v746 = vsel %vm650, %v458, 0.0
      %v747 = vsel %vm651, %v459, 0.0
      %v748 = vsel %vm652, %v460, 0.0
      %v749 = vsel %vm653, %v461, 0.0
      %v750 = vsel %vm654, %v462, 0.0
      %v751 = vsel %vm655, %v463, 0.0
      %v752 = vsel %vm656, %v464, 0.0
      %v753 = vsel %vm657, %v465, 0.0
      %v754 = vsel %vm658, %v466, 0.0
      %v755 = vsel %vm659, %v467, 0.0
      %v756 = vsel %vm660, %v468, 0.0
      %v757 = vsel %vm661, %v469, 0.0
      %v758 = vsel %vm662, %v470, 0.0
      %v759 = vsel %vm663, %v471, 0.0
      %v760 = vsel %vm664, %v472, 0.0
      %v761 = vsel %vm665, %v473, 0.0
      %v762 = vsel %vm666, %v474, 0.0
      %v763 = vsel %vm667, %v475, 0.0
      %v764 = vsel %vm668, %v476, 0.0
      %v765 = vsel %vm669, %v477, 0.0
      %v766 = vsel %vm670, %v478, 0.0
      %v767 = vsel %vm671, %v479, 0.0
      %v768 = vsel %vm672, %v480, 0.0
      %v769 = vsel %vm673, %v481, 0.0
      %v770 = vsel %vm674, %v482, 0.0
      %v771 = vsel %vm675, %v483, 0.0
      %v772 = vsel %vm676, %v484, 0.0
      %v773 = vsel %vm677, %v485, 0.0
      %v774 = vsel %vm678, %v486, 0.0
      %v775 = vsel %vm679, %v487, 0.0
      %v776 = vsel %vm680, %v488, 0.0
      %v777 = vsel %vm681, %v489, 0.0
      %v778 = vsel %vm682, %v490, 0.0
      %v779 = vsel %vm683, %v491, 0.0
      %v780 = vsel %vm684, %v492, 0.0
      %v781 = vsel %vm685, %v493, 0.0
      %v782 = vsel %vm686, %v494, 0.0
      %v783 = vsel %vm687, %v495, 0.0
      %v784 = vsel %vm688, %v496, 0.0
      %v785 = vsel %vm689, %v497, 0.0
      %v786 = vsel %vm690, %v498, 0.0
      %v787 = vsel %vm691, %v499, 0.0
      %v788 = vsel %vm692, %v500, 0.0
      %v789 = vsel %vm693, %v501, 0.0
      %v790 = vsel %vm694, %v502, 0.0
      %v791 = vsel %vm695, %v503, 0.0
      %v792 = vsel %vm696, %v504, 0.0
      %v793 = vsel %vm697, %v505, 0.0
      %v794 = vsel %vm698, %v506, 0.0
      %v795 = vsel %vm699, %v507, 0.0
      %v796 = vsel %vm700, %v508, 0.0
      %v797 = vsel %vm701, %v509, 0.0
      %v798 = vsel %vm702, %v510, 0.0
      %v799 = vsel %vm703, %v511, 0.0
      %v800 = vsel %vm704, %v512, 0.0
      %v801 = vsel %vm705, %v513, 0.0
      %v802 = vsel %vm706, %v514, 0.0
      %v803 = vsel %vm707, %v515, 0.0
      %v804 = vsel %vm708, %v516, 0.0
      %v805 = vsel %vm709, %v517, 0.0
      %v806 = vsel %vm710, %v518, 0.0
      %v807 = vsel %vm711, %v519, 0.0
      %v808 = vsel %vm712, %v520, 0.0
      %v809 = vsel %vm713, %v521, 0.0
      %v810 = vsel %vm714, %v522, 0.0
      %v811 = vsel %vm715, %v523, 0.0
      %v812 = vsel %vm716, %v524, 0.0
      %v813 = vsel %vm717, %v525, 0.0
      %v814 = vpack.c.bf16 %v718, %v718
      %v815 = vpack.c.bf16 %v719, %v719
      %v816 = vpack.c.bf16 %v720, %v720
      %v817 = vpack.c.bf16 %v721, %v721
      %v818 = vpack.c.bf16 %v722, %v722
      %v819 = vpack.c.bf16 %v723, %v723
      %v820 = vpack.c.bf16 %v724, %v724
      %v821 = vpack.c.bf16 %v725, %v725
      %v822 = vpack.c.bf16 %v726, %v726
      %v823 = vpack.c.bf16 %v727, %v727
      %v824 = vpack.c.bf16 %v728, %v728
      %v825 = vpack.c.bf16 %v729, %v729
      %v826 = vpack.c.bf16 %v730, %v730
      %v827 = vpack.c.bf16 %v731, %v731
      %v828 = vpack.c.bf16 %v732, %v732
      %v829 = vpack.c.bf16 %v733, %v733
      %v830 = vpack.c.bf16 %v734, %v734
      %v831 = vpack.c.bf16 %v735, %v735
      %v832 = vpack.c.bf16 %v736, %v736
      %v833 = vpack.c.bf16 %v737, %v737
      %v834 = vpack.c.bf16 %v738, %v738
      %v835 = vpack.c.bf16 %v739, %v739
      %v836 = vpack.c.bf16 %v740, %v740
      %v837 = vpack.c.bf16 %v741, %v741
      %v838 = vpack.c.bf16 %v742, %v742
      %v839 = vpack.c.bf16 %v743, %v743
      %v840 = vpack.c.bf16 %v744, %v744
      %v841 = vpack.c.bf16 %v745, %v745
      %v842 = vpack.c.bf16 %v746, %v746
      %v843 = vpack.c.bf16 %v747, %v747
      %v844 = vpack.c.bf16 %v748, %v748
      %v845 = vpack.c.bf16 %v749, %v749
      %v846 = vpack.c.bf16 %v750, %v750
      %v847 = vpack.c.bf16 %v751, %v751
      %v848 = vpack.c.bf16 %v752, %v752
      %v849 = vpack.c.bf16 %v753, %v753
      %v850 = vpack.c.bf16 %v754, %v754
      %v851 = vpack.c.bf16 %v755, %v755
      %v852 = vpack.c.bf16 %v756, %v756
      %v853 = vpack.c.bf16 %v757, %v757
      %v854 = vpack.c.bf16 %v758, %v758
      %v855 = vpack.c.bf16 %v759, %v759
      %v856 = vpack.c.bf16 %v760, %v760
      %v857 = vpack.c.bf16 %v761, %v761
      %v858 = vpack.c.bf16 %v762, %v762
      %v859 = vpack.c.bf16 %v763, %v763
      %v860 = vpack.c.bf16 %v764, %v764
      %v861 = vpack.c.bf16 %v765, %v765
      %v862 = vpack.c.bf16 %v766, %v766
      %v863 = vpack.c.bf16 %v767, %v767
      %v864 = vpack.c.bf16 %v768, %v768
      %v865 = vpack.c.bf16 %v769, %v769
      %v866 = vpack.c.bf16 %v770, %v770
      %v867 = vpack.c.bf16 %v771, %v771
      %v868 = vpack.c.bf16 %v772, %v772
      %v869 = vpack.c.bf16 %v773, %v773
      %v870 = vpack.c.bf16 %v774, %v774
      %v871 = vpack.c.bf16 %v775, %v775
      %v872 = vpack.c.bf16 %v776, %v776
      %v873 = vpack.c.bf16 %v777, %v777
      %v874 = vpack.c.bf16 %v778, %v778
      %v875 = vpack.c.bf16 %v779, %v779
      %v876 = vpack.c.bf16 %v780, %v780
      %v877 = vpack.c.bf16 %v781, %v781
      %v878 = vpack.c.bf16 %v782, %v782
      %v879 = vpack.c.bf16 %v783, %v783
      %v880 = vpack.c.bf16 %v784, %v784
      %v881 = vpack.c.bf16 %v785, %v785
      %v882 = vpack.c.bf16 %v786, %v786
      %v883 = vpack.c.bf16 %v787, %v787
      %v884 = vpack.c.bf16 %v788, %v788
      %v885 = vpack.c.bf16 %v789, %v789
      %v886 = vpack.c.bf16 %v790, %v790
      %v887 = vpack.c.bf16 %v791, %v791
      %v888 = vpack.c.bf16 %v792, %v792
      %v889 = vpack.c.bf16 %v793, %v793
      %v890 = vpack.c.bf16 %v794, %v794
      %v891 = vpack.c.bf16 %v795, %v795
      %v892 = vpack.c.bf16 %v796, %v796
      %v893 = vpack.c.bf16 %v797, %v797
      %v894 = vpack.c.bf16 %v798, %v798
      %v895 = vpack.c.bf16 %v799, %v799
      %v896 = vpack.c.bf16 %v800, %v800
      %v897 = vpack.c.bf16 %v801, %v801
      %v898 = vpack.c.bf16 %v802, %v802
      %v899 = vpack.c.bf16 %v803, %v803
      %v900 = vpack.c.bf16 %v804, %v804
      %v901 = vpack.c.bf16 %v805, %v805
      %v902 = vpack.c.bf16 %v806, %v806
      %v903 = vpack.c.bf16 %v807, %v807
      %v904 = vpack.c.bf16 %v808, %v808
      %v905 = vpack.c.bf16 %v809, %v809
      %v906 = vpack.c.bf16 %v810, %v810
      %v907 = vpack.c.bf16 %v811, %v811
      %v908 = vpack.c.bf16 %v812, %v812
      %v909 = vpack.c.bf16 %v813, %v813
      %v910 = vld [vmem:[#allocation2] sm:$0xff]
      %v911 = vld [vmem:[%s225] sm:$0xf]
      %v912 = vld [vmem:[%s225 + $0x4] sm:$0xf]
      %v913 = vld [vmem:[%s225 + $0x8] sm:$0xf]
      %v914 = vld [vmem:[%s225 + $0xc] sm:$0xf]
      %v915 = vld [vmem:[%s225 + $0x10] sm:$0xf]
      %v916 = vld [vmem:[%s225 + $0x14] sm:$0xf]
      %v917 = vld [vmem:[%s225 + $0x18] sm:$0xf]
      %v918 = vld [vmem:[%s225 + $0x1c] sm:$0xf]
      %v919 = vld [vmem:[%s225 + $0x20] sm:$0xf]
      %v920 = vld [vmem:[%s225 + $0x24] sm:$0xf]
      %v921 = vld [vmem:[%s225 + $0x28] sm:$0xf]
      %v922 = vld [vmem:[%s225 + $0x2c] sm:$0xf]
      %v923 = vld [vmem:[%s225 + $0x30] sm:$0xf]
      %v924 = vld [vmem:[%s225 + $0x34] sm:$0xf]
      %v925 = vld [vmem:[%s225 + $0x38] sm:$0xf]
      %v926 = vld [vmem:[%s225 + $0x3c] sm:$0xf]
      %v927 = vld [vmem:[%s225 + $0x40] sm:$0xf]
      %v928 = vld [vmem:[%s225 + $0x44] sm:$0xf]
      %v929 = vld [vmem:[%s225 + $0x48] sm:$0xf]
      %v930 = vld [vmem:[%s225 + $0x4c] sm:$0xf]
      %v931 = vld [vmem:[%s225 + $0x50] sm:$0xf]
      %v932 = vld [vmem:[%s225 + $0x54] sm:$0xf]
      %v933 = vld [vmem:[%s225 + $0x58] sm:$0xf]
      %v934 = vld [vmem:[%s225 + $0x5c] sm:$0xf]
      %v935 = vld [vmem:[%s225 + $0x60] sm:$0xf]
      %v936 = vld [vmem:[%s225 + $0x64] sm:$0xf]
      %v937 = vld [vmem:[%s225 + $0x68] sm:$0xf]
      %v938 = vld [vmem:[%s225 + $0x6c] sm:$0xf]
      %v939 = vld [vmem:[%s225 + $0x70] sm:$0xf]
      %v940 = vld [vmem:[%s225 + $0x74] sm:$0xf]
      %v941 = vld [vmem:[%s225 + $0x78] sm:$0xf]
      %v942 = vld [vmem:[%s225 + $0x7c] sm:$0xf]
      %v943 = vld [vmem:[%s225 + $0x80] sm:$0xf]
      %v944 = vld [vmem:[%s225 + $0x84] sm:$0xf]
      %v945 = vld [vmem:[%s225 + $0x88] sm:$0xf]
      %v946 = vld [vmem:[%s225 + $0x8c] sm:$0xf]
      %v947 = vld [vmem:[%s225 + $0x90] sm:$0xf]
      %v948 = vld [vmem:[%s225 + $0x94] sm:$0xf]
      %v949 = vld [vmem:[%s225 + $0x98] sm:$0xf]
      %v950 = vld [vmem:[%s225 + $0x9c] sm:$0xf]
      %v951 = vld [vmem:[%s225 + $0xa0] sm:$0xf]
      %v952 = vld [vmem:[%s225 + $0xa4] sm:$0xf]
      %v953 = vld [vmem:[%s225 + $0xa8] sm:$0xf]
      %v954 = vld [vmem:[%s225 + $0xac] sm:$0xf]
      %v955 = vld [vmem:[%s225 + $0xb0] sm:$0xf]
      %v956 = vld [vmem:[%s225 + $0xb4] sm:$0xf]
      %v957 = vld [vmem:[%s225 + $0xb8] sm:$0xf]
      %v958 = vld [vmem:[%s225 + $0xbc] sm:$0xf]
      %v959 = vld [vmem:[%s225 + $0xc0] sm:$0xf]
      %v960 = vld [vmem:[%s225 + $0xc4] sm:$0xf]
      %v961 = vld [vmem:[%s225 + $0xc8] sm:$0xf]
      %v962 = vld [vmem:[%s225 + $0xcc] sm:$0xf]
      %v963 = vld [vmem:[%s225 + $0xd0] sm:$0xf]
      %v964 = vld [vmem:[%s225 + $0xd4] sm:$0xf]
      %v965 = vld [vmem:[%s225 + $0xd8] sm:$0xf]
      %v966 = vld [vmem:[%s225 + $0xdc] sm:$0xf]
      %v967 = vld [vmem:[%s225 + $0xe0] sm:$0xf]
      %v968 = vld [vmem:[%s225 + $0xe4] sm:$0xf]
      %v969 = vld [vmem:[%s225 + $0xe8] sm:$0xf]
      %v970 = vld [vmem:[%s225 + $0xec] sm:$0xf]
      %v971 = vld [vmem:[%s225 + $0xf0] sm:$0xf]
      %v972 = vld [vmem:[%s225 + $0xf4] sm:$0xf]
      %v973 = vld [vmem:[%s225 + $0xf8] sm:$0xf]
      %v974 = vld [vmem:[%s225 + $0xfc] sm:$0xf]
      %v975 = vld [vmem:[%s225 + $0x100] sm:$0xf]
      %v976 = vld [vmem:[%s225 + $0x104] sm:$0xf]
      %v977 = vld [vmem:[%s225 + $0x108] sm:$0xf]
      %v978 = vld [vmem:[%s225 + $0x10c] sm:$0xf]
      %v979 = vld [vmem:[%s225 + $0x110] sm:$0xf]
      %v980 = vld [vmem:[%s225 + $0x114] sm:$0xf]
      %v981 = vld [vmem:[%s225 + $0x118] sm:$0xf]
      %v982 = vld [vmem:[%s225 + $0x11c] sm:$0xf]
      %v983 = vld [vmem:[%s225 + $0x120] sm:$0xf]
      %v984 = vld [vmem:[%s225 + $0x124] sm:$0xf]
      %v985 = vld [vmem:[%s225 + $0x128] sm:$0xf]
      %v986 = vld [vmem:[%s225 + $0x12c] sm:$0xf]
      %v987 = vld [vmem:[%s225 + $0x130] sm:$0xf]
      %v988 = vld [vmem:[%s225 + $0x134] sm:$0xf]
      %v989 = vld [vmem:[%s225 + $0x138] sm:$0xf]
      %v990 = vld [vmem:[%s225 + $0x13c] sm:$0xf]
      %v991 = vld [vmem:[%s225 + $0x140] sm:$0xf]
      %v992 = vld [vmem:[%s225 + $0x144] sm:$0xf]
      %v993 = vld [vmem:[%s225 + $0x148] sm:$0xf]
      %v994 = vld [vmem:[%s225 + $0x14c] sm:$0xf]
      %v995 = vld [vmem:[%s225 + $0x150] sm:$0xf]
      %v996 = vld [vmem:[%s225 + $0x154] sm:$0xf]
      %v997 = vld [vmem:[%s225 + $0x158] sm:$0xf]
      %v998 = vld [vmem:[%s225 + $0x15c] sm:$0xf]
      %v999 = vld [vmem:[%s225 + $0x160] sm:$0xf]
      %v1000 = vld [vmem:[%s225 + $0x164] sm:$0xf]
      %v1001 = vld [vmem:[%s225 + $0x168] sm:$0xf]
      %v1002 = vld [vmem:[%s225 + $0x16c] sm:$0xf]
      %v1003 = vld [vmem:[%s225 + $0x170] sm:$0xf]
      %v1004 = vld [vmem:[%s225 + $0x174] sm:$0xf]
      %v1005 = vld [vmem:[%s225 + $0x178] sm:$0xf]
      %v1006 = vld [vmem:[%s225 + $0x17c] sm:$0xf]
      %v1007 = vld [vmem:[%s225 + $0x180] sm:$0xf]
      %v1008 = vld [vmem:[%s225 + $0x184] sm:$0xf]
      %v1009 = vld [vmem:[%s225 + $0x188] sm:$0xf]
      %v1010 = vld [vmem:[%s225 + $0x18c] sm:$0xf]
      %v1011 = vld [vmem:[%s225 + $0x190] sm:$0xf]
      %v1012 = vld [vmem:[%s225 + $0x194] sm:$0xf]
      %v1013 = vld [vmem:[%s225 + $0x198] sm:$0xf]
      %v1014 = vld [vmem:[%s225 + $0x19c] sm:$0xf]
      %v1015 = vld [vmem:[%s225 + $0x1a0] sm:$0xf]
      %v1016 = vld [vmem:[%s225 + $0x1a4] sm:$0xf]
      %v1017 = vld [vmem:[%s225 + $0x1a8] sm:$0xf]
      %v1018 = vld [vmem:[%s225 + $0x1ac] sm:$0xf]
      %v1019 = vld [vmem:[%s225 + $0x1b0] sm:$0xf]
      %v1020 = vld [vmem:[%s225 + $0x1b4] sm:$0xf]
      %v1021 = vld [vmem:[%s225 + $0x1b8] sm:$0xf]
      %v1022 = vld [vmem:[%s225 + $0x1bc] sm:$0xf]
      %v1023 = vld [vmem:[%s225 + $0x1c0] sm:$0xf]
      %v1024 = vld [vmem:[%s225 + $0x1c4] sm:$0xf]
      %v1025 = vld [vmem:[%s225 + $0x1c8] sm:$0xf]
      %v1026 = vld [vmem:[%s225 + $0x1cc] sm:$0xf]
      %v1027 = vld [vmem:[%s225 + $0x1d0] sm:$0xf]
      %v1028 = vld [vmem:[%s225 + $0x1d4] sm:$0xf]
      %v1029 = vld [vmem:[%s225 + $0x1d8] sm:$0xf]
      %v1030 = vld [vmem:[%s225 + $0x1dc] sm:$0xf]
      %v1031 = vld [vmem:[%s225 + $0x1e0] sm:$0xf]
      %v1032 = vld [vmem:[%s225 + $0x1e4] sm:$0xf]
      %v1033 = vld [vmem:[%s225 + $0x1e8] sm:$0xf]
      %v1034 = vld [vmem:[%s225 + $0x1ec] sm:$0xf]
      %v1035 = vld [vmem:[%s225 + $0x1f0] sm:$0xf]
      %v1036 = vld [vmem:[%s225 + $0x1f4] sm:$0xf]
      %v1037 = vld [vmem:[%s225 + $0x1f8] sm:$0xf]
      %v1038 = vld [vmem:[%s225 + $0x1fc] sm:$0xf]
      %v1039 = vld [vmem:[%s225 + $0x200] sm:$0xf]
      %v1040 = vld [vmem:[%s225 + $0x204] sm:$0xf]
      %v1041 = vld [vmem:[%s225 + $0x208] sm:$0xf]
      %v1042 = vld [vmem:[%s225 + $0x20c] sm:$0xf]
      %v1043 = vld [vmem:[%s225 + $0x210] sm:$0xf]
      %v1044 = vld [vmem:[%s225 + $0x214] sm:$0xf]
      %v1045 = vld [vmem:[%s225 + $0x218] sm:$0xf]
      %v1046 = vld [vmem:[%s225 + $0x21c] sm:$0xf]
      %v1047 = vld [vmem:[%s225 + $0x220] sm:$0xf]
      %v1048 = vld [vmem:[%s225 + $0x224] sm:$0xf]
      %v1049 = vld [vmem:[%s225 + $0x228] sm:$0xf]
      %v1050 = vld [vmem:[%s225 + $0x22c] sm:$0xf]
      %v1051 = vld [vmem:[%s225 + $0x230] sm:$0xf]
      %v1052 = vld [vmem:[%s225 + $0x234] sm:$0xf]
      %v1053 = vld [vmem:[%s225 + $0x238] sm:$0xf]
      %v1054 = vld [vmem:[%s225 + $0x23c] sm:$0xf]
      %v1055 = vld [vmem:[%s225 + $0x240] sm:$0xf]
      %v1056 = vld [vmem:[%s225 + $0x244] sm:$0xf]
      %v1057 = vld [vmem:[%s225 + $0x248] sm:$0xf]
      %v1058 = vld [vmem:[%s225 + $0x24c] sm:$0xf]
      %v1059 = vld [vmem:[%s225 + $0x250] sm:$0xf]
      %v1060 = vld [vmem:[%s225 + $0x254] sm:$0xf]
      %v1061 = vld [vmem:[%s225 + $0x258] sm:$0xf]
      %v1062 = vld [vmem:[%s225 + $0x25c] sm:$0xf]
      %v1063 = vld [vmem:[%s225 + $0x260] sm:$0xf]
      %v1064 = vld [vmem:[%s225 + $0x264] sm:$0xf]
      %v1065 = vld [vmem:[%s225 + $0x268] sm:$0xf]
      %v1066 = vld [vmem:[%s225 + $0x26c] sm:$0xf]
      %v1067 = vld [vmem:[%s225 + $0x270] sm:$0xf]
      %v1068 = vld [vmem:[%s225 + $0x274] sm:$0xf]
      %v1069 = vld [vmem:[%s225 + $0x278] sm:$0xf]
      %v1070 = vld [vmem:[%s225 + $0x27c] sm:$0xf]
      %v1071 = vld [vmem:[%s225 + $0x280] sm:$0xf]
      %v1072 = vld [vmem:[%s225 + $0x284] sm:$0xf]
      %v1073 = vld [vmem:[%s225 + $0x288] sm:$0xf]
      %v1074 = vld [vmem:[%s225 + $0x28c] sm:$0xf]
      %v1075 = vld [vmem:[%s225 + $0x290] sm:$0xf]
      %v1076 = vld [vmem:[%s225 + $0x294] sm:$0xf]
      %v1077 = vld [vmem:[%s225 + $0x298] sm:$0xf]
      %v1078 = vld [vmem:[%s225 + $0x29c] sm:$0xf]
      %v1079 = vld [vmem:[%s225 + $0x2a0] sm:$0xf]
      %v1080 = vld [vmem:[%s225 + $0x2a4] sm:$0xf]
      %v1081 = vld [vmem:[%s225 + $0x2a8] sm:$0xf]
      %v1082 = vld [vmem:[%s225 + $0x2ac] sm:$0xf]
      %v1083 = vld [vmem:[%s225 + $0x2b0] sm:$0xf]
      %v1084 = vld [vmem:[%s225 + $0x2b4] sm:$0xf]
      %v1085 = vld [vmem:[%s225 + $0x2b8] sm:$0xf]
      %v1086 = vld [vmem:[%s225 + $0x2bc] sm:$0xf]
      %v1087 = vld [vmem:[%s225 + $0x2c0] sm:$0xf]
      %v1088 = vld [vmem:[%s225 + $0x2c4] sm:$0xf]
      %v1089 = vld [vmem:[%s225 + $0x2c8] sm:$0xf]
      %v1090 = vld [vmem:[%s225 + $0x2cc] sm:$0xf]
      %v1091 = vld [vmem:[%s225 + $0x2d0] sm:$0xf]
      %v1092 = vld [vmem:[%s225 + $0x2d4] sm:$0xf]
      %v1093 = vld [vmem:[%s225 + $0x2d8] sm:$0xf]
      %v1094 = vld [vmem:[%s225 + $0x2dc] sm:$0xf]
      %v1095 = vld [vmem:[%s225 + $0x2e0] sm:$0xf]
      %v1096 = vld [vmem:[%s225 + $0x2e4] sm:$0xf]
      %v1097 = vld [vmem:[%s225 + $0x2e8] sm:$0xf]
      %v1098 = vld [vmem:[%s225 + $0x2ec] sm:$0xf]
      %v1099 = vld [vmem:[%s225 + $0x2f0] sm:$0xf]
      %v1100 = vld [vmem:[%s225 + $0x2f4] sm:$0xf]
      %v1101 = vld [vmem:[%s225 + $0x2f8] sm:$0xf]
      %v1102 = vld [vmem:[%s225 + $0x2fc] sm:$0xf]
      %v1103 = vld [vmem:[%s225 + $0x300] sm:$0xf]
      %v1104 = vld [vmem:[%s225 + $0x304] sm:$0xf]
      %v1105 = vld [vmem:[%s225 + $0x308] sm:$0xf]
      %v1106 = vld [vmem:[%s225 + $0x30c] sm:$0xf]
      %v1107 = vld [vmem:[%s225 + $0x310] sm:$0xf]
      %v1108 = vld [vmem:[%s225 + $0x314] sm:$0xf]
      %v1109 = vld [vmem:[%s225 + $0x318] sm:$0xf]
      %v1110 = vld [vmem:[%s225 + $0x31c] sm:$0xf]
      %v1111 = vld [vmem:[%s225 + $0x320] sm:$0xf]
      %v1112 = vld [vmem:[%s225 + $0x324] sm:$0xf]
      %v1113 = vld [vmem:[%s225 + $0x328] sm:$0xf]
      %v1114 = vld [vmem:[%s225 + $0x32c] sm:$0xf]
      %v1115 = vld [vmem:[%s225 + $0x330] sm:$0xf]
      %v1116 = vld [vmem:[%s225 + $0x334] sm:$0xf]
      %v1117 = vld [vmem:[%s225 + $0x338] sm:$0xf]
      %v1118 = vld [vmem:[%s225 + $0x33c] sm:$0xf]
      %v1119 = vld [vmem:[%s225 + $0x340] sm:$0xf]
      %v1120 = vld [vmem:[%s225 + $0x344] sm:$0xf]
      %v1121 = vld [vmem:[%s225 + $0x348] sm:$0xf]
      %v1122 = vld [vmem:[%s225 + $0x34c] sm:$0xf]
      %v1123 = vld [vmem:[%s225 + $0x350] sm:$0xf]
      %v1124 = vld [vmem:[%s225 + $0x354] sm:$0xf]
      %v1125 = vld [vmem:[%s225 + $0x358] sm:$0xf]
      %v1126 = vld [vmem:[%s225 + $0x35c] sm:$0xf]
      %v1127 = vld [vmem:[%s225 + $0x360] sm:$0xf]
      %v1128 = vld [vmem:[%s225 + $0x364] sm:$0xf]
      %v1129 = vld [vmem:[%s225 + $0x368] sm:$0xf]
      %v1130 = vld [vmem:[%s225 + $0x36c] sm:$0xf]
      %v1131 = vld [vmem:[%s225 + $0x370] sm:$0xf]
      %v1132 = vld [vmem:[%s225 + $0x374] sm:$0xf]
      %v1133 = vld [vmem:[%s225 + $0x378] sm:$0xf]
      %v1134 = vld [vmem:[%s225 + $0x37c] sm:$0xf]
      %v1135 = vld [vmem:[%s225 + $0x380] sm:$0xf]
      %v1136 = vld [vmem:[%s225 + $0x384] sm:$0xf]
      %v1137 = vld [vmem:[%s225 + $0x388] sm:$0xf]
      %v1138 = vld [vmem:[%s225 + $0x38c] sm:$0xf]
      %v1139 = vld [vmem:[%s225 + $0x390] sm:$0xf]
      %v1140 = vld [vmem:[%s225 + $0x394] sm:$0xf]
      %v1141 = vld [vmem:[%s225 + $0x398] sm:$0xf]
      %v1142 = vld [vmem:[%s225 + $0x39c] sm:$0xf]
      %v1143 = vld [vmem:[%s225 + $0x3a0] sm:$0xf]
      %v1144 = vld [vmem:[%s225 + $0x3a4] sm:$0xf]
      %v1145 = vld [vmem:[%s225 + $0x3a8] sm:$0xf]
      %v1146 = vld [vmem:[%s225 + $0x3ac] sm:$0xf]
      %v1147 = vld [vmem:[%s225 + $0x3b0] sm:$0xf]
      %v1148 = vld [vmem:[%s225 + $0x3b4] sm:$0xf]
      %v1149 = vld [vmem:[%s225 + $0x3b8] sm:$0xf]
      %v1150 = vld [vmem:[%s225 + $0x3bc] sm:$0xf]
      %v1151 = vld [vmem:[%s225 + $0x3c0] sm:$0xf]
      %v1152 = vld [vmem:[%s225 + $0x3c4] sm:$0xf]
      %v1153 = vld [vmem:[%s225 + $0x3c8] sm:$0xf]
      %v1154 = vld [vmem:[%s225 + $0x3cc] sm:$0xf]
      %v1155 = vld [vmem:[%s225 + $0x3d0] sm:$0xf]
      %v1156 = vld [vmem:[%s225 + $0x3d4] sm:$0xf]
      %v1157 = vld [vmem:[%s225 + $0x3d8] sm:$0xf]
      %v1158 = vld [vmem:[%s225 + $0x3dc] sm:$0xf]
      %v1159 = vld [vmem:[%s225 + $0x3e0] sm:$0xf]
      %v1160 = vld [vmem:[%s225 + $0x3e4] sm:$0xf]
      %v1161 = vld [vmem:[%s225 + $0x3e8] sm:$0xf]
      %v1162 = vld [vmem:[%s225 + $0x3ec] sm:$0xf]
      %v1163 = vld [vmem:[%s225 + $0x3f0] sm:$0xf]
      %v1164 = vld [vmem:[%s225 + $0x3f4] sm:$0xf]
      %v1165 = vld [vmem:[%s225 + $0x3f8] sm:$0xf]
      %v1166 = vld [vmem:[%s225 + $0x3fc] sm:$0xf]
      %v1167 = vld [vmem:[%s225 + $0x400] sm:$0xf]
      %v1168 = vld [vmem:[%s225 + $0x404] sm:$0xf]
      %v1169 = vld [vmem:[%s225 + $0x408] sm:$0xf]
      %v1170 = vld [vmem:[%s225 + $0x40c] sm:$0xf]
      %v1171 = vld [vmem:[%s225 + $0x410] sm:$0xf]
      %v1172 = vld [vmem:[%s225 + $0x414] sm:$0xf]
      %v1173 = vld [vmem:[%s225 + $0x418] sm:$0xf]
      %v1174 = vld [vmem:[%s225 + $0x41c] sm:$0xf]
      %v1175 = vld [vmem:[%s225 + $0x420] sm:$0xf]
      %v1176 = vld [vmem:[%s225 + $0x424] sm:$0xf]
      %v1177 = vld [vmem:[%s225 + $0x428] sm:$0xf]
      %v1178 = vld [vmem:[%s225 + $0x42c] sm:$0xf]
      %v1179 = vld [vmem:[%s225 + $0x430] sm:$0xf]
      %v1180 = vld [vmem:[%s225 + $0x434] sm:$0xf]
      %v1181 = vld [vmem:[%s225 + $0x438] sm:$0xf]
      %v1182 = vld [vmem:[%s225 + $0x43c] sm:$0xf]
      %v1183 = vld [vmem:[%s225 + $0x440] sm:$0xf]
      %v1184 = vld [vmem:[%s225 + $0x444] sm:$0xf]
      %v1185 = vld [vmem:[%s225 + $0x448] sm:$0xf]
      %v1186 = vld [vmem:[%s225 + $0x44c] sm:$0xf]
      %v1187 = vld [vmem:[%s225 + $0x450] sm:$0xf]
      %v1188 = vld [vmem:[%s225 + $0x454] sm:$0xf]
      %v1189 = vld [vmem:[%s225 + $0x458] sm:$0xf]
      %v1190 = vld [vmem:[%s225 + $0x45c] sm:$0xf]
      %v1191 = vld [vmem:[%s225 + $0x460] sm:$0xf]
      %v1192 = vld [vmem:[%s225 + $0x464] sm:$0xf]
      %v1193 = vld [vmem:[%s225 + $0x468] sm:$0xf]
      %v1194 = vld [vmem:[%s225 + $0x46c] sm:$0xf]
      %v1195 = vld [vmem:[%s225 + $0x470] sm:$0xf]
      %v1196 = vld [vmem:[%s225 + $0x474] sm:$0xf]
      %v1197 = vld [vmem:[%s225 + $0x478] sm:$0xf]
      %v1198 = vld [vmem:[%s225 + $0x47c] sm:$0xf]
      %v1199 = vld [vmem:[%s225 + $0x480] sm:$0xf]
      %v1200 = vld [vmem:[%s225 + $0x484] sm:$0xf]
      %v1201 = vld [vmem:[%s225 + $0x488] sm:$0xf]
      %v1202 = vld [vmem:[%s225 + $0x48c] sm:$0xf]
      %v1203 = vld [vmem:[%s225 + $0x490] sm:$0xf]
      %v1204 = vld [vmem:[%s225 + $0x494] sm:$0xf]
      %v1205 = vld [vmem:[%s225 + $0x498] sm:$0xf]
      %v1206 = vld [vmem:[%s225 + $0x49c] sm:$0xf]
      %v1207 = vld [vmem:[%s225 + $0x4a0] sm:$0xf]
      %v1208 = vld [vmem:[%s225 + $0x4a4] sm:$0xf]
      %v1209 = vld [vmem:[%s225 + $0x4a8] sm:$0xf]
      %v1210 = vld [vmem:[%s225 + $0x4ac] sm:$0xf]
      %v1211 = vld [vmem:[%s225 + $0x4b0] sm:$0xf]
      %v1212 = vld [vmem:[%s225 + $0x4b4] sm:$0xf]
      %v1213 = vld [vmem:[%s225 + $0x4b8] sm:$0xf]
      %v1214 = vld [vmem:[%s225 + $0x4bc] sm:$0xf]
      %v1215 = vld [vmem:[%s225 + $0x4c0] sm:$0xf]
      %v1216 = vld [vmem:[%s225 + $0x4c4] sm:$0xf]
      %v1217 = vld [vmem:[%s225 + $0x4c8] sm:$0xf]
      %v1218 = vld [vmem:[%s225 + $0x4cc] sm:$0xf]
      %v1219 = vld [vmem:[%s225 + $0x4d0] sm:$0xf]
      %v1220 = vld [vmem:[%s225 + $0x4d4] sm:$0xf]
      %v1221 = vld [vmem:[%s225 + $0x4d8] sm:$0xf]
      %v1222 = vld [vmem:[%s225 + $0x4dc] sm:$0xf]
      %v1223 = vld [vmem:[%s225 + $0x4e0] sm:$0xf]
      %v1224 = vld [vmem:[%s225 + $0x4e4] sm:$0xf]
      %v1225 = vld [vmem:[%s225 + $0x4e8] sm:$0xf]
      %v1226 = vld [vmem:[%s225 + $0x4ec] sm:$0xf]
      %v1227 = vld [vmem:[%s225 + $0x4f0] sm:$0xf]
      %v1228 = vld [vmem:[%s225 + $0x4f4] sm:$0xf]
      %v1229 = vld [vmem:[%s225 + $0x4f8] sm:$0xf]
      %v1230 = vld [vmem:[%s225 + $0x4fc] sm:$0xf]
      %v1231 = vld [vmem:[%s225 + $0x500] sm:$0xf]
      %v1232 = vld [vmem:[%s225 + $0x504] sm:$0xf]
      %v1233 = vld [vmem:[%s225 + $0x508] sm:$0xf]
      %v1234 = vld [vmem:[%s225 + $0x50c] sm:$0xf]
      %v1235 = vld [vmem:[%s225 + $0x510] sm:$0xf]
      %v1236 = vld [vmem:[%s225 + $0x514] sm:$0xf]
      %v1237 = vld [vmem:[%s225 + $0x518] sm:$0xf]
      %v1238 = vld [vmem:[%s225 + $0x51c] sm:$0xf]
      %v1239 = vld [vmem:[%s225 + $0x520] sm:$0xf]
      %v1240 = vld [vmem:[%s225 + $0x524] sm:$0xf]
      %v1241 = vld [vmem:[%s225 + $0x528] sm:$0xf]
      %v1242 = vld [vmem:[%s225 + $0x52c] sm:$0xf]
      %v1243 = vld [vmem:[%s225 + $0x530] sm:$0xf]
      %v1244 = vld [vmem:[%s225 + $0x534] sm:$0xf]
      %v1245 = vld [vmem:[%s225 + $0x538] sm:$0xf]
      %v1246 = vld [vmem:[%s225 + $0x53c] sm:$0xf]
      %v1247 = vld [vmem:[%s225 + $0x540] sm:$0xf]
      %v1248 = vld [vmem:[%s225 + $0x544] sm:$0xf]
      %v1249 = vld [vmem:[%s225 + $0x548] sm:$0xf]
      %v1250 = vld [vmem:[%s225 + $0x54c] sm:$0xf]
      %v1251 = vld [vmem:[%s225 + $0x550] sm:$0xf]
      %v1252 = vld [vmem:[%s225 + $0x554] sm:$0xf]
      %v1253 = vld [vmem:[%s225 + $0x558] sm:$0xf]
      %v1254 = vld [vmem:[%s225 + $0x55c] sm:$0xf]
      %v1255 = vld [vmem:[%s225 + $0x560] sm:$0xf]
      %v1256 = vld [vmem:[%s225 + $0x564] sm:$0xf]
      %v1257 = vld [vmem:[%s225 + $0x568] sm:$0xf]
      %v1258 = vld [vmem:[%s225 + $0x56c] sm:$0xf]
      %v1259 = vld [vmem:[%s225 + $0x570] sm:$0xf]
      %v1260 = vld [vmem:[%s225 + $0x574] sm:$0xf]
      %v1261 = vld [vmem:[%s225 + $0x578] sm:$0xf]
      %v1262 = vld [vmem:[%s225 + $0x57c] sm:$0xf]
      %v1263 = vld [vmem:[%s225 + $0x580] sm:$0xf]
      %v1264 = vld [vmem:[%s225 + $0x584] sm:$0xf]
      %v1265 = vld [vmem:[%s225 + $0x588] sm:$0xf]
      %v1266 = vld [vmem:[%s225 + $0x58c] sm:$0xf]
      %v1267 = vld [vmem:[%s225 + $0x590] sm:$0xf]
      %v1268 = vld [vmem:[%s225 + $0x594] sm:$0xf]
      %v1269 = vld [vmem:[%s225 + $0x598] sm:$0xf]
      %v1270 = vld [vmem:[%s225 + $0x59c] sm:$0xf]
      %v1271 = vld [vmem:[%s225 + $0x5a0] sm:$0xf]
      %v1272 = vld [vmem:[%s225 + $0x5a4] sm:$0xf]
      %v1273 = vld [vmem:[%s225 + $0x5a8] sm:$0xf]
      %v1274 = vld [vmem:[%s225 + $0x5ac] sm:$0xf]
      %v1275 = vld [vmem:[%s225 + $0x5b0] sm:$0xf]
      %v1276 = vld [vmem:[%s225 + $0x5b4] sm:$0xf]
      %v1277 = vld [vmem:[%s225 + $0x5b8] sm:$0xf]
      %v1278 = vld [vmem:[%s225 + $0x5bc] sm:$0xf]
      %v1279 = vld [vmem:[%s225 + $0x5c0] sm:$0xf]
      %v1280 = vld [vmem:[%s225 + $0x5c4] sm:$0xf]
      %v1281 = vld [vmem:[%s225 + $0x5c8] sm:$0xf]
      %v1282 = vld [vmem:[%s225 + $0x5cc] sm:$0xf]
      %v1283 = vld [vmem:[%s225 + $0x5d0] sm:$0xf]
      %v1284 = vld [vmem:[%s225 + $0x5d4] sm:$0xf]
      %v1285 = vld [vmem:[%s225 + $0x5d8] sm:$0xf]
      %v1286 = vld [vmem:[%s225 + $0x5dc] sm:$0xf]
      %v1287 = vld [vmem:[%s225 + $0x5e0] sm:$0xf]
      %v1288 = vld [vmem:[%s225 + $0x5e4] sm:$0xf]
      %v1289 = vld [vmem:[%s225 + $0x5e8] sm:$0xf]
      %v1290 = vld [vmem:[%s225 + $0x5ec] sm:$0xf]
      %v1291 = vld [vmem:[%s225 + $0x5f0] sm:$0xf]
      %v1292 = vld [vmem:[%s225 + $0x5f4] sm:$0xf]
      %v1293 = vld [vmem:[%s225 + $0x5f8] sm:$0xf]
      %v1294 = vld [vmem:[%s225 + $0x5fc] sm:$0xf]
      %v1295 = vld [vmem:[%s225 + $0x600] sm:$0xf]
      %v1296 = vld [vmem:[%s225 + $0x604] sm:$0xf]
      %v1297 = vld [vmem:[%s225 + $0x608] sm:$0xf]
      %v1298 = vld [vmem:[%s225 + $0x60c] sm:$0xf]
      %v1299 = vld [vmem:[%s225 + $0x610] sm:$0xf]
      %v1300 = vld [vmem:[%s225 + $0x614] sm:$0xf]
      %v1301 = vld [vmem:[%s225 + $0x618] sm:$0xf]
      %v1302 = vld [vmem:[%s225 + $0x61c] sm:$0xf]
      %v1303 = vld [vmem:[%s225 + $0x620] sm:$0xf]
      %v1304 = vld [vmem:[%s225 + $0x624] sm:$0xf]
      %v1305 = vld [vmem:[%s225 + $0x628] sm:$0xf]
      %v1306 = vld [vmem:[%s225 + $0x62c] sm:$0xf]
      %v1307 = vld [vmem:[%s225 + $0x630] sm:$0xf]
      %v1308 = vld [vmem:[%s225 + $0x634] sm:$0xf]
      %v1309 = vld [vmem:[%s225 + $0x638] sm:$0xf]
      %v1310 = vld [vmem:[%s225 + $0x63c] sm:$0xf]
      %v1311 = vld [vmem:[%s225 + $0x640] sm:$0xf]
      %v1312 = vld [vmem:[%s225 + $0x644] sm:$0xf]
      %v1313 = vld [vmem:[%s225 + $0x648] sm:$0xf]
      %v1314 = vld [vmem:[%s225 + $0x64c] sm:$0xf]
      %v1315 = vld [vmem:[%s225 + $0x650] sm:$0xf]
      %v1316 = vld [vmem:[%s225 + $0x654] sm:$0xf]
      %v1317 = vld [vmem:[%s225 + $0x658] sm:$0xf]
      %v1318 = vld [vmem:[%s225 + $0x65c] sm:$0xf]
      %v1319 = vld [vmem:[%s225 + $0x660] sm:$0xf]
      %v1320 = vld [vmem:[%s225 + $0x664] sm:$0xf]
      %v1321 = vld [vmem:[%s225 + $0x668] sm:$0xf]
      %v1322 = vld [vmem:[%s225 + $0x66c] sm:$0xf]
      %v1323 = vld [vmem:[%s225 + $0x670] sm:$0xf]
      %v1324 = vld [vmem:[%s225 + $0x674] sm:$0xf]
      %v1325 = vld [vmem:[%s225 + $0x678] sm:$0xf]
      %v1326 = vld [vmem:[%s225 + $0x67c] sm:$0xf]
      %v1327 = vld [vmem:[%s225 + $0x680] sm:$0xf]
      %v1328 = vld [vmem:[%s225 + $0x684] sm:$0xf]
      %v1329 = vld [vmem:[%s225 + $0x688] sm:$0xf]
      %v1330 = vld [vmem:[%s225 + $0x68c] sm:$0xf]
      %v1331 = vld [vmem:[%s225 + $0x690] sm:$0xf]
      %v1332 = vld [vmem:[%s225 + $0x694] sm:$0xf]
      %v1333 = vld [vmem:[%s225 + $0x698] sm:$0xf]
      %v1334 = vld [vmem:[%s225 + $0x69c] sm:$0xf]
      %v1335 = vld [vmem:[%s225 + $0x6a0] sm:$0xf]
      %v1336 = vld [vmem:[%s225 + $0x6a4] sm:$0xf]
      %v1337 = vld [vmem:[%s225 + $0x6a8] sm:$0xf]
      %v1338 = vld [vmem:[%s225 + $0x6ac] sm:$0xf]
      %v1339 = vld [vmem:[%s225 + $0x6b0] sm:$0xf]
      %v1340 = vld [vmem:[%s225 + $0x6b4] sm:$0xf]
      %v1341 = vld [vmem:[%s225 + $0x6b8] sm:$0xf]
      %v1342 = vld [vmem:[%s225 + $0x6bc] sm:$0xf]
      %v1343 = vld [vmem:[%s225 + $0x6c0] sm:$0xf]
      %v1344 = vld [vmem:[%s225 + $0x6c4] sm:$0xf]
      %v1345 = vld [vmem:[%s225 + $0x6c8] sm:$0xf]
      %v1346 = vld [vmem:[%s225 + $0x6cc] sm:$0xf]
      %v1347 = vld [vmem:[%s225 + $0x6d0] sm:$0xf]
      %v1348 = vld [vmem:[%s225 + $0x6d4] sm:$0xf]
      %v1349 = vld [vmem:[%s225 + $0x6d8] sm:$0xf]
      %v1350 = vld [vmem:[%s225 + $0x6dc] sm:$0xf]
      %v1351 = vld [vmem:[%s225 + $0x6e0] sm:$0xf]
      %v1352 = vld [vmem:[%s225 + $0x6e4] sm:$0xf]
      %v1353 = vld [vmem:[%s225 + $0x6e8] sm:$0xf]
      %v1354 = vld [vmem:[%s225 + $0x6ec] sm:$0xf]
      %v1355 = vld [vmem:[%s225 + $0x6f0] sm:$0xf]
      %v1356 = vld [vmem:[%s225 + $0x6f4] sm:$0xf]
      %v1357 = vld [vmem:[%s225 + $0x6f8] sm:$0xf]
      %v1358 = vld [vmem:[%s225 + $0x6fc] sm:$0xf]
      %v1359 = vld [vmem:[%s225 + $0x700] sm:$0xf]
      %v1360 = vld [vmem:[%s225 + $0x704] sm:$0xf]
      %v1361 = vld [vmem:[%s225 + $0x708] sm:$0xf]
      %v1362 = vld [vmem:[%s225 + $0x70c] sm:$0xf]
      %v1363 = vld [vmem:[%s225 + $0x710] sm:$0xf]
      %v1364 = vld [vmem:[%s225 + $0x714] sm:$0xf]
      %v1365 = vld [vmem:[%s225 + $0x718] sm:$0xf]
      %v1366 = vld [vmem:[%s225 + $0x71c] sm:$0xf]
      %v1367 = vld [vmem:[%s225 + $0x720] sm:$0xf]
      %v1368 = vld [vmem:[%s225 + $0x724] sm:$0xf]
      %v1369 = vld [vmem:[%s225 + $0x728] sm:$0xf]
      %v1370 = vld [vmem:[%s225 + $0x72c] sm:$0xf]
      %v1371 = vld [vmem:[%s225 + $0x730] sm:$0xf]
      %v1372 = vld [vmem:[%s225 + $0x734] sm:$0xf]
      %v1373 = vld [vmem:[%s225 + $0x738] sm:$0xf]
      %v1374 = vld [vmem:[%s225 + $0x73c] sm:$0xf]
      %v1375 = vld [vmem:[%s225 + $0x740] sm:$0xf]
      %v1376 = vld [vmem:[%s225 + $0x744] sm:$0xf]
      %v1377 = vld [vmem:[%s225 + $0x748] sm:$0xf]
      %v1378 = vld [vmem:[%s225 + $0x74c] sm:$0xf]
      %v1379 = vld [vmem:[%s225 + $0x750] sm:$0xf]
      %v1380 = vld [vmem:[%s225 + $0x754] sm:$0xf]
      %v1381 = vld [vmem:[%s225 + $0x758] sm:$0xf]
      %v1382 = vld [vmem:[%s225 + $0x75c] sm:$0xf]
      %v1383 = vld [vmem:[%s225 + $0x760] sm:$0xf]
      %v1384 = vld [vmem:[%s225 + $0x764] sm:$0xf]
      %v1385 = vld [vmem:[%s225 + $0x768] sm:$0xf]
      %v1386 = vld [vmem:[%s225 + $0x76c] sm:$0xf]
      %v1387 = vld [vmem:[%s225 + $0x770] sm:$0xf]
      %v1388 = vld [vmem:[%s225 + $0x774] sm:$0xf]
      %v1389 = vld [vmem:[%s225 + $0x778] sm:$0xf]
      %v1390 = vld [vmem:[%s225 + $0x77c] sm:$0xf]
      %v1391 = vld [vmem:[%s225 + $0x780] sm:$0xf]
      %v1392 = vld [vmem:[%s225 + $0x784] sm:$0xf]
      %v1393 = vld [vmem:[%s225 + $0x788] sm:$0xf]
      %v1394 = vld [vmem:[%s225 + $0x78c] sm:$0xf]
      %v1395 = vld [vmem:[%s225 + $0x790] sm:$0xf]
      %v1396 = vld [vmem:[%s225 + $0x794] sm:$0xf]
      %v1397 = vld [vmem:[%s225 + $0x798] sm:$0xf]
      %v1398 = vld [vmem:[%s225 + $0x79c] sm:$0xf]
      %v1399 = vld [vmem:[%s225 + $0x7a0] sm:$0xf]
      %v1400 = vld [vmem:[%s225 + $0x7a4] sm:$0xf]
      %v1401 = vld [vmem:[%s225 + $0x7a8] sm:$0xf]
      %v1402 = vld [vmem:[%s225 + $0x7ac] sm:$0xf]
      %v1403 = vld [vmem:[%s225 + $0x7b0] sm:$0xf]
      %v1404 = vld [vmem:[%s225 + $0x7b4] sm:$0xf]
      %v1405 = vld [vmem:[%s225 + $0x7b8] sm:$0xf]
      %v1406 = vld [vmem:[%s225 + $0x7bc] sm:$0xf]
      %v1407 = vld [vmem:[%s225 + $0x7c0] sm:$0xf]
      %v1408 = vld [vmem:[%s225 + $0x7c4] sm:$0xf]
      %v1409 = vld [vmem:[%s225 + $0x7c8] sm:$0xf]
      %v1410 = vld [vmem:[%s225 + $0x7cc] sm:$0xf]
      %v1411 = vld [vmem:[%s225 + $0x7d0] sm:$0xf]
      %v1412 = vld [vmem:[%s225 + $0x7d4] sm:$0xf]
      %v1413 = vld [vmem:[%s225 + $0x7d8] sm:$0xf]
      %v1414 = vld [vmem:[%s225 + $0x7dc] sm:$0xf]
      %v1415 = vld [vmem:[%s225 + $0x7e0] sm:$0xf]
      %v1416 = vld [vmem:[%s225 + $0x7e4] sm:$0xf]
      %v1417 = vld [vmem:[%s225 + $0x7e8] sm:$0xf]
      %v1418 = vld [vmem:[%s225 + $0x7ec] sm:$0xf]
      %v1419 = vld [vmem:[%s225 + $0x7f0] sm:$0xf]
      %v1420 = vld [vmem:[%s225 + $0x7f4] sm:$0xf]
      %v1421 = vld [vmem:[%s225 + $0x7f8] sm:$0xf]
      %v1422 = vld [vmem:[%s225 + $0x7fc] sm:$0xf]
      %v1423 = vld [vmem:[%s225 + $0x800] sm:$0xf]
      %v1424 = vld [vmem:[%s225 + $0x804] sm:$0xf]
      %v1425 = vld [vmem:[%s225 + $0x808] sm:$0xf]
      %v1426 = vld [vmem:[%s225 + $0x80c] sm:$0xf]
      %v1427 = vld [vmem:[%s225 + $0x810] sm:$0xf]
      %v1428 = vld [vmem:[%s225 + $0x814] sm:$0xf]
      %v1429 = vld [vmem:[%s225 + $0x818] sm:$0xf]
      %v1430 = vld [vmem:[%s225 + $0x81c] sm:$0xf]
      %v1431 = vld [vmem:[%s225 + $0x820] sm:$0xf]
      %v1432 = vld [vmem:[%s225 + $0x824] sm:$0xf]
      %v1433 = vld [vmem:[%s225 + $0x828] sm:$0xf]
      %v1434 = vld [vmem:[%s225 + $0x82c] sm:$0xf]
      %v1435 = vld [vmem:[%s225 + $0x830] sm:$0xf]
      %v1436 = vld [vmem:[%s225 + $0x834] sm:$0xf]
      %v1437 = vld [vmem:[%s225 + $0x838] sm:$0xf]
      %v1438 = vld [vmem:[%s225 + $0x83c] sm:$0xf]
      %v1439 = vld [vmem:[%s225 + $0x840] sm:$0xf]
      %v1440 = vld [vmem:[%s225 + $0x844] sm:$0xf]
      %v1441 = vld [vmem:[%s225 + $0x848] sm:$0xf]
      %v1442 = vld [vmem:[%s225 + $0x84c] sm:$0xf]
      %v1443 = vld [vmem:[%s225 + $0x850] sm:$0xf]
      %v1444 = vld [vmem:[%s225 + $0x854] sm:$0xf]
      %v1445 = vld [vmem:[%s225 + $0x858] sm:$0xf]
      %v1446 = vld [vmem:[%s225 + $0x85c] sm:$0xf]
      %v1447 = vld [vmem:[%s225 + $0x860] sm:$0xf]
      %v1448 = vld [vmem:[%s225 + $0x864] sm:$0xf]
      %v1449 = vld [vmem:[%s225 + $0x868] sm:$0xf]
      %v1450 = vld [vmem:[%s225 + $0x86c] sm:$0xf]
      %v1451 = vld [vmem:[%s225 + $0x870] sm:$0xf]
      %v1452 = vld [vmem:[%s225 + $0x874] sm:$0xf]
      %v1453 = vld [vmem:[%s225 + $0x878] sm:$0xf]
      %v1454 = vld [vmem:[%s225 + $0x87c] sm:$0xf]
      %v1455 = vld [vmem:[%s225 + $0x880] sm:$0xf]
      %v1456 = vld [vmem:[%s225 + $0x884] sm:$0xf]
      %v1457 = vld [vmem:[%s225 + $0x888] sm:$0xf]
      %v1458 = vld [vmem:[%s225 + $0x88c] sm:$0xf]
      %v1459 = vld [vmem:[%s225 + $0x890] sm:$0xf]
      %v1460 = vld [vmem:[%s225 + $0x894] sm:$0xf]
      %v1461 = vld [vmem:[%s225 + $0x898] sm:$0xf]
      %v1462 = vld [vmem:[%s225 + $0x89c] sm:$0xf]
      %v1463 = vld [vmem:[%s225 + $0x8a0] sm:$0xf]
      %v1464 = vld [vmem:[%s225 + $0x8a4] sm:$0xf]
      %v1465 = vld [vmem:[%s225 + $0x8a8] sm:$0xf]
      %v1466 = vld [vmem:[%s225 + $0x8ac] sm:$0xf]
      %v1467 = vld [vmem:[%s225 + $0x8b0] sm:$0xf]
      %v1468 = vld [vmem:[%s225 + $0x8b4] sm:$0xf]
      %v1469 = vld [vmem:[%s225 + $0x8b8] sm:$0xf]
      %v1470 = vld [vmem:[%s225 + $0x8bc] sm:$0xf]
      %v1471 = vld [vmem:[%s225 + $0x8c0] sm:$0xf]
      %v1472 = vld [vmem:[%s225 + $0x8c4] sm:$0xf]
      %v1473 = vld [vmem:[%s225 + $0x8c8] sm:$0xf]
      %v1474 = vld [vmem:[%s225 + $0x8cc] sm:$0xf]
      %v1475 = vld [vmem:[%s225 + $0x8d0] sm:$0xf]
      %v1476 = vld [vmem:[%s225 + $0x8d4] sm:$0xf]
      %v1477 = vld [vmem:[%s225 + $0x8d8] sm:$0xf]
      %v1478 = vld [vmem:[%s225 + $0x8dc] sm:$0xf]
      %v1479 = vld [vmem:[%s225 + $0x8e0] sm:$0xf]
      %v1480 = vld [vmem:[%s225 + $0x8e4] sm:$0xf]
      %v1481 = vld [vmem:[%s225 + $0x8e8] sm:$0xf]
      %v1482 = vld [vmem:[%s225 + $0x8ec] sm:$0xf]
      %v1483 = vld [vmem:[%s225 + $0x8f0] sm:$0xf]
      %v1484 = vld [vmem:[%s225 + $0x8f4] sm:$0xf]
      %v1485 = vld [vmem:[%s225 + $0x8f8] sm:$0xf]
      %v1486 = vld [vmem:[%s225 + $0x8fc] sm:$0xf]
      %v1487 = vld [vmem:[%s225 + $0x900] sm:$0xf]
      %v1488 = vld [vmem:[%s225 + $0x904] sm:$0xf]
      %v1489 = vld [vmem:[%s225 + $0x908] sm:$0xf]
      %v1490 = vld [vmem:[%s225 + $0x90c] sm:$0xf]
      %v1491 = vld [vmem:[%s225 + $0x910] sm:$0xf]
      %v1492 = vld [vmem:[%s225 + $0x914] sm:$0xf]
      %v1493 = vld [vmem:[%s225 + $0x918] sm:$0xf]
      %v1494 = vld [vmem:[%s225 + $0x91c] sm:$0xf]
      %v1495 = vld [vmem:[%s225 + $0x920] sm:$0xf]
      %v1496 = vld [vmem:[%s225 + $0x924] sm:$0xf]
      %v1497 = vld [vmem:[%s225 + $0x928] sm:$0xf]
      %v1498 = vld [vmem:[%s225 + $0x92c] sm:$0xf]
      %v1499 = vld [vmem:[%s225 + $0x930] sm:$0xf]
      %v1500 = vld [vmem:[%s225 + $0x934] sm:$0xf]
      %v1501 = vld [vmem:[%s225 + $0x938] sm:$0xf]
      %v1502 = vld [vmem:[%s225 + $0x93c] sm:$0xf]
      %v1503 = vld [vmem:[%s225 + $0x940] sm:$0xf]
      %v1504 = vld [vmem:[%s225 + $0x944] sm:$0xf]
      %v1505 = vld [vmem:[%s225 + $0x948] sm:$0xf]
      %v1506 = vld [vmem:[%s225 + $0x94c] sm:$0xf]
      %v1507 = vld [vmem:[%s225 + $0x950] sm:$0xf]
      %v1508 = vld [vmem:[%s225 + $0x954] sm:$0xf]
      %v1509 = vld [vmem:[%s225 + $0x958] sm:$0xf]
      %v1510 = vld [vmem:[%s225 + $0x95c] sm:$0xf]
      %v1511 = vld [vmem:[%s225 + $0x960] sm:$0xf]
      %v1512 = vld [vmem:[%s225 + $0x964] sm:$0xf]
      %v1513 = vld [vmem:[%s225 + $0x968] sm:$0xf]
      %v1514 = vld [vmem:[%s225 + $0x96c] sm:$0xf]
      %v1515 = vld [vmem:[%s225 + $0x970] sm:$0xf]
      %v1516 = vld [vmem:[%s225 + $0x974] sm:$0xf]
      %v1517 = vld [vmem:[%s225 + $0x978] sm:$0xf]
      %v1518 = vld [vmem:[%s225 + $0x97c] sm:$0xf]
      %v1519 = vld [vmem:[%s225 + $0x980] sm:$0xf]
      %v1520 = vld [vmem:[%s225 + $0x984] sm:$0xf]
      %v1521 = vld [vmem:[%s225 + $0x988] sm:$0xf]
      %v1522 = vld [vmem:[%s225 + $0x98c] sm:$0xf]
      %v1523 = vld [vmem:[%s225 + $0x990] sm:$0xf]
      %v1524 = vld [vmem:[%s225 + $0x994] sm:$0xf]
      %v1525 = vld [vmem:[%s225 + $0x998] sm:$0xf]
      %v1526 = vld [vmem:[%s225 + $0x99c] sm:$0xf]
      %v1527 = vld [vmem:[%s225 + $0x9a0] sm:$0xf]
      %v1528 = vld [vmem:[%s225 + $0x9a4] sm:$0xf]
      %v1529 = vld [vmem:[%s225 + $0x9a8] sm:$0xf]
      %v1530 = vld [vmem:[%s225 + $0x9ac] sm:$0xf]
      %v1531 = vld [vmem:[%s225 + $0x9b0] sm:$0xf]
      %v1532 = vld [vmem:[%s225 + $0x9b4] sm:$0xf]
      %v1533 = vld [vmem:[%s225 + $0x9b8] sm:$0xf]
      %v1534 = vld [vmem:[%s225 + $0x9bc] sm:$0xf]
      %v1535 = vld [vmem:[%s225 + $0x9c0] sm:$0xf]
      %v1536 = vld [vmem:[%s225 + $0x9c4] sm:$0xf]
      %v1537 = vld [vmem:[%s225 + $0x9c8] sm:$0xf]
      %v1538 = vld [vmem:[%s225 + $0x9cc] sm:$0xf]
      %v1539 = vld [vmem:[%s225 + $0x9d0] sm:$0xf]
      %v1540 = vld [vmem:[%s225 + $0x9d4] sm:$0xf]
      %v1541 = vld [vmem:[%s225 + $0x9d8] sm:$0xf]
      %v1542 = vld [vmem:[%s225 + $0x9dc] sm:$0xf]
      %v1543 = vld [vmem:[%s225 + $0x9e0] sm:$0xf]
      %v1544 = vld [vmem:[%s225 + $0x9e4] sm:$0xf]
      %v1545 = vld [vmem:[%s225 + $0x9e8] sm:$0xf]
      %v1546 = vld [vmem:[%s225 + $0x9ec] sm:$0xf]
      %v1547 = vld [vmem:[%s225 + $0x9f0] sm:$0xf]
      %v1548 = vld [vmem:[%s225 + $0x9f4] sm:$0xf]
      %v1549 = vld [vmem:[%s225 + $0x9f8] sm:$0xf]
      %v1550 = vld [vmem:[%s225 + $0x9fc] sm:$0xf]
      %v1551 = vld [vmem:[%s225 + $0xa00] sm:$0xf]
      %v1552 = vld [vmem:[%s225 + $0xa04] sm:$0xf]
      %v1553 = vld [vmem:[%s225 + $0xa08] sm:$0xf]
      %v1554 = vld [vmem:[%s225 + $0xa0c] sm:$0xf]
      %v1555 = vld [vmem:[%s225 + $0xa10] sm:$0xf]
      %v1556 = vld [vmem:[%s225 + $0xa14] sm:$0xf]
      %v1557 = vld [vmem:[%s225 + $0xa18] sm:$0xf]
      %v1558 = vld [vmem:[%s225 + $0xa1c] sm:$0xf]
      %v1559 = vld [vmem:[%s225 + $0xa20] sm:$0xf]
      %v1560 = vld [vmem:[%s225 + $0xa24] sm:$0xf]
      %v1561 = vld [vmem:[%s225 + $0xa28] sm:$0xf]
      %v1562 = vld [vmem:[%s225 + $0xa2c] sm:$0xf]
      %v1563 = vld [vmem:[%s225 + $0xa30] sm:$0xf]
      %v1564 = vld [vmem:[%s225 + $0xa34] sm:$0xf]
      %v1565 = vld [vmem:[%s225 + $0xa38] sm:$0xf]
      %v1566 = vld [vmem:[%s225 + $0xa3c] sm:$0xf]
      %v1567 = vld [vmem:[%s225 + $0xa40] sm:$0xf]
      %v1568 = vld [vmem:[%s225 + $0xa44] sm:$0xf]
      %v1569 = vld [vmem:[%s225 + $0xa48] sm:$0xf]
      %v1570 = vld [vmem:[%s225 + $0xa4c] sm:$0xf]
      %v1571 = vld [vmem:[%s225 + $0xa50] sm:$0xf]
      %v1572 = vld [vmem:[%s225 + $0xa54] sm:$0xf]
      %v1573 = vld [vmem:[%s225 + $0xa58] sm:$0xf]
      %v1574 = vld [vmem:[%s225 + $0xa5c] sm:$0xf]
      %v1575 = vld [vmem:[%s225 + $0xa60] sm:$0xf]
      %v1576 = vld [vmem:[%s225 + $0xa64] sm:$0xf]
      %v1577 = vld [vmem:[%s225 + $0xa68] sm:$0xf]
      %v1578 = vld [vmem:[%s225 + $0xa6c] sm:$0xf]
      %v1579 = vld [vmem:[%s225 + $0xa70] sm:$0xf]
      %v1580 = vld [vmem:[%s225 + $0xa74] sm:$0xf]
      %v1581 = vld [vmem:[%s225 + $0xa78] sm:$0xf]
      %v1582 = vld [vmem:[%s225 + $0xa7c] sm:$0xf]
      %v1583 = vld [vmem:[%s225 + $0xa80] sm:$0xf]
      %v1584 = vld [vmem:[%s225 + $0xa84] sm:$0xf]
      %v1585 = vld [vmem:[%s225 + $0xa88] sm:$0xf]
      %v1586 = vld [vmem:[%s225 + $0xa8c] sm:$0xf]
      %v1587 = vld [vmem:[%s225 + $0xa90] sm:$0xf]
      %v1588 = vld [vmem:[%s225 + $0xa94] sm:$0xf]
      %v1589 = vld [vmem:[%s225 + $0xa98] sm:$0xf]
      %v1590 = vld [vmem:[%s225 + $0xa9c] sm:$0xf]
      %v1591 = vld [vmem:[%s225 + $0xaa0] sm:$0xf]
      %v1592 = vld [vmem:[%s225 + $0xaa4] sm:$0xf]
      %v1593 = vld [vmem:[%s225 + $0xaa8] sm:$0xf]
      %v1594 = vld [vmem:[%s225 + $0xaac] sm:$0xf]
      %v1595 = vld [vmem:[%s225 + $0xab0] sm:$0xf]
      %v1596 = vld [vmem:[%s225 + $0xab4] sm:$0xf]
      %v1597 = vld [vmem:[%s225 + $0xab8] sm:$0xf]
      %v1598 = vld [vmem:[%s225 + $0xabc] sm:$0xf]
      %v1599 = vld [vmem:[%s225 + $0xac0] sm:$0xf]
      %v1600 = vld [vmem:[%s225 + $0xac4] sm:$0xf]
      %v1601 = vld [vmem:[%s225 + $0xac8] sm:$0xf]
      %v1602 = vld [vmem:[%s225 + $0xacc] sm:$0xf]
      %v1603 = vld [vmem:[%s225 + $0xad0] sm:$0xf]
      %v1604 = vld [vmem:[%s225 + $0xad4] sm:$0xf]
      %v1605 = vld [vmem:[%s225 + $0xad8] sm:$0xf]
      %v1606 = vld [vmem:[%s225 + $0xadc] sm:$0xf]
      %v1607 = vld [vmem:[%s225 + $0xae0] sm:$0xf]
      %v1608 = vld [vmem:[%s225 + $0xae4] sm:$0xf]
      %v1609 = vld [vmem:[%s225 + $0xae8] sm:$0xf]
      %v1610 = vld [vmem:[%s225 + $0xaec] sm:$0xf]
      %v1611 = vld [vmem:[%s225 + $0xaf0] sm:$0xf]
      %v1612 = vld [vmem:[%s225 + $0xaf4] sm:$0xf]
      %v1613 = vld [vmem:[%s225 + $0xaf8] sm:$0xf]
      %v1614 = vld [vmem:[%s225 + $0xafc] sm:$0xf]
      %v1615 = vld [vmem:[%s225 + $0xb00] sm:$0xf]
      %v1616 = vld [vmem:[%s225 + $0xb04] sm:$0xf]
      %v1617 = vld [vmem:[%s225 + $0xb08] sm:$0xf]
      %v1618 = vld [vmem:[%s225 + $0xb0c] sm:$0xf]
      %v1619 = vld [vmem:[%s225 + $0xb10] sm:$0xf]
      %v1620 = vld [vmem:[%s225 + $0xb14] sm:$0xf]
      %v1621 = vld [vmem:[%s225 + $0xb18] sm:$0xf]
      %v1622 = vld [vmem:[%s225 + $0xb1c] sm:$0xf]
      %v1623 = vld [vmem:[%s225 + $0xb20] sm:$0xf]
      %v1624 = vld [vmem:[%s225 + $0xb24] sm:$0xf]
      %v1625 = vld [vmem:[%s225 + $0xb28] sm:$0xf]
      %v1626 = vld [vmem:[%s225 + $0xb2c] sm:$0xf]
      %v1627 = vld [vmem:[%s225 + $0xb30] sm:$0xf]
      %v1628 = vld [vmem:[%s225 + $0xb34] sm:$0xf]
      %v1629 = vld [vmem:[%s225 + $0xb38] sm:$0xf]
      %v1630 = vld [vmem:[%s225 + $0xb3c] sm:$0xf]
      %v1631 = vld [vmem:[%s225 + $0xb40] sm:$0xf]
      %v1632 = vld [vmem:[%s225 + $0xb44] sm:$0xf]
      %v1633 = vld [vmem:[%s225 + $0xb48] sm:$0xf]
      %v1634 = vld [vmem:[%s225 + $0xb4c] sm:$0xf]
      %v1635 = vld [vmem:[%s225 + $0xb50] sm:$0xf]
      %v1636 = vld [vmem:[%s225 + $0xb54] sm:$0xf]
      %v1637 = vld [vmem:[%s225 + $0xb58] sm:$0xf]
      %v1638 = vld [vmem:[%s225 + $0xb5c] sm:$0xf]
      %v1639 = vld [vmem:[%s225 + $0xb60] sm:$0xf]
      %v1640 = vld [vmem:[%s225 + $0xb64] sm:$0xf]
      %v1641 = vld [vmem:[%s225 + $0xb68] sm:$0xf]
      %v1642 = vld [vmem:[%s225 + $0xb6c] sm:$0xf]
      %v1643 = vld [vmem:[%s225 + $0xb70] sm:$0xf]
      %v1644 = vld [vmem:[%s225 + $0xb74] sm:$0xf]
      %v1645 = vld [vmem:[%s225 + $0xb78] sm:$0xf]
      %v1646 = vld [vmem:[%s225 + $0xb7c] sm:$0xf]
      %v1647 = vld [vmem:[%s225 + $0xb80] sm:$0xf]
      %v1648 = vld [vmem:[%s225 + $0xb84] sm:$0xf]
      %v1649 = vld [vmem:[%s225 + $0xb88] sm:$0xf]
      %v1650 = vld [vmem:[%s225 + $0xb8c] sm:$0xf]
      %v1651 = vld [vmem:[%s225 + $0xb90] sm:$0xf]
      %v1652 = vld [vmem:[%s225 + $0xb94] sm:$0xf]
      %v1653 = vld [vmem:[%s225 + $0xb98] sm:$0xf]
      %v1654 = vld [vmem:[%s225 + $0xb9c] sm:$0xf]
      %v1655 = vld [vmem:[%s225 + $0xba0] sm:$0xf]
      %v1656 = vld [vmem:[%s225 + $0xba4] sm:$0xf]
      %v1657 = vld [vmem:[%s225 + $0xba8] sm:$0xf]
      %v1658 = vld [vmem:[%s225 + $0xbac] sm:$0xf]
      %v1659 = vld [vmem:[%s225 + $0xbb0] sm:$0xf]
      %v1660 = vld [vmem:[%s225 + $0xbb4] sm:$0xf]
      %v1661 = vld [vmem:[%s225 + $0xbb8] sm:$0xf]
      %v1662 = vld [vmem:[%s225 + $0xbbc] sm:$0xf]
      %v1663 = vld [vmem:[%s225 + $0xbc0] sm:$0xf]
      %v1664 = vld [vmem:[%s225 + $0xbc4] sm:$0xf]
      %v1665 = vld [vmem:[%s225 + $0xbc8] sm:$0xf]
      %v1666 = vld [vmem:[%s225 + $0xbcc] sm:$0xf]
      %v1667 = vld [vmem:[%s225 + $0xbd0] sm:$0xf]
      %v1668 = vld [vmem:[%s225 + $0xbd4] sm:$0xf]
      %v1669 = vld [vmem:[%s225 + $0xbd8] sm:$0xf]
      %v1670 = vld [vmem:[%s225 + $0xbdc] sm:$0xf]
      %v1671 = vld [vmem:[%s225 + $0xbe0] sm:$0xf]
      %v1672 = vld [vmem:[%s225 + $0xbe4] sm:$0xf]
      %v1673 = vld [vmem:[%s225 + $0xbe8] sm:$0xf]
      %v1674 = vld [vmem:[%s225 + $0xbec] sm:$0xf]
      %v1675 = vld [vmem:[%s225 + $0xbf0] sm:$0xf]
      %v1676 = vld [vmem:[%s225 + $0xbf4] sm:$0xf]
      %v1677 = vld [vmem:[%s225 + $0xbf8] sm:$0xf]
      %v1678 = vld [vmem:[%s225 + $0xbfc] sm:$0xf]
      %v1679 = vld [vmem:[%s225 + $0xc00] sm:$0xf]
      %v1680 = vld [vmem:[%s225 + $0xc04] sm:$0xf]
      %v1681 = vld [vmem:[%s225 + $0xc08] sm:$0xf]
      %v1682 = vld [vmem:[%s225 + $0xc0c] sm:$0xf]
      %v1683 = vld [vmem:[%s225 + $0xc10] sm:$0xf]
      %v1684 = vld [vmem:[%s225 + $0xc14] sm:$0xf]
      %v1685 = vld [vmem:[%s225 + $0xc18] sm:$0xf]
      %v1686 = vld [vmem:[%s225 + $0xc1c] sm:$0xf]
      %v1687 = vld [vmem:[%s225 + $0xc20] sm:$0xf]
      %v1688 = vld [vmem:[%s225 + $0xc24] sm:$0xf]
      %v1689 = vld [vmem:[%s225 + $0xc28] sm:$0xf]
      %v1690 = vld [vmem:[%s225 + $0xc2c] sm:$0xf]
      %v1691 = vld [vmem:[%s225 + $0xc30] sm:$0xf]
      %v1692 = vld [vmem:[%s225 + $0xc34] sm:$0xf]
      %v1693 = vld [vmem:[%s225 + $0xc38] sm:$0xf]
      %v1694 = vld [vmem:[%s225 + $0xc3c] sm:$0xf]
      %v1695 = vld [vmem:[%s225 + $0xc40] sm:$0xf]
      %v1696 = vld [vmem:[%s225 + $0xc44] sm:$0xf]
      %v1697 = vld [vmem:[%s225 + $0xc48] sm:$0xf]
      %v1698 = vld [vmem:[%s225 + $0xc4c] sm:$0xf]
      %v1699 = vld [vmem:[%s225 + $0xc50] sm:$0xf]
      %v1700 = vld [vmem:[%s225 + $0xc54] sm:$0xf]
      %v1701 = vld [vmem:[%s225 + $0xc58] sm:$0xf]
      %v1702 = vld [vmem:[%s225 + $0xc5c] sm:$0xf]
      %v1703 = vld [vmem:[%s225 + $0xc60] sm:$0xf]
      %v1704 = vld [vmem:[%s225 + $0xc64] sm:$0xf]
      %v1705 = vld [vmem:[%s225 + $0xc68] sm:$0xf]
      %v1706 = vld [vmem:[%s225 + $0xc6c] sm:$0xf]
      %v1707 = vld [vmem:[%s225 + $0xc70] sm:$0xf]
      %v1708 = vld [vmem:[%s225 + $0xc74] sm:$0xf]
      %v1709 = vld [vmem:[%s225 + $0xc78] sm:$0xf]
      %v1710 = vld [vmem:[%s225 + $0xc7c] sm:$0xf]
      %v1711 = vld [vmem:[%s225 + $0xc80] sm:$0xf]
      %v1712 = vld [vmem:[%s225 + $0xc84] sm:$0xf]
      %v1713 = vld [vmem:[%s225 + $0xc88] sm:$0xf]
      %v1714 = vld [vmem:[%s225 + $0xc8c] sm:$0xf]
      %v1715 = vld [vmem:[%s225 + $0xc90] sm:$0xf]
      %v1716 = vld [vmem:[%s225 + $0xc94] sm:$0xf]
      %v1717 = vld [vmem:[%s225 + $0xc98] sm:$0xf]
      %v1718 = vld [vmem:[%s225 + $0xc9c] sm:$0xf]
      %v1719 = vld [vmem:[%s225 + $0xca0] sm:$0xf]
      %v1720 = vld [vmem:[%s225 + $0xca4] sm:$0xf]
      %v1721 = vld [vmem:[%s225 + $0xca8] sm:$0xf]
      %v1722 = vld [vmem:[%s225 + $0xcac] sm:$0xf]
      %v1723 = vld [vmem:[%s225 + $0xcb0] sm:$0xf]
      %v1724 = vld [vmem:[%s225 + $0xcb4] sm:$0xf]
      %v1725 = vld [vmem:[%s225 + $0xcb8] sm:$0xf]
      %v1726 = vld [vmem:[%s225 + $0xcbc] sm:$0xf]
      %v1727 = vld [vmem:[%s225 + $0xcc0] sm:$0xf]
      %v1728 = vld [vmem:[%s225 + $0xcc4] sm:$0xf]
      %v1729 = vld [vmem:[%s225 + $0xcc8] sm:$0xf]
      %v1730 = vld [vmem:[%s225 + $0xccc] sm:$0xf]
      %v1731 = vld [vmem:[%s225 + $0xcd0] sm:$0xf]
      %v1732 = vld [vmem:[%s225 + $0xcd4] sm:$0xf]
      %v1733 = vld [vmem:[%s225 + $0xcd8] sm:$0xf]
      %v1734 = vld [vmem:[%s225 + $0xcdc] sm:$0xf]
      %v1735 = vld [vmem:[%s225 + $0xce0] sm:$0xf]
      %v1736 = vld [vmem:[%s225 + $0xce4] sm:$0xf]
      %v1737 = vld [vmem:[%s225 + $0xce8] sm:$0xf]
      %v1738 = vld [vmem:[%s225 + $0xcec] sm:$0xf]
      %v1739 = vld [vmem:[%s225 + $0xcf0] sm:$0xf]
      %v1740 = vld [vmem:[%s225 + $0xcf4] sm:$0xf]
      %v1741 = vld [vmem:[%s225 + $0xcf8] sm:$0xf]
      %v1742 = vld [vmem:[%s225 + $0xcfc] sm:$0xf]
      %v1743 = vld [vmem:[%s225 + $0xd00] sm:$0xf]
      %v1744 = vld [vmem:[%s225 + $0xd04] sm:$0xf]
      %v1745 = vld [vmem:[%s225 + $0xd08] sm:$0xf]
      %v1746 = vld [vmem:[%s225 + $0xd0c] sm:$0xf]
      %v1747 = vld [vmem:[%s225 + $0xd10] sm:$0xf]
      %v1748 = vld [vmem:[%s225 + $0xd14] sm:$0xf]
      %v1749 = vld [vmem:[%s225 + $0xd18] sm:$0xf]
      %v1750 = vld [vmem:[%s225 + $0xd1c] sm:$0xf]
      %v1751 = vld [vmem:[%s225 + $0xd20] sm:$0xf]
      %v1752 = vld [vmem:[%s225 + $0xd24] sm:$0xf]
      %v1753 = vld [vmem:[%s225 + $0xd28] sm:$0xf]
      %v1754 = vld [vmem:[%s225 + $0xd2c] sm:$0xf]
      %v1755 = vld [vmem:[%s225 + $0xd30] sm:$0xf]
      %v1756 = vld [vmem:[%s225 + $0xd34] sm:$0xf]
      %v1757 = vld [vmem:[%s225 + $0xd38] sm:$0xf]
      %v1758 = vld [vmem:[%s225 + $0xd3c] sm:$0xf]
      %v1759 = vld [vmem:[%s225 + $0xd40] sm:$0xf]
      %v1760 = vld [vmem:[%s225 + $0xd44] sm:$0xf]
      %v1761 = vld [vmem:[%s225 + $0xd48] sm:$0xf]
      %v1762 = vld [vmem:[%s225 + $0xd4c] sm:$0xf]
      %v1763 = vld [vmem:[%s225 + $0xd50] sm:$0xf]
      %v1764 = vld [vmem:[%s225 + $0xd54] sm:$0xf]
      %v1765 = vld [vmem:[%s225 + $0xd58] sm:$0xf]
      %v1766 = vld [vmem:[%s225 + $0xd5c] sm:$0xf]
      %v1767 = vld [vmem:[%s225 + $0xd60] sm:$0xf]
      %v1768 = vld [vmem:[%s225 + $0xd64] sm:$0xf]
      %v1769 = vld [vmem:[%s225 + $0xd68] sm:$0xf]
      %v1770 = vld [vmem:[%s225 + $0xd6c] sm:$0xf]
      %v1771 = vld [vmem:[%s225 + $0xd70] sm:$0xf]
      %v1772 = vld [vmem:[%s225 + $0xd74] sm:$0xf]
      %v1773 = vld [vmem:[%s225 + $0xd78] sm:$0xf]
      %v1774 = vld [vmem:[%s225 + $0xd7c] sm:$0xf]
      %v1775 = vld [vmem:[%s225 + $0xd80] sm:$0xf]
      %v1776 = vld [vmem:[%s225 + $0xd84] sm:$0xf]
      %v1777 = vld [vmem:[%s225 + $0xd88] sm:$0xf]
      %v1778 = vld [vmem:[%s225 + $0xd8c] sm:$0xf]
      %v1779 = vld [vmem:[%s225 + $0xd90] sm:$0xf]
      %v1780 = vld [vmem:[%s225 + $0xd94] sm:$0xf]
      %v1781 = vld [vmem:[%s225 + $0xd98] sm:$0xf]
      %v1782 = vld [vmem:[%s225 + $0xd9c] sm:$0xf]
      %v1783 = vld [vmem:[%s225 + $0xda0] sm:$0xf]
      %v1784 = vld [vmem:[%s225 + $0xda4] sm:$0xf]
      %v1785 = vld [vmem:[%s225 + $0xda8] sm:$0xf]
      %v1786 = vld [vmem:[%s225 + $0xdac] sm:$0xf]
      %v1787 = vld [vmem:[%s225 + $0xdb0] sm:$0xf]
      %v1788 = vld [vmem:[%s225 + $0xdb4] sm:$0xf]
      %v1789 = vld [vmem:[%s225 + $0xdb8] sm:$0xf]
      %v1790 = vld [vmem:[%s225 + $0xdbc] sm:$0xf]
      %v1791 = vld [vmem:[%s225 + $0xdc0] sm:$0xf]
      %v1792 = vld [vmem:[%s225 + $0xdc4] sm:$0xf]
      %v1793 = vld [vmem:[%s225 + $0xdc8] sm:$0xf]
      %v1794 = vld [vmem:[%s225 + $0xdcc] sm:$0xf]
      %v1795 = vld [vmem:[%s225 + $0xdd0] sm:$0xf]
      %v1796 = vld [vmem:[%s225 + $0xdd4] sm:$0xf]
      %v1797 = vld [vmem:[%s225 + $0xdd8] sm:$0xf]
      %v1798 = vld [vmem:[%s225 + $0xddc] sm:$0xf]
      %v1799 = vld [vmem:[%s225 + $0xde0] sm:$0xf]
      %v1800 = vld [vmem:[%s225 + $0xde4] sm:$0xf]
      %v1801 = vld [vmem:[%s225 + $0xde8] sm:$0xf]
      %v1802 = vld [vmem:[%s225 + $0xdec] sm:$0xf]
      %v1803 = vld [vmem:[%s225 + $0xdf0] sm:$0xf]
      %v1804 = vld [vmem:[%s225 + $0xdf4] sm:$0xf]
      %v1805 = vld [vmem:[%s225 + $0xdf8] sm:$0xf]
      %v1806 = vld [vmem:[%s225 + $0xdfc] sm:$0xf]
      %v1807 = vld [vmem:[%s225 + $0xe00] sm:$0xf]
      %v1808 = vld [vmem:[%s225 + $0xe04] sm:$0xf]
      %v1809 = vld [vmem:[%s225 + $0xe08] sm:$0xf]
      %v1810 = vld [vmem:[%s225 + $0xe0c] sm:$0xf]
      %v1811 = vld [vmem:[%s225 + $0xe10] sm:$0xf]
      %v1812 = vld [vmem:[%s225 + $0xe14] sm:$0xf]
      %v1813 = vld [vmem:[%s225 + $0xe18] sm:$0xf]
      %v1814 = vld [vmem:[%s225 + $0xe1c] sm:$0xf]
      %v1815 = vld [vmem:[%s225 + $0xe20] sm:$0xf]
      %v1816 = vld [vmem:[%s225 + $0xe24] sm:$0xf]
      %v1817 = vld [vmem:[%s225 + $0xe28] sm:$0xf]
      %v1818 = vld [vmem:[%s225 + $0xe2c] sm:$0xf]
      %v1819 = vld [vmem:[%s225 + $0xe30] sm:$0xf]
      %v1820 = vld [vmem:[%s225 + $0xe34] sm:$0xf]
      %v1821 = vld [vmem:[%s225 + $0xe38] sm:$0xf]
      %v1822 = vld [vmem:[%s225 + $0xe3c] sm:$0xf]
      %v1823 = vld [vmem:[%s225 + $0xe40] sm:$0xf]
      %v1824 = vld [vmem:[%s225 + $0xe44] sm:$0xf]
      %v1825 = vld [vmem:[%s225 + $0xe48] sm:$0xf]
      %v1826 = vld [vmem:[%s225 + $0xe4c] sm:$0xf]
      %v1827 = vld [vmem:[%s225 + $0xe50] sm:$0xf]
      %v1828 = vld [vmem:[%s225 + $0xe54] sm:$0xf]
      %v1829 = vld [vmem:[%s225 + $0xe58] sm:$0xf]
      %v1830 = vld [vmem:[%s225 + $0xe5c] sm:$0xf]
      %v1831 = vld [vmem:[%s225 + $0xe60] sm:$0xf]
      %v1832 = vld [vmem:[%s225 + $0xe64] sm:$0xf]
      %v1833 = vld [vmem:[%s225 + $0xe68] sm:$0xf]
      %v1834 = vld [vmem:[%s225 + $0xe6c] sm:$0xf]
      %v1835 = vld [vmem:[%s225 + $0xe70] sm:$0xf]
      %v1836 = vld [vmem:[%s225 + $0xe74] sm:$0xf]
      %v1837 = vld [vmem:[%s225 + $0xe78] sm:$0xf]
      %v1838 = vld [vmem:[%s225 + $0xe7c] sm:$0xf]
      %v1839 = vld [vmem:[%s225 + $0xe80] sm:$0xf]
      %v1840 = vld [vmem:[%s225 + $0xe84] sm:$0xf]
      %v1841 = vld [vmem:[%s225 + $0xe88] sm:$0xf]
      %v1842 = vld [vmem:[%s225 + $0xe8c] sm:$0xf]
      %v1843 = vld [vmem:[%s225 + $0xe90] sm:$0xf]
      %v1844 = vld [vmem:[%s225 + $0xe94] sm:$0xf]
      %v1845 = vld [vmem:[%s225 + $0xe98] sm:$0xf]
      %v1846 = vld [vmem:[%s225 + $0xe9c] sm:$0xf]
      %v1847 = vld [vmem:[%s225 + $0xea0] sm:$0xf]
      %v1848 = vld [vmem:[%s225 + $0xea4] sm:$0xf]
      %v1849 = vld [vmem:[%s225 + $0xea8] sm:$0xf]
      %v1850 = vld [vmem:[%s225 + $0xeac] sm:$0xf]
      %v1851 = vld [vmem:[%s225 + $0xeb0] sm:$0xf]
      %v1852 = vld [vmem:[%s225 + $0xeb4] sm:$0xf]
      %v1853 = vld [vmem:[%s225 + $0xeb8] sm:$0xf]
      %v1854 = vld [vmem:[%s225 + $0xebc] sm:$0xf]
      %v1855 = vld [vmem:[%s225 + $0xec0] sm:$0xf]
      %v1856 = vld [vmem:[%s225 + $0xec4] sm:$0xf]
      %v1857 = vld [vmem:[%s225 + $0xec8] sm:$0xf]
      %v1858 = vld [vmem:[%s225 + $0xecc] sm:$0xf]
      %v1859 = vld [vmem:[%s225 + $0xed0] sm:$0xf]
      %v1860 = vld [vmem:[%s225 + $0xed4] sm:$0xf]
      %v1861 = vld [vmem:[%s225 + $0xed8] sm:$0xf]
      %v1862 = vld [vmem:[%s225 + $0xedc] sm:$0xf]
      %v1863 = vld [vmem:[%s225 + $0xee0] sm:$0xf]
      %v1864 = vld [vmem:[%s225 + $0xee4] sm:$0xf]
      %v1865 = vld [vmem:[%s225 + $0xee8] sm:$0xf]
      %v1866 = vld [vmem:[%s225 + $0xeec] sm:$0xf]
      %v1867 = vld [vmem:[%s225 + $0xef0] sm:$0xf]
      %v1868 = vld [vmem:[%s225 + $0xef4] sm:$0xf]
      %v1869 = vld [vmem:[%s225 + $0xef8] sm:$0xf]
      %v1870 = vld [vmem:[%s225 + $0xefc] sm:$0xf]
      %v1871 = vld [vmem:[%s225 + $0xf00] sm:$0xf]
      %v1872 = vld [vmem:[%s225 + $0xf04] sm:$0xf]
      %v1873 = vld [vmem:[%s225 + $0xf08] sm:$0xf]
      %v1874 = vld [vmem:[%s225 + $0xf0c] sm:$0xf]
      %v1875 = vld [vmem:[%s225 + $0xf10] sm:$0xf]
      %v1876 = vld [vmem:[%s225 + $0xf14] sm:$0xf]
      %v1877 = vld [vmem:[%s225 + $0xf18] sm:$0xf]
      %v1878 = vld [vmem:[%s225 + $0xf1c] sm:$0xf]
      %v1879 = vld [vmem:[%s225 + $0xf20] sm:$0xf]
      %v1880 = vld [vmem:[%s225 + $0xf24] sm:$0xf]
      %v1881 = vld [vmem:[%s225 + $0xf28] sm:$0xf]
      %v1882 = vld [vmem:[%s225 + $0xf2c] sm:$0xf]
      %v1883 = vld [vmem:[%s225 + $0xf30] sm:$0xf]
      %v1884 = vld [vmem:[%s225 + $0xf34] sm:$0xf]
      %v1885 = vld [vmem:[%s225 + $0xf38] sm:$0xf]
      %v1886 = vld [vmem:[%s225 + $0xf3c] sm:$0xf]
      %v1887 = vld [vmem:[%s225 + $0xf40] sm:$0xf]
      %v1888 = vld [vmem:[%s225 + $0xf44] sm:$0xf]
      %v1889 = vld [vmem:[%s225 + $0xf48] sm:$0xf]
      %v1890 = vld [vmem:[%s225 + $0xf4c] sm:$0xf]
      %v1891 = vld [vmem:[%s225 + $0xf50] sm:$0xf]
      %v1892 = vld [vmem:[%s225 + $0xf54] sm:$0xf]
      %v1893 = vld [vmem:[%s225 + $0xf58] sm:$0xf]
      %v1894 = vld [vmem:[%s225 + $0xf5c] sm:$0xf]
      %v1895 = vld [vmem:[%s225 + $0xf60] sm:$0xf]
      %v1896 = vld [vmem:[%s225 + $0xf64] sm:$0xf]
      %v1897 = vld [vmem:[%s225 + $0xf68] sm:$0xf]
      %v1898 = vld [vmem:[%s225 + $0xf6c] sm:$0xf]
      %v1899 = vld [vmem:[%s225 + $0xf70] sm:$0xf]
      %v1900 = vld [vmem:[%s225 + $0xf74] sm:$0xf]
      %v1901 = vld [vmem:[%s225 + $0xf78] sm:$0xf]
      %v1902 = vld [vmem:[%s225 + $0xf7c] sm:$0xf]
      %v1903 = vld [vmem:[%s225 + $0xf80] sm:$0xf]
      %v1904 = vld [vmem:[%s225 + $0xf84] sm:$0xf]
      %v1905 = vld [vmem:[%s225 + $0xf88] sm:$0xf]
      %v1906 = vld [vmem:[%s225 + $0xf8c] sm:$0xf]
      %v1907 = vld [vmem:[%s225 + $0xf90] sm:$0xf]
      %v1908 = vld [vmem:[%s225 + $0xf94] sm:$0xf]
      %v1909 = vld [vmem:[%s225 + $0xf98] sm:$0xf]
      %v1910 = vld [vmem:[%s225 + $0xf9c] sm:$0xf]
      %v1911 = vld [vmem:[%s225 + $0xfa0] sm:$0xf]
      %v1912 = vld [vmem:[%s225 + $0xfa4] sm:$0xf]
      %v1913 = vld [vmem:[%s225 + $0xfa8] sm:$0xf]
      %v1914 = vld [vmem:[%s225 + $0xfac] sm:$0xf]
      %v1915 = vld [vmem:[%s225 + $0xfb0] sm:$0xf]
      %v1916 = vld [vmem:[%s225 + $0xfb4] sm:$0xf]
      %v1917 = vld [vmem:[%s225 + $0xfb8] sm:$0xf]
      %v1918 = vld [vmem:[%s225 + $0xfbc] sm:$0xf]
      %v1919 = vld [vmem:[%s225 + $0xfc0] sm:$0xf]
      %v1920 = vld [vmem:[%s225 + $0xfc4] sm:$0xf]
      %v1921 = vld [vmem:[%s225 + $0xfc8] sm:$0xf]
      %v1922 = vld [vmem:[%s225 + $0xfcc] sm:$0xf]
      %v1923 = vld [vmem:[%s225 + $0xfd0] sm:$0xf]
      %v1924 = vld [vmem:[%s225 + $0xfd4] sm:$0xf]
      %v1925 = vld [vmem:[%s225 + $0xfd8] sm:$0xf]
      %v1926 = vld [vmem:[%s225 + $0xfdc] sm:$0xf]
      %v1927 = vld [vmem:[%s225 + $0xfe0] sm:$0xf]
      %v1928 = vld [vmem:[%s225 + $0xfe4] sm:$0xf]
      %v1929 = vld [vmem:[%s225 + $0xfe8] sm:$0xf]
      %v1930 = vld [vmem:[%s225 + $0xfec] sm:$0xf]
      %v1931 = vld [vmem:[%s225 + $0xff0] sm:$0xf]
      %v1932 = vld [vmem:[%s225 + $0xff4] sm:$0xf]
      %v1933 = vld [vmem:[%s225 + $0xff8] sm:$0xf]
      %v1934 = vld [vmem:[%s225 + $0xffc] sm:$0xf]
      %v1935 = vld [vmem:[%s225 + $0x1000] sm:$0xf]
      %v1936 = vld [vmem:[%s225 + $0x1004] sm:$0xf]
      %v1937 = vld [vmem:[%s225 + $0x1008] sm:$0xf]
      %v1938 = vld [vmem:[%s225 + $0x100c] sm:$0xf]
      %v1939 = vld [vmem:[%s225 + $0x1010] sm:$0xf]
      %v1940 = vld [vmem:[%s225 + $0x1014] sm:$0xf]
      %v1941 = vld [vmem:[%s225 + $0x1018] sm:$0xf]
      %v1942 = vld [vmem:[%s225 + $0x101c] sm:$0xf]
      %v1943 = vld [vmem:[%s225 + $0x1020] sm:$0xf]
      %v1944 = vld [vmem:[%s225 + $0x1024] sm:$0xf]
      %v1945 = vld [vmem:[%s225 + $0x1028] sm:$0xf]
      %v1946 = vld [vmem:[%s225 + $0x102c] sm:$0xf]
      %v1947 = vld [vmem:[%s225 + $0x1030] sm:$0xf]
      %v1948 = vld [vmem:[%s225 + $0x1034] sm:$0xf]
      %v1949 = vld [vmem:[%s225 + $0x1038] sm:$0xf]
      %v1950 = vld [vmem:[%s225 + $0x103c] sm:$0xf]
      %v1951 = vld [vmem:[%s225 + $0x1040] sm:$0xf]
      %v1952 = vld [vmem:[%s225 + $0x1044] sm:$0xf]
      %v1953 = vld [vmem:[%s225 + $0x1048] sm:$0xf]
      %v1954 = vld [vmem:[%s225 + $0x104c] sm:$0xf]
      %v1955 = vld [vmem:[%s225 + $0x1050] sm:$0xf]
      %v1956 = vld [vmem:[%s225 + $0x1054] sm:$0xf]
      %v1957 = vld [vmem:[%s225 + $0x1058] sm:$0xf]
      %v1958 = vld [vmem:[%s225 + $0x105c] sm:$0xf]
      %v1959 = vld [vmem:[%s225 + $0x1060] sm:$0xf]
      %v1960 = vld [vmem:[%s225 + $0x1064] sm:$0xf]
      %v1961 = vld [vmem:[%s225 + $0x1068] sm:$0xf]
      %v1962 = vld [vmem:[%s225 + $0x106c] sm:$0xf]
      %v1963 = vld [vmem:[%s225 + $0x1070] sm:$0xf]
      %v1964 = vld [vmem:[%s225 + $0x1074] sm:$0xf]
      %v1965 = vld [vmem:[%s225 + $0x1078] sm:$0xf]
      %v1966 = vld [vmem:[%s225 + $0x107c] sm:$0xf]
      %v1967 = vld [vmem:[%s225 + $0x1080] sm:$0xf]
      %v1968 = vld [vmem:[%s225 + $0x1084] sm:$0xf]
      %v1969 = vld [vmem:[%s225 + $0x1088] sm:$0xf]
      %v1970 = vld [vmem:[%s225 + $0x108c] sm:$0xf]
      %v1971 = vld [vmem:[%s225 + $0x1090] sm:$0xf]
      %v1972 = vld [vmem:[%s225 + $0x1094] sm:$0xf]
      %v1973 = vld [vmem:[%s225 + $0x1098] sm:$0xf]
      %v1974 = vld [vmem:[%s225 + $0x109c] sm:$0xf]
      %v1975 = vld [vmem:[%s225 + $0x10a0] sm:$0xf]
      %v1976 = vld [vmem:[%s225 + $0x10a4] sm:$0xf]
      %v1977 = vld [vmem:[%s225 + $0x10a8] sm:$0xf]
      %v1978 = vld [vmem:[%s225 + $0x10ac] sm:$0xf]
      %v1979 = vld [vmem:[%s225 + $0x10b0] sm:$0xf]
      %v1980 = vld [vmem:[%s225 + $0x10b4] sm:$0xf]
      %v1981 = vld [vmem:[%s225 + $0x10b8] sm:$0xf]
      %v1982 = vld [vmem:[%s225 + $0x10bc] sm:$0xf]
      %v1983 = vld [vmem:[%s225 + $0x10c0] sm:$0xf]
      %v1984 = vld [vmem:[%s225 + $0x10c4] sm:$0xf]
      %v1985 = vld [vmem:[%s225 + $0x10c8] sm:$0xf]
      %v1986 = vld [vmem:[%s225 + $0x10cc] sm:$0xf]
      %v1987 = vld [vmem:[%s225 + $0x10d0] sm:$0xf]
      %v1988 = vld [vmem:[%s225 + $0x10d4] sm:$0xf]
      %v1989 = vld [vmem:[%s225 + $0x10d8] sm:$0xf]
      %v1990 = vld [vmem:[%s225 + $0x10dc] sm:$0xf]
      %v1991 = vld [vmem:[%s225 + $0x10e0] sm:$0xf]
      %v1992 = vld [vmem:[%s225 + $0x10e4] sm:$0xf]
      %v1993 = vld [vmem:[%s225 + $0x10e8] sm:$0xf]
      %v1994 = vld [vmem:[%s225 + $0x10ec] sm:$0xf]
      %v1995 = vld [vmem:[%s225 + $0x10f0] sm:$0xf]
      %v1996 = vld [vmem:[%s225 + $0x10f4] sm:$0xf]
      %v1997 = vld [vmem:[%s225 + $0x10f8] sm:$0xf]
      %v1998 = vld [vmem:[%s225 + $0x10fc] sm:$0xf]
      %v1999 = vld [vmem:[%s225 + $0x1100] sm:$0xf]
      %v2000 = vld [vmem:[%s225 + $0x1104] sm:$0xf]
      %v2001 = vld [vmem:[%s225 + $0x1108] sm:$0xf]
      %v2002 = vld [vmem:[%s225 + $0x110c] sm:$0xf]
      %v2003 = vld [vmem:[%s225 + $0x1110] sm:$0xf]
      %v2004 = vld [vmem:[%s225 + $0x1114] sm:$0xf]
      %v2005 = vld [vmem:[%s225 + $0x1118] sm:$0xf]
      %v2006 = vld [vmem:[%s225 + $0x111c] sm:$0xf]
      %v2007 = vld [vmem:[%s225 + $0x1120] sm:$0xf]
      %v2008 = vld [vmem:[%s225 + $0x1124] sm:$0xf]
      %v2009 = vld [vmem:[%s225 + $0x1128] sm:$0xf]
      %v2010 = vld [vmem:[%s225 + $0x112c] sm:$0xf]
      %v2011 = vld [vmem:[%s225 + $0x1130] sm:$0xf]
      %v2012 = vld [vmem:[%s225 + $0x1134] sm:$0xf]
      %v2013 = vld [vmem:[%s225 + $0x1138] sm:$0xf]
      %v2014 = vld [vmem:[%s225 + $0x113c] sm:$0xf]
      %v2015 = vld [vmem:[%s225 + $0x1140] sm:$0xf]
      %v2016 = vld [vmem:[%s225 + $0x1144] sm:$0xf]
      %v2017 = vld [vmem:[%s225 + $0x1148] sm:$0xf]
      %v2018 = vld [vmem:[%s225 + $0x114c] sm:$0xf]
      %v2019 = vld [vmem:[%s225 + $0x1150] sm:$0xf]
      %v2020 = vld [vmem:[%s225 + $0x1154] sm:$0xf]
      %v2021 = vld [vmem:[%s225 + $0x1158] sm:$0xf]
      %v2022 = vld [vmem:[%s225 + $0x115c] sm:$0xf]
      %v2023 = vld [vmem:[%s225 + $0x1160] sm:$0xf]
      %v2024 = vld [vmem:[%s225 + $0x1164] sm:$0xf]
      %v2025 = vld [vmem:[%s225 + $0x1168] sm:$0xf]
      %v2026 = vld [vmem:[%s225 + $0x116c] sm:$0xf]
      %v2027 = vld [vmem:[%s225 + $0x1170] sm:$0xf]
      %v2028 = vld [vmem:[%s225 + $0x1174] sm:$0xf]
      %v2029 = vld [vmem:[%s225 + $0x1178] sm:$0xf]
      %v2030 = vld [vmem:[%s225 + $0x117c] sm:$0xf]
      %v2031 = vld [vmem:[%s225 + $0x1180] sm:$0xf]
      %v2032 = vld [vmem:[%s225 + $0x1184] sm:$0xf]
      %v2033 = vld [vmem:[%s225 + $0x1188] sm:$0xf]
      %v2034 = vld [vmem:[%s225 + $0x118c] sm:$0xf]
      %v2035 = vld [vmem:[%s225 + $0x1190] sm:$0xf]
      %v2036 = vld [vmem:[%s225 + $0x1194] sm:$0xf]
      %v2037 = vld [vmem:[%s225 + $0x1198] sm:$0xf]
      %v2038 = vld [vmem:[%s225 + $0x119c] sm:$0xf]
      %v2039 = vld [vmem:[%s225 + $0x11a0] sm:$0xf]
      %v2040 = vld [vmem:[%s225 + $0x11a4] sm:$0xf]
      %v2041 = vld [vmem:[%s225 + $0x11a8] sm:$0xf]
      %v2042 = vld [vmem:[%s225 + $0x11ac] sm:$0xf]
      %v2043 = vld [vmem:[%s225 + $0x11b0] sm:$0xf]
      %v2044 = vld [vmem:[%s225 + $0x11b4] sm:$0xf]
      %v2045 = vld [vmem:[%s225 + $0x11b8] sm:$0xf]
      %v2046 = vld [vmem:[%s225 + $0x11bc] sm:$0xf]
      %v2047 = vld [vmem:[%s225 + $0x11c0] sm:$0xf]
      %v2048 = vld [vmem:[%s225 + $0x11c4] sm:$0xf]
      %v2049 = vld [vmem:[%s225 + $0x11c8] sm:$0xf]
      %v2050 = vld [vmem:[%s225 + $0x11cc] sm:$0xf]
      %v2051 = vld [vmem:[%s225 + $0x11d0] sm:$0xf]
      %v2052 = vld [vmem:[%s225 + $0x11d4] sm:$0xf]
      %v2053 = vld [vmem:[%s225 + $0x11d8] sm:$0xf]
      %v2054 = vld [vmem:[%s225 + $0x11dc] sm:$0xf]
      %v2055 = vld [vmem:[%s225 + $0x11e0] sm:$0xf]
      %v2056 = vld [vmem:[%s225 + $0x11e4] sm:$0xf]
      %v2057 = vld [vmem:[%s225 + $0x11e8] sm:$0xf]
      %v2058 = vld [vmem:[%s225 + $0x11ec] sm:$0xf]
      %v2059 = vld [vmem:[%s225 + $0x11f0] sm:$0xf]
      %v2060 = vld [vmem:[%s225 + $0x11f4] sm:$0xf]
      %v2061 = vld [vmem:[%s225 + $0x11f8] sm:$0xf]
      %v2062 = vld [vmem:[%s225 + $0x11fc] sm:$0xf]
      %v2063 = vld [vmem:[%s225 + $0x1200] sm:$0xf]
      %v2064 = vld [vmem:[%s225 + $0x1204] sm:$0xf]
      %v2065 = vld [vmem:[%s225 + $0x1208] sm:$0xf]
      %v2066 = vld [vmem:[%s225 + $0x120c] sm:$0xf]
      %v2067 = vld [vmem:[%s225 + $0x1210] sm:$0xf]
      %v2068 = vld [vmem:[%s225 + $0x1214] sm:$0xf]
      %v2069 = vld [vmem:[%s225 + $0x1218] sm:$0xf]
      %v2070 = vld [vmem:[%s225 + $0x121c] sm:$0xf]
      %v2071 = vld [vmem:[%s225 + $0x1220] sm:$0xf]
      %v2072 = vld [vmem:[%s225 + $0x1224] sm:$0xf]
      %v2073 = vld [vmem:[%s225 + $0x1228] sm:$0xf]
      %v2074 = vld [vmem:[%s225 + $0x122c] sm:$0xf]
      %v2075 = vld [vmem:[%s225 + $0x1230] sm:$0xf]
      %v2076 = vld [vmem:[%s225 + $0x1234] sm:$0xf]
      %v2077 = vld [vmem:[%s225 + $0x1238] sm:$0xf]
      %v2078 = vld [vmem:[%s225 + $0x123c] sm:$0xf]
      %v2079 = vld [vmem:[%s225 + $0x1240] sm:$0xf]
      %v2080 = vld [vmem:[%s225 + $0x1244] sm:$0xf]
      %v2081 = vld [vmem:[%s225 + $0x1248] sm:$0xf]
      %v2082 = vld [vmem:[%s225 + $0x124c] sm:$0xf]
      %v2083 = vld [vmem:[%s225 + $0x1250] sm:$0xf]
      %v2084 = vld [vmem:[%s225 + $0x1254] sm:$0xf]
      %v2085 = vld [vmem:[%s225 + $0x1258] sm:$0xf]
      %v2086 = vld [vmem:[%s225 + $0x125c] sm:$0xf]
      %v2087 = vld [vmem:[%s225 + $0x1260] sm:$0xf]
      %v2088 = vld [vmem:[%s225 + $0x1264] sm:$0xf]
      %v2089 = vld [vmem:[%s225 + $0x1268] sm:$0xf]
      %v2090 = vld [vmem:[%s225 + $0x126c] sm:$0xf]
      %v2091 = vld [vmem:[%s225 + $0x1270] sm:$0xf]
      %v2092 = vld [vmem:[%s225 + $0x1274] sm:$0xf]
      %v2093 = vld [vmem:[%s225 + $0x1278] sm:$0xf]
      %v2094 = vld [vmem:[%s225 + $0x127c] sm:$0xf]
      %v2095 = vld [vmem:[%s225 + $0x1280] sm:$0xf]
      %v2096 = vld [vmem:[%s225 + $0x1284] sm:$0xf]
      %v2097 = vld [vmem:[%s225 + $0x1288] sm:$0xf]
      %v2098 = vld [vmem:[%s225 + $0x128c] sm:$0xf]
      %v2099 = vld [vmem:[%s225 + $0x1290] sm:$0xf]
      %v2100 = vld [vmem:[%s225 + $0x1294] sm:$0xf]
      %v2101 = vld [vmem:[%s225 + $0x1298] sm:$0xf]
      %v2102 = vld [vmem:[%s225 + $0x129c] sm:$0xf]
      %v2103 = vld [vmem:[%s225 + $0x12a0] sm:$0xf]
      %v2104 = vld [vmem:[%s225 + $0x12a4] sm:$0xf]
      %v2105 = vld [vmem:[%s225 + $0x12a8] sm:$0xf]
      %v2106 = vld [vmem:[%s225 + $0x12ac] sm:$0xf]
      %v2107 = vld [vmem:[%s225 + $0x12b0] sm:$0xf]
      %v2108 = vld [vmem:[%s225 + $0x12b4] sm:$0xf]
      %v2109 = vld [vmem:[%s225 + $0x12b8] sm:$0xf]
      %v2110 = vld [vmem:[%s225 + $0x12bc] sm:$0xf]
      %v2111 = vld [vmem:[%s225 + $0x12c0] sm:$0xf]
      %v2112 = vld [vmem:[%s225 + $0x12c4] sm:$0xf]
      %v2113 = vld [vmem:[%s225 + $0x12c8] sm:$0xf]
      %v2114 = vld [vmem:[%s225 + $0x12cc] sm:$0xf]
      %v2115 = vld [vmem:[%s225 + $0x12d0] sm:$0xf]
      %v2116 = vld [vmem:[%s225 + $0x12d4] sm:$0xf]
      %v2117 = vld [vmem:[%s225 + $0x12d8] sm:$0xf]
      %v2118 = vld [vmem:[%s225 + $0x12dc] sm:$0xf]
      %v2119 = vld [vmem:[%s225 + $0x12e0] sm:$0xf]
      %v2120 = vld [vmem:[%s225 + $0x12e4] sm:$0xf]
      %v2121 = vld [vmem:[%s225 + $0x12e8] sm:$0xf]
      %v2122 = vld [vmem:[%s225 + $0x12ec] sm:$0xf]
      %v2123 = vld [vmem:[%s225 + $0x12f0] sm:$0xf]
      %v2124 = vld [vmem:[%s225 + $0x12f4] sm:$0xf]
      %v2125 = vld [vmem:[%s225 + $0x12f8] sm:$0xf]
      %v2126 = vld [vmem:[%s225 + $0x12fc] sm:$0xf]
      %v2127 = vld [vmem:[%s225 + $0x1300] sm:$0xf]
      %v2128 = vld [vmem:[%s225 + $0x1304] sm:$0xf]
      %v2129 = vld [vmem:[%s225 + $0x1308] sm:$0xf]
      %v2130 = vld [vmem:[%s225 + $0x130c] sm:$0xf]
      %v2131 = vld [vmem:[%s225 + $0x1310] sm:$0xf]
      %v2132 = vld [vmem:[%s225 + $0x1314] sm:$0xf]
      %v2133 = vld [vmem:[%s225 + $0x1318] sm:$0xf]
      %v2134 = vld [vmem:[%s225 + $0x131c] sm:$0xf]
      %v2135 = vld [vmem:[%s225 + $0x1320] sm:$0xf]
      %v2136 = vld [vmem:[%s225 + $0x1324] sm:$0xf]
      %v2137 = vld [vmem:[%s225 + $0x1328] sm:$0xf]
      %v2138 = vld [vmem:[%s225 + $0x132c] sm:$0xf]
      %v2139 = vld [vmem:[%s225 + $0x1330] sm:$0xf]
      %v2140 = vld [vmem:[%s225 + $0x1334] sm:$0xf]
      %v2141 = vld [vmem:[%s225 + $0x1338] sm:$0xf]
      %v2142 = vld [vmem:[%s225 + $0x133c] sm:$0xf]
      %v2143 = vld [vmem:[%s225 + $0x1340] sm:$0xf]
      %v2144 = vld [vmem:[%s225 + $0x1344] sm:$0xf]
      %v2145 = vld [vmem:[%s225 + $0x1348] sm:$0xf]
      %v2146 = vld [vmem:[%s225 + $0x134c] sm:$0xf]
      %v2147 = vld [vmem:[%s225 + $0x1350] sm:$0xf]
      %v2148 = vld [vmem:[%s225 + $0x1354] sm:$0xf]
      %v2149 = vld [vmem:[%s225 + $0x1358] sm:$0xf]
      %v2150 = vld [vmem:[%s225 + $0x135c] sm:$0xf]
      %v2151 = vld [vmem:[%s225 + $0x1360] sm:$0xf]
      %v2152 = vld [vmem:[%s225 + $0x1364] sm:$0xf]
      %v2153 = vld [vmem:[%s225 + $0x1368] sm:$0xf]
      %v2154 = vld [vmem:[%s225 + $0x136c] sm:$0xf]
      %v2155 = vld [vmem:[%s225 + $0x1370] sm:$0xf]
      %v2156 = vld [vmem:[%s225 + $0x1374] sm:$0xf]
      %v2157 = vld [vmem:[%s225 + $0x1378] sm:$0xf]
      %v2158 = vld [vmem:[%s225 + $0x137c] sm:$0xf]
      %v2159 = vld [vmem:[%s225 + $0x1380] sm:$0xf]
      %v2160 = vld [vmem:[%s225 + $0x1384] sm:$0xf]
      %v2161 = vld [vmem:[%s225 + $0x1388] sm:$0xf]
      %v2162 = vld [vmem:[%s225 + $0x138c] sm:$0xf]
      %v2163 = vld [vmem:[%s225 + $0x1390] sm:$0xf]
      %v2164 = vld [vmem:[%s225 + $0x1394] sm:$0xf]
      %v2165 = vld [vmem:[%s225 + $0x1398] sm:$0xf]
      %v2166 = vld [vmem:[%s225 + $0x139c] sm:$0xf]
      %v2167 = vld [vmem:[%s225 + $0x13a0] sm:$0xf]
      %v2168 = vld [vmem:[%s225 + $0x13a4] sm:$0xf]
      %v2169 = vld [vmem:[%s225 + $0x13a8] sm:$0xf]
      %v2170 = vld [vmem:[%s225 + $0x13ac] sm:$0xf]
      %v2171 = vld [vmem:[%s225 + $0x13b0] sm:$0xf]
      %v2172 = vld [vmem:[%s225 + $0x13b4] sm:$0xf]
      %v2173 = vld [vmem:[%s225 + $0x13b8] sm:$0xf]
      %v2174 = vld [vmem:[%s225 + $0x13bc] sm:$0xf]
      %v2175 = vld [vmem:[%s225 + $0x13c0] sm:$0xf]
      %v2176 = vld [vmem:[%s225 + $0x13c4] sm:$0xf]
      %v2177 = vld [vmem:[%s225 + $0x13c8] sm:$0xf]
      %v2178 = vld [vmem:[%s225 + $0x13cc] sm:$0xf]
      %v2179 = vld [vmem:[%s225 + $0x13d0] sm:$0xf]
      %v2180 = vld [vmem:[%s225 + $0x13d4] sm:$0xf]
      %v2181 = vld [vmem:[%s225 + $0x13d8] sm:$0xf]
      %v2182 = vld [vmem:[%s225 + $0x13dc] sm:$0xf]
      %v2183 = vld [vmem:[%s225 + $0x13e0] sm:$0xf]
      %v2184 = vld [vmem:[%s225 + $0x13e4] sm:$0xf]
      %v2185 = vld [vmem:[%s225 + $0x13e8] sm:$0xf]
      %v2186 = vld [vmem:[%s225 + $0x13ec] sm:$0xf]
      %v2187 = vld [vmem:[%s225 + $0x13f0] sm:$0xf]
      %v2188 = vld [vmem:[%s225 + $0x13f4] sm:$0xf]
      %v2189 = vld [vmem:[%s225 + $0x13f8] sm:$0xf]
      %v2190 = vld [vmem:[%s225 + $0x13fc] sm:$0xf]
      %v2191 = vld [vmem:[%s225 + $0x1400] sm:$0xf]
      %v2192 = vld [vmem:[%s225 + $0x1404] sm:$0xf]
      %v2193 = vld [vmem:[%s225 + $0x1408] sm:$0xf]
      %v2194 = vld [vmem:[%s225 + $0x140c] sm:$0xf]
      %v2195 = vld [vmem:[%s225 + $0x1410] sm:$0xf]
      %v2196 = vld [vmem:[%s225 + $0x1414] sm:$0xf]
      %v2197 = vld [vmem:[%s225 + $0x1418] sm:$0xf]
      %v2198 = vld [vmem:[%s225 + $0x141c] sm:$0xf]
      %v2199 = vld [vmem:[%s225 + $0x1420] sm:$0xf]
      %v2200 = vld [vmem:[%s225 + $0x1424] sm:$0xf]
      %v2201 = vld [vmem:[%s225 + $0x1428] sm:$0xf]
      %v2202 = vld [vmem:[%s225 + $0x142c] sm:$0xf]
      %v2203 = vld [vmem:[%s225 + $0x1430] sm:$0xf]
      %v2204 = vld [vmem:[%s225 + $0x1434] sm:$0xf]
      %v2205 = vld [vmem:[%s225 + $0x1438] sm:$0xf]
      %v2206 = vld [vmem:[%s225 + $0x143c] sm:$0xf]
      %v2207 = vld [vmem:[%s225 + $0x1440] sm:$0xf]
      %v2208 = vld [vmem:[%s225 + $0x1444] sm:$0xf]
      %v2209 = vld [vmem:[%s225 + $0x1448] sm:$0xf]
      %v2210 = vld [vmem:[%s225 + $0x144c] sm:$0xf]
      %v2211 = vld [vmem:[%s225 + $0x1450] sm:$0xf]
      %v2212 = vld [vmem:[%s225 + $0x1454] sm:$0xf]
      %v2213 = vld [vmem:[%s225 + $0x1458] sm:$0xf]
      %v2214 = vld [vmem:[%s225 + $0x145c] sm:$0xf]
      %v2215 = vld [vmem:[%s225 + $0x1460] sm:$0xf]
      %v2216 = vld [vmem:[%s225 + $0x1464] sm:$0xf]
      %v2217 = vld [vmem:[%s225 + $0x1468] sm:$0xf]
      %v2218 = vld [vmem:[%s225 + $0x146c] sm:$0xf]
      %v2219 = vld [vmem:[%s225 + $0x1470] sm:$0xf]
      %v2220 = vld [vmem:[%s225 + $0x1474] sm:$0xf]
      %v2221 = vld [vmem:[%s225 + $0x1478] sm:$0xf]
      %v2222 = vld [vmem:[%s225 + $0x147c] sm:$0xf]
      %v2223 = vld [vmem:[%s225 + $0x1480] sm:$0xf]
      %v2224 = vld [vmem:[%s225 + $0x1484] sm:$0xf]
      %v2225 = vld [vmem:[%s225 + $0x1488] sm:$0xf]
      %v2226 = vld [vmem:[%s225 + $0x148c] sm:$0xf]
      %v2227 = vld [vmem:[%s225 + $0x1490] sm:$0xf]
      %v2228 = vld [vmem:[%s225 + $0x1494] sm:$0xf]
      %v2229 = vld [vmem:[%s225 + $0x1498] sm:$0xf]
      %v2230 = vld [vmem:[%s225 + $0x149c] sm:$0xf]
      %v2231 = vld [vmem:[%s225 + $0x14a0] sm:$0xf]
      %v2232 = vld [vmem:[%s225 + $0x14a4] sm:$0xf]
      %v2233 = vld [vmem:[%s225 + $0x14a8] sm:$0xf]
      %v2234 = vld [vmem:[%s225 + $0x14ac] sm:$0xf]
      %v2235 = vld [vmem:[%s225 + $0x14b0] sm:$0xf]
      %v2236 = vld [vmem:[%s225 + $0x14b4] sm:$0xf]
      %v2237 = vld [vmem:[%s225 + $0x14b8] sm:$0xf]
      %v2238 = vld [vmem:[%s225 + $0x14bc] sm:$0xf]
      %v2239 = vld [vmem:[%s225 + $0x14c0] sm:$0xf]
      %v2240 = vld [vmem:[%s225 + $0x14c4] sm:$0xf]
      %v2241 = vld [vmem:[%s225 + $0x14c8] sm:$0xf]
      %v2242 = vld [vmem:[%s225 + $0x14cc] sm:$0xf]
      %v2243 = vld [vmem:[%s225 + $0x14d0] sm:$0xf]
      %v2244 = vld [vmem:[%s225 + $0x14d4] sm:$0xf]
      %v2245 = vld [vmem:[%s225 + $0x14d8] sm:$0xf]
      %v2246 = vld [vmem:[%s225 + $0x14dc] sm:$0xf]
      %v2247 = vld [vmem:[%s225 + $0x14e0] sm:$0xf]
      %v2248 = vld [vmem:[%s225 + $0x14e4] sm:$0xf]
      %v2249 = vld [vmem:[%s225 + $0x14e8] sm:$0xf]
      %v2250 = vld [vmem:[%s225 + $0x14ec] sm:$0xf]
      %v2251 = vld [vmem:[%s225 + $0x14f0] sm:$0xf]
      %v2252 = vld [vmem:[%s225 + $0x14f4] sm:$0xf]
      %v2253 = vld [vmem:[%s225 + $0x14f8] sm:$0xf]
      %v2254 = vld [vmem:[%s225 + $0x14fc] sm:$0xf]
      %v2255 = vld [vmem:[%s225 + $0x1500] sm:$0xf]
      %v2256 = vld [vmem:[%s225 + $0x1504] sm:$0xf]
      %v2257 = vld [vmem:[%s225 + $0x1508] sm:$0xf]
      %v2258 = vld [vmem:[%s225 + $0x150c] sm:$0xf]
      %v2259 = vld [vmem:[%s225 + $0x1510] sm:$0xf]
      %v2260 = vld [vmem:[%s225 + $0x1514] sm:$0xf]
      %v2261 = vld [vmem:[%s225 + $0x1518] sm:$0xf]
      %v2262 = vld [vmem:[%s225 + $0x151c] sm:$0xf]
      %v2263 = vld [vmem:[%s225 + $0x1520] sm:$0xf]
      %v2264 = vld [vmem:[%s225 + $0x1524] sm:$0xf]
      %v2265 = vld [vmem:[%s225 + $0x1528] sm:$0xf]
      %v2266 = vld [vmem:[%s225 + $0x152c] sm:$0xf]
      %v2267 = vld [vmem:[%s225 + $0x1530] sm:$0xf]
      %v2268 = vld [vmem:[%s225 + $0x1534] sm:$0xf]
      %v2269 = vld [vmem:[%s225 + $0x1538] sm:$0xf]
      %v2270 = vld [vmem:[%s225 + $0x153c] sm:$0xf]
      %v2271 = vld [vmem:[%s225 + $0x1540] sm:$0xf]
      %v2272 = vld [vmem:[%s225 + $0x1544] sm:$0xf]
      %v2273 = vld [vmem:[%s225 + $0x1548] sm:$0xf]
      %v2274 = vld [vmem:[%s225 + $0x154c] sm:$0xf]
      %v2275 = vld [vmem:[%s225 + $0x1550] sm:$0xf]
      %v2276 = vld [vmem:[%s225 + $0x1554] sm:$0xf]
      %v2277 = vld [vmem:[%s225 + $0x1558] sm:$0xf]
      %v2278 = vld [vmem:[%s225 + $0x155c] sm:$0xf]
      %v2279 = vld [vmem:[%s225 + $0x1560] sm:$0xf]
      %v2280 = vld [vmem:[%s225 + $0x1564] sm:$0xf]
      %v2281 = vld [vmem:[%s225 + $0x1568] sm:$0xf]
      %v2282 = vld [vmem:[%s225 + $0x156c] sm:$0xf]
      %v2283 = vld [vmem:[%s225 + $0x1570] sm:$0xf]
      %v2284 = vld [vmem:[%s225 + $0x1574] sm:$0xf]
      %v2285 = vld [vmem:[%s225 + $0x1578] sm:$0xf]
      %v2286 = vld [vmem:[%s225 + $0x157c] sm:$0xf]
      %v2287 = vld [vmem:[%s225 + $0x1580] sm:$0xf]
      %v2288 = vld [vmem:[%s225 + $0x1584] sm:$0xf]
      %v2289 = vld [vmem:[%s225 + $0x1588] sm:$0xf]
      %v2290 = vld [vmem:[%s225 + $0x158c] sm:$0xf]
      %v2291 = vld [vmem:[%s225 + $0x1590] sm:$0xf]
      %v2292 = vld [vmem:[%s225 + $0x1594] sm:$0xf]
      %v2293 = vld [vmem:[%s225 + $0x1598] sm:$0xf]
      %v2294 = vld [vmem:[%s225 + $0x159c] sm:$0xf]
      %v2295 = vld [vmem:[%s225 + $0x15a0] sm:$0xf]
      %v2296 = vld [vmem:[%s225 + $0x15a4] sm:$0xf]
      %v2297 = vld [vmem:[%s225 + $0x15a8] sm:$0xf]
      %v2298 = vld [vmem:[%s225 + $0x15ac] sm:$0xf]
      %v2299 = vld [vmem:[%s225 + $0x15b0] sm:$0xf]
      %v2300 = vld [vmem:[%s225 + $0x15b4] sm:$0xf]
      %v2301 = vld [vmem:[%s225 + $0x15b8] sm:$0xf]
      %v2302 = vld [vmem:[%s225 + $0x15bc] sm:$0xf]
      %v2303 = vld [vmem:[%s225 + $0x15c0] sm:$0xf]
      %v2304 = vld [vmem:[%s225 + $0x15c4] sm:$0xf]
      %v2305 = vld [vmem:[%s225 + $0x15c8] sm:$0xf]
      %v2306 = vld [vmem:[%s225 + $0x15cc] sm:$0xf]
      %v2307 = vld [vmem:[%s225 + $0x15d0] sm:$0xf]
      %v2308 = vld [vmem:[%s225 + $0x15d4] sm:$0xf]
      %v2309 = vld [vmem:[%s225 + $0x15d8] sm:$0xf]
      %v2310 = vld [vmem:[%s225 + $0x15dc] sm:$0xf]
      %v2311 = vld [vmem:[%s225 + $0x15e0] sm:$0xf]
      %v2312 = vld [vmem:[%s225 + $0x15e4] sm:$0xf]
      %v2313 = vld [vmem:[%s225 + $0x15e8] sm:$0xf]
      %v2314 = vld [vmem:[%s225 + $0x15ec] sm:$0xf]
      %v2315 = vld [vmem:[%s225 + $0x15f0] sm:$0xf]
      %v2316 = vld [vmem:[%s225 + $0x15f4] sm:$0xf]
      %v2317 = vld [vmem:[%s225 + $0x15f8] sm:$0xf]
      %v2318 = vld [vmem:[%s225 + $0x15fc] sm:$0xf]
      %v2319 = vld [vmem:[%s225 + $0x1600] sm:$0xf]
      %v2320 = vld [vmem:[%s225 + $0x1604] sm:$0xf]
      %v2321 = vld [vmem:[%s225 + $0x1608] sm:$0xf]
      %v2322 = vld [vmem:[%s225 + $0x160c] sm:$0xf]
      %v2323 = vld [vmem:[%s225 + $0x1610] sm:$0xf]
      %v2324 = vld [vmem:[%s225 + $0x1614] sm:$0xf]
      %v2325 = vld [vmem:[%s225 + $0x1618] sm:$0xf]
      %v2326 = vld [vmem:[%s225 + $0x161c] sm:$0xf]
      %v2327 = vld [vmem:[%s225 + $0x1620] sm:$0xf]
      %v2328 = vld [vmem:[%s225 + $0x1624] sm:$0xf]
      %v2329 = vld [vmem:[%s225 + $0x1628] sm:$0xf]
      %v2330 = vld [vmem:[%s225 + $0x162c] sm:$0xf]
      %v2331 = vld [vmem:[%s225 + $0x1630] sm:$0xf]
      %v2332 = vld [vmem:[%s225 + $0x1634] sm:$0xf]
      %v2333 = vld [vmem:[%s225 + $0x1638] sm:$0xf]
      %v2334 = vld [vmem:[%s225 + $0x163c] sm:$0xf]
      %v2335 = vld [vmem:[%s225 + $0x1640] sm:$0xf]
      %v2336 = vld [vmem:[%s225 + $0x1644] sm:$0xf]
      %v2337 = vld [vmem:[%s225 + $0x1648] sm:$0xf]
      %v2338 = vld [vmem:[%s225 + $0x164c] sm:$0xf]
      %v2339 = vld [vmem:[%s225 + $0x1650] sm:$0xf]
      %v2340 = vld [vmem:[%s225 + $0x1654] sm:$0xf]
      %v2341 = vld [vmem:[%s225 + $0x1658] sm:$0xf]
      %v2342 = vld [vmem:[%s225 + $0x165c] sm:$0xf]
      %v2343 = vld [vmem:[%s225 + $0x1660] sm:$0xf]
      %v2344 = vld [vmem:[%s225 + $0x1664] sm:$0xf]
      %v2345 = vld [vmem:[%s225 + $0x1668] sm:$0xf]
      %v2346 = vld [vmem:[%s225 + $0x166c] sm:$0xf]
      %v2347 = vld [vmem:[%s225 + $0x1670] sm:$0xf]
      %v2348 = vld [vmem:[%s225 + $0x1674] sm:$0xf]
      %v2349 = vld [vmem:[%s225 + $0x1678] sm:$0xf]
      %v2350 = vld [vmem:[%s225 + $0x167c] sm:$0xf]
      %v2351 = vld [vmem:[%s225 + $0x1680] sm:$0xf]
      %v2352 = vld [vmem:[%s225 + $0x1684] sm:$0xf]
      %v2353 = vld [vmem:[%s225 + $0x1688] sm:$0xf]
      %v2354 = vld [vmem:[%s225 + $0x168c] sm:$0xf]
      %v2355 = vld [vmem:[%s225 + $0x1690] sm:$0xf]
      %v2356 = vld [vmem:[%s225 + $0x1694] sm:$0xf]
      %v2357 = vld [vmem:[%s225 + $0x1698] sm:$0xf]
      %v2358 = vld [vmem:[%s225 + $0x169c] sm:$0xf]
      %v2359 = vld [vmem:[%s225 + $0x16a0] sm:$0xf]
      %v2360 = vld [vmem:[%s225 + $0x16a4] sm:$0xf]
      %v2361 = vld [vmem:[%s225 + $0x16a8] sm:$0xf]
      %v2362 = vld [vmem:[%s225 + $0x16ac] sm:$0xf]
      %v2363 = vld [vmem:[%s225 + $0x16b0] sm:$0xf]
      %v2364 = vld [vmem:[%s225 + $0x16b4] sm:$0xf]
      %v2365 = vld [vmem:[%s225 + $0x16b8] sm:$0xf]
      %v2366 = vld [vmem:[%s225 + $0x16bc] sm:$0xf]
      %v2367 = vld [vmem:[%s225 + $0x16c0] sm:$0xf]
      %v2368 = vld [vmem:[%s225 + $0x16c4] sm:$0xf]
      %v2369 = vld [vmem:[%s225 + $0x16c8] sm:$0xf]
      %v2370 = vld [vmem:[%s225 + $0x16cc] sm:$0xf]
      %v2371 = vld [vmem:[%s225 + $0x16d0] sm:$0xf]
      %v2372 = vld [vmem:[%s225 + $0x16d4] sm:$0xf]
      %v2373 = vld [vmem:[%s225 + $0x16d8] sm:$0xf]
      %v2374 = vld [vmem:[%s225 + $0x16dc] sm:$0xf]
      %v2375 = vld [vmem:[%s225 + $0x16e0] sm:$0xf]
      %v2376 = vld [vmem:[%s225 + $0x16e4] sm:$0xf]
      %v2377 = vld [vmem:[%s225 + $0x16e8] sm:$0xf]
      %v2378 = vld [vmem:[%s225 + $0x16ec] sm:$0xf]
      %v2379 = vld [vmem:[%s225 + $0x16f0] sm:$0xf]
      %v2380 = vld [vmem:[%s225 + $0x16f4] sm:$0xf]
      %v2381 = vld [vmem:[%s225 + $0x16f8] sm:$0xf]
      %v2382 = vld [vmem:[%s225 + $0x16fc] sm:$0xf]
      %v2383 = vld [vmem:[%s225 + $0x1700] sm:$0xf]
      %v2384 = vld [vmem:[%s225 + $0x1704] sm:$0xf]
      %v2385 = vld [vmem:[%s225 + $0x1708] sm:$0xf]
      %v2386 = vld [vmem:[%s225 + $0x170c] sm:$0xf]
      %v2387 = vld [vmem:[%s225 + $0x1710] sm:$0xf]
      %v2388 = vld [vmem:[%s225 + $0x1714] sm:$0xf]
      %v2389 = vld [vmem:[%s225 + $0x1718] sm:$0xf]
      %v2390 = vld [vmem:[%s225 + $0x171c] sm:$0xf]
      %v2391 = vld [vmem:[%s225 + $0x1720] sm:$0xf]
      %v2392 = vld [vmem:[%s225 + $0x1724] sm:$0xf]
      %v2393 = vld [vmem:[%s225 + $0x1728] sm:$0xf]
      %v2394 = vld [vmem:[%s225 + $0x172c] sm:$0xf]
      %v2395 = vld [vmem:[%s225 + $0x1730] sm:$0xf]
      %v2396 = vld [vmem:[%s225 + $0x1734] sm:$0xf]
      %v2397 = vld [vmem:[%s225 + $0x1738] sm:$0xf]
      %v2398 = vld [vmem:[%s225 + $0x173c] sm:$0xf]
      %v2399 = vld [vmem:[%s225 + $0x1740] sm:$0xf]
      %v2400 = vld [vmem:[%s225 + $0x1744] sm:$0xf]
      %v2401 = vld [vmem:[%s225 + $0x1748] sm:$0xf]
      %v2402 = vld [vmem:[%s225 + $0x174c] sm:$0xf]
      %v2403 = vld [vmem:[%s225 + $0x1750] sm:$0xf]
      %v2404 = vld [vmem:[%s225 + $0x1754] sm:$0xf]
      %v2405 = vld [vmem:[%s225 + $0x1758] sm:$0xf]
      %v2406 = vld [vmem:[%s225 + $0x175c] sm:$0xf]
      %v2407 = vld [vmem:[%s225 + $0x1760] sm:$0xf]
      %v2408 = vld [vmem:[%s225 + $0x1764] sm:$0xf]
      %v2409 = vld [vmem:[%s225 + $0x1768] sm:$0xf]
      %v2410 = vld [vmem:[%s225 + $0x176c] sm:$0xf]
      %v2411 = vld [vmem:[%s225 + $0x1770] sm:$0xf]
      %v2412 = vld [vmem:[%s225 + $0x1774] sm:$0xf]
      %v2413 = vld [vmem:[%s225 + $0x1778] sm:$0xf]
      %v2414 = vld [vmem:[%s225 + $0x177c] sm:$0xf]
      %v2415 = vld [vmem:[%s225 + $0x1780] sm:$0xf]
      %v2416 = vld [vmem:[%s225 + $0x1784] sm:$0xf]
      %v2417 = vld [vmem:[%s225 + $0x1788] sm:$0xf]
      %v2418 = vld [vmem:[%s225 + $0x178c] sm:$0xf]
      %v2419 = vld [vmem:[%s225 + $0x1790] sm:$0xf]
      %v2420 = vld [vmem:[%s225 + $0x1794] sm:$0xf]
      %v2421 = vld [vmem:[%s225 + $0x1798] sm:$0xf]
      %v2422 = vld [vmem:[%s225 + $0x179c] sm:$0xf]
      %v2423 = vld [vmem:[%s225 + $0x17a0] sm:$0xf]
      %v2424 = vld [vmem:[%s225 + $0x17a4] sm:$0xf]
      %v2425 = vld [vmem:[%s225 + $0x17a8] sm:$0xf]
      %v2426 = vld [vmem:[%s225 + $0x17ac] sm:$0xf]
      %v2427 = vld [vmem:[%s225 + $0x17b0] sm:$0xf]
      %v2428 = vld [vmem:[%s225 + $0x17b4] sm:$0xf]
      %v2429 = vld [vmem:[%s225 + $0x17b8] sm:$0xf]
      %v2430 = vld [vmem:[%s225 + $0x17bc] sm:$0xf]
      %v2431 = vld [vmem:[%s225 + $0x17c0] sm:$0xf]
      %v2432 = vld [vmem:[%s225 + $0x17c4] sm:$0xf]
      %v2433 = vld [vmem:[%s225 + $0x17c8] sm:$0xf]
      %v2434 = vld [vmem:[%s225 + $0x17cc] sm:$0xf]
      %v2435 = vld [vmem:[%s225 + $0x17d0] sm:$0xf]
      %v2436 = vld [vmem:[%s225 + $0x17d4] sm:$0xf]
      %v2437 = vld [vmem:[%s225 + $0x17d8] sm:$0xf]
      %v2438 = vld [vmem:[%s225 + $0x17dc] sm:$0xf]
      %v2439 = vld [vmem:[%s225 + $0x17e0] sm:$0xf]
      %v2440 = vld [vmem:[%s225 + $0x17e4] sm:$0xf]
      %v2441 = vld [vmem:[%s225 + $0x17e8] sm:$0xf]
      %v2442 = vld [vmem:[%s225 + $0x17ec] sm:$0xf]
      %v2443 = vld [vmem:[%s225 + $0x17f0] sm:$0xf]
      %v2444 = vld [vmem:[%s225 + $0x17f4] sm:$0xf]
      %v2445 = vld [vmem:[%s225 + $0x17f8] sm:$0xf]
      %v2446 = vld [vmem:[%s225 + $0x17fc] sm:$0xf]
      %v3983 = vunpack.c.l.b16 %v911
      %v3984 = vunpack.c.l.b16 %v912
      %v3985 = vunpack.c.l.b16 %v913
      %v3986 = vunpack.c.l.b16 %v914
      %v3987 = vunpack.c.l.b16 %v915
      %v3988 = vunpack.c.l.b16 %v916
      %v3989 = vunpack.c.l.b16 %v917
      %v3990 = vunpack.c.l.b16 %v918
      %v3991 = vunpack.c.l.b16 %v919
      %v3992 = vunpack.c.l.b16 %v920
      %v3993 = vunpack.c.l.b16 %v921
      %v3994 = vunpack.c.l.b16 %v922
      %v3995 = vunpack.c.l.b16 %v923
      %v3996 = vunpack.c.l.b16 %v924
      %v3997 = vunpack.c.l.b16 %v925
      %v3998 = vunpack.c.l.b16 %v926
      %v3999 = vunpack.c.l.b16 %v927
      %v4000 = vunpack.c.l.b16 %v928
      %v4001 = vunpack.c.l.b16 %v929
      %v4002 = vunpack.c.l.b16 %v930
      %v4003 = vunpack.c.l.b16 %v931
      %v4004 = vunpack.c.l.b16 %v932
      %v4005 = vunpack.c.l.b16 %v933
      %v4006 = vunpack.c.l.b16 %v934
      %v4007 = vunpack.c.l.b16 %v935
      %v4008 = vunpack.c.l.b16 %v936
      %v4009 = vunpack.c.l.b16 %v937
      %v4010 = vunpack.c.l.b16 %v938
      %v4011 = vunpack.c.l.b16 %v939
      %v4012 = vunpack.c.l.b16 %v940
      %v4013 = vunpack.c.l.b16 %v941
      %v4014 = vunpack.c.l.b16 %v942
      %v4015 = vunpack.c.l.b16 %v943
      %v4016 = vunpack.c.l.b16 %v944
      %v4017 = vunpack.c.l.b16 %v945
      %v4018 = vunpack.c.l.b16 %v946
      %v4019 = vunpack.c.l.b16 %v947
      %v4020 = vunpack.c.l.b16 %v948
      %v4021 = vunpack.c.l.b16 %v949
      %v4022 = vunpack.c.l.b16 %v950
      %v4023 = vunpack.c.l.b16 %v951
      %v4024 = vunpack.c.l.b16 %v952
      %v4025 = vunpack.c.l.b16 %v953
      %v4026 = vunpack.c.l.b16 %v954
      %v4027 = vunpack.c.l.b16 %v955
      %v4028 = vunpack.c.l.b16 %v956
      %v4029 = vunpack.c.l.b16 %v957
      %v4030 = vunpack.c.l.b16 %v958
      %v4031 = vunpack.c.l.b16 %v959
      %v4032 = vunpack.c.l.b16 %v960
      %v4033 = vunpack.c.l.b16 %v961
      %v4034 = vunpack.c.l.b16 %v962
      %v4035 = vunpack.c.l.b16 %v963
      %v4036 = vunpack.c.l.b16 %v964
      %v4037 = vunpack.c.l.b16 %v965
      %v4038 = vunpack.c.l.b16 %v966
      %v4039 = vunpack.c.l.b16 %v967
      %v4040 = vunpack.c.l.b16 %v968
      %v4041 = vunpack.c.l.b16 %v969
      %v4042 = vunpack.c.l.b16 %v970
      %v4043 = vunpack.c.l.b16 %v971
      %v4044 = vunpack.c.l.b16 %v972
      %v4045 = vunpack.c.l.b16 %v973
      %v4046 = vunpack.c.l.b16 %v974
      %v4047 = vunpack.c.l.b16 %v975
      %v4048 = vunpack.c.l.b16 %v976
      %v4049 = vunpack.c.l.b16 %v977
      %v4050 = vunpack.c.l.b16 %v978
      %v4051 = vunpack.c.l.b16 %v979
      %v4052 = vunpack.c.l.b16 %v980
      %v4053 = vunpack.c.l.b16 %v981
      %v4054 = vunpack.c.l.b16 %v982
      %v4055 = vunpack.c.l.b16 %v983
      %v4056 = vunpack.c.l.b16 %v984
      %v4057 = vunpack.c.l.b16 %v985
      %v4058 = vunpack.c.l.b16 %v986
      %v4059 = vunpack.c.l.b16 %v987
      %v4060 = vunpack.c.l.b16 %v988
      %v4061 = vunpack.c.l.b16 %v989
      %v4062 = vunpack.c.l.b16 %v990
      %v4063 = vunpack.c.l.b16 %v991
      %v4064 = vunpack.c.l.b16 %v992
      %v4065 = vunpack.c.l.b16 %v993
      %v4066 = vunpack.c.l.b16 %v994
      %v4067 = vunpack.c.l.b16 %v995
      %v4068 = vunpack.c.l.b16 %v996
      %v4069 = vunpack.c.l.b16 %v997
      %v4070 = vunpack.c.l.b16 %v998
      %v4071 = vunpack.c.l.b16 %v999
      %v4072 = vunpack.c.l.b16 %v1000
      %v4073 = vunpack.c.l.b16 %v1001
      %v4074 = vunpack.c.l.b16 %v1002
      %v4075 = vunpack.c.l.b16 %v1003
      %v4076 = vunpack.c.l.b16 %v1004
      %v4077 = vunpack.c.l.b16 %v1005
      %v4078 = vunpack.c.l.b16 %v1006
      %v4079 = vunpack.c.l.b16 %v1007
      %v4080 = vunpack.c.l.b16 %v1008
      %v4081 = vunpack.c.l.b16 %v1009
      %v4082 = vunpack.c.l.b16 %v1010
      %v4083 = vunpack.c.l.b16 %v1011
      %v4084 = vunpack.c.l.b16 %v1012
      %v4085 = vunpack.c.l.b16 %v1013
      %v4086 = vunpack.c.l.b16 %v1014
      %v4087 = vunpack.c.l.b16 %v1015
      %v4088 = vunpack.c.l.b16 %v1016
      %v4089 = vunpack.c.l.b16 %v1017
      %v4090 = vunpack.c.l.b16 %v1018
      %v4091 = vunpack.c.l.b16 %v1019
      %v4092 = vunpack.c.l.b16 %v1020
      %v4093 = vunpack.c.l.b16 %v1021
      %v4094 = vunpack.c.l.b16 %v1022
      %v4095 = vunpack.c.l.b16 %v1023
      %v4096 = vunpack.c.l.b16 %v1024
      %v4097 = vunpack.c.l.b16 %v1025
      %v4098 = vunpack.c.l.b16 %v1026
      %v4099 = vunpack.c.l.b16 %v1027
      %v4100 = vunpack.c.l.b16 %v1028
      %v4101 = vunpack.c.l.b16 %v1029
      %v4102 = vunpack.c.l.b16 %v1030
      %v4103 = vunpack.c.l.b16 %v1031
      %v4104 = vunpack.c.l.b16 %v1032
      %v4105 = vunpack.c.l.b16 %v1033
      %v4106 = vunpack.c.l.b16 %v1034
      %v4107 = vunpack.c.l.b16 %v1035
      %v4108 = vunpack.c.l.b16 %v1036
      %v4109 = vunpack.c.l.b16 %v1037
      %v4110 = vunpack.c.l.b16 %v1038
      %v4111 = vunpack.c.l.b16 %v1039
      %v4112 = vunpack.c.l.b16 %v1040
      %v4113 = vunpack.c.l.b16 %v1041
      %v4114 = vunpack.c.l.b16 %v1042
      %v4115 = vunpack.c.l.b16 %v1043
      %v4116 = vunpack.c.l.b16 %v1044
      %v4117 = vunpack.c.l.b16 %v1045
      %v4118 = vunpack.c.l.b16 %v1046
      %v4119 = vunpack.c.l.b16 %v1047
      %v4120 = vunpack.c.l.b16 %v1048
      %v4121 = vunpack.c.l.b16 %v1049
      %v4122 = vunpack.c.l.b16 %v1050
      %v4123 = vunpack.c.l.b16 %v1051
      %v4124 = vunpack.c.l.b16 %v1052
      %v4125 = vunpack.c.l.b16 %v1053
      %v4126 = vunpack.c.l.b16 %v1054
      %v4127 = vunpack.c.l.b16 %v1055
      %v4128 = vunpack.c.l.b16 %v1056
      %v4129 = vunpack.c.l.b16 %v1057
      %v4130 = vunpack.c.l.b16 %v1058
      %v4131 = vunpack.c.l.b16 %v1059
      %v4132 = vunpack.c.l.b16 %v1060
      %v4133 = vunpack.c.l.b16 %v1061
      %v4134 = vunpack.c.l.b16 %v1062
      %v4135 = vunpack.c.l.b16 %v1063
      %v4136 = vunpack.c.l.b16 %v1064
      %v4137 = vunpack.c.l.b16 %v1065
      %v4138 = vunpack.c.l.b16 %v1066
      %v4139 = vunpack.c.l.b16 %v1067
      %v4140 = vunpack.c.l.b16 %v1068
      %v4141 = vunpack.c.l.b16 %v1069
      %v4142 = vunpack.c.l.b16 %v1070
      %v4143 = vunpack.c.l.b16 %v1071
      %v4144 = vunpack.c.l.b16 %v1072
      %v4145 = vunpack.c.l.b16 %v1073
      %v4146 = vunpack.c.l.b16 %v1074
      %v4147 = vunpack.c.l.b16 %v1075
      %v4148 = vunpack.c.l.b16 %v1076
      %v4149 = vunpack.c.l.b16 %v1077
      %v4150 = vunpack.c.l.b16 %v1078
      %v4151 = vunpack.c.l.b16 %v1079
      %v4152 = vunpack.c.l.b16 %v1080
      %v4153 = vunpack.c.l.b16 %v1081
      %v4154 = vunpack.c.l.b16 %v1082
      %v4155 = vunpack.c.l.b16 %v1083
      %v4156 = vunpack.c.l.b16 %v1084
      %v4157 = vunpack.c.l.b16 %v1085
      %v4158 = vunpack.c.l.b16 %v1086
      %v4159 = vunpack.c.l.b16 %v1087
      %v4160 = vunpack.c.l.b16 %v1088
      %v4161 = vunpack.c.l.b16 %v1089
      %v4162 = vunpack.c.l.b16 %v1090
      %v4163 = vunpack.c.l.b16 %v1091
      %v4164 = vunpack.c.l.b16 %v1092
      %v4165 = vunpack.c.l.b16 %v1093
      %v4166 = vunpack.c.l.b16 %v1094
      %v4167 = vunpack.c.l.b16 %v1095
      %v4168 = vunpack.c.l.b16 %v1096
      %v4169 = vunpack.c.l.b16 %v1097
      %v4170 = vunpack.c.l.b16 %v1098
      %v4171 = vunpack.c.l.b16 %v1099
      %v4172 = vunpack.c.l.b16 %v1100
      %v4173 = vunpack.c.l.b16 %v1101
      %v4174 = vunpack.c.l.b16 %v1102
      %v4175 = vunpack.c.l.b16 %v1103
      %v4176 = vunpack.c.l.b16 %v1104
      %v4177 = vunpack.c.l.b16 %v1105
      %v4178 = vunpack.c.l.b16 %v1106
      %v4179 = vunpack.c.l.b16 %v1107
      %v4180 = vunpack.c.l.b16 %v1108
      %v4181 = vunpack.c.l.b16 %v1109
      %v4182 = vunpack.c.l.b16 %v1110
      %v4183 = vunpack.c.l.b16 %v1111
      %v4184 = vunpack.c.l.b16 %v1112
      %v4185 = vunpack.c.l.b16 %v1113
      %v4186 = vunpack.c.l.b16 %v1114
      %v4187 = vunpack.c.l.b16 %v1115
      %v4188 = vunpack.c.l.b16 %v1116
      %v4189 = vunpack.c.l.b16 %v1117
      %v4190 = vunpack.c.l.b16 %v1118
      %v4191 = vunpack.c.l.b16 %v1119
      %v4192 = vunpack.c.l.b16 %v1120
      %v4193 = vunpack.c.l.b16 %v1121
      %v4194 = vunpack.c.l.b16 %v1122
      %v4195 = vunpack.c.l.b16 %v1123
      %v4196 = vunpack.c.l.b16 %v1124
      %v4197 = vunpack.c.l.b16 %v1125
      %v4198 = vunpack.c.l.b16 %v1126
      %v4199 = vunpack.c.l.b16 %v1127
      %v4200 = vunpack.c.l.b16 %v1128
      %v4201 = vunpack.c.l.b16 %v1129
      %v4202 = vunpack.c.l.b16 %v1130
      %v4203 = vunpack.c.l.b16 %v1131
      %v4204 = vunpack.c.l.b16 %v1132
      %v4205 = vunpack.c.l.b16 %v1133
      %v4206 = vunpack.c.l.b16 %v1134
      %v4207 = vunpack.c.l.b16 %v1135
      %v4208 = vunpack.c.l.b16 %v1136
      %v4209 = vunpack.c.l.b16 %v1137
      %v4210 = vunpack.c.l.b16 %v1138
      %v4211 = vunpack.c.l.b16 %v1139
      %v4212 = vunpack.c.l.b16 %v1140
      %v4213 = vunpack.c.l.b16 %v1141
      %v4214 = vunpack.c.l.b16 %v1142
      %v4215 = vunpack.c.l.b16 %v1143
      %v4216 = vunpack.c.l.b16 %v1144
      %v4217 = vunpack.c.l.b16 %v1145
      %v4218 = vunpack.c.l.b16 %v1146
      %v4219 = vunpack.c.l.b16 %v1147
      %v4220 = vunpack.c.l.b16 %v1148
      %v4221 = vunpack.c.l.b16 %v1149
      %v4222 = vunpack.c.l.b16 %v1150
      %v4223 = vunpack.c.l.b16 %v1151
      %v4224 = vunpack.c.l.b16 %v1152
      %v4225 = vunpack.c.l.b16 %v1153
      %v4226 = vunpack.c.l.b16 %v1154
      %v4227 = vunpack.c.l.b16 %v1155
      %v4228 = vunpack.c.l.b16 %v1156
      %v4229 = vunpack.c.l.b16 %v1157
      %v4230 = vunpack.c.l.b16 %v1158
      %v4231 = vunpack.c.l.b16 %v1159
      %v4232 = vunpack.c.l.b16 %v1160
      %v4233 = vunpack.c.l.b16 %v1161
      %v4234 = vunpack.c.l.b16 %v1162
      %v4235 = vunpack.c.l.b16 %v1163
      %v4236 = vunpack.c.l.b16 %v1164
      %v4237 = vunpack.c.l.b16 %v1165
      %v4238 = vunpack.c.l.b16 %v1166
      %v4239 = vunpack.c.l.b16 %v1167
      %v4240 = vunpack.c.l.b16 %v1168
      %v4241 = vunpack.c.l.b16 %v1169
      %v4242 = vunpack.c.l.b16 %v1170
      %v4243 = vunpack.c.l.b16 %v1171
      %v4244 = vunpack.c.l.b16 %v1172
      %v4245 = vunpack.c.l.b16 %v1173
      %v4246 = vunpack.c.l.b16 %v1174
      %v4247 = vunpack.c.l.b16 %v1175
      %v4248 = vunpack.c.l.b16 %v1176
      %v4249 = vunpack.c.l.b16 %v1177
      %v4250 = vunpack.c.l.b16 %v1178
      %v4251 = vunpack.c.l.b16 %v1179
      %v4252 = vunpack.c.l.b16 %v1180
      %v4253 = vunpack.c.l.b16 %v1181
      %v4254 = vunpack.c.l.b16 %v1182
      %v4255 = vunpack.c.l.b16 %v1183
      %v4256 = vunpack.c.l.b16 %v1184
      %v4257 = vunpack.c.l.b16 %v1185
      %v4258 = vunpack.c.l.b16 %v1186
      %v4259 = vunpack.c.l.b16 %v1187
      %v4260 = vunpack.c.l.b16 %v1188
      %v4261 = vunpack.c.l.b16 %v1189
      %v4262 = vunpack.c.l.b16 %v1190
      %v4263 = vunpack.c.l.b16 %v1191
      %v4264 = vunpack.c.l.b16 %v1192
      %v4265 = vunpack.c.l.b16 %v1193
      %v4266 = vunpack.c.l.b16 %v1194
      %v4267 = vunpack.c.l.b16 %v1195
      %v4268 = vunpack.c.l.b16 %v1196
      %v4269 = vunpack.c.l.b16 %v1197
      %v4270 = vunpack.c.l.b16 %v1198
      %v4271 = vunpack.c.l.b16 %v1199
      %v4272 = vunpack.c.l.b16 %v1200
      %v4273 = vunpack.c.l.b16 %v1201
      %v4274 = vunpack.c.l.b16 %v1202
      %v4275 = vunpack.c.l.b16 %v1203
      %v4276 = vunpack.c.l.b16 %v1204
      %v4277 = vunpack.c.l.b16 %v1205
      %v4278 = vunpack.c.l.b16 %v1206
      %v4279 = vunpack.c.l.b16 %v1207
      %v4280 = vunpack.c.l.b16 %v1208
      %v4281 = vunpack.c.l.b16 %v1209
      %v4282 = vunpack.c.l.b16 %v1210
      %v4283 = vunpack.c.l.b16 %v1211
      %v4284 = vunpack.c.l.b16 %v1212
      %v4285 = vunpack.c.l.b16 %v1213
      %v4286 = vunpack.c.l.b16 %v1214
      %v4287 = vunpack.c.l.b16 %v1215
      %v4288 = vunpack.c.l.b16 %v1216
      %v4289 = vunpack.c.l.b16 %v1217
      %v4290 = vunpack.c.l.b16 %v1218
      %v4291 = vunpack.c.l.b16 %v1219
      %v4292 = vunpack.c.l.b16 %v1220
      %v4293 = vunpack.c.l.b16 %v1221
      %v4294 = vunpack.c.l.b16 %v1222
      %v4295 = vunpack.c.l.b16 %v1223
      %v4296 = vunpack.c.l.b16 %v1224
      %v4297 = vunpack.c.l.b16 %v1225
      %v4298 = vunpack.c.l.b16 %v1226
      %v4299 = vunpack.c.l.b16 %v1227
      %v4300 = vunpack.c.l.b16 %v1228
      %v4301 = vunpack.c.l.b16 %v1229
      %v4302 = vunpack.c.l.b16 %v1230
      %v4303 = vunpack.c.l.b16 %v1231
      %v4304 = vunpack.c.l.b16 %v1232
      %v4305 = vunpack.c.l.b16 %v1233
      %v4306 = vunpack.c.l.b16 %v1234
      %v4307 = vunpack.c.l.b16 %v1235
      %v4308 = vunpack.c.l.b16 %v1236
      %v4309 = vunpack.c.l.b16 %v1237
      %v4310 = vunpack.c.l.b16 %v1238
      %v4311 = vunpack.c.l.b16 %v1239
      %v4312 = vunpack.c.l.b16 %v1240
      %v4313 = vunpack.c.l.b16 %v1241
      %v4314 = vunpack.c.l.b16 %v1242
      %v4315 = vunpack.c.l.b16 %v1243
      %v4316 = vunpack.c.l.b16 %v1244
      %v4317 = vunpack.c.l.b16 %v1245
      %v4318 = vunpack.c.l.b16 %v1246
      %v4319 = vunpack.c.l.b16 %v1247
      %v4320 = vunpack.c.l.b16 %v1248
      %v4321 = vunpack.c.l.b16 %v1249
      %v4322 = vunpack.c.l.b16 %v1250
      %v4323 = vunpack.c.l.b16 %v1251
      %v4324 = vunpack.c.l.b16 %v1252
      %v4325 = vunpack.c.l.b16 %v1253
      %v4326 = vunpack.c.l.b16 %v1254
      %v4327 = vunpack.c.l.b16 %v1255
      %v4328 = vunpack.c.l.b16 %v1256
      %v4329 = vunpack.c.l.b16 %v1257
      %v4330 = vunpack.c.l.b16 %v1258
      %v4331 = vunpack.c.l.b16 %v1259
      %v4332 = vunpack.c.l.b16 %v1260
      %v4333 = vunpack.c.l.b16 %v1261
      %v4334 = vunpack.c.l.b16 %v1262
      %v4335 = vunpack.c.l.b16 %v1263
      %v4336 = vunpack.c.l.b16 %v1264
      %v4337 = vunpack.c.l.b16 %v1265
      %v4338 = vunpack.c.l.b16 %v1266
      %v4339 = vunpack.c.l.b16 %v1267
      %v4340 = vunpack.c.l.b16 %v1268
      %v4341 = vunpack.c.l.b16 %v1269
      %v4342 = vunpack.c.l.b16 %v1270
      %v4343 = vunpack.c.l.b16 %v1271
      %v4344 = vunpack.c.l.b16 %v1272
      %v4345 = vunpack.c.l.b16 %v1273
      %v4346 = vunpack.c.l.b16 %v1274
      %v4347 = vunpack.c.l.b16 %v1275
      %v4348 = vunpack.c.l.b16 %v1276
      %v4349 = vunpack.c.l.b16 %v1277
      %v4350 = vunpack.c.l.b16 %v1278
      %v4351 = vunpack.c.l.b16 %v1279
      %v4352 = vunpack.c.l.b16 %v1280
      %v4353 = vunpack.c.l.b16 %v1281
      %v4354 = vunpack.c.l.b16 %v1282
      %v4355 = vunpack.c.l.b16 %v1283
      %v4356 = vunpack.c.l.b16 %v1284
      %v4357 = vunpack.c.l.b16 %v1285
      %v4358 = vunpack.c.l.b16 %v1286
      %v4359 = vunpack.c.l.b16 %v1287
      %v4360 = vunpack.c.l.b16 %v1288
      %v4361 = vunpack.c.l.b16 %v1289
      %v4362 = vunpack.c.l.b16 %v1290
      %v4363 = vunpack.c.l.b16 %v1291
      %v4364 = vunpack.c.l.b16 %v1292
      %v4365 = vunpack.c.l.b16 %v1293
      %v4366 = vunpack.c.l.b16 %v1294
      %v4367 = vunpack.c.l.b16 %v1295
      %v4368 = vunpack.c.l.b16 %v1296
      %v4369 = vunpack.c.l.b16 %v1297
      %v4370 = vunpack.c.l.b16 %v1298
      %v4371 = vunpack.c.l.b16 %v1299
      %v4372 = vunpack.c.l.b16 %v1300
      %v4373 = vunpack.c.l.b16 %v1301
      %v4374 = vunpack.c.l.b16 %v1302
      %v4375 = vunpack.c.l.b16 %v1303
      %v4376 = vunpack.c.l.b16 %v1304
      %v4377 = vunpack.c.l.b16 %v1305
      %v4378 = vunpack.c.l.b16 %v1306
      %v4379 = vunpack.c.l.b16 %v1307
      %v4380 = vunpack.c.l.b16 %v1308
      %v4381 = vunpack.c.l.b16 %v1309
      %v4382 = vunpack.c.l.b16 %v1310
      %v4383 = vunpack.c.l.b16 %v1311
      %v4384 = vunpack.c.l.b16 %v1312
      %v4385 = vunpack.c.l.b16 %v1313
      %v4386 = vunpack.c.l.b16 %v1314
      %v4387 = vunpack.c.l.b16 %v1315
      %v4388 = vunpack.c.l.b16 %v1316
      %v4389 = vunpack.c.l.b16 %v1317
      %v4390 = vunpack.c.l.b16 %v1318
      %v4391 = vunpack.c.l.b16 %v1319
      %v4392 = vunpack.c.l.b16 %v1320
      %v4393 = vunpack.c.l.b16 %v1321
      %v4394 = vunpack.c.l.b16 %v1322
      %v4395 = vunpack.c.l.b16 %v1323
      %v4396 = vunpack.c.l.b16 %v1324
      %v4397 = vunpack.c.l.b16 %v1325
      %v4398 = vunpack.c.l.b16 %v1326
      %v4399 = vunpack.c.l.b16 %v1327
      %v4400 = vunpack.c.l.b16 %v1328
      %v4401 = vunpack.c.l.b16 %v1329
      %v4402 = vunpack.c.l.b16 %v1330
      %v4403 = vunpack.c.l.b16 %v1331
      %v4404 = vunpack.c.l.b16 %v1332
      %v4405 = vunpack.c.l.b16 %v1333
      %v4406 = vunpack.c.l.b16 %v1334
      %v4407 = vunpack.c.l.b16 %v1335
      %v4408 = vunpack.c.l.b16 %v1336
      %v4409 = vunpack.c.l.b16 %v1337
      %v4410 = vunpack.c.l.b16 %v1338
      %v4411 = vunpack.c.l.b16 %v1339
      %v4412 = vunpack.c.l.b16 %v1340
      %v4413 = vunpack.c.l.b16 %v1341
      %v4414 = vunpack.c.l.b16 %v1342
      %v4415 = vunpack.c.l.b16 %v1343
      %v4416 = vunpack.c.l.b16 %v1344
      %v4417 = vunpack.c.l.b16 %v1345
      %v4418 = vunpack.c.l.b16 %v1346
      %v4419 = vunpack.c.l.b16 %v1347
      %v4420 = vunpack.c.l.b16 %v1348
      %v4421 = vunpack.c.l.b16 %v1349
      %v4422 = vunpack.c.l.b16 %v1350
      %v4423 = vunpack.c.l.b16 %v1351
      %v4424 = vunpack.c.l.b16 %v1352
      %v4425 = vunpack.c.l.b16 %v1353
      %v4426 = vunpack.c.l.b16 %v1354
      %v4427 = vunpack.c.l.b16 %v1355
      %v4428 = vunpack.c.l.b16 %v1356
      %v4429 = vunpack.c.l.b16 %v1357
      %v4430 = vunpack.c.l.b16 %v1358
      %v4431 = vunpack.c.l.b16 %v1359
      %v4432 = vunpack.c.l.b16 %v1360
      %v4433 = vunpack.c.l.b16 %v1361
      %v4434 = vunpack.c.l.b16 %v1362
      %v4435 = vunpack.c.l.b16 %v1363
      %v4436 = vunpack.c.l.b16 %v1364
      %v4437 = vunpack.c.l.b16 %v1365
      %v4438 = vunpack.c.l.b16 %v1366
      %v4439 = vunpack.c.l.b16 %v1367
      %v4440 = vunpack.c.l.b16 %v1368
      %v4441 = vunpack.c.l.b16 %v1369
      %v4442 = vunpack.c.l.b16 %v1370
      %v4443 = vunpack.c.l.b16 %v1371
      %v4444 = vunpack.c.l.b16 %v1372
      %v4445 = vunpack.c.l.b16 %v1373
      %v4446 = vunpack.c.l.b16 %v1374
      %v4447 = vunpack.c.l.b16 %v1375
      %v4448 = vunpack.c.l.b16 %v1376
      %v4449 = vunpack.c.l.b16 %v1377
      %v4450 = vunpack.c.l.b16 %v1378
      %v4451 = vunpack.c.l.b16 %v1379
      %v4452 = vunpack.c.l.b16 %v1380
      %v4453 = vunpack.c.l.b16 %v1381
      %v4454 = vunpack.c.l.b16 %v1382
      %v4455 = vunpack.c.l.b16 %v1383
      %v4456 = vunpack.c.l.b16 %v1384
      %v4457 = vunpack.c.l.b16 %v1385
      %v4458 = vunpack.c.l.b16 %v1386
      %v4459 = vunpack.c.l.b16 %v1387
      %v4460 = vunpack.c.l.b16 %v1388
      %v4461 = vunpack.c.l.b16 %v1389
      %v4462 = vunpack.c.l.b16 %v1390
      %v4463 = vunpack.c.l.b16 %v1391
      %v4464 = vunpack.c.l.b16 %v1392
      %v4465 = vunpack.c.l.b16 %v1393
      %v4466 = vunpack.c.l.b16 %v1394
      %v4467 = vunpack.c.l.b16 %v1395
      %v4468 = vunpack.c.l.b16 %v1396
      %v4469 = vunpack.c.l.b16 %v1397
      %v4470 = vunpack.c.l.b16 %v1398
      %v4471 = vunpack.c.l.b16 %v1399
      %v4472 = vunpack.c.l.b16 %v1400
      %v4473 = vunpack.c.l.b16 %v1401
      %v4474 = vunpack.c.l.b16 %v1402
      %v4475 = vunpack.c.l.b16 %v1403
      %v4476 = vunpack.c.l.b16 %v1404
      %v4477 = vunpack.c.l.b16 %v1405
      %v4478 = vunpack.c.l.b16 %v1406
      %v4479 = vunpack.c.l.b16 %v1407
      %v4480 = vunpack.c.l.b16 %v1408
      %v4481 = vunpack.c.l.b16 %v1409
      %v4482 = vunpack.c.l.b16 %v1410
      %v4483 = vunpack.c.l.b16 %v1411
      %v4484 = vunpack.c.l.b16 %v1412
      %v4485 = vunpack.c.l.b16 %v1413
      %v4486 = vunpack.c.l.b16 %v1414
      %v4487 = vunpack.c.l.b16 %v1415
      %v4488 = vunpack.c.l.b16 %v1416
      %v4489 = vunpack.c.l.b16 %v1417
      %v4490 = vunpack.c.l.b16 %v1418
      %v4491 = vunpack.c.l.b16 %v1419
      %v4492 = vunpack.c.l.b16 %v1420
      %v4493 = vunpack.c.l.b16 %v1421
      %v4494 = vunpack.c.l.b16 %v1422
      %v4495 = vunpack.c.l.b16 %v1423
      %v4496 = vunpack.c.l.b16 %v1424
      %v4497 = vunpack.c.l.b16 %v1425
      %v4498 = vunpack.c.l.b16 %v1426
      %v4499 = vunpack.c.l.b16 %v1427
      %v4500 = vunpack.c.l.b16 %v1428
      %v4501 = vunpack.c.l.b16 %v1429
      %v4502 = vunpack.c.l.b16 %v1430
      %v4503 = vunpack.c.l.b16 %v1431
      %v4504 = vunpack.c.l.b16 %v1432
      %v4505 = vunpack.c.l.b16 %v1433
      %v4506 = vunpack.c.l.b16 %v1434
      %v4507 = vunpack.c.l.b16 %v1435
      %v4508 = vunpack.c.l.b16 %v1436
      %v4509 = vunpack.c.l.b16 %v1437
      %v4510 = vunpack.c.l.b16 %v1438
      %v4511 = vunpack.c.l.b16 %v1439
      %v4512 = vunpack.c.l.b16 %v1440
      %v4513 = vunpack.c.l.b16 %v1441
      %v4514 = vunpack.c.l.b16 %v1442
      %v4515 = vunpack.c.l.b16 %v1443
      %v4516 = vunpack.c.l.b16 %v1444
      %v4517 = vunpack.c.l.b16 %v1445
      %v4518 = vunpack.c.l.b16 %v1446
      %v4519 = vunpack.c.l.b16 %v1447
      %v4520 = vunpack.c.l.b16 %v1448
      %v4521 = vunpack.c.l.b16 %v1449
      %v4522 = vunpack.c.l.b16 %v1450
      %v4523 = vunpack.c.l.b16 %v1451
      %v4524 = vunpack.c.l.b16 %v1452
      %v4525 = vunpack.c.l.b16 %v1453
      %v4526 = vunpack.c.l.b16 %v1454
      %v4527 = vunpack.c.l.b16 %v1455
      %v4528 = vunpack.c.l.b16 %v1456
      %v4529 = vunpack.c.l.b16 %v1457
      %v4530 = vunpack.c.l.b16 %v1458
      %v4531 = vunpack.c.l.b16 %v1459
      %v4532 = vunpack.c.l.b16 %v1460
      %v4533 = vunpack.c.l.b16 %v1461
      %v4534 = vunpack.c.l.b16 %v1462
      %v4535 = vunpack.c.l.b16 %v1463
      %v4536 = vunpack.c.l.b16 %v1464
      %v4537 = vunpack.c.l.b16 %v1465
      %v4538 = vunpack.c.l.b16 %v1466
      %v4539 = vunpack.c.l.b16 %v1467
      %v4540 = vunpack.c.l.b16 %v1468
      %v4541 = vunpack.c.l.b16 %v1469
      %v4542 = vunpack.c.l.b16 %v1470
      %v4543 = vunpack.c.l.b16 %v1471
      %v4544 = vunpack.c.l.b16 %v1472
      %v4545 = vunpack.c.l.b16 %v1473
      %v4546 = vunpack.c.l.b16 %v1474
      %v4547 = vunpack.c.l.b16 %v1475
      %v4548 = vunpack.c.l.b16 %v1476
      %v4549 = vunpack.c.l.b16 %v1477
      %v4550 = vunpack.c.l.b16 %v1478
      %v4551 = vunpack.c.l.b16 %v1479
      %v4552 = vunpack.c.l.b16 %v1480
      %v4553 = vunpack.c.l.b16 %v1481
      %v4554 = vunpack.c.l.b16 %v1482
      %v4555 = vunpack.c.l.b16 %v1483
      %v4556 = vunpack.c.l.b16 %v1484
      %v4557 = vunpack.c.l.b16 %v1485
      %v4558 = vunpack.c.l.b16 %v1486
      %v4559 = vunpack.c.l.b16 %v1487
      %v4560 = vunpack.c.l.b16 %v1488
      %v4561 = vunpack.c.l.b16 %v1489
      %v4562 = vunpack.c.l.b16 %v1490
      %v4563 = vunpack.c.l.b16 %v1491
      %v4564 = vunpack.c.l.b16 %v1492
      %v4565 = vunpack.c.l.b16 %v1493
      %v4566 = vunpack.c.l.b16 %v1494
      %v4567 = vunpack.c.l.b16 %v1495
      %v4568 = vunpack.c.l.b16 %v1496
      %v4569 = vunpack.c.l.b16 %v1497
      %v4570 = vunpack.c.l.b16 %v1498
      %v4571 = vunpack.c.l.b16 %v1499
      %v4572 = vunpack.c.l.b16 %v1500
      %v4573 = vunpack.c.l.b16 %v1501
      %v4574 = vunpack.c.l.b16 %v1502
      %v4575 = vunpack.c.l.b16 %v1503
      %v4576 = vunpack.c.l.b16 %v1504
      %v4577 = vunpack.c.l.b16 %v1505
      %v4578 = vunpack.c.l.b16 %v1506
      %v4579 = vunpack.c.l.b16 %v1507
      %v4580 = vunpack.c.l.b16 %v1508
      %v4581 = vunpack.c.l.b16 %v1509
      %v4582 = vunpack.c.l.b16 %v1510
      %v4583 = vunpack.c.l.b16 %v1511
      %v4584 = vunpack.c.l.b16 %v1512
      %v4585 = vunpack.c.l.b16 %v1513
      %v4586 = vunpack.c.l.b16 %v1514
      %v4587 = vunpack.c.l.b16 %v1515
      %v4588 = vunpack.c.l.b16 %v1516
      %v4589 = vunpack.c.l.b16 %v1517
      %v4590 = vunpack.c.l.b16 %v1518
      %v4591 = vunpack.c.l.b16 %v1519
      %v4592 = vunpack.c.l.b16 %v1520
      %v4593 = vunpack.c.l.b16 %v1521
      %v4594 = vunpack.c.l.b16 %v1522
      %v4595 = vunpack.c.l.b16 %v1523
      %v4596 = vunpack.c.l.b16 %v1524
      %v4597 = vunpack.c.l.b16 %v1525
      %v4598 = vunpack.c.l.b16 %v1526
      %v4599 = vunpack.c.l.b16 %v1527
      %v4600 = vunpack.c.l.b16 %v1528
      %v4601 = vunpack.c.l.b16 %v1529
      %v4602 = vunpack.c.l.b16 %v1530
      %v4603 = vunpack.c.l.b16 %v1531
      %v4604 = vunpack.c.l.b16 %v1532
      %v4605 = vunpack.c.l.b16 %v1533
      %v4606 = vunpack.c.l.b16 %v1534
      %v4607 = vunpack.c.l.b16 %v1535
      %v4608 = vunpack.c.l.b16 %v1536
      %v4609 = vunpack.c.l.b16 %v1537
      %v4610 = vunpack.c.l.b16 %v1538
      %v4611 = vunpack.c.l.b16 %v1539
      %v4612 = vunpack.c.l.b16 %v1540
      %v4613 = vunpack.c.l.b16 %v1541
      %v4614 = vunpack.c.l.b16 %v1542
      %v4615 = vunpack.c.l.b16 %v1543
      %v4616 = vunpack.c.l.b16 %v1544
      %v4617 = vunpack.c.l.b16 %v1545
      %v4618 = vunpack.c.l.b16 %v1546
      %v4619 = vunpack.c.l.b16 %v1547
      %v4620 = vunpack.c.l.b16 %v1548
      %v4621 = vunpack.c.l.b16 %v1549
      %v4622 = vunpack.c.l.b16 %v1550
      %v4623 = vunpack.c.l.b16 %v1551
      %v4624 = vunpack.c.l.b16 %v1552
      %v4625 = vunpack.c.l.b16 %v1553
      %v4626 = vunpack.c.l.b16 %v1554
      %v4627 = vunpack.c.l.b16 %v1555
      %v4628 = vunpack.c.l.b16 %v1556
      %v4629 = vunpack.c.l.b16 %v1557
      %v4630 = vunpack.c.l.b16 %v1558
      %v4631 = vunpack.c.l.b16 %v1559
      %v4632 = vunpack.c.l.b16 %v1560
      %v4633 = vunpack.c.l.b16 %v1561
      %v4634 = vunpack.c.l.b16 %v1562
      %v4635 = vunpack.c.l.b16 %v1563
      %v4636 = vunpack.c.l.b16 %v1564
      %v4637 = vunpack.c.l.b16 %v1565
      %v4638 = vunpack.c.l.b16 %v1566
      %v4639 = vunpack.c.l.b16 %v1567
      %v4640 = vunpack.c.l.b16 %v1568
      %v4641 = vunpack.c.l.b16 %v1569
      %v4642 = vunpack.c.l.b16 %v1570
      %v4643 = vunpack.c.l.b16 %v1571
      %v4644 = vunpack.c.l.b16 %v1572
      %v4645 = vunpack.c.l.b16 %v1573
      %v4646 = vunpack.c.l.b16 %v1574
      %v4647 = vunpack.c.l.b16 %v1575
      %v4648 = vunpack.c.l.b16 %v1576
      %v4649 = vunpack.c.l.b16 %v1577
      %v4650 = vunpack.c.l.b16 %v1578
      %v4651 = vunpack.c.l.b16 %v1579
      %v4652 = vunpack.c.l.b16 %v1580
      %v4653 = vunpack.c.l.b16 %v1581
      %v4654 = vunpack.c.l.b16 %v1582
      %v4655 = vunpack.c.l.b16 %v1583
      %v4656 = vunpack.c.l.b16 %v1584
      %v4657 = vunpack.c.l.b16 %v1585
      %v4658 = vunpack.c.l.b16 %v1586
      %v4659 = vunpack.c.l.b16 %v1587
      %v4660 = vunpack.c.l.b16 %v1588
      %v4661 = vunpack.c.l.b16 %v1589
      %v4662 = vunpack.c.l.b16 %v1590
      %v4663 = vunpack.c.l.b16 %v1591
      %v4664 = vunpack.c.l.b16 %v1592
      %v4665 = vunpack.c.l.b16 %v1593
      %v4666 = vunpack.c.l.b16 %v1594
      %v4667 = vunpack.c.l.b16 %v1595
      %v4668 = vunpack.c.l.b16 %v1596
      %v4669 = vunpack.c.l.b16 %v1597
      %v4670 = vunpack.c.l.b16 %v1598
      %v4671 = vunpack.c.l.b16 %v1599
      %v4672 = vunpack.c.l.b16 %v1600
      %v4673 = vunpack.c.l.b16 %v1601
      %v4674 = vunpack.c.l.b16 %v1602
      %v4675 = vunpack.c.l.b16 %v1603
      %v4676 = vunpack.c.l.b16 %v1604
      %v4677 = vunpack.c.l.b16 %v1605
      %v4678 = vunpack.c.l.b16 %v1606
      %v4679 = vunpack.c.l.b16 %v1607
      %v4680 = vunpack.c.l.b16 %v1608
      %v4681 = vunpack.c.l.b16 %v1609
      %v4682 = vunpack.c.l.b16 %v1610
      %v4683 = vunpack.c.l.b16 %v1611
      %v4684 = vunpack.c.l.b16 %v1612
      %v4685 = vunpack.c.l.b16 %v1613
      %v4686 = vunpack.c.l.b16 %v1614
      %v4687 = vunpack.c.l.b16 %v1615
      %v4688 = vunpack.c.l.b16 %v1616
      %v4689 = vunpack.c.l.b16 %v1617
      %v4690 = vunpack.c.l.b16 %v1618
      %v4691 = vunpack.c.l.b16 %v1619
      %v4692 = vunpack.c.l.b16 %v1620
      %v4693 = vunpack.c.l.b16 %v1621
      %v4694 = vunpack.c.l.b16 %v1622
      %v4695 = vunpack.c.l.b16 %v1623
      %v4696 = vunpack.c.l.b16 %v1624
      %v4697 = vunpack.c.l.b16 %v1625
      %v4698 = vunpack.c.l.b16 %v1626
      %v4699 = vunpack.c.l.b16 %v1627
      %v4700 = vunpack.c.l.b16 %v1628
      %v4701 = vunpack.c.l.b16 %v1629
      %v4702 = vunpack.c.l.b16 %v1630
      %v4703 = vunpack.c.l.b16 %v1631
      %v4704 = vunpack.c.l.b16 %v1632
      %v4705 = vunpack.c.l.b16 %v1633
      %v4706 = vunpack.c.l.b16 %v1634
      %v4707 = vunpack.c.l.b16 %v1635
      %v4708 = vunpack.c.l.b16 %v1636
      %v4709 = vunpack.c.l.b16 %v1637
      %v4710 = vunpack.c.l.b16 %v1638
      %v4711 = vunpack.c.l.b16 %v1639
      %v4712 = vunpack.c.l.b16 %v1640
      %v4713 = vunpack.c.l.b16 %v1641
      %v4714 = vunpack.c.l.b16 %v1642
      %v4715 = vunpack.c.l.b16 %v1643
      %v4716 = vunpack.c.l.b16 %v1644
      %v4717 = vunpack.c.l.b16 %v1645
      %v4718 = vunpack.c.l.b16 %v1646
      %v4719 = vunpack.c.l.b16 %v1647
      %v4720 = vunpack.c.l.b16 %v1648
      %v4721 = vunpack.c.l.b16 %v1649
      %v4722 = vunpack.c.l.b16 %v1650
      %v4723 = vunpack.c.l.b16 %v1651
      %v4724 = vunpack.c.l.b16 %v1652
      %v4725 = vunpack.c.l.b16 %v1653
      %v4726 = vunpack.c.l.b16 %v1654
      %v4727 = vunpack.c.l.b16 %v1655
      %v4728 = vunpack.c.l.b16 %v1656
      %v4729 = vunpack.c.l.b16 %v1657
      %v4730 = vunpack.c.l.b16 %v1658
      %v4731 = vunpack.c.l.b16 %v1659
      %v4732 = vunpack.c.l.b16 %v1660
      %v4733 = vunpack.c.l.b16 %v1661
      %v4734 = vunpack.c.l.b16 %v1662
      %v4735 = vunpack.c.l.b16 %v1663
      %v4736 = vunpack.c.l.b16 %v1664
      %v4737 = vunpack.c.l.b16 %v1665
      %v4738 = vunpack.c.l.b16 %v1666
      %v4739 = vunpack.c.l.b16 %v1667
      %v4740 = vunpack.c.l.b16 %v1668
      %v4741 = vunpack.c.l.b16 %v1669
      %v4742 = vunpack.c.l.b16 %v1670
      %v4743 = vunpack.c.l.b16 %v1671
      %v4744 = vunpack.c.l.b16 %v1672
      %v4745 = vunpack.c.l.b16 %v1673
      %v4746 = vunpack.c.l.b16 %v1674
      %v4747 = vunpack.c.l.b16 %v1675
      %v4748 = vunpack.c.l.b16 %v1676
      %v4749 = vunpack.c.l.b16 %v1677
      %v4750 = vunpack.c.l.b16 %v1678
      %v4751 = vunpack.c.l.b16 %v1679
      %v4752 = vunpack.c.l.b16 %v1680
      %v4753 = vunpack.c.l.b16 %v1681
      %v4754 = vunpack.c.l.b16 %v1682
      %v4755 = vunpack.c.l.b16 %v1683
      %v4756 = vunpack.c.l.b16 %v1684
      %v4757 = vunpack.c.l.b16 %v1685
      %v4758 = vunpack.c.l.b16 %v1686
      %v4759 = vunpack.c.l.b16 %v1687
      %v4760 = vunpack.c.l.b16 %v1688
      %v4761 = vunpack.c.l.b16 %v1689
      %v4762 = vunpack.c.l.b16 %v1690
      %v4763 = vunpack.c.l.b16 %v1691
      %v4764 = vunpack.c.l.b16 %v1692
      %v4765 = vunpack.c.l.b16 %v1693
      %v4766 = vunpack.c.l.b16 %v1694
      %v4767 = vunpack.c.l.b16 %v1695
      %v4768 = vunpack.c.l.b16 %v1696
      %v4769 = vunpack.c.l.b16 %v1697
      %v4770 = vunpack.c.l.b16 %v1698
      %v4771 = vunpack.c.l.b16 %v1699
      %v4772 = vunpack.c.l.b16 %v1700
      %v4773 = vunpack.c.l.b16 %v1701
      %v4774 = vunpack.c.l.b16 %v1702
      %v4775 = vunpack.c.l.b16 %v1703
      %v4776 = vunpack.c.l.b16 %v1704
      %v4777 = vunpack.c.l.b16 %v1705
      %v4778 = vunpack.c.l.b16 %v1706
      %v4779 = vunpack.c.l.b16 %v1707
      %v4780 = vunpack.c.l.b16 %v1708
      %v4781 = vunpack.c.l.b16 %v1709
      %v4782 = vunpack.c.l.b16 %v1710
      %v4783 = vunpack.c.l.b16 %v1711
      %v4784 = vunpack.c.l.b16 %v1712
      %v4785 = vunpack.c.l.b16 %v1713
      %v4786 = vunpack.c.l.b16 %v1714
      %v4787 = vunpack.c.l.b16 %v1715
      %v4788 = vunpack.c.l.b16 %v1716
      %v4789 = vunpack.c.l.b16 %v1717
      %v4790 = vunpack.c.l.b16 %v1718
      %v4791 = vunpack.c.l.b16 %v1719
      %v4792 = vunpack.c.l.b16 %v1720
      %v4793 = vunpack.c.l.b16 %v1721
      %v4794 = vunpack.c.l.b16 %v1722
      %v4795 = vunpack.c.l.b16 %v1723
      %v4796 = vunpack.c.l.b16 %v1724
      %v4797 = vunpack.c.l.b16 %v1725
      %v4798 = vunpack.c.l.b16 %v1726
      %v4799 = vunpack.c.l.b16 %v1727
      %v4800 = vunpack.c.l.b16 %v1728
      %v4801 = vunpack.c.l.b16 %v1729
      %v4802 = vunpack.c.l.b16 %v1730
      %v4803 = vunpack.c.l.b16 %v1731
      %v4804 = vunpack.c.l.b16 %v1732
      %v4805 = vunpack.c.l.b16 %v1733
      %v4806 = vunpack.c.l.b16 %v1734
      %v4807 = vunpack.c.l.b16 %v1735
      %v4808 = vunpack.c.l.b16 %v1736
      %v4809 = vunpack.c.l.b16 %v1737
      %v4810 = vunpack.c.l.b16 %v1738
      %v4811 = vunpack.c.l.b16 %v1739
      %v4812 = vunpack.c.l.b16 %v1740
      %v4813 = vunpack.c.l.b16 %v1741
      %v4814 = vunpack.c.l.b16 %v1742
      %v4815 = vunpack.c.l.b16 %v1743
      %v4816 = vunpack.c.l.b16 %v1744
      %v4817 = vunpack.c.l.b16 %v1745
      %v4818 = vunpack.c.l.b16 %v1746
      %v4819 = vunpack.c.l.b16 %v1747
      %v4820 = vunpack.c.l.b16 %v1748
      %v4821 = vunpack.c.l.b16 %v1749
      %v4822 = vunpack.c.l.b16 %v1750
      %v4823 = vunpack.c.l.b16 %v1751
      %v4824 = vunpack.c.l.b16 %v1752
      %v4825 = vunpack.c.l.b16 %v1753
      %v4826 = vunpack.c.l.b16 %v1754
      %v4827 = vunpack.c.l.b16 %v1755
      %v4828 = vunpack.c.l.b16 %v1756
      %v4829 = vunpack.c.l.b16 %v1757
      %v4830 = vunpack.c.l.b16 %v1758
      %v4831 = vunpack.c.l.b16 %v1759
      %v4832 = vunpack.c.l.b16 %v1760
      %v4833 = vunpack.c.l.b16 %v1761
      %v4834 = vunpack.c.l.b16 %v1762
      %v4835 = vunpack.c.l.b16 %v1763
      %v4836 = vunpack.c.l.b16 %v1764
      %v4837 = vunpack.c.l.b16 %v1765
      %v4838 = vunpack.c.l.b16 %v1766
      %v4839 = vunpack.c.l.b16 %v1767
      %v4840 = vunpack.c.l.b16 %v1768
      %v4841 = vunpack.c.l.b16 %v1769
      %v4842 = vunpack.c.l.b16 %v1770
      %v4843 = vunpack.c.l.b16 %v1771
      %v4844 = vunpack.c.l.b16 %v1772
      %v4845 = vunpack.c.l.b16 %v1773
      %v4846 = vunpack.c.l.b16 %v1774
      %v4847 = vunpack.c.l.b16 %v1775
      %v4848 = vunpack.c.l.b16 %v1776
      %v4849 = vunpack.c.l.b16 %v1777
      %v4850 = vunpack.c.l.b16 %v1778
      %v4851 = vunpack.c.l.b16 %v1779
      %v4852 = vunpack.c.l.b16 %v1780
      %v4853 = vunpack.c.l.b16 %v1781
      %v4854 = vunpack.c.l.b16 %v1782
      %v4855 = vunpack.c.l.b16 %v1783
      %v4856 = vunpack.c.l.b16 %v1784
      %v4857 = vunpack.c.l.b16 %v1785
      %v4858 = vunpack.c.l.b16 %v1786
      %v4859 = vunpack.c.l.b16 %v1787
      %v4860 = vunpack.c.l.b16 %v1788
      %v4861 = vunpack.c.l.b16 %v1789
      %v4862 = vunpack.c.l.b16 %v1790
      %v4863 = vunpack.c.l.b16 %v1791
      %v4864 = vunpack.c.l.b16 %v1792
      %v4865 = vunpack.c.l.b16 %v1793
      %v4866 = vunpack.c.l.b16 %v1794
      %v4867 = vunpack.c.l.b16 %v1795
      %v4868 = vunpack.c.l.b16 %v1796
      %v4869 = vunpack.c.l.b16 %v1797
      %v4870 = vunpack.c.l.b16 %v1798
      %v4871 = vunpack.c.l.b16 %v1799
      %v4872 = vunpack.c.l.b16 %v1800
      %v4873 = vunpack.c.l.b16 %v1801
      %v4874 = vunpack.c.l.b16 %v1802
      %v4875 = vunpack.c.l.b16 %v1803
      %v4876 = vunpack.c.l.b16 %v1804
      %v4877 = vunpack.c.l.b16 %v1805
      %v4878 = vunpack.c.l.b16 %v1806
      %v4879 = vunpack.c.l.b16 %v1807
      %v4880 = vunpack.c.l.b16 %v1808
      %v4881 = vunpack.c.l.b16 %v1809
      %v4882 = vunpack.c.l.b16 %v1810
      %v4883 = vunpack.c.l.b16 %v1811
      %v4884 = vunpack.c.l.b16 %v1812
      %v4885 = vunpack.c.l.b16 %v1813
      %v4886 = vunpack.c.l.b16 %v1814
      %v4887 = vunpack.c.l.b16 %v1815
      %v4888 = vunpack.c.l.b16 %v1816
      %v4889 = vunpack.c.l.b16 %v1817
      %v4890 = vunpack.c.l.b16 %v1818
      %v4891 = vunpack.c.l.b16 %v1819
      %v4892 = vunpack.c.l.b16 %v1820
      %v4893 = vunpack.c.l.b16 %v1821
      %v4894 = vunpack.c.l.b16 %v1822
      %v4895 = vunpack.c.l.b16 %v1823
      %v4896 = vunpack.c.l.b16 %v1824
      %v4897 = vunpack.c.l.b16 %v1825
      %v4898 = vunpack.c.l.b16 %v1826
      %v4899 = vunpack.c.l.b16 %v1827
      %v4900 = vunpack.c.l.b16 %v1828
      %v4901 = vunpack.c.l.b16 %v1829
      %v4902 = vunpack.c.l.b16 %v1830
      %v4903 = vunpack.c.l.b16 %v1831
      %v4904 = vunpack.c.l.b16 %v1832
      %v4905 = vunpack.c.l.b16 %v1833
      %v4906 = vunpack.c.l.b16 %v1834
      %v4907 = vunpack.c.l.b16 %v1835
      %v4908 = vunpack.c.l.b16 %v1836
      %v4909 = vunpack.c.l.b16 %v1837
      %v4910 = vunpack.c.l.b16 %v1838
      %v4911 = vunpack.c.l.b16 %v1839
      %v4912 = vunpack.c.l.b16 %v1840
      %v4913 = vunpack.c.l.b16 %v1841
      %v4914 = vunpack.c.l.b16 %v1842
      %v4915 = vunpack.c.l.b16 %v1843
      %v4916 = vunpack.c.l.b16 %v1844
      %v4917 = vunpack.c.l.b16 %v1845
      %v4918 = vunpack.c.l.b16 %v1846
      %v4919 = vunpack.c.l.b16 %v1847
      %v4920 = vunpack.c.l.b16 %v1848
      %v4921 = vunpack.c.l.b16 %v1849
      %v4922 = vunpack.c.l.b16 %v1850
      %v4923 = vunpack.c.l.b16 %v1851
      %v4924 = vunpack.c.l.b16 %v1852
      %v4925 = vunpack.c.l.b16 %v1853
      %v4926 = vunpack.c.l.b16 %v1854
      %v4927 = vunpack.c.l.b16 %v1855
      %v4928 = vunpack.c.l.b16 %v1856
      %v4929 = vunpack.c.l.b16 %v1857
      %v4930 = vunpack.c.l.b16 %v1858
      %v4931 = vunpack.c.l.b16 %v1859
      %v4932 = vunpack.c.l.b16 %v1860
      %v4933 = vunpack.c.l.b16 %v1861
      %v4934 = vunpack.c.l.b16 %v1862
      %v4935 = vunpack.c.l.b16 %v1863
      %v4936 = vunpack.c.l.b16 %v1864
      %v4937 = vunpack.c.l.b16 %v1865
      %v4938 = vunpack.c.l.b16 %v1866
      %v4939 = vunpack.c.l.b16 %v1867
      %v4940 = vunpack.c.l.b16 %v1868
      %v4941 = vunpack.c.l.b16 %v1869
      %v4942 = vunpack.c.l.b16 %v1870
      %v4943 = vunpack.c.l.b16 %v1871
      %v4944 = vunpack.c.l.b16 %v1872
      %v4945 = vunpack.c.l.b16 %v1873
      %v4946 = vunpack.c.l.b16 %v1874
      %v4947 = vunpack.c.l.b16 %v1875
      %v4948 = vunpack.c.l.b16 %v1876
      %v4949 = vunpack.c.l.b16 %v1877
      %v4950 = vunpack.c.l.b16 %v1878
      %v4951 = vunpack.c.l.b16 %v1879
      %v4952 = vunpack.c.l.b16 %v1880
      %v4953 = vunpack.c.l.b16 %v1881
      %v4954 = vunpack.c.l.b16 %v1882
      %v4955 = vunpack.c.l.b16 %v1883
      %v4956 = vunpack.c.l.b16 %v1884
      %v4957 = vunpack.c.l.b16 %v1885
      %v4958 = vunpack.c.l.b16 %v1886
      %v4959 = vunpack.c.l.b16 %v1887
      %v4960 = vunpack.c.l.b16 %v1888
      %v4961 = vunpack.c.l.b16 %v1889
      %v4962 = vunpack.c.l.b16 %v1890
      %v4963 = vunpack.c.l.b16 %v1891
      %v4964 = vunpack.c.l.b16 %v1892
      %v4965 = vunpack.c.l.b16 %v1893
      %v4966 = vunpack.c.l.b16 %v1894
      %v4967 = vunpack.c.l.b16 %v1895
      %v4968 = vunpack.c.l.b16 %v1896
      %v4969 = vunpack.c.l.b16 %v1897
      %v4970 = vunpack.c.l.b16 %v1898
      %v4971 = vunpack.c.l.b16 %v1899
      %v4972 = vunpack.c.l.b16 %v1900
      %v4973 = vunpack.c.l.b16 %v1901
      %v4974 = vunpack.c.l.b16 %v1902
      %v4975 = vunpack.c.l.b16 %v1903
      %v4976 = vunpack.c.l.b16 %v1904
      %v4977 = vunpack.c.l.b16 %v1905
      %v4978 = vunpack.c.l.b16 %v1906
      %v4979 = vunpack.c.l.b16 %v1907
      %v4980 = vunpack.c.l.b16 %v1908
      %v4981 = vunpack.c.l.b16 %v1909
      %v4982 = vunpack.c.l.b16 %v1910
      %v4983 = vunpack.c.l.b16 %v1911
      %v4984 = vunpack.c.l.b16 %v1912
      %v4985 = vunpack.c.l.b16 %v1913
      %v4986 = vunpack.c.l.b16 %v1914
      %v4987 = vunpack.c.l.b16 %v1915
      %v4988 = vunpack.c.l.b16 %v1916
      %v4989 = vunpack.c.l.b16 %v1917
      %v4990 = vunpack.c.l.b16 %v1918
      %v4991 = vunpack.c.l.b16 %v1919
      %v4992 = vunpack.c.l.b16 %v1920
      %v4993 = vunpack.c.l.b16 %v1921
      %v4994 = vunpack.c.l.b16 %v1922
      %v4995 = vunpack.c.l.b16 %v1923
      %v4996 = vunpack.c.l.b16 %v1924
      %v4997 = vunpack.c.l.b16 %v1925
      %v4998 = vunpack.c.l.b16 %v1926
      %v4999 = vunpack.c.l.b16 %v1927
      %v5000 = vunpack.c.l.b16 %v1928
      %v5001 = vunpack.c.l.b16 %v1929
      %v5002 = vunpack.c.l.b16 %v1930
      %v5003 = vunpack.c.l.b16 %v1931
      %v5004 = vunpack.c.l.b16 %v1932
      %v5005 = vunpack.c.l.b16 %v1933
      %v5006 = vunpack.c.l.b16 %v1934
      %v5007 = vunpack.c.l.b16 %v1935
      %v5008 = vunpack.c.l.b16 %v1936
      %v5009 = vunpack.c.l.b16 %v1937
      %v5010 = vunpack.c.l.b16 %v1938
      %v5011 = vunpack.c.l.b16 %v1939
      %v5012 = vunpack.c.l.b16 %v1940
      %v5013 = vunpack.c.l.b16 %v1941
      %v5014 = vunpack.c.l.b16 %v1942
      %v5015 = vunpack.c.l.b16 %v1943
      %v5016 = vunpack.c.l.b16 %v1944
      %v5017 = vunpack.c.l.b16 %v1945
      %v5018 = vunpack.c.l.b16 %v1946
      %v5019 = vunpack.c.l.b16 %v1947
      %v5020 = vunpack.c.l.b16 %v1948
      %v5021 = vunpack.c.l.b16 %v1949
      %v5022 = vunpack.c.l.b16 %v1950
      %v5023 = vunpack.c.l.b16 %v1951
      %v5024 = vunpack.c.l.b16 %v1952
      %v5025 = vunpack.c.l.b16 %v1953
      %v5026 = vunpack.c.l.b16 %v1954
      %v5027 = vunpack.c.l.b16 %v1955
      %v5028 = vunpack.c.l.b16 %v1956
      %v5029 = vunpack.c.l.b16 %v1957
      %v5030 = vunpack.c.l.b16 %v1958
      %v5031 = vunpack.c.l.b16 %v1959
      %v5032 = vunpack.c.l.b16 %v1960
      %v5033 = vunpack.c.l.b16 %v1961
      %v5034 = vunpack.c.l.b16 %v1962
      %v5035 = vunpack.c.l.b16 %v1963
      %v5036 = vunpack.c.l.b16 %v1964
      %v5037 = vunpack.c.l.b16 %v1965
      %v5038 = vunpack.c.l.b16 %v1966
      %v5039 = vunpack.c.l.b16 %v1967
      %v5040 = vunpack.c.l.b16 %v1968
      %v5041 = vunpack.c.l.b16 %v1969
      %v5042 = vunpack.c.l.b16 %v1970
      %v5043 = vunpack.c.l.b16 %v1971
      %v5044 = vunpack.c.l.b16 %v1972
      %v5045 = vunpack.c.l.b16 %v1973
      %v5046 = vunpack.c.l.b16 %v1974
      %v5047 = vunpack.c.l.b16 %v1975
      %v5048 = vunpack.c.l.b16 %v1976
      %v5049 = vunpack.c.l.b16 %v1977
      %v5050 = vunpack.c.l.b16 %v1978
      %v5051 = vunpack.c.l.b16 %v1979
      %v5052 = vunpack.c.l.b16 %v1980
      %v5053 = vunpack.c.l.b16 %v1981
      %v5054 = vunpack.c.l.b16 %v1982
      %v5055 = vunpack.c.l.b16 %v1983
      %v5056 = vunpack.c.l.b16 %v1984
      %v5057 = vunpack.c.l.b16 %v1985
      %v5058 = vunpack.c.l.b16 %v1986
      %v5059 = vunpack.c.l.b16 %v1987
      %v5060 = vunpack.c.l.b16 %v1988
      %v5061 = vunpack.c.l.b16 %v1989
      %v5062 = vunpack.c.l.b16 %v1990
      %v5063 = vunpack.c.l.b16 %v1991
      %v5064 = vunpack.c.l.b16 %v1992
      %v5065 = vunpack.c.l.b16 %v1993
      %v5066 = vunpack.c.l.b16 %v1994
      %v5067 = vunpack.c.l.b16 %v1995
      %v5068 = vunpack.c.l.b16 %v1996
      %v5069 = vunpack.c.l.b16 %v1997
      %v5070 = vunpack.c.l.b16 %v1998
      %v5071 = vunpack.c.l.b16 %v1999
      %v5072 = vunpack.c.l.b16 %v2000
      %v5073 = vunpack.c.l.b16 %v2001
      %v5074 = vunpack.c.l.b16 %v2002
      %v5075 = vunpack.c.l.b16 %v2003
      %v5076 = vunpack.c.l.b16 %v2004
      %v5077 = vunpack.c.l.b16 %v2005
      %v5078 = vunpack.c.l.b16 %v2006
      %v5079 = vunpack.c.l.b16 %v2007
      %v5080 = vunpack.c.l.b16 %v2008
      %v5081 = vunpack.c.l.b16 %v2009
      %v5082 = vunpack.c.l.b16 %v2010
      %v5083 = vunpack.c.l.b16 %v2011
      %v5084 = vunpack.c.l.b16 %v2012
      %v5085 = vunpack.c.l.b16 %v2013
      %v5086 = vunpack.c.l.b16 %v2014
      %v5087 = vunpack.c.l.b16 %v2015
      %v5088 = vunpack.c.l.b16 %v2016
      %v5089 = vunpack.c.l.b16 %v2017
      %v5090 = vunpack.c.l.b16 %v2018
      %v5091 = vunpack.c.l.b16 %v2019
      %v5092 = vunpack.c.l.b16 %v2020
      %v5093 = vunpack.c.l.b16 %v2021
      %v5094 = vunpack.c.l.b16 %v2022
      %v5095 = vunpack.c.l.b16 %v2023
      %v5096 = vunpack.c.l.b16 %v2024
      %v5097 = vunpack.c.l.b16 %v2025
      %v5098 = vunpack.c.l.b16 %v2026
      %v5099 = vunpack.c.l.b16 %v2027
      %v5100 = vunpack.c.l.b16 %v2028
      %v5101 = vunpack.c.l.b16 %v2029
      %v5102 = vunpack.c.l.b16 %v2030
      %v5103 = vunpack.c.l.b16 %v2031
      %v5104 = vunpack.c.l.b16 %v2032
      %v5105 = vunpack.c.l.b16 %v2033
      %v5106 = vunpack.c.l.b16 %v2034
      %v5107 = vunpack.c.l.b16 %v2035
      %v5108 = vunpack.c.l.b16 %v2036
      %v5109 = vunpack.c.l.b16 %v2037
      %v5110 = vunpack.c.l.b16 %v2038
      %v5111 = vunpack.c.l.b16 %v2039
      %v5112 = vunpack.c.l.b16 %v2040
      %v5113 = vunpack.c.l.b16 %v2041
      %v5114 = vunpack.c.l.b16 %v2042
      %v5115 = vunpack.c.l.b16 %v2043
      %v5116 = vunpack.c.l.b16 %v2044
      %v5117 = vunpack.c.l.b16 %v2045
      %v5118 = vunpack.c.l.b16 %v2046
      %v5119 = vunpack.c.l.b16 %v2047
      %v5120 = vunpack.c.l.b16 %v2048
      %v5121 = vunpack.c.l.b16 %v2049
      %v5122 = vunpack.c.l.b16 %v2050
      %v5123 = vunpack.c.l.b16 %v2051
      %v5124 = vunpack.c.l.b16 %v2052
      %v5125 = vunpack.c.l.b16 %v2053
      %v5126 = vunpack.c.l.b16 %v2054
      %v5127 = vunpack.c.l.b16 %v2055
      %v5128 = vunpack.c.l.b16 %v2056
      %v5129 = vunpack.c.l.b16 %v2057
      %v5130 = vunpack.c.l.b16 %v2058
      %v5131 = vunpack.c.l.b16 %v2059
      %v5132 = vunpack.c.l.b16 %v2060
      %v5133 = vunpack.c.l.b16 %v2061
      %v5134 = vunpack.c.l.b16 %v2062
      %v5135 = vunpack.c.l.b16 %v2063
      %v5136 = vunpack.c.l.b16 %v2064
      %v5137 = vunpack.c.l.b16 %v2065
      %v5138 = vunpack.c.l.b16 %v2066
      %v5139 = vunpack.c.l.b16 %v2067
      %v5140 = vunpack.c.l.b16 %v2068
      %v5141 = vunpack.c.l.b16 %v2069
      %v5142 = vunpack.c.l.b16 %v2070
      %v5143 = vunpack.c.l.b16 %v2071
      %v5144 = vunpack.c.l.b16 %v2072
      %v5145 = vunpack.c.l.b16 %v2073
      %v5146 = vunpack.c.l.b16 %v2074
      %v5147 = vunpack.c.l.b16 %v2075
      %v5148 = vunpack.c.l.b16 %v2076
      %v5149 = vunpack.c.l.b16 %v2077
      %v5150 = vunpack.c.l.b16 %v2078
      %v5151 = vunpack.c.l.b16 %v2079
      %v5152 = vunpack.c.l.b16 %v2080
      %v5153 = vunpack.c.l.b16 %v2081
      %v5154 = vunpack.c.l.b16 %v2082
      %v5155 = vunpack.c.l.b16 %v2083
      %v5156 = vunpack.c.l.b16 %v2084
      %v5157 = vunpack.c.l.b16 %v2085
      %v5158 = vunpack.c.l.b16 %v2086
      %v5159 = vunpack.c.l.b16 %v2087
      %v5160 = vunpack.c.l.b16 %v2088
      %v5161 = vunpack.c.l.b16 %v2089
      %v5162 = vunpack.c.l.b16 %v2090
      %v5163 = vunpack.c.l.b16 %v2091
      %v5164 = vunpack.c.l.b16 %v2092
      %v5165 = vunpack.c.l.b16 %v2093
      %v5166 = vunpack.c.l.b16 %v2094
      %v5167 = vunpack.c.l.b16 %v2095
      %v5168 = vunpack.c.l.b16 %v2096
      %v5169 = vunpack.c.l.b16 %v2097
      %v5170 = vunpack.c.l.b16 %v2098
      %v5171 = vunpack.c.l.b16 %v2099
      %v5172 = vunpack.c.l.b16 %v2100
      %v5173 = vunpack.c.l.b16 %v2101
      %v5174 = vunpack.c.l.b16 %v2102
      %v5175 = vunpack.c.l.b16 %v2103
      %v5176 = vunpack.c.l.b16 %v2104
      %v5177 = vunpack.c.l.b16 %v2105
      %v5178 = vunpack.c.l.b16 %v2106
      %v5179 = vunpack.c.l.b16 %v2107
      %v5180 = vunpack.c.l.b16 %v2108
      %v5181 = vunpack.c.l.b16 %v2109
      %v5182 = vunpack.c.l.b16 %v2110
      %v5183 = vunpack.c.l.b16 %v2111
      %v5184 = vunpack.c.l.b16 %v2112
      %v5185 = vunpack.c.l.b16 %v2113
      %v5186 = vunpack.c.l.b16 %v2114
      %v5187 = vunpack.c.l.b16 %v2115
      %v5188 = vunpack.c.l.b16 %v2116
      %v5189 = vunpack.c.l.b16 %v2117
      %v5190 = vunpack.c.l.b16 %v2118
      %v5191 = vunpack.c.l.b16 %v2119
      %v5192 = vunpack.c.l.b16 %v2120
      %v5193 = vunpack.c.l.b16 %v2121
      %v5194 = vunpack.c.l.b16 %v2122
      %v5195 = vunpack.c.l.b16 %v2123
      %v5196 = vunpack.c.l.b16 %v2124
      %v5197 = vunpack.c.l.b16 %v2125
      %v5198 = vunpack.c.l.b16 %v2126
      %v5199 = vunpack.c.l.b16 %v2127
      %v5200 = vunpack.c.l.b16 %v2128
      %v5201 = vunpack.c.l.b16 %v2129
      %v5202 = vunpack.c.l.b16 %v2130
      %v5203 = vunpack.c.l.b16 %v2131
      %v5204 = vunpack.c.l.b16 %v2132
      %v5205 = vunpack.c.l.b16 %v2133
      %v5206 = vunpack.c.l.b16 %v2134
      %v5207 = vunpack.c.l.b16 %v2135
      %v5208 = vunpack.c.l.b16 %v2136
      %v5209 = vunpack.c.l.b16 %v2137
      %v5210 = vunpack.c.l.b16 %v2138
      %v5211 = vunpack.c.l.b16 %v2139
      %v5212 = vunpack.c.l.b16 %v2140
      %v5213 = vunpack.c.l.b16 %v2141
      %v5214 = vunpack.c.l.b16 %v2142
      %v5215 = vunpack.c.l.b16 %v2143
      %v5216 = vunpack.c.l.b16 %v2144
      %v5217 = vunpack.c.l.b16 %v2145
      %v5218 = vunpack.c.l.b16 %v2146
      %v5219 = vunpack.c.l.b16 %v2147
      %v5220 = vunpack.c.l.b16 %v2148
      %v5221 = vunpack.c.l.b16 %v2149
      %v5222 = vunpack.c.l.b16 %v2150
      %v5223 = vunpack.c.l.b16 %v2151
      %v5224 = vunpack.c.l.b16 %v2152
      %v5225 = vunpack.c.l.b16 %v2153
      %v5226 = vunpack.c.l.b16 %v2154
      %v5227 = vunpack.c.l.b16 %v2155
      %v5228 = vunpack.c.l.b16 %v2156
      %v5229 = vunpack.c.l.b16 %v2157
      %v5230 = vunpack.c.l.b16 %v2158
      %v5231 = vunpack.c.l.b16 %v2159
      %v5232 = vunpack.c.l.b16 %v2160
      %v5233 = vunpack.c.l.b16 %v2161
      %v5234 = vunpack.c.l.b16 %v2162
      %v5235 = vunpack.c.l.b16 %v2163
      %v5236 = vunpack.c.l.b16 %v2164
      %v5237 = vunpack.c.l.b16 %v2165
      %v5238 = vunpack.c.l.b16 %v2166
      %v5239 = vunpack.c.l.b16 %v2167
      %v5240 = vunpack.c.l.b16 %v2168
      %v5241 = vunpack.c.l.b16 %v2169
      %v5242 = vunpack.c.l.b16 %v2170
      %v5243 = vunpack.c.l.b16 %v2171
      %v5244 = vunpack.c.l.b16 %v2172
      %v5245 = vunpack.c.l.b16 %v2173
      %v5246 = vunpack.c.l.b16 %v2174
      %v5247 = vunpack.c.l.b16 %v2175
      %v5248 = vunpack.c.l.b16 %v2176
      %v5249 = vunpack.c.l.b16 %v2177
      %v5250 = vunpack.c.l.b16 %v2178
      %v5251 = vunpack.c.l.b16 %v2179
      %v5252 = vunpack.c.l.b16 %v2180
      %v5253 = vunpack.c.l.b16 %v2181
      %v5254 = vunpack.c.l.b16 %v2182
      %v5255 = vunpack.c.l.b16 %v2183
      %v5256 = vunpack.c.l.b16 %v2184
      %v5257 = vunpack.c.l.b16 %v2185
      %v5258 = vunpack.c.l.b16 %v2186
      %v5259 = vunpack.c.l.b16 %v2187
      %v5260 = vunpack.c.l.b16 %v2188
      %v5261 = vunpack.c.l.b16 %v2189
      %v5262 = vunpack.c.l.b16 %v2190
      %v5263 = vunpack.c.l.b16 %v2191
      %v5264 = vunpack.c.l.b16 %v2192
      %v5265 = vunpack.c.l.b16 %v2193
      %v5266 = vunpack.c.l.b16 %v2194
      %v5267 = vunpack.c.l.b16 %v2195
      %v5268 = vunpack.c.l.b16 %v2196
      %v5269 = vunpack.c.l.b16 %v2197
      %v5270 = vunpack.c.l.b16 %v2198
      %v5271 = vunpack.c.l.b16 %v2199
      %v5272 = vunpack.c.l.b16 %v2200
      %v5273 = vunpack.c.l.b16 %v2201
      %v5274 = vunpack.c.l.b16 %v2202
      %v5275 = vunpack.c.l.b16 %v2203
      %v5276 = vunpack.c.l.b16 %v2204
      %v5277 = vunpack.c.l.b16 %v2205
      %v5278 = vunpack.c.l.b16 %v2206
      %v5279 = vunpack.c.l.b16 %v2207
      %v5280 = vunpack.c.l.b16 %v2208
      %v5281 = vunpack.c.l.b16 %v2209
      %v5282 = vunpack.c.l.b16 %v2210
      %v5283 = vunpack.c.l.b16 %v2211
      %v5284 = vunpack.c.l.b16 %v2212
      %v5285 = vunpack.c.l.b16 %v2213
      %v5286 = vunpack.c.l.b16 %v2214
      %v5287 = vunpack.c.l.b16 %v2215
      %v5288 = vunpack.c.l.b16 %v2216
      %v5289 = vunpack.c.l.b16 %v2217
      %v5290 = vunpack.c.l.b16 %v2218
      %v5291 = vunpack.c.l.b16 %v2219
      %v5292 = vunpack.c.l.b16 %v2220
      %v5293 = vunpack.c.l.b16 %v2221
      %v5294 = vunpack.c.l.b16 %v2222
      %v5295 = vunpack.c.l.b16 %v2223
      %v5296 = vunpack.c.l.b16 %v2224
      %v5297 = vunpack.c.l.b16 %v2225
      %v5298 = vunpack.c.l.b16 %v2226
      %v5299 = vunpack.c.l.b16 %v2227
      %v5300 = vunpack.c.l.b16 %v2228
      %v5301 = vunpack.c.l.b16 %v2229
      %v5302 = vunpack.c.l.b16 %v2230
      %v5303 = vunpack.c.l.b16 %v2231
      %v5304 = vunpack.c.l.b16 %v2232
      %v5305 = vunpack.c.l.b16 %v2233
      %v5306 = vunpack.c.l.b16 %v2234
      %v5307 = vunpack.c.l.b16 %v2235
      %v5308 = vunpack.c.l.b16 %v2236
      %v5309 = vunpack.c.l.b16 %v2237
      %v5310 = vunpack.c.l.b16 %v2238
      %v5311 = vunpack.c.l.b16 %v2239
      %v5312 = vunpack.c.l.b16 %v2240
      %v5313 = vunpack.c.l.b16 %v2241
      %v5314 = vunpack.c.l.b16 %v2242
      %v5315 = vunpack.c.l.b16 %v2243
      %v5316 = vunpack.c.l.b16 %v2244
      %v5317 = vunpack.c.l.b16 %v2245
      %v5318 = vunpack.c.l.b16 %v2246
      %v5319 = vunpack.c.l.b16 %v2247
      %v5320 = vunpack.c.l.b16 %v2248
      %v5321 = vunpack.c.l.b16 %v2249
      %v5322 = vunpack.c.l.b16 %v2250
      %v5323 = vunpack.c.l.b16 %v2251
      %v5324 = vunpack.c.l.b16 %v2252
      %v5325 = vunpack.c.l.b16 %v2253
      %v5326 = vunpack.c.l.b16 %v2254
      %v5327 = vunpack.c.l.b16 %v2255
      %v5328 = vunpack.c.l.b16 %v2256
      %v5329 = vunpack.c.l.b16 %v2257
      %v5330 = vunpack.c.l.b16 %v2258
      %v5331 = vunpack.c.l.b16 %v2259
      %v5332 = vunpack.c.l.b16 %v2260
      %v5333 = vunpack.c.l.b16 %v2261
      %v5334 = vunpack.c.l.b16 %v2262
      %v5335 = vunpack.c.l.b16 %v2263
      %v5336 = vunpack.c.l.b16 %v2264
      %v5337 = vunpack.c.l.b16 %v2265
      %v5338 = vunpack.c.l.b16 %v2266
      %v5339 = vunpack.c.l.b16 %v2267
      %v5340 = vunpack.c.l.b16 %v2268
      %v5341 = vunpack.c.l.b16 %v2269
      %v5342 = vunpack.c.l.b16 %v2270
      %v5343 = vunpack.c.l.b16 %v2271
      %v5344 = vunpack.c.l.b16 %v2272
      %v5345 = vunpack.c.l.b16 %v2273
      %v5346 = vunpack.c.l.b16 %v2274
      %v5347 = vunpack.c.l.b16 %v2275
      %v5348 = vunpack.c.l.b16 %v2276
      %v5349 = vunpack.c.l.b16 %v2277
      %v5350 = vunpack.c.l.b16 %v2278
      %v5351 = vunpack.c.l.b16 %v2279
      %v5352 = vunpack.c.l.b16 %v2280
      %v5353 = vunpack.c.l.b16 %v2281
      %v5354 = vunpack.c.l.b16 %v2282
      %v5355 = vunpack.c.l.b16 %v2283
      %v5356 = vunpack.c.l.b16 %v2284
      %v5357 = vunpack.c.l.b16 %v2285
      %v5358 = vunpack.c.l.b16 %v2286
      %v5359 = vunpack.c.l.b16 %v2287
      %v5360 = vunpack.c.l.b16 %v2288
      %v5361 = vunpack.c.l.b16 %v2289
      %v5362 = vunpack.c.l.b16 %v2290
      %v5363 = vunpack.c.l.b16 %v2291
      %v5364 = vunpack.c.l.b16 %v2292
      %v5365 = vunpack.c.l.b16 %v2293
      %v5366 = vunpack.c.l.b16 %v2294
      %v5367 = vunpack.c.l.b16 %v2295
      %v5368 = vunpack.c.l.b16 %v2296
      %v5369 = vunpack.c.l.b16 %v2297
      %v5370 = vunpack.c.l.b16 %v2298
      %v5371 = vunpack.c.l.b16 %v2299
      %v5372 = vunpack.c.l.b16 %v2300
      %v5373 = vunpack.c.l.b16 %v2301
      %v5374 = vunpack.c.l.b16 %v2302
      %v5375 = vunpack.c.l.b16 %v2303
      %v5376 = vunpack.c.l.b16 %v2304
      %v5377 = vunpack.c.l.b16 %v2305
      %v5378 = vunpack.c.l.b16 %v2306
      %v5379 = vunpack.c.l.b16 %v2307
      %v5380 = vunpack.c.l.b16 %v2308
      %v5381 = vunpack.c.l.b16 %v2309
      %v5382 = vunpack.c.l.b16 %v2310
      %v5383 = vunpack.c.l.b16 %v2311
      %v5384 = vunpack.c.l.b16 %v2312
      %v5385 = vunpack.c.l.b16 %v2313
      %v5386 = vunpack.c.l.b16 %v2314
      %v5387 = vunpack.c.l.b16 %v2315
      %v5388 = vunpack.c.l.b16 %v2316
      %v5389 = vunpack.c.l.b16 %v2317
      %v5390 = vunpack.c.l.b16 %v2318
      %v5391 = vunpack.c.l.b16 %v2319
      %v5392 = vunpack.c.l.b16 %v2320
      %v5393 = vunpack.c.l.b16 %v2321
      %v5394 = vunpack.c.l.b16 %v2322
      %v5395 = vunpack.c.l.b16 %v2323
      %v5396 = vunpack.c.l.b16 %v2324
      %v5397 = vunpack.c.l.b16 %v2325
      %v5398 = vunpack.c.l.b16 %v2326
      %v5399 = vunpack.c.l.b16 %v2327
      %v5400 = vunpack.c.l.b16 %v2328
      %v5401 = vunpack.c.l.b16 %v2329
      %v5402 = vunpack.c.l.b16 %v2330
      %v5403 = vunpack.c.l.b16 %v2331
      %v5404 = vunpack.c.l.b16 %v2332
      %v5405 = vunpack.c.l.b16 %v2333
      %v5406 = vunpack.c.l.b16 %v2334
      %v5407 = vunpack.c.l.b16 %v2335
      %v5408 = vunpack.c.l.b16 %v2336
      %v5409 = vunpack.c.l.b16 %v2337
      %v5410 = vunpack.c.l.b16 %v2338
      %v5411 = vunpack.c.l.b16 %v2339
      %v5412 = vunpack.c.l.b16 %v2340
      %v5413 = vunpack.c.l.b16 %v2341
      %v5414 = vunpack.c.l.b16 %v2342
      %v5415 = vunpack.c.l.b16 %v2343
      %v5416 = vunpack.c.l.b16 %v2344
      %v5417 = vunpack.c.l.b16 %v2345
      %v5418 = vunpack.c.l.b16 %v2346
      %v5419 = vunpack.c.l.b16 %v2347
      %v5420 = vunpack.c.l.b16 %v2348
      %v5421 = vunpack.c.l.b16 %v2349
      %v5422 = vunpack.c.l.b16 %v2350
      %v5423 = vunpack.c.l.b16 %v2351
      %v5424 = vunpack.c.l.b16 %v2352
      %v5425 = vunpack.c.l.b16 %v2353
      %v5426 = vunpack.c.l.b16 %v2354
      %v5427 = vunpack.c.l.b16 %v2355
      %v5428 = vunpack.c.l.b16 %v2356
      %v5429 = vunpack.c.l.b16 %v2357
      %v5430 = vunpack.c.l.b16 %v2358
      %v5431 = vunpack.c.l.b16 %v2359
      %v5432 = vunpack.c.l.b16 %v2360
      %v5433 = vunpack.c.l.b16 %v2361
      %v5434 = vunpack.c.l.b16 %v2362
      %v5435 = vunpack.c.l.b16 %v2363
      %v5436 = vunpack.c.l.b16 %v2364
      %v5437 = vunpack.c.l.b16 %v2365
      %v5438 = vunpack.c.l.b16 %v2366
      %v5439 = vunpack.c.l.b16 %v2367
      %v5440 = vunpack.c.l.b16 %v2368
      %v5441 = vunpack.c.l.b16 %v2369
      %v5442 = vunpack.c.l.b16 %v2370
      %v5443 = vunpack.c.l.b16 %v2371
      %v5444 = vunpack.c.l.b16 %v2372
      %v5445 = vunpack.c.l.b16 %v2373
      %v5446 = vunpack.c.l.b16 %v2374
      %v5447 = vunpack.c.l.b16 %v2375
      %v5448 = vunpack.c.l.b16 %v2376
      %v5449 = vunpack.c.l.b16 %v2377
      %v5450 = vunpack.c.l.b16 %v2378
      %v5451 = vunpack.c.l.b16 %v2379
      %v5452 = vunpack.c.l.b16 %v2380
      %v5453 = vunpack.c.l.b16 %v2381
      %v5454 = vunpack.c.l.b16 %v2382
      %v5455 = vunpack.c.l.b16 %v2383
      %v5456 = vunpack.c.l.b16 %v2384
      %v5457 = vunpack.c.l.b16 %v2385
      %v5458 = vunpack.c.l.b16 %v2386
      %v5459 = vunpack.c.l.b16 %v2387
      %v5460 = vunpack.c.l.b16 %v2388
      %v5461 = vunpack.c.l.b16 %v2389
      %v5462 = vunpack.c.l.b16 %v2390
      %v5463 = vunpack.c.l.b16 %v2391
      %v5464 = vunpack.c.l.b16 %v2392
      %v5465 = vunpack.c.l.b16 %v2393
      %v5466 = vunpack.c.l.b16 %v2394
      %v5467 = vunpack.c.l.b16 %v2395
      %v5468 = vunpack.c.l.b16 %v2396
      %v5469 = vunpack.c.l.b16 %v2397
      %v5470 = vunpack.c.l.b16 %v2398
      %v5471 = vunpack.c.l.b16 %v2399
      %v5472 = vunpack.c.l.b16 %v2400
      %v5473 = vunpack.c.l.b16 %v2401
      %v5474 = vunpack.c.l.b16 %v2402
      %v5475 = vunpack.c.l.b16 %v2403
      %v5476 = vunpack.c.l.b16 %v2404
      %v5477 = vunpack.c.l.b16 %v2405
      %v5478 = vunpack.c.l.b16 %v2406
      %v5479 = vunpack.c.l.b16 %v2407
      %v5480 = vunpack.c.l.b16 %v2408
      %v5481 = vunpack.c.l.b16 %v2409
      %v5482 = vunpack.c.l.b16 %v2410
      %v5483 = vunpack.c.l.b16 %v2411
      %v5484 = vunpack.c.l.b16 %v2412
      %v5485 = vunpack.c.l.b16 %v2413
      %v5486 = vunpack.c.l.b16 %v2414
      %v5487 = vunpack.c.l.b16 %v2415
      %v5488 = vunpack.c.l.b16 %v2416
      %v5489 = vunpack.c.l.b16 %v2417
      %v5490 = vunpack.c.l.b16 %v2418
      %v5491 = vunpack.c.l.b16 %v2419
      %v5492 = vunpack.c.l.b16 %v2420
      %v5493 = vunpack.c.l.b16 %v2421
      %v5494 = vunpack.c.l.b16 %v2422
      %v5495 = vunpack.c.l.b16 %v2423
      %v5496 = vunpack.c.l.b16 %v2424
      %v5497 = vunpack.c.l.b16 %v2425
      %v5498 = vunpack.c.l.b16 %v2426
      %v5499 = vunpack.c.l.b16 %v2427
      %v5500 = vunpack.c.l.b16 %v2428
      %v5501 = vunpack.c.l.b16 %v2429
      %v5502 = vunpack.c.l.b16 %v2430
      %v5503 = vunpack.c.l.b16 %v2431
      %v5504 = vunpack.c.l.b16 %v2432
      %v5505 = vunpack.c.l.b16 %v2433
      %v5506 = vunpack.c.l.b16 %v2434
      %v5507 = vunpack.c.l.b16 %v2435
      %v5508 = vunpack.c.l.b16 %v2436
      %v5509 = vunpack.c.l.b16 %v2437
      %v5510 = vunpack.c.l.b16 %v2438
      %v5511 = vunpack.c.l.b16 %v2439
      %v5512 = vunpack.c.l.b16 %v2440
      %v5513 = vunpack.c.l.b16 %v2441
      %v5514 = vunpack.c.l.b16 %v2442
      %v5515 = vunpack.c.l.b16 %v2443
      %v5516 = vunpack.c.l.b16 %v2444
      %v5517 = vunpack.c.l.b16 %v2445
      %v5518 = vunpack.c.l.b16 %v2446
      %v5519 = vpack.c.b16 %v3984, %v3983
      %v5520 = vpack.c.b16 %v3986, %v3985
      %v5521 = vpack.c.b16 %v3988, %v3987
      %v5522 = vpack.c.b16 %v3990, %v3989
      %v5523 = vpack.c.b16 %v3992, %v3991
      %v5524 = vpack.c.b16 %v3994, %v3993
      %v5525 = vpack.c.b16 %v3996, %v3995
      %v5526 = vpack.c.b16 %v3998, %v3997
      %v5527 = vpack.c.b16 %v4000, %v3999
      %v5528 = vpack.c.b16 %v4002, %v4001
      %v5529 = vpack.c.b16 %v4004, %v4003
      %v5530 = vpack.c.b16 %v4006, %v4005
      %v5531 = vpack.c.b16 %v4008, %v4007
      %v5532 = vpack.c.b16 %v4010, %v4009
      %v5533 = vpack.c.b16 %v4012, %v4011
      %v5534 = vpack.c.b16 %v4014, %v4013
      %v5535 = vpack.c.b16 %v4016, %v4015
      %v5536 = vpack.c.b16 %v4018, %v4017
      %v5537 = vpack.c.b16 %v4020, %v4019
      %v5538 = vpack.c.b16 %v4022, %v4021
      %v5539 = vpack.c.b16 %v4024, %v4023
      %v5540 = vpack.c.b16 %v4026, %v4025
      %v5541 = vpack.c.b16 %v4028, %v4027
      %v5542 = vpack.c.b16 %v4030, %v4029
      %v5543 = vpack.c.b16 %v4032, %v4031
      %v5544 = vpack.c.b16 %v4034, %v4033
      %v5545 = vpack.c.b16 %v4036, %v4035
      %v5546 = vpack.c.b16 %v4038, %v4037
      %v5547 = vpack.c.b16 %v4040, %v4039
      %v5548 = vpack.c.b16 %v4042, %v4041
      %v5549 = vpack.c.b16 %v4044, %v4043
      %v5550 = vpack.c.b16 %v4046, %v4045
      %v5551 = vpack.c.b16 %v4048, %v4047
      %v5552 = vpack.c.b16 %v4050, %v4049
      %v5553 = vpack.c.b16 %v4052, %v4051
      %v5554 = vpack.c.b16 %v4054, %v4053
      %v5555 = vpack.c.b16 %v4056, %v4055
      %v5556 = vpack.c.b16 %v4058, %v4057
      %v5557 = vpack.c.b16 %v4060, %v4059
      %v5558 = vpack.c.b16 %v4062, %v4061
      %v5559 = vpack.c.b16 %v4064, %v4063
      %v5560 = vpack.c.b16 %v4066, %v4065
      %v5561 = vpack.c.b16 %v4068, %v4067
      %v5562 = vpack.c.b16 %v4070, %v4069
      %v5563 = vpack.c.b16 %v4072, %v4071
      %v5564 = vpack.c.b16 %v4074, %v4073
      %v5565 = vpack.c.b16 %v4076, %v4075
      %v5566 = vpack.c.b16 %v4078, %v4077
      %v5567 = vpack.c.b16 %v4080, %v4079
      %v5568 = vpack.c.b16 %v4082, %v4081
      %v5569 = vpack.c.b16 %v4084, %v4083
      %v5570 = vpack.c.b16 %v4086, %v4085
      %v5571 = vpack.c.b16 %v4088, %v4087
      %v5572 = vpack.c.b16 %v4090, %v4089
      %v5573 = vpack.c.b16 %v4092, %v4091
      %v5574 = vpack.c.b16 %v4094, %v4093
      %v5575 = vpack.c.b16 %v4096, %v4095
      %v5576 = vpack.c.b16 %v4098, %v4097
      %v5577 = vpack.c.b16 %v4100, %v4099
      %v5578 = vpack.c.b16 %v4102, %v4101
      %v5579 = vpack.c.b16 %v4104, %v4103
      %v5580 = vpack.c.b16 %v4106, %v4105
      %v5581 = vpack.c.b16 %v4108, %v4107
      %v5582 = vpack.c.b16 %v4110, %v4109
      %v5583 = vpack.c.b16 %v4112, %v4111
      %v5584 = vpack.c.b16 %v4114, %v4113
      %v5585 = vpack.c.b16 %v4116, %v4115
      %v5586 = vpack.c.b16 %v4118, %v4117
      %v5587 = vpack.c.b16 %v4120, %v4119
      %v5588 = vpack.c.b16 %v4122, %v4121
      %v5589 = vpack.c.b16 %v4124, %v4123
      %v5590 = vpack.c.b16 %v4126, %v4125
      %v5591 = vpack.c.b16 %v4128, %v4127
      %v5592 = vpack.c.b16 %v4130, %v4129
      %v5593 = vpack.c.b16 %v4132, %v4131
      %v5594 = vpack.c.b16 %v4134, %v4133
      %v5595 = vpack.c.b16 %v4136, %v4135
      %v5596 = vpack.c.b16 %v4138, %v4137
      %v5597 = vpack.c.b16 %v4140, %v4139
      %v5598 = vpack.c.b16 %v4142, %v4141
      %v5599 = vpack.c.b16 %v4144, %v4143
      %v5600 = vpack.c.b16 %v4146, %v4145
      %v5601 = vpack.c.b16 %v4148, %v4147
      %v5602 = vpack.c.b16 %v4150, %v4149
      %v5603 = vpack.c.b16 %v4152, %v4151
      %v5604 = vpack.c.b16 %v4154, %v4153
      %v5605 = vpack.c.b16 %v4156, %v4155
      %v5606 = vpack.c.b16 %v4158, %v4157
      %v5607 = vpack.c.b16 %v4160, %v4159
      %v5608 = vpack.c.b16 %v4162, %v4161
      %v5609 = vpack.c.b16 %v4164, %v4163
      %v5610 = vpack.c.b16 %v4166, %v4165
      %v5611 = vpack.c.b16 %v4168, %v4167
      %v5612 = vpack.c.b16 %v4170, %v4169
      %v5613 = vpack.c.b16 %v4172, %v4171
      %v5614 = vpack.c.b16 %v4174, %v4173
      %v5615 = vpack.c.b16 %v4176, %v4175
      %v5616 = vpack.c.b16 %v4178, %v4177
      %v5617 = vpack.c.b16 %v4180, %v4179
      %v5618 = vpack.c.b16 %v4182, %v4181
      %v5619 = vpack.c.b16 %v4184, %v4183
      %v5620 = vpack.c.b16 %v4186, %v4185
      %v5621 = vpack.c.b16 %v4188, %v4187
      %v5622 = vpack.c.b16 %v4190, %v4189
      %v5623 = vpack.c.b16 %v4192, %v4191
      %v5624 = vpack.c.b16 %v4194, %v4193
      %v5625 = vpack.c.b16 %v4196, %v4195
      %v5626 = vpack.c.b16 %v4198, %v4197
      %v5627 = vpack.c.b16 %v4200, %v4199
      %v5628 = vpack.c.b16 %v4202, %v4201
      %v5629 = vpack.c.b16 %v4204, %v4203
      %v5630 = vpack.c.b16 %v4206, %v4205
      %v5631 = vpack.c.b16 %v4208, %v4207
      %v5632 = vpack.c.b16 %v4210, %v4209
      %v5633 = vpack.c.b16 %v4212, %v4211
      %v5634 = vpack.c.b16 %v4214, %v4213
      %v5635 = vpack.c.b16 %v4216, %v4215
      %v5636 = vpack.c.b16 %v4218, %v4217
      %v5637 = vpack.c.b16 %v4220, %v4219
      %v5638 = vpack.c.b16 %v4222, %v4221
      %v5639 = vpack.c.b16 %v4224, %v4223
      %v5640 = vpack.c.b16 %v4226, %v4225
      %v5641 = vpack.c.b16 %v4228, %v4227
      %v5642 = vpack.c.b16 %v4230, %v4229
      %v5643 = vpack.c.b16 %v4232, %v4231
      %v5644 = vpack.c.b16 %v4234, %v4233
      %v5645 = vpack.c.b16 %v4236, %v4235
      %v5646 = vpack.c.b16 %v4238, %v4237
      %v5647 = vpack.c.b16 %v4240, %v4239
      %v5648 = vpack.c.b16 %v4242, %v4241
      %v5649 = vpack.c.b16 %v4244, %v4243
      %v5650 = vpack.c.b16 %v4246, %v4245
      %v5651 = vpack.c.b16 %v4248, %v4247
      %v5652 = vpack.c.b16 %v4250, %v4249
      %v5653 = vpack.c.b16 %v4252, %v4251
      %v5654 = vpack.c.b16 %v4254, %v4253
      %v5655 = vpack.c.b16 %v4256, %v4255
      %v5656 = vpack.c.b16 %v4258, %v4257
      %v5657 = vpack.c.b16 %v4260, %v4259
      %v5658 = vpack.c.b16 %v4262, %v4261
      %v5659 = vpack.c.b16 %v4264, %v4263
      %v5660 = vpack.c.b16 %v4266, %v4265
      %v5661 = vpack.c.b16 %v4268, %v4267
      %v5662 = vpack.c.b16 %v4270, %v4269
      %v5663 = vpack.c.b16 %v4272, %v4271
      %v5664 = vpack.c.b16 %v4274, %v4273
      %v5665 = vpack.c.b16 %v4276, %v4275
      %v5666 = vpack.c.b16 %v4278, %v4277
      %v5667 = vpack.c.b16 %v4280, %v4279
      %v5668 = vpack.c.b16 %v4282, %v4281
      %v5669 = vpack.c.b16 %v4284, %v4283
      %v5670 = vpack.c.b16 %v4286, %v4285
      %v5671 = vpack.c.b16 %v4288, %v4287
      %v5672 = vpack.c.b16 %v4290, %v4289
      %v5673 = vpack.c.b16 %v4292, %v4291
      %v5674 = vpack.c.b16 %v4294, %v4293
      %v5675 = vpack.c.b16 %v4296, %v4295
      %v5676 = vpack.c.b16 %v4298, %v4297
      %v5677 = vpack.c.b16 %v4300, %v4299
      %v5678 = vpack.c.b16 %v4302, %v4301
      %v5679 = vpack.c.b16 %v4304, %v4303
      %v5680 = vpack.c.b16 %v4306, %v4305
      %v5681 = vpack.c.b16 %v4308, %v4307
      %v5682 = vpack.c.b16 %v4310, %v4309
      %v5683 = vpack.c.b16 %v4312, %v4311
      %v5684 = vpack.c.b16 %v4314, %v4313
      %v5685 = vpack.c.b16 %v4316, %v4315
      %v5686 = vpack.c.b16 %v4318, %v4317
      %v5687 = vpack.c.b16 %v4320, %v4319
      %v5688 = vpack.c.b16 %v4322, %v4321
      %v5689 = vpack.c.b16 %v4324, %v4323
      %v5690 = vpack.c.b16 %v4326, %v4325
      %v5691 = vpack.c.b16 %v4328, %v4327
      %v5692 = vpack.c.b16 %v4330, %v4329
      %v5693 = vpack.c.b16 %v4332, %v4331
      %v5694 = vpack.c.b16 %v4334, %v4333
      %v5695 = vpack.c.b16 %v4336, %v4335
      %v5696 = vpack.c.b16 %v4338, %v4337
      %v5697 = vpack.c.b16 %v4340, %v4339
      %v5698 = vpack.c.b16 %v4342, %v4341
      %v5699 = vpack.c.b16 %v4344, %v4343
      %v5700 = vpack.c.b16 %v4346, %v4345
      %v5701 = vpack.c.b16 %v4348, %v4347
      %v5702 = vpack.c.b16 %v4350, %v4349
      %v5703 = vpack.c.b16 %v4352, %v4351
      %v5704 = vpack.c.b16 %v4354, %v4353
      %v5705 = vpack.c.b16 %v4356, %v4355
      %v5706 = vpack.c.b16 %v4358, %v4357
      %v5707 = vpack.c.b16 %v4360, %v4359
      %v5708 = vpack.c.b16 %v4362, %v4361
      %v5709 = vpack.c.b16 %v4364, %v4363
      %v5710 = vpack.c.b16 %v4366, %v4365
      %v5711 = vpack.c.b16 %v4368, %v4367
      %v5712 = vpack.c.b16 %v4370, %v4369
      %v5713 = vpack.c.b16 %v4372, %v4371
      %v5714 = vpack.c.b16 %v4374, %v4373
      %v5715 = vpack.c.b16 %v4376, %v4375
      %v5716 = vpack.c.b16 %v4378, %v4377
      %v5717 = vpack.c.b16 %v4380, %v4379
      %v5718 = vpack.c.b16 %v4382, %v4381
      %v5719 = vpack.c.b16 %v4384, %v4383
      %v5720 = vpack.c.b16 %v4386, %v4385
      %v5721 = vpack.c.b16 %v4388, %v4387
      %v5722 = vpack.c.b16 %v4390, %v4389
      %v5723 = vpack.c.b16 %v4392, %v4391
      %v5724 = vpack.c.b16 %v4394, %v4393
      %v5725 = vpack.c.b16 %v4396, %v4395
      %v5726 = vpack.c.b16 %v4398, %v4397
      %v5727 = vpack.c.b16 %v4400, %v4399
      %v5728 = vpack.c.b16 %v4402, %v4401
      %v5729 = vpack.c.b16 %v4404, %v4403
      %v5730 = vpack.c.b16 %v4406, %v4405
      %v5731 = vpack.c.b16 %v4408, %v4407
      %v5732 = vpack.c.b16 %v4410, %v4409
      %v5733 = vpack.c.b16 %v4412, %v4411
      %v5734 = vpack.c.b16 %v4414, %v4413
      %v5735 = vpack.c.b16 %v4416, %v4415
      %v5736 = vpack.c.b16 %v4418, %v4417
      %v5737 = vpack.c.b16 %v4420, %v4419
      %v5738 = vpack.c.b16 %v4422, %v4421
      %v5739 = vpack.c.b16 %v4424, %v4423
      %v5740 = vpack.c.b16 %v4426, %v4425
      %v5741 = vpack.c.b16 %v4428, %v4427
      %v5742 = vpack.c.b16 %v4430, %v4429
      %v5743 = vpack.c.b16 %v4432, %v4431
      %v5744 = vpack.c.b16 %v4434, %v4433
      %v5745 = vpack.c.b16 %v4436, %v4435
      %v5746 = vpack.c.b16 %v4438, %v4437
      %v5747 = vpack.c.b16 %v4440, %v4439
      %v5748 = vpack.c.b16 %v4442, %v4441
      %v5749 = vpack.c.b16 %v4444, %v4443
      %v5750 = vpack.c.b16 %v4446, %v4445
      %v5751 = vpack.c.b16 %v4448, %v4447
      %v5752 = vpack.c.b16 %v4450, %v4449
      %v5753 = vpack.c.b16 %v4452, %v4451
      %v5754 = vpack.c.b16 %v4454, %v4453
      %v5755 = vpack.c.b16 %v4456, %v4455
      %v5756 = vpack.c.b16 %v4458, %v4457
      %v5757 = vpack.c.b16 %v4460, %v4459
      %v5758 = vpack.c.b16 %v4462, %v4461
      %v5759 = vpack.c.b16 %v4464, %v4463
      %v5760 = vpack.c.b16 %v4466, %v4465
      %v5761 = vpack.c.b16 %v4468, %v4467
      %v5762 = vpack.c.b16 %v4470, %v4469
      %v5763 = vpack.c.b16 %v4472, %v4471
      %v5764 = vpack.c.b16 %v4474, %v4473
      %v5765 = vpack.c.b16 %v4476, %v4475
      %v5766 = vpack.c.b16 %v4478, %v4477
      %v5767 = vpack.c.b16 %v4480, %v4479
      %v5768 = vpack.c.b16 %v4482, %v4481
      %v5769 = vpack.c.b16 %v4484, %v4483
      %v5770 = vpack.c.b16 %v4486, %v4485
      %v5771 = vpack.c.b16 %v4488, %v4487
      %v5772 = vpack.c.b16 %v4490, %v4489
      %v5773 = vpack.c.b16 %v4492, %v4491
      %v5774 = vpack.c.b16 %v4494, %v4493
      %v5775 = vpack.c.b16 %v4496, %v4495
      %v5776 = vpack.c.b16 %v4498, %v4497
      %v5777 = vpack.c.b16 %v4500, %v4499
      %v5778 = vpack.c.b16 %v4502, %v4501
      %v5779 = vpack.c.b16 %v4504, %v4503
      %v5780 = vpack.c.b16 %v4506, %v4505
      %v5781 = vpack.c.b16 %v4508, %v4507
      %v5782 = vpack.c.b16 %v4510, %v4509
      %v5783 = vpack.c.b16 %v4512, %v4511
      %v5784 = vpack.c.b16 %v4514, %v4513
      %v5785 = vpack.c.b16 %v4516, %v4515
      %v5786 = vpack.c.b16 %v4518, %v4517
      %v5787 = vpack.c.b16 %v4520, %v4519
      %v5788 = vpack.c.b16 %v4522, %v4521
      %v5789 = vpack.c.b16 %v4524, %v4523
      %v5790 = vpack.c.b16 %v4526, %v4525
      %v5791 = vpack.c.b16 %v4528, %v4527
      %v5792 = vpack.c.b16 %v4530, %v4529
      %v5793 = vpack.c.b16 %v4532, %v4531
      %v5794 = vpack.c.b16 %v4534, %v4533
      %v5795 = vpack.c.b16 %v4536, %v4535
      %v5796 = vpack.c.b16 %v4538, %v4537
      %v5797 = vpack.c.b16 %v4540, %v4539
      %v5798 = vpack.c.b16 %v4542, %v4541
      %v5799 = vpack.c.b16 %v4544, %v4543
      %v5800 = vpack.c.b16 %v4546, %v4545
      %v5801 = vpack.c.b16 %v4548, %v4547
      %v5802 = vpack.c.b16 %v4550, %v4549
      %v5803 = vpack.c.b16 %v4552, %v4551
      %v5804 = vpack.c.b16 %v4554, %v4553
      %v5805 = vpack.c.b16 %v4556, %v4555
      %v5806 = vpack.c.b16 %v4558, %v4557
      %v5807 = vpack.c.b16 %v4560, %v4559
      %v5808 = vpack.c.b16 %v4562, %v4561
      %v5809 = vpack.c.b16 %v4564, %v4563
      %v5810 = vpack.c.b16 %v4566, %v4565
      %v5811 = vpack.c.b16 %v4568, %v4567
      %v5812 = vpack.c.b16 %v4570, %v4569
      %v5813 = vpack.c.b16 %v4572, %v4571
      %v5814 = vpack.c.b16 %v4574, %v4573
      %v5815 = vpack.c.b16 %v4576, %v4575
      %v5816 = vpack.c.b16 %v4578, %v4577
      %v5817 = vpack.c.b16 %v4580, %v4579
      %v5818 = vpack.c.b16 %v4582, %v4581
      %v5819 = vpack.c.b16 %v4584, %v4583
      %v5820 = vpack.c.b16 %v4586, %v4585
      %v5821 = vpack.c.b16 %v4588, %v4587
      %v5822 = vpack.c.b16 %v4590, %v4589
      %v5823 = vpack.c.b16 %v4592, %v4591
      %v5824 = vpack.c.b16 %v4594, %v4593
      %v5825 = vpack.c.b16 %v4596, %v4595
      %v5826 = vpack.c.b16 %v4598, %v4597
      %v5827 = vpack.c.b16 %v4600, %v4599
      %v5828 = vpack.c.b16 %v4602, %v4601
      %v5829 = vpack.c.b16 %v4604, %v4603
      %v5830 = vpack.c.b16 %v4606, %v4605
      %v5831 = vpack.c.b16 %v4608, %v4607
      %v5832 = vpack.c.b16 %v4610, %v4609
      %v5833 = vpack.c.b16 %v4612, %v4611
      %v5834 = vpack.c.b16 %v4614, %v4613
      %v5835 = vpack.c.b16 %v4616, %v4615
      %v5836 = vpack.c.b16 %v4618, %v4617
      %v5837 = vpack.c.b16 %v4620, %v4619
      %v5838 = vpack.c.b16 %v4622, %v4621
      %v5839 = vpack.c.b16 %v4624, %v4623
      %v5840 = vpack.c.b16 %v4626, %v4625
      %v5841 = vpack.c.b16 %v4628, %v4627
      %v5842 = vpack.c.b16 %v4630, %v4629
      %v5843 = vpack.c.b16 %v4632, %v4631
      %v5844 = vpack.c.b16 %v4634, %v4633
      %v5845 = vpack.c.b16 %v4636, %v4635
      %v5846 = vpack.c.b16 %v4638, %v4637
      %v5847 = vpack.c.b16 %v4640, %v4639
      %v5848 = vpack.c.b16 %v4642, %v4641
      %v5849 = vpack.c.b16 %v4644, %v4643
      %v5850 = vpack.c.b16 %v4646, %v4645
      %v5851 = vpack.c.b16 %v4648, %v4647
      %v5852 = vpack.c.b16 %v4650, %v4649
      %v5853 = vpack.c.b16 %v4652, %v4651
      %v5854 = vpack.c.b16 %v4654, %v4653
      %v5855 = vpack.c.b16 %v4656, %v4655
      %v5856 = vpack.c.b16 %v4658, %v4657
      %v5857 = vpack.c.b16 %v4660, %v4659
      %v5858 = vpack.c.b16 %v4662, %v4661
      %v5859 = vpack.c.b16 %v4664, %v4663
      %v5860 = vpack.c.b16 %v4666, %v4665
      %v5861 = vpack.c.b16 %v4668, %v4667
      %v5862 = vpack.c.b16 %v4670, %v4669
      %v5863 = vpack.c.b16 %v4672, %v4671
      %v5864 = vpack.c.b16 %v4674, %v4673
      %v5865 = vpack.c.b16 %v4676, %v4675
      %v5866 = vpack.c.b16 %v4678, %v4677
      %v5867 = vpack.c.b16 %v4680, %v4679
      %v5868 = vpack.c.b16 %v4682, %v4681
      %v5869 = vpack.c.b16 %v4684, %v4683
      %v5870 = vpack.c.b16 %v4686, %v4685
      %v5871 = vpack.c.b16 %v4688, %v4687
      %v5872 = vpack.c.b16 %v4690, %v4689
      %v5873 = vpack.c.b16 %v4692, %v4691
      %v5874 = vpack.c.b16 %v4694, %v4693
      %v5875 = vpack.c.b16 %v4696, %v4695
      %v5876 = vpack.c.b16 %v4698, %v4697
      %v5877 = vpack.c.b16 %v4700, %v4699
      %v5878 = vpack.c.b16 %v4702, %v4701
      %v5879 = vpack.c.b16 %v4704, %v4703
      %v5880 = vpack.c.b16 %v4706, %v4705
      %v5881 = vpack.c.b16 %v4708, %v4707
      %v5882 = vpack.c.b16 %v4710, %v4709
      %v5883 = vpack.c.b16 %v4712, %v4711
      %v5884 = vpack.c.b16 %v4714, %v4713
      %v5885 = vpack.c.b16 %v4716, %v4715
      %v5886 = vpack.c.b16 %v4718, %v4717
      %v5887 = vpack.c.b16 %v4720, %v4719
      %v5888 = vpack.c.b16 %v4722, %v4721
      %v5889 = vpack.c.b16 %v4724, %v4723
      %v5890 = vpack.c.b16 %v4726, %v4725
      %v5891 = vpack.c.b16 %v4728, %v4727
      %v5892 = vpack.c.b16 %v4730, %v4729
      %v5893 = vpack.c.b16 %v4732, %v4731
      %v5894 = vpack.c.b16 %v4734, %v4733
      %v5895 = vpack.c.b16 %v4736, %v4735
      %v5896 = vpack.c.b16 %v4738, %v4737
      %v5897 = vpack.c.b16 %v4740, %v4739
      %v5898 = vpack.c.b16 %v4742, %v4741
      %v5899 = vpack.c.b16 %v4744, %v4743
      %v5900 = vpack.c.b16 %v4746, %v4745
      %v5901 = vpack.c.b16 %v4748, %v4747
      %v5902 = vpack.c.b16 %v4750, %v4749
      %v5903 = vpack.c.b16 %v4752, %v4751
      %v5904 = vpack.c.b16 %v4754, %v4753
      %v5905 = vpack.c.b16 %v4756, %v4755
      %v5906 = vpack.c.b16 %v4758, %v4757
      %v5907 = vpack.c.b16 %v4760, %v4759
      %v5908 = vpack.c.b16 %v4762, %v4761
      %v5909 = vpack.c.b16 %v4764, %v4763
      %v5910 = vpack.c.b16 %v4766, %v4765
      %v5911 = vpack.c.b16 %v4768, %v4767
      %v5912 = vpack.c.b16 %v4770, %v4769
      %v5913 = vpack.c.b16 %v4772, %v4771
      %v5914 = vpack.c.b16 %v4774, %v4773
      %v5915 = vpack.c.b16 %v4776, %v4775
      %v5916 = vpack.c.b16 %v4778, %v4777
      %v5917 = vpack.c.b16 %v4780, %v4779
      %v5918 = vpack.c.b16 %v4782, %v4781
      %v5919 = vpack.c.b16 %v4784, %v4783
      %v5920 = vpack.c.b16 %v4786, %v4785
      %v5921 = vpack.c.b16 %v4788, %v4787
      %v5922 = vpack.c.b16 %v4790, %v4789
      %v5923 = vpack.c.b16 %v4792, %v4791
      %v5924 = vpack.c.b16 %v4794, %v4793
      %v5925 = vpack.c.b16 %v4796, %v4795
      %v5926 = vpack.c.b16 %v4798, %v4797
      %v5927 = vpack.c.b16 %v4800, %v4799
      %v5928 = vpack.c.b16 %v4802, %v4801
      %v5929 = vpack.c.b16 %v4804, %v4803
      %v5930 = vpack.c.b16 %v4806, %v4805
      %v5931 = vpack.c.b16 %v4808, %v4807
      %v5932 = vpack.c.b16 %v4810, %v4809
      %v5933 = vpack.c.b16 %v4812, %v4811
      %v5934 = vpack.c.b16 %v4814, %v4813
      %v5935 = vpack.c.b16 %v4816, %v4815
      %v5936 = vpack.c.b16 %v4818, %v4817
      %v5937 = vpack.c.b16 %v4820, %v4819
      %v5938 = vpack.c.b16 %v4822, %v4821
      %v5939 = vpack.c.b16 %v4824, %v4823
      %v5940 = vpack.c.b16 %v4826, %v4825
      %v5941 = vpack.c.b16 %v4828, %v4827
      %v5942 = vpack.c.b16 %v4830, %v4829
      %v5943 = vpack.c.b16 %v4832, %v4831
      %v5944 = vpack.c.b16 %v4834, %v4833
      %v5945 = vpack.c.b16 %v4836, %v4835
      %v5946 = vpack.c.b16 %v4838, %v4837
      %v5947 = vpack.c.b16 %v4840, %v4839
      %v5948 = vpack.c.b16 %v4842, %v4841
      %v5949 = vpack.c.b16 %v4844, %v4843
      %v5950 = vpack.c.b16 %v4846, %v4845
      %v5951 = vpack.c.b16 %v4848, %v4847
      %v5952 = vpack.c.b16 %v4850, %v4849
      %v5953 = vpack.c.b16 %v4852, %v4851
      %v5954 = vpack.c.b16 %v4854, %v4853
      %v5955 = vpack.c.b16 %v4856, %v4855
      %v5956 = vpack.c.b16 %v4858, %v4857
      %v5957 = vpack.c.b16 %v4860, %v4859
      %v5958 = vpack.c.b16 %v4862, %v4861
      %v5959 = vpack.c.b16 %v4864, %v4863
      %v5960 = vpack.c.b16 %v4866, %v4865
      %v5961 = vpack.c.b16 %v4868, %v4867
      %v5962 = vpack.c.b16 %v4870, %v4869
      %v5963 = vpack.c.b16 %v4872, %v4871
      %v5964 = vpack.c.b16 %v4874, %v4873
      %v5965 = vpack.c.b16 %v4876, %v4875
      %v5966 = vpack.c.b16 %v4878, %v4877
      %v5967 = vpack.c.b16 %v4880, %v4879
      %v5968 = vpack.c.b16 %v4882, %v4881
      %v5969 = vpack.c.b16 %v4884, %v4883
      %v5970 = vpack.c.b16 %v4886, %v4885
      %v5971 = vpack.c.b16 %v4888, %v4887
      %v5972 = vpack.c.b16 %v4890, %v4889
      %v5973 = vpack.c.b16 %v4892, %v4891
      %v5974 = vpack.c.b16 %v4894, %v4893
      %v5975 = vpack.c.b16 %v4896, %v4895
      %v5976 = vpack.c.b16 %v4898, %v4897
      %v5977 = vpack.c.b16 %v4900, %v4899
      %v5978 = vpack.c.b16 %v4902, %v4901
      %v5979 = vpack.c.b16 %v4904, %v4903
      %v5980 = vpack.c.b16 %v4906, %v4905
      %v5981 = vpack.c.b16 %v4908, %v4907
      %v5982 = vpack.c.b16 %v4910, %v4909
      %v5983 = vpack.c.b16 %v4912, %v4911
      %v5984 = vpack.c.b16 %v4914, %v4913
      %v5985 = vpack.c.b16 %v4916, %v4915
      %v5986 = vpack.c.b16 %v4918, %v4917
      %v5987 = vpack.c.b16 %v4920, %v4919
      %v5988 = vpack.c.b16 %v4922, %v4921
      %v5989 = vpack.c.b16 %v4924, %v4923
      %v5990 = vpack.c.b16 %v4926, %v4925
      %v5991 = vpack.c.b16 %v4928, %v4927
      %v5992 = vpack.c.b16 %v4930, %v4929
      %v5993 = vpack.c.b16 %v4932, %v4931
      %v5994 = vpack.c.b16 %v4934, %v4933
      %v5995 = vpack.c.b16 %v4936, %v4935
      %v5996 = vpack.c.b16 %v4938, %v4937
      %v5997 = vpack.c.b16 %v4940, %v4939
      %v5998 = vpack.c.b16 %v4942, %v4941
      %v5999 = vpack.c.b16 %v4944, %v4943
      %v6000 = vpack.c.b16 %v4946, %v4945
      %v6001 = vpack.c.b16 %v4948, %v4947
      %v6002 = vpack.c.b16 %v4950, %v4949
      %v6003 = vpack.c.b16 %v4952, %v4951
      %v6004 = vpack.c.b16 %v4954, %v4953
      %v6005 = vpack.c.b16 %v4956, %v4955
      %v6006 = vpack.c.b16 %v4958, %v4957
      %v6007 = vpack.c.b16 %v4960, %v4959
      %v6008 = vpack.c.b16 %v4962, %v4961
      %v6009 = vpack.c.b16 %v4964, %v4963
      %v6010 = vpack.c.b16 %v4966, %v4965
      %v6011 = vpack.c.b16 %v4968, %v4967
      %v6012 = vpack.c.b16 %v4970, %v4969
      %v6013 = vpack.c.b16 %v4972, %v4971
      %v6014 = vpack.c.b16 %v4974, %v4973
      %v6015 = vpack.c.b16 %v4976, %v4975
      %v6016 = vpack.c.b16 %v4978, %v4977
      %v6017 = vpack.c.b16 %v4980, %v4979
      %v6018 = vpack.c.b16 %v4982, %v4981
      %v6019 = vpack.c.b16 %v4984, %v4983
      %v6020 = vpack.c.b16 %v4986, %v4985
      %v6021 = vpack.c.b16 %v4988, %v4987
      %v6022 = vpack.c.b16 %v4990, %v4989
      %v6023 = vpack.c.b16 %v4992, %v4991
      %v6024 = vpack.c.b16 %v4994, %v4993
      %v6025 = vpack.c.b16 %v4996, %v4995
      %v6026 = vpack.c.b16 %v4998, %v4997
      %v6027 = vpack.c.b16 %v5000, %v4999
      %v6028 = vpack.c.b16 %v5002, %v5001
      %v6029 = vpack.c.b16 %v5004, %v5003
      %v6030 = vpack.c.b16 %v5006, %v5005
      %v6031 = vpack.c.b16 %v5008, %v5007
      %v6032 = vpack.c.b16 %v5010, %v5009
      %v6033 = vpack.c.b16 %v5012, %v5011
      %v6034 = vpack.c.b16 %v5014, %v5013
      %v6035 = vpack.c.b16 %v5016, %v5015
      %v6036 = vpack.c.b16 %v5018, %v5017
      %v6037 = vpack.c.b16 %v5020, %v5019
      %v6038 = vpack.c.b16 %v5022, %v5021
      %v6039 = vpack.c.b16 %v5024, %v5023
      %v6040 = vpack.c.b16 %v5026, %v5025
      %v6041 = vpack.c.b16 %v5028, %v5027
      %v6042 = vpack.c.b16 %v5030, %v5029
      %v6043 = vpack.c.b16 %v5032, %v5031
      %v6044 = vpack.c.b16 %v5034, %v5033
      %v6045 = vpack.c.b16 %v5036, %v5035
      %v6046 = vpack.c.b16 %v5038, %v5037
      %v6047 = vpack.c.b16 %v5040, %v5039
      %v6048 = vpack.c.b16 %v5042, %v5041
      %v6049 = vpack.c.b16 %v5044, %v5043
      %v6050 = vpack.c.b16 %v5046, %v5045
      %v6051 = vpack.c.b16 %v5048, %v5047
      %v6052 = vpack.c.b16 %v5050, %v5049
      %v6053 = vpack.c.b16 %v5052, %v5051
      %v6054 = vpack.c.b16 %v5054, %v5053
      %v6055 = vpack.c.b16 %v5056, %v5055
      %v6056 = vpack.c.b16 %v5058, %v5057
      %v6057 = vpack.c.b16 %v5060, %v5059
      %v6058 = vpack.c.b16 %v5062, %v5061
      %v6059 = vpack.c.b16 %v5064, %v5063
      %v6060 = vpack.c.b16 %v5066, %v5065
      %v6061 = vpack.c.b16 %v5068, %v5067
      %v6062 = vpack.c.b16 %v5070, %v5069
      %v6063 = vpack.c.b16 %v5072, %v5071
      %v6064 = vpack.c.b16 %v5074, %v5073
      %v6065 = vpack.c.b16 %v5076, %v5075
      %v6066 = vpack.c.b16 %v5078, %v5077
      %v6067 = vpack.c.b16 %v5080, %v5079
      %v6068 = vpack.c.b16 %v5082, %v5081
      %v6069 = vpack.c.b16 %v5084, %v5083
      %v6070 = vpack.c.b16 %v5086, %v5085
      %v6071 = vpack.c.b16 %v5088, %v5087
      %v6072 = vpack.c.b16 %v5090, %v5089
      %v6073 = vpack.c.b16 %v5092, %v5091
      %v6074 = vpack.c.b16 %v5094, %v5093
      %v6075 = vpack.c.b16 %v5096, %v5095
      %v6076 = vpack.c.b16 %v5098, %v5097
      %v6077 = vpack.c.b16 %v5100, %v5099
      %v6078 = vpack.c.b16 %v5102, %v5101
      %v6079 = vpack.c.b16 %v5104, %v5103
      %v6080 = vpack.c.b16 %v5106, %v5105
      %v6081 = vpack.c.b16 %v5108, %v5107
      %v6082 = vpack.c.b16 %v5110, %v5109
      %v6083 = vpack.c.b16 %v5112, %v5111
      %v6084 = vpack.c.b16 %v5114, %v5113
      %v6085 = vpack.c.b16 %v5116, %v5115
      %v6086 = vpack.c.b16 %v5118, %v5117
      %v6087 = vpack.c.b16 %v5120, %v5119
      %v6088 = vpack.c.b16 %v5122, %v5121
      %v6089 = vpack.c.b16 %v5124, %v5123
      %v6090 = vpack.c.b16 %v5126, %v5125
      %v6091 = vpack.c.b16 %v5128, %v5127
      %v6092 = vpack.c.b16 %v5130, %v5129
      %v6093 = vpack.c.b16 %v5132, %v5131
      %v6094 = vpack.c.b16 %v5134, %v5133
      %v6095 = vpack.c.b16 %v5136, %v5135
      %v6096 = vpack.c.b16 %v5138, %v5137
      %v6097 = vpack.c.b16 %v5140, %v5139
      %v6098 = vpack.c.b16 %v5142, %v5141
      %v6099 = vpack.c.b16 %v5144, %v5143
      %v6100 = vpack.c.b16 %v5146, %v5145
      %v6101 = vpack.c.b16 %v5148, %v5147
      %v6102 = vpack.c.b16 %v5150, %v5149
      %v6103 = vpack.c.b16 %v5152, %v5151
      %v6104 = vpack.c.b16 %v5154, %v5153
      %v6105 = vpack.c.b16 %v5156, %v5155
      %v6106 = vpack.c.b16 %v5158, %v5157
      %v6107 = vpack.c.b16 %v5160, %v5159
      %v6108 = vpack.c.b16 %v5162, %v5161
      %v6109 = vpack.c.b16 %v5164, %v5163
      %v6110 = vpack.c.b16 %v5166, %v5165
      %v6111 = vpack.c.b16 %v5168, %v5167
      %v6112 = vpack.c.b16 %v5170, %v5169
      %v6113 = vpack.c.b16 %v5172, %v5171
      %v6114 = vpack.c.b16 %v5174, %v5173
      %v6115 = vpack.c.b16 %v5176, %v5175
      %v6116 = vpack.c.b16 %v5178, %v5177
      %v6117 = vpack.c.b16 %v5180, %v5179
      %v6118 = vpack.c.b16 %v5182, %v5181
      %v6119 = vpack.c.b16 %v5184, %v5183
      %v6120 = vpack.c.b16 %v5186, %v5185
      %v6121 = vpack.c.b16 %v5188, %v5187
      %v6122 = vpack.c.b16 %v5190, %v5189
      %v6123 = vpack.c.b16 %v5192, %v5191
      %v6124 = vpack.c.b16 %v5194, %v5193
      %v6125 = vpack.c.b16 %v5196, %v5195
      %v6126 = vpack.c.b16 %v5198, %v5197
      %v6127 = vpack.c.b16 %v5200, %v5199
      %v6128 = vpack.c.b16 %v5202, %v5201
      %v6129 = vpack.c.b16 %v5204, %v5203
      %v6130 = vpack.c.b16 %v5206, %v5205
      %v6131 = vpack.c.b16 %v5208, %v5207
      %v6132 = vpack.c.b16 %v5210, %v5209
      %v6133 = vpack.c.b16 %v5212, %v5211
      %v6134 = vpack.c.b16 %v5214, %v5213
      %v6135 = vpack.c.b16 %v5216, %v5215
      %v6136 = vpack.c.b16 %v5218, %v5217
      %v6137 = vpack.c.b16 %v5220, %v5219
      %v6138 = vpack.c.b16 %v5222, %v5221
      %v6139 = vpack.c.b16 %v5224, %v5223
      %v6140 = vpack.c.b16 %v5226, %v5225
      %v6141 = vpack.c.b16 %v5228, %v5227
      %v6142 = vpack.c.b16 %v5230, %v5229
      %v6143 = vpack.c.b16 %v5232, %v5231
      %v6144 = vpack.c.b16 %v5234, %v5233
      %v6145 = vpack.c.b16 %v5236, %v5235
      %v6146 = vpack.c.b16 %v5238, %v5237
      %v6147 = vpack.c.b16 %v5240, %v5239
      %v6148 = vpack.c.b16 %v5242, %v5241
      %v6149 = vpack.c.b16 %v5244, %v5243
      %v6150 = vpack.c.b16 %v5246, %v5245
      %v6151 = vpack.c.b16 %v5248, %v5247
      %v6152 = vpack.c.b16 %v5250, %v5249
      %v6153 = vpack.c.b16 %v5252, %v5251
      %v6154 = vpack.c.b16 %v5254, %v5253
      %v6155 = vpack.c.b16 %v5256, %v5255
      %v6156 = vpack.c.b16 %v5258, %v5257
      %v6157 = vpack.c.b16 %v5260, %v5259
      %v6158 = vpack.c.b16 %v5262, %v5261
      %v6159 = vpack.c.b16 %v5264, %v5263
      %v6160 = vpack.c.b16 %v5266, %v5265
      %v6161 = vpack.c.b16 %v5268, %v5267
      %v6162 = vpack.c.b16 %v5270, %v5269
      %v6163 = vpack.c.b16 %v5272, %v5271
      %v6164 = vpack.c.b16 %v5274, %v5273
      %v6165 = vpack.c.b16 %v5276, %v5275
      %v6166 = vpack.c.b16 %v5278, %v5277
      %v6167 = vpack.c.b16 %v5280, %v5279
      %v6168 = vpack.c.b16 %v5282, %v5281
      %v6169 = vpack.c.b16 %v5284, %v5283
      %v6170 = vpack.c.b16 %v5286, %v5285
      %v6171 = vpack.c.b16 %v5288, %v5287
      %v6172 = vpack.c.b16 %v5290, %v5289
      %v6173 = vpack.c.b16 %v5292, %v5291
      %v6174 = vpack.c.b16 %v5294, %v5293
      %v6175 = vpack.c.b16 %v5296, %v5295
      %v6176 = vpack.c.b16 %v5298, %v5297
      %v6177 = vpack.c.b16 %v5300, %v5299
      %v6178 = vpack.c.b16 %v5302, %v5301
      %v6179 = vpack.c.b16 %v5304, %v5303
      %v6180 = vpack.c.b16 %v5306, %v5305
      %v6181 = vpack.c.b16 %v5308, %v5307
      %v6182 = vpack.c.b16 %v5310, %v5309
      %v6183 = vpack.c.b16 %v5312, %v5311
      %v6184 = vpack.c.b16 %v5314, %v5313
      %v6185 = vpack.c.b16 %v5316, %v5315
      %v6186 = vpack.c.b16 %v5318, %v5317
      %v6187 = vpack.c.b16 %v5320, %v5319
      %v6188 = vpack.c.b16 %v5322, %v5321
      %v6189 = vpack.c.b16 %v5324, %v5323
      %v6190 = vpack.c.b16 %v5326, %v5325
      %v6191 = vpack.c.b16 %v5328, %v5327
      %v6192 = vpack.c.b16 %v5330, %v5329
      %v6193 = vpack.c.b16 %v5332, %v5331
      %v6194 = vpack.c.b16 %v5334, %v5333
      %v6195 = vpack.c.b16 %v5336, %v5335
      %v6196 = vpack.c.b16 %v5338, %v5337
      %v6197 = vpack.c.b16 %v5340, %v5339
      %v6198 = vpack.c.b16 %v5342, %v5341
      %v6199 = vpack.c.b16 %v5344, %v5343
      %v6200 = vpack.c.b16 %v5346, %v5345
      %v6201 = vpack.c.b16 %v5348, %v5347
      %v6202 = vpack.c.b16 %v5350, %v5349
      %v6203 = vpack.c.b16 %v5352, %v5351
      %v6204 = vpack.c.b16 %v5354, %v5353
      %v6205 = vpack.c.b16 %v5356, %v5355
      %v6206 = vpack.c.b16 %v5358, %v5357
      %v6207 = vpack.c.b16 %v5360, %v5359
      %v6208 = vpack.c.b16 %v5362, %v5361
      %v6209 = vpack.c.b16 %v5364, %v5363
      %v6210 = vpack.c.b16 %v5366, %v5365
      %v6211 = vpack.c.b16 %v5368, %v5367
      %v6212 = vpack.c.b16 %v5370, %v5369
      %v6213 = vpack.c.b16 %v5372, %v5371
      %v6214 = vpack.c.b16 %v5374, %v5373
      %v6215 = vpack.c.b16 %v5376, %v5375
      %v6216 = vpack.c.b16 %v5378, %v5377
      %v6217 = vpack.c.b16 %v5380, %v5379
      %v6218 = vpack.c.b16 %v5382, %v5381
      %v6219 = vpack.c.b16 %v5384, %v5383
      %v6220 = vpack.c.b16 %v5386, %v5385
      %v6221 = vpack.c.b16 %v5388, %v5387
      %v6222 = vpack.c.b16 %v5390, %v5389
      %v6223 = vpack.c.b16 %v5392, %v5391
      %v6224 = vpack.c.b16 %v5394, %v5393
      %v6225 = vpack.c.b16 %v5396, %v5395
      %v6226 = vpack.c.b16 %v5398, %v5397
      %v6227 = vpack.c.b16 %v5400, %v5399
      %v6228 = vpack.c.b16 %v5402, %v5401
      %v6229 = vpack.c.b16 %v5404, %v5403
      %v6230 = vpack.c.b16 %v5406, %v5405
      %v6231 = vpack.c.b16 %v5408, %v5407
      %v6232 = vpack.c.b16 %v5410, %v5409
      %v6233 = vpack.c.b16 %v5412, %v5411
      %v6234 = vpack.c.b16 %v5414, %v5413
      %v6235 = vpack.c.b16 %v5416, %v5415
      %v6236 = vpack.c.b16 %v5418, %v5417
      %v6237 = vpack.c.b16 %v5420, %v5419
      %v6238 = vpack.c.b16 %v5422, %v5421
      %v6239 = vpack.c.b16 %v5424, %v5423
      %v6240 = vpack.c.b16 %v5426, %v5425
      %v6241 = vpack.c.b16 %v5428, %v5427
      %v6242 = vpack.c.b16 %v5430, %v5429
      %v6243 = vpack.c.b16 %v5432, %v5431
      %v6244 = vpack.c.b16 %v5434, %v5433
      %v6245 = vpack.c.b16 %v5436, %v5435
      %v6246 = vpack.c.b16 %v5438, %v5437
      %v6247 = vpack.c.b16 %v5440, %v5439
      %v6248 = vpack.c.b16 %v5442, %v5441
      %v6249 = vpack.c.b16 %v5444, %v5443
      %v6250 = vpack.c.b16 %v5446, %v5445
      %v6251 = vpack.c.b16 %v5448, %v5447
      %v6252 = vpack.c.b16 %v5450, %v5449
      %v6253 = vpack.c.b16 %v5452, %v5451
      %v6254 = vpack.c.b16 %v5454, %v5453
      %v6255 = vpack.c.b16 %v5456, %v5455
      %v6256 = vpack.c.b16 %v5458, %v5457
      %v6257 = vpack.c.b16 %v5460, %v5459
      %v6258 = vpack.c.b16 %v5462, %v5461
      %v6259 = vpack.c.b16 %v5464, %v5463
      %v6260 = vpack.c.b16 %v5466, %v5465
      %v6261 = vpack.c.b16 %v5468, %v5467
      %v6262 = vpack.c.b16 %v5470, %v5469
      %v6263 = vpack.c.b16 %v5472, %v5471
      %v6264 = vpack.c.b16 %v5474, %v5473
      %v6265 = vpack.c.b16 %v5476, %v5475
      %v6266 = vpack.c.b16 %v5478, %v5477
      %v6267 = vpack.c.b16 %v5480, %v5479
      %v6268 = vpack.c.b16 %v5482, %v5481
      %v6269 = vpack.c.b16 %v5484, %v5483
      %v6270 = vpack.c.b16 %v5486, %v5485
      %v6271 = vpack.c.b16 %v5488, %v5487
      %v6272 = vpack.c.b16 %v5490, %v5489
      %v6273 = vpack.c.b16 %v5492, %v5491
      %v6274 = vpack.c.b16 %v5494, %v5493
      %v6275 = vpack.c.b16 %v5496, %v5495
      %v6276 = vpack.c.b16 %v5498, %v5497
      %v6277 = vpack.c.b16 %v5500, %v5499
      %v6278 = vpack.c.b16 %v5502, %v5501
      %v6279 = vpack.c.b16 %v5504, %v5503
      %v6280 = vpack.c.b16 %v5506, %v5505
      %v6281 = vpack.c.b16 %v5508, %v5507
      %v6282 = vpack.c.b16 %v5510, %v5509
      %v6283 = vpack.c.b16 %v5512, %v5511
      %v6284 = vpack.c.b16 %v5514, %v5513
      %v6285 = vpack.c.b16 %v5516, %v5515
      %v6286 = vpack.c.b16 %v5518, %v5517
      %7055 = vmatprep.subr.bf16.mxu0 0
      %7056 = vmatpush1.bf16.msra.mxu0 %v5519
      %7057 = vmatprep.subr.bf16.mxu0 0
      %7058 = vmatpush1.bf16.msra.mxu0 %v5520
      %7059 = vmatprep.subr.bf16.mxu0 0
      %7060 = vmatpush1.bf16.msra.mxu0 %v5521
      %7061 = vmatprep.subr.bf16.mxu0 0
      %7062 = vmatpush1.bf16.msra.mxu0 %v5522
      %7063 = vmatprep.subr.bf16.mxu0 0
      %7064 = vmatpush1.bf16.msra.mxu0 %v5523
      %7065 = vmatprep.subr.bf16.mxu0 0
      %7066 = vmatpush1.bf16.msra.mxu0 %v5524
      %7067 = vmatprep.subr.bf16.mxu0 0
      %7068 = vmatpush1.bf16.msra.mxu0 %v5525
      %7069 = vmatprep.subr.bf16.mxu0 0
      %7070 = vmatpush1.bf16.msra.mxu0 %v5526
      %7071 = vmatprep.subr.bf16.mxu0 0
      %7072 = vmatpush1.bf16.msra.mxu0 %v5527
      %7073 = vmatprep.subr.bf16.mxu0 0
      %7074 = vmatpush1.bf16.msra.mxu0 %v5528
      %7075 = vmatprep.subr.bf16.mxu0 0
      %7076 = vmatpush1.bf16.msra.mxu0 %v5529
      %7077 = vmatprep.subr.bf16.mxu0 0
      %7078 = vmatpush1.bf16.msra.mxu0 %v5530
      %7079 = vmatprep.subr.bf16.mxu0 0
      %7080 = vmatpush1.bf16.msra.mxu0 %v5531
      %7081 = vmatprep.subr.bf16.mxu0 0
      %7082 = vmatpush1.bf16.msra.mxu0 %v5532
      %7083 = vmatprep.subr.bf16.mxu0 0
      %7084 = vmatpush1.bf16.msra.mxu0 %v5533
      %7085 = vmatprep.subr.bf16.mxu0 0
      %7086 = vmatpush1.bf16.msra.mxu0 %v5534
      %7087 = vmatprep.mubr.bf16.mxu0 %v815
      %7088 = vmatmul.mubr.bf16.gmra.mrb[0].mxu0 %v814
      %v7089 = vpop.f32.mrb[0].mxu0
      %v7090 = vadd.f32 0.0, %v7089
      %v7091 = vpop.f32.mrb[0].mxu0
      %v7092 = vpop.f32.mrb[0].mxu0
      %v7093 = vpop.f32.mrb[0].mxu0
      %7094 = vdwg.mxu0
      %7095 = vmatprep.subr.bf16.mxu0 0
      %7096 = vmatpush1.bf16.msra.mxu0 %v5535
      %7097 = vmatprep.subr.bf16.mxu0 0
      %7098 = vmatpush1.bf16.msra.mxu0 %v5536
      %7099 = vmatprep.subr.bf16.mxu0 0
      %7100 = vmatpush1.bf16.msra.mxu0 %v5537
      %7101 = vmatprep.subr.bf16.mxu0 0
      %7102 = vmatpush1.bf16.msra.mxu0 %v5538
      %7103 = vmatprep.subr.bf16.mxu0 0
      %7104 = vmatpush1.bf16.msra.mxu0 %v5539
      %7105 = vmatprep.subr.bf16.mxu0 0
      %7106 = vmatpush1.bf16.msra.mxu0 %v5540
      %7107 = vmatprep.subr.bf16.mxu0 0
      %7108 = vmatpush1.bf16.msra.mxu0 %v5541
      %7109 = vmatprep.subr.bf16.mxu0 0
      %7110 = vmatpush1.bf16.msra.mxu0 %v5542
      %7111 = vmatprep.subr.bf16.mxu0 0
      %7112 = vmatpush1.bf16.msra.mxu0 %v5543
      %7113 = vmatprep.subr.bf16.mxu0 0
      %7114 = vmatpush1.bf16.msra.mxu0 %v5544
      %7115 = vmatprep.subr.bf16.mxu0 0
      %7116 = vmatpush1.bf16.msra.mxu0 %v5545
      %7117 = vmatprep.subr.bf16.mxu0 0
      %7118 = vmatpush1.bf16.msra.mxu0 %v5546
      %7119 = vmatprep.subr.bf16.mxu0 0
      %7120 = vmatpush1.bf16.msra.mxu0 %v5547
      %7121 = vmatprep.subr.bf16.mxu0 0
      %7122 = vmatpush1.bf16.msra.mxu0 %v5548
      %7123 = vmatprep.subr.bf16.mxu0 0
      %7124 = vmatpush1.bf16.msra.mxu0 %v5549
      %7125 = vmatprep.subr.bf16.mxu0 0
      %7126 = vmatpush1.bf16.msra.mxu0 %v5550
      %7127 = vmatprep.mubr.bf16.mxu0 %v817
      %7128 = vmatmul.mubr.bf16.gmra.mrb[0].mxu0 %v816
      %v7129 = vpop.f32.mrb[0].mxu0
      %v7130 = vadd.f32 %v7090, %v7129
      %v7131 = vpop.f32.mrb[0].mxu0
      %v7132 = vpop.f32.mrb[0].mxu0
      %v7133 = vpop.f32.mrb[0].mxu0
      %7134 = vdwg.mxu0
      %7135 = vmatprep.subr.bf16.mxu0 0
      %7136 = vmatpush1.bf16.msra.mxu0 %v5551
      %7137 = vmatprep.subr.bf16.mxu0 0
      %7138 = vmatpush1.bf16.msra.mxu0 %v5552
      %7139 = vmatprep.subr.bf16.mxu0 0
      %7140 = vmatpush1.bf16.msra.mxu0 %v5553
      %7141 = vmatprep.subr.bf16.mxu0 0
      %7142 = vmatpush1.bf16.msra.mxu0 %v5554
      %7143 = vmatprep.subr.bf16.mxu0 0
      %7144 = vmatpush1.bf16.msra.mxu0 %v5555
      %7145 = vmatprep.subr.bf16.mxu0 0
      %7146 = vmatpush1.bf16.msra.mxu0 %v5556
      %7147 = vmatprep.subr.bf16.mxu0 0
      %7148 = vmatpush1.bf16.msra.mxu0 %v5557
      %7149 = vmatprep.subr.bf16.mxu0 0
      %7150 = vmatpush1.bf16.msra.mxu0 %v5558
      %7151 = vmatprep.subr.bf16.mxu0 0
      %7152 = vmatpush1.bf16.msra.mxu0 %v5559
      %7153 = vmatprep.subr.bf16.mxu0 0
      %7154 = vmatpush1.bf16.msra.mxu0 %v5560
      %7155 = vmatprep.subr.bf16.mxu0 0
      %7156 = vmatpush1.bf16.msra.mxu0 %v5561
      %7157 = vmatprep.subr.bf16.mxu0 0
      %7158 = vmatpush1.bf16.msra.mxu0 %v5562
      %7159 = vmatprep.subr.bf16.mxu0 0
      %7160 = vmatpush1.bf16.msra.mxu0 %v5563
      %7161 = vmatprep.subr.bf16.mxu0 0
      %7162 = vmatpush1.bf16.msra.mxu0 %v5564
      %7163 = vmatprep.subr.bf16.mxu0 0
      %7164 = vmatpush1.bf16.msra.mxu0 %v5565
      %7165 = vmatprep.subr.bf16.mxu0 0
      %7166 = vmatpush1.bf16.msra.mxu0 %v5566
      %7167 = vmatprep.mubr.bf16.mxu0 %v819
      %7168 = vmatmul.mubr.bf16.gmra.mrb[0].mxu0 %v818
      %v7169 = vpop.f32.mrb[0].mxu0
      %v7170 = vadd.f32 %v7130, %v7169
      %v7171 = vpop.f32.mrb[0].mxu0
      %v7172 = vpop.f32.mrb[0].mxu0
      %v7173 = vpop.f32.mrb[0].mxu0
      %7174 = vdwg.mxu0
      %7175 = vmatprep.subr.bf16.mxu0 0
      %7176 = vmatpush1.bf16.msra.mxu0 %v5567
      %7177 = vmatprep.subr.bf16.mxu0 0
      %7178 = vmatpush1.bf16.msra.mxu0 %v5568
      %7179 = vmatprep.subr.bf16.mxu0 0
      %7180 = vmatpush1.bf16.msra.mxu0 %v5569
      %7181 = vmatprep.subr.bf16.mxu0 0
      %7182 = vmatpush1.bf16.msra.mxu0 %v5570
      %7183 = vmatprep.subr.bf16.mxu0 0
      %7184 = vmatpush1.bf16.msra.mxu0 %v5571
      %7185 = vmatprep.subr.bf16.mxu0 0
      %7186 = vmatpush1.bf16.msra.mxu0 %v5572
      %7187 = vmatprep.subr.bf16.mxu0 0
      %7188 = vmatpush1.bf16.msra.mxu0 %v5573
      %7189 = vmatprep.subr.bf16.mxu0 0
      %7190 = vmatpush1.bf16.msra.mxu0 %v5574
      %7191 = vmatprep.subr.bf16.mxu0 0
      %7192 = vmatpush1.bf16.msra.mxu0 %v5575
      %7193 = vmatprep.subr.bf16.mxu0 0
      %7194 = vmatpush1.bf16.msra.mxu0 %v5576
      %7195 = vmatprep.subr.bf16.mxu0 0
      %7196 = vmatpush1.bf16.msra.mxu0 %v5577
      %7197 = vmatprep.subr.bf16.mxu0 0
      %7198 = vmatpush1.bf16.msra.mxu0 %v5578
      %7199 = vmatprep.subr.bf16.mxu0 0
      %7200 = vmatpush1.bf16.msra.mxu0 %v5579
      %7201 = vmatprep.subr.bf16.mxu0 0
      %7202 = vmatpush1.bf16.msra.mxu0 %v5580
      %7203 = vmatprep.subr.bf16.mxu0 0
      %7204 = vmatpush1.bf16.msra.mxu0 %v5581
      %7205 = vmatprep.subr.bf16.mxu0 0
      %7206 = vmatpush1.bf16.msra.mxu0 %v5582
      %7207 = vmatprep.mubr.bf16.mxu0 %v821
      %7208 = vmatmul.mubr.bf16.gmra.mrb[0].mxu0 %v820
      %v7209 = vpop.f32.mrb[0].mxu0
      %v7210 = vadd.f32 %v7170, %v7209
      %v7211 = vpop.f32.mrb[0].mxu0
      %v7212 = vpop.f32.mrb[0].mxu0
      %v7213 = vpop.f32.mrb[0].mxu0
      %7214 = vdwg.mxu0
      %7215 = vmatprep.subr.bf16.mxu0 0
      %7216 = vmatpush1.bf16.msra.mxu0 %v5583
      %7217 = vmatprep.subr.bf16.mxu0 0
      %7218 = vmatpush1.bf16.msra.mxu0 %v5584
      %7219 = vmatprep.subr.bf16.mxu0 0
      %7220 = vmatpush1.bf16.msra.mxu0 %v5585
      %7221 = vmatprep.subr.bf16.mxu0 0
      %7222 = vmatpush1.bf16.msra.mxu0 %v5586
      %7223 = vmatprep.subr.bf16.mxu0 0
      %7224 = vmatpush1.bf16.msra.mxu0 %v5587
      %7225 = vmatprep.subr.bf16.mxu0 0
      %7226 = vmatpush1.bf16.msra.mxu0 %v5588
      %7227 = vmatprep.subr.bf16.mxu0 0
      %7228 = vmatpush1.bf16.msra.mxu0 %v5589
      %7229 = vmatprep.subr.bf16.mxu0 0
      %7230 = vmatpush1.bf16.msra.mxu0 %v5590
      %7231 = vmatprep.subr.bf16.mxu0 0
      %7232 = vmatpush1.bf16.msra.mxu0 %v5591
      %7233 = vmatprep.subr.bf16.mxu0 0
      %7234 = vmatpush1.bf16.msra.mxu0 %v5592
      %7235 = vmatprep.subr.bf16.mxu0 0
      %7236 = vmatpush1.bf16.msra.mxu0 %v5593
      %7237 = vmatprep.subr.bf16.mxu0 0
      %7238 = vmatpush1.bf16.msra.mxu0 %v5594
      %7239 = vmatprep.subr.bf16.mxu0 0
      %7240 = vmatpush1.bf16.msra.mxu0 %v5595
      %7241 = vmatprep.subr.bf16.mxu0 0
      %7242 = vmatpush1.bf16.msra.mxu0 %v5596
      %7243 = vmatprep.subr.bf16.mxu0 0
      %7244 = vmatpush1.bf16.msra.mxu0 %v5597
      %7245 = vmatprep.subr.bf16.mxu0 0
      %7246 = vmatpush1.bf16.msra.mxu0 %v5598
      %7247 = vmatprep.mubr.bf16.mxu0 %v823
      %7248 = vmatmul.mubr.bf16.gmra.mrb[0].mxu0 %v822
      %v7249 = vpop.f32.mrb[0].mxu0
      %v7250 = vadd.f32 %v7210, %v7249
      %v7251 = vpop.f32.mrb[0].mxu0
      %v7252 = vpop.f32.mrb[0].mxu0
      %v7253 = vpop.f32.mrb[0].mxu0
      %7254 = vdwg.mxu0
      %7255 = vmatprep.subr.bf16.mxu0 0
      %7256 = vmatpush1.bf16.msra.mxu0 %v5599
      %7257 = vmatprep.subr.bf16.mxu0 0
      %7258 = vmatpush1.bf16.msra.mxu0 %v5600
      %7259 = vmatprep.subr.bf16.mxu0 0
      %7260 = vmatpush1.bf16.msra.mxu0 %v5601
      %7261 = vmatprep.subr.bf16.mxu0 0
      %7262 = vmatpush1.bf16.msra.mxu0 %v5602
      %7263 = vmatprep.subr.bf16.mxu0 0
      %7264 = vmatpush1.bf16.msra.mxu0 %v5603
      %7265 = vmatprep.subr.bf16.mxu0 0
      %7266 = vmatpush1.bf16.msra.mxu0 %v5604
      %7267 = vmatprep.subr.bf16.mxu0 0
      %7268 = vmatpush1.bf16.msra.mxu0 %v5605
      %7269 = vmatprep.subr.bf16.mxu0 0
      %7270 = vmatpush1.bf16.msra.mxu0 %v5606
      %7271 = vmatprep.subr.bf16.mxu0 0
      %7272 = vmatpush1.bf16.msra.mxu0 %v5607
      %7273 = vmatprep.subr.bf16.mxu0 0
      %7274 = vmatpush1.bf16.msra.mxu0 %v5608
      %7275 = vmatprep.subr.bf16.mxu0 0
      %7276 = vmatpush1.bf16.msra.mxu0 %v5609
      %7277 = vmatprep.subr.bf16.mxu0 0
      %7278 = vmatpush1.bf16.msra.mxu0 %v5610
      %7279 = vmatprep.subr.bf16.mxu0 0
      %7280 = vmatpush1.bf16.msra.mxu0 %v5611
      %7281 = vmatprep.subr.bf16.mxu0 0
      %7282 = vmatpush1.bf16.msra.mxu0 %v5612
      %7283 = vmatprep.subr.bf16.mxu0 0
      %7284 = vmatpush1.bf16.msra.mxu0 %v5613
      %7285 = vmatprep.subr.bf16.mxu0 0
      %7286 = vmatpush1.bf16.msra.mxu0 %v5614
      %7287 = vmatprep.mubr.bf16.mxu0 %v825
      %7288 = vmatmul.mubr.bf16.gmra.mrb[0].mxu0 %v824
      %v7289 = vpop.f32.mrb[0].mxu0
      %v7290 = vadd.f32 %v7250, %v7289
      %v7291 = vpop.f32.mrb[0].mxu0
      %v7292 = vpop.f32.mrb[0].mxu0
      %v7293 = vpop.f32.mrb[0].mxu0
      %7294 = vdwg.mxu0
      %7295 = vmatprep.subr.bf16.mxu0 0
      %7296 = vmatpush1.bf16.msra.mxu0 %v5615
      %7297 = vmatprep.subr.bf16.mxu0 0
      %7298 = vmatpush1.bf16.msra.mxu0 %v5616
      %7299 = vmatprep.subr.bf16.mxu0 0
      %7300 = vmatpush1.bf16.msra.mxu0 %v5617
      %7301 = vmatprep.subr.bf16.mxu0 0
      %7302 = vmatpush1.bf16.msra.mxu0 %v5618
      %7303 = vmatprep.subr.bf16.mxu0 0
      %7304 = vmatpush1.bf16.msra.mxu0 %v5619
      %7305 = vmatprep.subr.bf16.mxu0 0
      %7306 = vmatpush1.bf16.msra.mxu0 %v5620
      %7307 = vmatprep.subr.bf16.mxu0 0
      %7308 = vmatpush1.bf16.msra.mxu0 %v5621
      %7309 = vmatprep.subr.bf16.mxu0 0
      %7310 = vmatpush1.bf16.msra.mxu0 %v5622
      %7311 = vmatprep.subr.bf16.mxu0 0
      %7312 = vmatpush1.bf16.msra.mxu0 %v5623
      %7313 = vmatprep.subr.bf16.mxu0 0
      %7314 = vmatpush1.bf16.msra.mxu0 %v5624
      %7315 = vmatprep.subr.bf16.mxu0 0
      %7316 = vmatpush1.bf16.msra.mxu0 %v5625
      %7317 = vmatprep.subr.bf16.mxu0 0
      %7318 = vmatpush1.bf16.msra.mxu0 %v5626
      %7319 = vmatprep.subr.bf16.mxu0 0
      %7320 = vmatpush1.bf16.msra.mxu0 %v5627
      %7321 = vmatprep.subr.bf16.mxu0 0
      %7322 = vmatpush1.bf16.msra.mxu0 %v5628
      %7323 = vmatprep.subr.bf16.mxu0 0
      %7324 = vmatpush1.bf16.msra.mxu0 %v5629
      %7325 = vmatprep.subr.bf16.mxu0 0
      %7326 = vmatpush1.bf16.msra.mxu0 %v5630
      %7327 = vmatprep.mubr.bf16.mxu0 %v827
      %7328 = vmatmul.mubr.bf16.gmra.mrb[0].mxu0 %v826
      %v7329 = vpop.f32.mrb[0].mxu0
      %v7330 = vadd.f32 %v7290, %v7329
      %v7331 = vpop.f32.mrb[0].mxu0
      %v7332 = vpop.f32.mrb[0].mxu0
      %v7333 = vpop.f32.mrb[0].mxu0
      %7334 = vdwg.mxu0
      %7335 = vmatprep.subr.bf16.mxu0 0
      %7336 = vmatpush1.bf16.msra.mxu0 %v5631
      %7337 = vmatprep.subr.bf16.mxu0 0
      %7338 = vmatpush1.bf16.msra.mxu0 %v5632
      %7339 = vmatprep.subr.bf16.mxu0 0
      %7340 = vmatpush1.bf16.msra.mxu0 %v5633
      %7341 = vmatprep.subr.bf16.mxu0 0
      %7342 = vmatpush1.bf16.msra.mxu0 %v5634
      %7343 = vmatprep.subr.bf16.mxu0 0
      %7344 = vmatpush1.bf16.msra.mxu0 %v5635
      %7345 = vmatprep.subr.bf16.mxu0 0
      %7346 = vmatpush1.bf16.msra.mxu0 %v5636
      %7347 = vmatprep.subr.bf16.mxu0 0
      %7348 = vmatpush1.bf16.msra.mxu0 %v5637
      %7349 = vmatprep.subr.bf16.mxu0 0
      %7350 = vmatpush1.bf16.msra.mxu0 %v5638
      %7351 = vmatprep.subr.bf16.mxu0 0
      %7352 = vmatpush1.bf16.msra.mxu0 %v5639
      %7353 = vmatprep.subr.bf16.mxu0 0
      %7354 = vmatpush1.bf16.msra.mxu0 %v5640
      %7355 = vmatprep.subr.bf16.mxu0 0
      %7356 = vmatpush1.bf16.msra.mxu0 %v5641
      %7357 = vmatprep.subr.bf16.mxu0 0
      %7358 = vmatpush1.bf16.msra.mxu0 %v5642
      %7359 = vmatprep.subr.bf16.mxu0 0
      %7360 = vmatpush1.bf16.msra.mxu0 %v5643
      %7361 = vmatprep.subr.bf16.mxu0 0
      %7362 = vmatpush1.bf16.msra.mxu0 %v5644
      %7363 = vmatprep.subr.bf16.mxu0 0
      %7364 = vmatpush1.bf16.msra.mxu0 %v5645
      %7365 = vmatprep.subr.bf16.mxu0 0
      %7366 = vmatpush1.bf16.msra.mxu0 %v5646
      %7367 = vmatprep.mubr.bf16.mxu0 %v829
      %7368 = vmatmul.mubr.bf16.gmra.mrb[0].mxu0 %v828
      %v7369 = vpop.f32.mrb[0].mxu0
      %v7370 = vadd.f32 %v7330, %v7369
      %v7371 = vpop.f32.mrb[0].mxu0
      %v7372 = vpop.f32.mrb[0].mxu0
      %v7373 = vpop.f32.mrb[0].mxu0
      %7374 = vdwg.mxu0
      %7375 = vmatprep.subr.bf16.mxu0 0
      %7376 = vmatpush1.bf16.msra.mxu0 %v5647
      %7377 = vmatprep.subr.bf16.mxu0 0
      %7378 = vmatpush1.bf16.msra.mxu0 %v5648
      %7379 = vmatprep.subr.bf16.mxu0 0
      %7380 = vmatpush1.bf16.msra.mxu0 %v5649
      %7381 = vmatprep.subr.bf16.mxu0 0
      %7382 = vmatpush1.bf16.msra.mxu0 %v5650
      %7383 = vmatprep.subr.bf16.mxu0 0
      %7384 = vmatpush1.bf16.msra.mxu0 %v5651
      %7385 = vmatprep.subr.bf16.mxu0 0
      %7386 = vmatpush1.bf16.msra.mxu0 %v5652
      %7387 = vmatprep.subr.bf16.mxu0 0
      %7388 = vmatpush1.bf16.msra.mxu0 %v5653
      %7389 = vmatprep.subr.bf16.mxu0 0
      %7390 = vmatpush1.bf16.msra.mxu0 %v5654
      %7391 = vmatprep.subr.bf16.mxu0 0
      %7392 = vmatpush1.bf16.msra.mxu0 %v5655
      %7393 = vmatprep.subr.bf16.mxu0 0
      %7394 = vmatpush1.bf16.msra.mxu0 %v5656
      %7395 = vmatprep.subr.bf16.mxu0 0
      %7396 = vmatpush1.bf16.msra.mxu0 %v5657
      %7397 = vmatprep.subr.bf16.mxu0 0
      %7398 = vmatpush1.bf16.msra.mxu0 %v5658
      %7399 = vmatprep.subr.bf16.mxu0 0
      %7400 = vmatpush1.bf16.msra.mxu0 %v5659
      %7401 = vmatprep.subr.bf16.mxu0 0
      %7402 = vmatpush1.bf16.msra.mxu0 %v5660
      %7403 = vmatprep.subr.bf16.mxu0 0
      %7404 = vmatpush1.bf16.msra.mxu0 %v5661
      %7405 = vmatprep.subr.bf16.mxu0 0
      %7406 = vmatpush1.bf16.msra.mxu0 %v5662
      %7407 = vmatprep.mubr.bf16.mxu0 %v831
      %7408 = vmatmul.mubr.bf16.gmra.mrb[0].mxu0 %v830
      %v7409 = vpop.f32.mrb[0].mxu0
      %v7410 = vadd.f32 %v7370, %v7409
      %v7411 = vpop.f32.mrb[0].mxu0
      %v7412 = vpop.f32.mrb[0].mxu0
      %v7413 = vpop.f32.mrb[0].mxu0
      %7414 = vdwg.mxu0
      %7415 = vmatprep.subr.bf16.mxu0 0
      %7416 = vmatpush1.bf16.msra.mxu0 %v5663
      %7417 = vmatprep.subr.bf16.mxu0 0
      %7418 = vmatpush1.bf16.msra.mxu0 %v5664
      %7419 = vmatprep.subr.bf16.mxu0 0
      %7420 = vmatpush1.bf16.msra.mxu0 %v5665
      %7421 = vmatprep.subr.bf16.mxu0 0
      %7422 = vmatpush1.bf16.msra.mxu0 %v5666
      %7423 = vmatprep.subr.bf16.mxu0 0
      %7424 = vmatpush1.bf16.msra.mxu0 %v5667
      %7425 = vmatprep.subr.bf16.mxu0 0
      %7426 = vmatpush1.bf16.msra.mxu0 %v5668
      %7427 = vmatprep.subr.bf16.mxu0 0
      %7428 = vmatpush1.bf16.msra.mxu0 %v5669
      %7429 = vmatprep.subr.bf16.mxu0 0
      %7430 = vmatpush1.bf16.msra.mxu0 %v5670
      %7431 = vmatprep.subr.bf16.mxu0 0
      %7432 = vmatpush1.bf16.msra.mxu0 %v5671
      %7433 = vmatprep.subr.bf16.mxu0 0
      %7434 = vmatpush1.bf16.msra.mxu0 %v5672
      %7435 = vmatprep.subr.bf16.mxu0 0
      %7436 = vmatpush1.bf16.msra.mxu0 %v5673
      %7437 = vmatprep.subr.bf16.mxu0 0
      %7438 = vmatpush1.bf16.msra.mxu0 %v5674
      %7439 = vmatprep.subr.bf16.mxu0 0
      %7440 = vmatpush1.bf16.msra.mxu0 %v5675
      %7441 = vmatprep.subr.bf16.mxu0 0
      %7442 = vmatpush1.bf16.msra.mxu0 %v5676
      %7443 = vmatprep.subr.bf16.mxu0 0
      %7444 = vmatpush1.bf16.msra.mxu0 %v5677
      %7445 = vmatprep.subr.bf16.mxu0 0
      %7446 = vmatpush1.bf16.msra.mxu0 %v5678
      %7447 = vmatprep.mubr.bf16.mxu0 %v833
      %7448 = vmatmul.mubr.bf16.gmra.mrb[0].mxu0 %v832
      %v7449 = vpop.f32.mrb[0].mxu0
      %v7450 = vadd.f32 %v7410, %v7449
      %v7451 = vpop.f32.mrb[0].mxu0
      %v7452 = vpop.f32.mrb[0].mxu0
      %v7453 = vpop.f32.mrb[0].mxu0
      %7454 = vdwg.mxu0
      %7455 = vmatprep.subr.bf16.mxu0 0
      %7456 = vmatpush1.bf16.msra.mxu0 %v5679
      %7457 = vmatprep.subr.bf16.mxu0 0
      %7458 = vmatpush1.bf16.msra.mxu0 %v5680
      %7459 = vmatprep.subr.bf16.mxu0 0
      %7460 = vmatpush1.bf16.msra.mxu0 %v5681
      %7461 = vmatprep.subr.bf16.mxu0 0
      %7462 = vmatpush1.bf16.msra.mxu0 %v5682
      %7463 = vmatprep.subr.bf16.mxu0 0
      %7464 = vmatpush1.bf16.msra.mxu0 %v5683
      %7465 = vmatprep.subr.bf16.mxu0 0
      %7466 = vmatpush1.bf16.msra.mxu0 %v5684
      %7467 = vmatprep.subr.bf16.mxu0 0
      %7468 = vmatpush1.bf16.msra.mxu0 %v5685
      %7469 = vmatprep.subr.bf16.mxu0 0
      %7470 = vmatpush1.bf16.msra.mxu0 %v5686
      %7471 = vmatprep.subr.bf16.mxu0 0
      %7472 = vmatpush1.bf16.msra.mxu0 %v5687
      %7473 = vmatprep.subr.bf16.mxu0 0
      %7474 = vmatpush1.bf16.msra.mxu0 %v5688
      %7475 = vmatprep.subr.bf16.mxu0 0
      %7476 = vmatpush1.bf16.msra.mxu0 %v5689
      %7477 = vmatprep.subr.bf16.mxu0 0
      %7478 = vmatpush1.bf16.msra.mxu0 %v5690
      %7479 = vmatprep.subr.bf16.mxu0 0
      %7480 = vmatpush1.bf16.msra.mxu0 %v5691
      %7481 = vmatprep.subr.bf16.mxu0 0
      %7482 = vmatpush1.bf16.msra.mxu0 %v5692
      %7483 = vmatprep.subr.bf16.mxu0 0
      %7484 = vmatpush1.bf16.msra.mxu0 %v5693
      %7485 = vmatprep.subr.bf16.mxu0 0
      %7486 = vmatpush1.bf16.msra.mxu0 %v5694
      %7487 = vmatprep.mubr.bf16.mxu0 %v835
      %7488 = vmatmul.mubr.bf16.gmra.mrb[0].mxu0 %v834
      %v7489 = vpop.f32.mrb[0].mxu0
      %v7490 = vadd.f32 %v7450, %v7489
      %v7491 = vpop.f32.mrb[0].mxu0
      %v7492 = vpop.f32.mrb[0].mxu0
      %v7493 = vpop.f32.mrb[0].mxu0
      %7494 = vdwg.mxu0
      %7495 = vmatprep.subr.bf16.mxu0 0
      %7496 = vmatpush1.bf16.msra.mxu0 %v5695
      %7497 = vmatprep.subr.bf16.mxu0 0
      %7498 = vmatpush1.bf16.msra.mxu0 %v5696
      %7499 = vmatprep.subr.bf16.mxu0 0
      %7500 = vmatpush1.bf16.msra.mxu0 %v5697
      %7501 = vmatprep.subr.bf16.mxu0 0
      %7502 = vmatpush1.bf16.msra.mxu0 %v5698
      %7503 = vmatprep.subr.bf16.mxu0 0
      %7504 = vmatpush1.bf16.msra.mxu0 %v5699
      %7505 = vmatprep.subr.bf16.mxu0 0
      %7506 = vmatpush1.bf16.msra.mxu0 %v5700
      %7507 = vmatprep.subr.bf16.mxu0 0
      %7508 = vmatpush1.bf16.msra.mxu0 %v5701
      %7509 = vmatprep.subr.bf16.mxu0 0
      %7510 = vmatpush1.bf16.msra.mxu0 %v5702
      %7511 = vmatprep.subr.bf16.mxu0 0
      %7512 = vmatpush1.bf16.msra.mxu0 %v5703
      %7513 = vmatprep.subr.bf16.mxu0 0
      %7514 = vmatpush1.bf16.msra.mxu0 %v5704
      %7515 = vmatprep.subr.bf16.mxu0 0
      %7516 = vmatpush1.bf16.msra.mxu0 %v5705
      %7517 = vmatprep.subr.bf16.mxu0 0
      %7518 = vmatpush1.bf16.msra.mxu0 %v5706
      %7519 = vmatprep.subr.bf16.mxu0 0
      %7520 = vmatpush1.bf16.msra.mxu0 %v5707
      %7521 = vmatprep.subr.bf16.mxu0 0
      %7522 = vmatpush1.bf16.msra.mxu0 %v5708
      %7523 = vmatprep.subr.bf16.mxu0 0
      %7524 = vmatpush1.bf16.msra.mxu0 %v5709
      %7525 = vmatprep.subr.bf16.mxu0 0
      %7526 = vmatpush1.bf16.msra.mxu0 %v5710
      %7527 = vmatprep.mubr.bf16.mxu0 %v837
      %7528 = vmatmul.mubr.bf16.gmra.mrb[0].mxu0 %v836
      %v7529 = vpop.f32.mrb[0].mxu0
      %v7530 = vadd.f32 %v7490, %v7529
      %v7531 = vpop.f32.mrb[0].mxu0
      %v7532 = vpop.f32.mrb[0].mxu0
      %v7533 = vpop.f32.mrb[0].mxu0
      %7534 = vdwg.mxu0
      %7535 = vmatprep.subr.bf16.mxu0 0
      %7536 = vmatpush1.bf16.msra.mxu0 %v5711
      %7537 = vmatprep.subr.bf16.mxu0 0
      %7538 = vmatpush1.bf16.msra.mxu0 %v5712
      %7539 = vmatprep.subr.bf16.mxu0 0
      %7540 = vmatpush1.bf16.msra.mxu0 %v5713
      %7541 = vmatprep.subr.bf16.mxu0 0
      %7542 = vmatpush1.bf16.msra.mxu0 %v5714
      %7543 = vmatprep.subr.bf16.mxu0 0
      %7544 = vmatpush1.bf16.msra.mxu0 %v5715
      %7545 = vmatprep.subr.bf16.mxu0 0
      %7546 = vmatpush1.bf16.msra.mxu0 %v5716
      %7547 = vmatprep.subr.bf16.mxu0 0
      %7548 = vmatpush1.bf16.msra.mxu0 %v5717
      %7549 = vmatprep.subr.bf16.mxu0 0
      %7550 = vmatpush1.bf16.msra.mxu0 %v5718
      %7551 = vmatprep.subr.bf16.mxu0 0
      %7552 = vmatpush1.bf16.msra.mxu0 %v5719
      %7553 = vmatprep.subr.bf16.mxu0 0
      %7554 = vmatpush1.bf16.msra.mxu0 %v5720
      %7555 = vmatprep.subr.bf16.mxu0 0
      %7556 = vmatpush1.bf16.msra.mxu0 %v5721
      %7557 = vmatprep.subr.bf16.mxu0 0
      %7558 = vmatpush1.bf16.msra.mxu0 %v5722
      %7559 = vmatprep.subr.bf16.mxu0 0
      %7560 = vmatpush1.bf16.msra.mxu0 %v5723
      %7561 = vmatprep.subr.bf16.mxu0 0
      %7562 = vmatpush1.bf16.msra.mxu0 %v5724
      %7563 = vmatprep.subr.bf16.mxu0 0
      %7564 = vmatpush1.bf16.msra.mxu0 %v5725
      %7565 = vmatprep.subr.bf16.mxu0 0
      %7566 = vmatpush1.bf16.msra.mxu0 %v5726
      %7567 = vmatprep.mubr.bf16.mxu0 %v839
      %7568 = vmatmul.mubr.bf16.gmra.mrb[0].mxu0 %v838
      %v7569 = vpop.f32.mrb[0].mxu0
      %v7570 = vadd.f32 %v7530, %v7569
      %v7571 = vpop.f32.mrb[0].mxu0
      %v7572 = vpop.f32.mrb[0].mxu0
      %v7573 = vpop.f32.mrb[0].mxu0
      %7574 = vdwg.mxu0
      %7575 = vmatprep.subr.bf16.mxu0 0
      %7576 = vmatpush1.bf16.msra.mxu0 %v5727
      %7577 = vmatprep.subr.bf16.mxu0 0
      %7578 = vmatpush1.bf16.msra.mxu0 %v5728
      %7579 = vmatprep.subr.bf16.mxu0 0
      %7580 = vmatpush1.bf16.msra.mxu0 %v5729
      %7581 = vmatprep.subr.bf16.mxu0 0
      %7582 = vmatpush1.bf16.msra.mxu0 %v5730
      %7583 = vmatprep.subr.bf16.mxu0 0
      %7584 = vmatpush1.bf16.msra.mxu0 %v5731
      %7585 = vmatprep.subr.bf16.mxu0 0
      %7586 = vmatpush1.bf16.msra.mxu0 %v5732
      %7587 = vmatprep.subr.bf16.mxu0 0
      %7588 = vmatpush1.bf16.msra.mxu0 %v5733
      %7589 = vmatprep.subr.bf16.mxu0 0
      %7590 = vmatpush1.bf16.msra.mxu0 %v5734
      %7591 = vmatprep.subr.bf16.mxu0 0
      %7592 = vmatpush1.bf16.msra.mxu0 %v5735
      %7593 = vmatprep.subr.bf16.mxu0 0
      %7594 = vmatpush1.bf16.msra.mxu0 %v5736
      %7595 = vmatprep.subr.bf16.mxu0 0
      %7596 = vmatpush1.bf16.msra.mxu0 %v5737
      %7597 = vmatprep.subr.bf16.mxu0 0
      %7598 = vmatpush1.bf16.msra.mxu0 %v5738
      %7599 = vmatprep.subr.bf16.mxu0 0
      %7600 = vmatpush1.bf16.msra.mxu0 %v5739
      %7601 = vmatprep.subr.bf16.mxu0 0
      %7602 = vmatpush1.bf16.msra.mxu0 %v5740
      %7603 = vmatprep.subr.bf16.mxu0 0
      %7604 = vmatpush1.bf16.msra.mxu0 %v5741
      %7605 = vmatprep.subr.bf16.mxu0 0
      %7606 = vmatpush1.bf16.msra.mxu0 %v5742
      %7607 = vmatprep.mubr.bf16.mxu0 %v841
      %7608 = vmatmul.mubr.bf16.gmra.mrb[0].mxu0 %v840
      %v7609 = vpop.f32.mrb[0].mxu0
      %v7610 = vadd.f32 %v7570, %v7609
      %v7611 = vpop.f32.mrb[0].mxu0
      %v7612 = vpop.f32.mrb[0].mxu0
      %v7613 = vpop.f32.mrb[0].mxu0
      %7614 = vdwg.mxu0
      %7615 = vmatprep.subr.bf16.mxu0 0
      %7616 = vmatpush1.bf16.msra.mxu0 %v5743
      %7617 = vmatprep.subr.bf16.mxu0 0
      %7618 = vmatpush1.bf16.msra.mxu0 %v5744
      %7619 = vmatprep.subr.bf16.mxu0 0
      %7620 = vmatpush1.bf16.msra.mxu0 %v5745
      %7621 = vmatprep.subr.bf16.mxu0 0
      %7622 = vmatpush1.bf16.msra.mxu0 %v5746
      %7623 = vmatprep.subr.bf16.mxu0 0
      %7624 = vmatpush1.bf16.msra.mxu0 %v5747
      %7625 = vmatprep.subr.bf16.mxu0 0
      %7626 = vmatpush1.bf16.msra.mxu0 %v5748
      %7627 = vmatprep.subr.bf16.mxu0 0
      %7628 = vmatpush1.bf16.msra.mxu0 %v5749
      %7629 = vmatprep.subr.bf16.mxu0 0
      %7630 = vmatpush1.bf16.msra.mxu0 %v5750
      %7631 = vmatprep.subr.bf16.mxu0 0
      %7632 = vmatpush1.bf16.msra.mxu0 %v5751
      %7633 = vmatprep.subr.bf16.mxu0 0
      %7634 = vmatpush1.bf16.msra.mxu0 %v5752
      %7635 = vmatprep.subr.bf16.mxu0 0
      %7636 = vmatpush1.bf16.msra.mxu0 %v5753
      %7637 = vmatprep.subr.bf16.mxu0 0
      %7638 = vmatpush1.bf16.msra.mxu0 %v5754
      %7639 = vmatprep.subr.bf16.mxu0 0
      %7640 = vmatpush1.bf16.msra.mxu0 %v5755
      %7641 = vmatprep.subr.bf16.mxu0 0
      %7642 = vmatpush1.bf16.msra.mxu0 %v5756
      %7643 = vmatprep.subr.bf16.mxu0 0
      %7644 = vmatpush1.bf16.msra.mxu0 %v5757
      %7645 = vmatprep.subr.bf16.mxu0 0
      %7646 = vmatpush1.bf16.msra.mxu0 %v5758
      %7647 = vmatprep.mubr.bf16.mxu0 %v843
      %7648 = vmatmul.mubr.bf16.gmra.mrb[0].mxu0 %v842
      %v7649 = vpop.f32.mrb[0].mxu0
      %v7650 = vadd.f32 %v7610, %v7649
      %v7651 = vpop.f32.mrb[0].mxu0
      %v7652 = vpop.f32.mrb[0].mxu0
      %v7653 = vpop.f32.mrb[0].mxu0
      %7654 = vdwg.mxu0
      %7655 = vmatprep.subr.bf16.mxu0 0
      %7656 = vmatpush1.bf16.msra.mxu0 %v5759
      %7657 = vmatprep.subr.bf16.mxu0 0
      %7658 = vmatpush1.bf16.msra.mxu0 %v5760
      %7659 = vmatprep.subr.bf16.mxu0 0
      %7660 = vmatpush1.bf16.msra.mxu0 %v5761
      %7661 = vmatprep.subr.bf16.mxu0 0
      %7662 = vmatpush1.bf16.msra.mxu0 %v5762
      %7663 = vmatprep.subr.bf16.mxu0 0
      %7664 = vmatpush1.bf16.msra.mxu0 %v5763
      %7665 = vmatprep.subr.bf16.mxu0 0
      %7666 = vmatpush1.bf16.msra.mxu0 %v5764
      %7667 = vmatprep.subr.bf16.mxu0 0
      %7668 = vmatpush1.bf16.msra.mxu0 %v5765
      %7669 = vmatprep.subr.bf16.mxu0 0
      %7670 = vmatpush1.bf16.msra.mxu0 %v5766
      %7671 = vmatprep.subr.bf16.mxu0 0
      %7672 = vmatpush1.bf16.msra.mxu0 %v5767
      %7673 = vmatprep.subr.bf16.mxu0 0
      %7674 = vmatpush1.bf16.msra.mxu0 %v5768
      %7675 = vmatprep.subr.bf16.mxu0 0
      %7676 = vmatpush1.bf16.msra.mxu0 %v5769
      %7677 = vmatprep.subr.bf16.mxu0 0
      %7678 = vmatpush1.bf16.msra.mxu0 %v5770
      %7679 = vmatprep.subr.bf16.mxu0 0
      %7680 = vmatpush1.bf16.msra.mxu0 %v5771
      %7681 = vmatprep.subr.bf16.mxu0 0
      %7682 = vmatpush1.bf16.msra.mxu0 %v5772
      %7683 = vmatprep.subr.bf16.mxu0 0
      %7684 = vmatpush1.bf16.msra.mxu0 %v5773
      %7685 = vmatprep.subr.bf16.mxu0 0
      %7686 = vmatpush1.bf16.msra.mxu0 %v5774
      %7687 = vmatprep.mubr.bf16.mxu0 %v845
      %7688 = vmatmul.mubr.bf16.gmra.mrb[0].mxu0 %v844
      %v7689 = vpop.f32.mrb[0].mxu0
      %v7690 = vadd.f32 %v7650, %v7689
      %v7691 = vpop.f32.mrb[0].mxu0
      %v7692 = vpop.f32.mrb[0].mxu0
      %v7693 = vpop.f32.mrb[0].mxu0
      %7694 = vdwg.mxu0
      %7695 = vmatprep.subr.bf16.mxu0 0
      %7696 = vmatpush1.bf16.msra.mxu0 %v5775
      %7697 = vmatprep.subr.bf16.mxu0 0
      %7698 = vmatpush1.bf16.msra.mxu0 %v5776
      %7699 = vmatprep.subr.bf16.mxu0 0
      %7700 = vmatpush1.bf16.msra.mxu0 %v5777
      %7701 = vmatprep.subr.bf16.mxu0 0
      %7702 = vmatpush1.bf16.msra.mxu0 %v5778
      %7703 = vmatprep.subr.bf16.mxu0 0
      %7704 = vmatpush1.bf16.msra.mxu0 %v5779
      %7705 = vmatprep.subr.bf16.mxu0 0
      %7706 = vmatpush1.bf16.msra.mxu0 %v5780
      %7707 = vmatprep.subr.bf16.mxu0 0
      %7708 = vmatpush1.bf16.msra.mxu0 %v5781
      %7709 = vmatprep.subr.bf16.mxu0 0
      %7710 = vmatpush1.bf16.msra.mxu0 %v5782
      %7711 = vmatprep.subr.bf16.mxu0 0
      %7712 = vmatpush1.bf16.msra.mxu0 %v5783
      %7713 = vmatprep.subr.bf16.mxu0 0
      %7714 = vmatpush1.bf16.msra.mxu0 %v5784
      %7715 = vmatprep.subr.bf16.mxu0 0
      %7716 = vmatpush1.bf16.msra.mxu0 %v5785
      %7717 = vmatprep.subr.bf16.mxu0 0
      %7718 = vmatpush1.bf16.msra.mxu0 %v5786
      %7719 = vmatprep.subr.bf16.mxu0 0
      %7720 = vmatpush1.bf16.msra.mxu0 %v5787
      %7721 = vmatprep.subr.bf16.mxu0 0
      %7722 = vmatpush1.bf16.msra.mxu0 %v5788
      %7723 = vmatprep.subr.bf16.mxu0 0
      %7724 = vmatpush1.bf16.msra.mxu0 %v5789
      %7725 = vmatprep.subr.bf16.mxu0 0
      %7726 = vmatpush1.bf16.msra.mxu0 %v5790
      %7727 = vmatprep.mubr.bf16.mxu0 %v847
      %7728 = vmatmul.mubr.bf16.gmra.mrb[0].mxu0 %v846
      %v7729 = vpop.f32.mrb[0].mxu0
      %v7730 = vadd.f32 %v7690, %v7729
      %v7731 = vpop.f32.mrb[0].mxu0
      %v7732 = vpop.f32.mrb[0].mxu0
      %v7733 = vpop.f32.mrb[0].mxu0
      %7734 = vdwg.mxu0
      %7735 = vmatprep.subr.bf16.mxu0 0
      %7736 = vmatpush1.bf16.msra.mxu0 %v5791
      %7737 = vmatprep.subr.bf16.mxu0 0
      %7738 = vmatpush1.bf16.msra.mxu0 %v5792
      %7739 = vmatprep.subr.bf16.mxu0 0
      %7740 = vmatpush1.bf16.msra.mxu0 %v5793
      %7741 = vmatprep.subr.bf16.mxu0 0
      %7742 = vmatpush1.bf16.msra.mxu0 %v5794
      %7743 = vmatprep.subr.bf16.mxu0 0
      %7744 = vmatpush1.bf16.msra.mxu0 %v5795
      %7745 = vmatprep.subr.bf16.mxu0 0
      %7746 = vmatpush1.bf16.msra.mxu0 %v5796
      %7747 = vmatprep.subr.bf16.mxu0 0
      %7748 = vmatpush1.bf16.msra.mxu0 %v5797
      %7749 = vmatprep.subr.bf16.mxu0 0
      %7750 = vmatpush1.bf16.msra.mxu0 %v5798
      %7751 = vmatprep.subr.bf16.mxu0 0
      %7752 = vmatpush1.bf16.msra.mxu0 %v5799
      %7753 = vmatprep.subr.bf16.mxu0 0
      %7754 = vmatpush1.bf16.msra.mxu0 %v5800
      %7755 = vmatprep.subr.bf16.mxu0 0
      %7756 = vmatpush1.bf16.msra.mxu0 %v5801
      %7757 = vmatprep.subr.bf16.mxu0 0
      %7758 = vmatpush1.bf16.msra.mxu0 %v5802
      %7759 = vmatprep.subr.bf16.mxu0 0
      %7760 = vmatpush1.bf16.msra.mxu0 %v5803
      %7761 = vmatprep.subr.bf16.mxu0 0
      %7762 = vmatpush1.bf16.msra.mxu0 %v5804
      %7763 = vmatprep.subr.bf16.mxu0 0
      %7764 = vmatpush1.bf16.msra.mxu0 %v5805
      %7765 = vmatprep.subr.bf16.mxu0 0
      %7766 = vmatpush1.bf16.msra.mxu0 %v5806
      %7767 = vmatprep.mubr.bf16.mxu0 %v849
      %7768 = vmatmul.mubr.bf16.gmra.mrb[0].mxu0 %v848
      %v7769 = vpop.f32.mrb[0].mxu0
      %v7770 = vadd.f32 %v7730, %v7769
      %v7771 = vpop.f32.mrb[0].mxu0
      %v7772 = vpop.f32.mrb[0].mxu0
      %v7773 = vpop.f32.mrb[0].mxu0
      %7774 = vdwg.mxu0
      %7775 = vmatprep.subr.bf16.mxu0 0
      %7776 = vmatpush1.bf16.msra.mxu0 %v5807
      %7777 = vmatprep.subr.bf16.mxu0 0
      %7778 = vmatpush1.bf16.msra.mxu0 %v5808
      %7779 = vmatprep.subr.bf16.mxu0 0
      %7780 = vmatpush1.bf16.msra.mxu0 %v5809
      %7781 = vmatprep.subr.bf16.mxu0 0
      %7782 = vmatpush1.bf16.msra.mxu0 %v5810
      %7783 = vmatprep.subr.bf16.mxu0 0
      %7784 = vmatpush1.bf16.msra.mxu0 %v5811
      %7785 = vmatprep.subr.bf16.mxu0 0
      %7786 = vmatpush1.bf16.msra.mxu0 %v5812
      %7787 = vmatprep.subr.bf16.mxu0 0
      %7788 = vmatpush1.bf16.msra.mxu0 %v5813
      %7789 = vmatprep.subr.bf16.mxu0 0
      %7790 = vmatpush1.bf16.msra.mxu0 %v5814
      %7791 = vmatprep.subr.bf16.mxu0 0
      %7792 = vmatpush1.bf16.msra.mxu0 %v5815
      %7793 = vmatprep.subr.bf16.mxu0 0
      %7794 = vmatpush1.bf16.msra.mxu0 %v5816
      %7795 = vmatprep.subr.bf16.mxu0 0
      %7796 = vmatpush1.bf16.msra.mxu0 %v5817
      %7797 = vmatprep.subr.bf16.mxu0 0
      %7798 = vmatpush1.bf16.msra.mxu0 %v5818
      %7799 = vmatprep.subr.bf16.mxu0 0
      %7800 = vmatpush1.bf16.msra.mxu0 %v5819
      %7801 = vmatprep.subr.bf16.mxu0 0
      %7802 = vmatpush1.bf16.msra.mxu0 %v5820
      %7803 = vmatprep.subr.bf16.mxu0 0
      %7804 = vmatpush1.bf16.msra.mxu0 %v5821
      %7805 = vmatprep.subr.bf16.mxu0 0
      %7806 = vmatpush1.bf16.msra.mxu0 %v5822
      %7807 = vmatprep.mubr.bf16.mxu0 %v851
      %7808 = vmatmul.mubr.bf16.gmra.mrb[0].mxu0 %v850
      %v7809 = vpop.f32.mrb[0].mxu0
      %v7810 = vadd.f32 %v7770, %v7809
      %v7811 = vpop.f32.mrb[0].mxu0
      %v7812 = vpop.f32.mrb[0].mxu0
      %v7813 = vpop.f32.mrb[0].mxu0
      %7814 = vdwg.mxu0
      %7815 = vmatprep.subr.bf16.mxu0 0
      %7816 = vmatpush1.bf16.msra.mxu0 %v5823
      %7817 = vmatprep.subr.bf16.mxu0 0
      %7818 = vmatpush1.bf16.msra.mxu0 %v5824
      %7819 = vmatprep.subr.bf16.mxu0 0
      %7820 = vmatpush1.bf16.msra.mxu0 %v5825
      %7821 = vmatprep.subr.bf16.mxu0 0
      %7822 = vmatpush1.bf16.msra.mxu0 %v5826
      %7823 = vmatprep.subr.bf16.mxu0 0
      %7824 = vmatpush1.bf16.msra.mxu0 %v5827
      %7825 = vmatprep.subr.bf16.mxu0 0
      %7826 = vmatpush1.bf16.msra.mxu0 %v5828
      %7827 = vmatprep.subr.bf16.mxu0 0
      %7828 = vmatpush1.bf16.msra.mxu0 %v5829
      %7829 = vmatprep.subr.bf16.mxu0 0
      %7830 = vmatpush1.bf16.msra.mxu0 %v5830
      %7831 = vmatprep.subr.bf16.mxu0 0
      %7832 = vmatpush1.bf16.msra.mxu0 %v5831
      %7833 = vmatprep.subr.bf16.mxu0 0
      %7834 = vmatpush1.bf16.msra.mxu0 %v5832
      %7835 = vmatprep.subr.bf16.mxu0 0
      %7836 = vmatpush1.bf16.msra.mxu0 %v5833
      %7837 = vmatprep.subr.bf16.mxu0 0
      %7838 = vmatpush1.bf16.msra.mxu0 %v5834
      %7839 = vmatprep.subr.bf16.mxu0 0
      %7840 = vmatpush1.bf16.msra.mxu0 %v5835
      %7841 = vmatprep.subr.bf16.mxu0 0
      %7842 = vmatpush1.bf16.msra.mxu0 %v5836
      %7843 = vmatprep.subr.bf16.mxu0 0
      %7844 = vmatpush1.bf16.msra.mxu0 %v5837
      %7845 = vmatprep.subr.bf16.mxu0 0
      %7846 = vmatpush1.bf16.msra.mxu0 %v5838
      %7847 = vmatprep.mubr.bf16.mxu0 %v853
      %7848 = vmatmul.mubr.bf16.gmra.mrb[0].mxu0 %v852
      %v7849 = vpop.f32.mrb[0].mxu0
      %v7850 = vadd.f32 %v7810, %v7849
      %v7851 = vpop.f32.mrb[0].mxu0
      %v7852 = vpop.f32.mrb[0].mxu0
      %v7853 = vpop.f32.mrb[0].mxu0
      %7854 = vdwg.mxu0
      %7855 = vmatprep.subr.bf16.mxu0 0
      %7856 = vmatpush1.bf16.msra.mxu0 %v5839
      %7857 = vmatprep.subr.bf16.mxu0 0
      %7858 = vmatpush1.bf16.msra.mxu0 %v5840
      %7859 = vmatprep.subr.bf16.mxu0 0
      %7860 = vmatpush1.bf16.msra.mxu0 %v5841
      %7861 = vmatprep.subr.bf16.mxu0 0
      %7862 = vmatpush1.bf16.msra.mxu0 %v5842
      %7863 = vmatprep.subr.bf16.mxu0 0
      %7864 = vmatpush1.bf16.msra.mxu0 %v5843
      %7865 = vmatprep.subr.bf16.mxu0 0
      %7866 = vmatpush1.bf16.msra.mxu0 %v5844
      %7867 = vmatprep.subr.bf16.mxu0 0
      %7868 = vmatpush1.bf16.msra.mxu0 %v5845
      %7869 = vmatprep.subr.bf16.mxu0 0
      %7870 = vmatpush1.bf16.msra.mxu0 %v5846
      %7871 = vmatprep.subr.bf16.mxu0 0
      %7872 = vmatpush1.bf16.msra.mxu0 %v5847
      %7873 = vmatprep.subr.bf16.mxu0 0
      %7874 = vmatpush1.bf16.msra.mxu0 %v5848
      %7875 = vmatprep.subr.bf16.mxu0 0
      %7876 = vmatpush1.bf16.msra.mxu0 %v5849
      %7877 = vmatprep.subr.bf16.mxu0 0
      %7878 = vmatpush1.bf16.msra.mxu0 %v5850
      %7879 = vmatprep.subr.bf16.mxu0 0
      %7880 = vmatpush1.bf16.msra.mxu0 %v5851
      %7881 = vmatprep.subr.bf16.mxu0 0
      %7882 = vmatpush1.bf16.msra.mxu0 %v5852
      %7883 = vmatprep.subr.bf16.mxu0 0
      %7884 = vmatpush1.bf16.msra.mxu0 %v5853
      %7885 = vmatprep.subr.bf16.mxu0 0
      %7886 = vmatpush1.bf16.msra.mxu0 %v5854
      %7887 = vmatprep.mubr.bf16.mxu0 %v855
      %7888 = vmatmul.mubr.bf16.gmra.mrb[0].mxu0 %v854
      %v7889 = vpop.f32.mrb[0].mxu0
      %v7890 = vadd.f32 %v7850, %v7889
      %v7891 = vpop.f32.mrb[0].mxu0
      %v7892 = vpop.f32.mrb[0].mxu0
      %v7893 = vpop.f32.mrb[0].mxu0
      %7894 = vdwg.mxu0
      %7895 = vmatprep.subr.bf16.mxu0 0
      %7896 = vmatpush1.bf16.msra.mxu0 %v5855
      %7897 = vmatprep.subr.bf16.mxu0 0
      %7898 = vmatpush1.bf16.msra.mxu0 %v5856
      %7899 = vmatprep.subr.bf16.mxu0 0
      %7900 = vmatpush1.bf16.msra.mxu0 %v5857
      %7901 = vmatprep.subr.bf16.mxu0 0
      %7902 = vmatpush1.bf16.msra.mxu0 %v5858
      %7903 = vmatprep.subr.bf16.mxu0 0
      %7904 = vmatpush1.bf16.msra.mxu0 %v5859
      %7905 = vmatprep.subr.bf16.mxu0 0
      %7906 = vmatpush1.bf16.msra.mxu0 %v5860
      %7907 = vmatprep.subr.bf16.mxu0 0
      %7908 = vmatpush1.bf16.msra.mxu0 %v5861
      %7909 = vmatprep.subr.bf16.mxu0 0
      %7910 = vmatpush1.bf16.msra.mxu0 %v5862
      %7911 = vmatprep.subr.bf16.mxu0 0
      %7912 = vmatpush1.bf16.msra.mxu0 %v5863
      %7913 = vmatprep.subr.bf16.mxu0 0
      %7914 = vmatpush1.bf16.msra.mxu0 %v5864
      %7915 = vmatprep.subr.bf16.mxu0 0
      %7916 = vmatpush1.bf16.msra.mxu0 %v5865
      %7917 = vmatprep.subr.bf16.mxu0 0
      %7918 = vmatpush1.bf16.msra.mxu0 %v5866
      %7919 = vmatprep.subr.bf16.mxu0 0
      %7920 = vmatpush1.bf16.msra.mxu0 %v5867
      %7921 = vmatprep.subr.bf16.mxu0 0
      %7922 = vmatpush1.bf16.msra.mxu0 %v5868
      %7923 = vmatprep.subr.bf16.mxu0 0
      %7924 = vmatpush1.bf16.msra.mxu0 %v5869
      %7925 = vmatprep.subr.bf16.mxu0 0
      %7926 = vmatpush1.bf16.msra.mxu0 %v5870
      %7927 = vmatprep.mubr.bf16.mxu0 %v857
      %7928 = vmatmul.mubr.bf16.gmra.mrb[0].mxu0 %v856
      %v7929 = vpop.f32.mrb[0].mxu0
      %v7930 = vadd.f32 %v7890, %v7929
      %v7931 = vpop.f32.mrb[0].mxu0
      %v7932 = vpop.f32.mrb[0].mxu0
      %v7933 = vpop.f32.mrb[0].mxu0
      %7934 = vdwg.mxu0
      %7935 = vmatprep.subr.bf16.mxu0 0
      %7936 = vmatpush1.bf16.msra.mxu0 %v5871
      %7937 = vmatprep.subr.bf16.mxu0 0
      %7938 = vmatpush1.bf16.msra.mxu0 %v5872
      %7939 = vmatprep.subr.bf16.mxu0 0
      %7940 = vmatpush1.bf16.msra.mxu0 %v5873
      %7941 = vmatprep.subr.bf16.mxu0 0
      %7942 = vmatpush1.bf16.msra.mxu0 %v5874
      %7943 = vmatprep.subr.bf16.mxu0 0
      %7944 = vmatpush1.bf16.msra.mxu0 %v5875
      %7945 = vmatprep.subr.bf16.mxu0 0
      %7946 = vmatpush1.bf16.msra.mxu0 %v5876
      %7947 = vmatprep.subr.bf16.mxu0 0
      %7948 = vmatpush1.bf16.msra.mxu0 %v5877
      %7949 = vmatprep.subr.bf16.mxu0 0
      %7950 = vmatpush1.bf16.msra.mxu0 %v5878
      %7951 = vmatprep.subr.bf16.mxu0 0
      %7952 = vmatpush1.bf16.msra.mxu0 %v5879
      %7953 = vmatprep.subr.bf16.mxu0 0
      %7954 = vmatpush1.bf16.msra.mxu0 %v5880
      %7955 = vmatprep.subr.bf16.mxu0 0
      %7956 = vmatpush1.bf16.msra.mxu0 %v5881
      %7957 = vmatprep.subr.bf16.mxu0 0
      %7958 = vmatpush1.bf16.msra.mxu0 %v5882
      %7959 = vmatprep.subr.bf16.mxu0 0
      %7960 = vmatpush1.bf16.msra.mxu0 %v5883
      %7961 = vmatprep.subr.bf16.mxu0 0
      %7962 = vmatpush1.bf16.msra.mxu0 %v5884
      %7963 = vmatprep.subr.bf16.mxu0 0
      %7964 = vmatpush1.bf16.msra.mxu0 %v5885
      %7965 = vmatprep.subr.bf16.mxu0 0
      %7966 = vmatpush1.bf16.msra.mxu0 %v5886
      %7967 = vmatprep.mubr.bf16.mxu0 %v859
      %7968 = vmatmul.mubr.bf16.gmra.mrb[0].mxu0 %v858
      %v7969 = vpop.f32.mrb[0].mxu0
      %v7970 = vadd.f32 %v7930, %v7969
      %v7971 = vpop.f32.mrb[0].mxu0
      %v7972 = vpop.f32.mrb[0].mxu0
      %v7973 = vpop.f32.mrb[0].mxu0
      %7974 = vdwg.mxu0
      %7975 = vmatprep.subr.bf16.mxu0 0
      %7976 = vmatpush1.bf16.msra.mxu0 %v5887
      %7977 = vmatprep.subr.bf16.mxu0 0
      %7978 = vmatpush1.bf16.msra.mxu0 %v5888
      %7979 = vmatprep.subr.bf16.mxu0 0
      %7980 = vmatpush1.bf16.msra.mxu0 %v5889
      %7981 = vmatprep.subr.bf16.mxu0 0
      %7982 = vmatpush1.bf16.msra.mxu0 %v5890
      %7983 = vmatprep.subr.bf16.mxu0 0
      %7984 = vmatpush1.bf16.msra.mxu0 %v5891
      %7985 = vmatprep.subr.bf16.mxu0 0
      %7986 = vmatpush1.bf16.msra.mxu0 %v5892
      %7987 = vmatprep.subr.bf16.mxu0 0
      %7988 = vmatpush1.bf16.msra.mxu0 %v5893
      %7989 = vmatprep.subr.bf16.mxu0 0
      %7990 = vmatpush1.bf16.msra.mxu0 %v5894
      %7991 = vmatprep.subr.bf16.mxu0 0
      %7992 = vmatpush1.bf16.msra.mxu0 %v5895
      %7993 = vmatprep.subr.bf16.mxu0 0
      %7994 = vmatpush1.bf16.msra.mxu0 %v5896
      %7995 = vmatprep.subr.bf16.mxu0 0
      %7996 = vmatpush1.bf16.msra.mxu0 %v5897
      %7997 = vmatprep.subr.bf16.mxu0 0
      %7998 = vmatpush1.bf16.msra.mxu0 %v5898
      %7999 = vmatprep.subr.bf16.mxu0 0
      %8000 = vmatpush1.bf16.msra.mxu0 %v5899
      %8001 = vmatprep.subr.bf16.mxu0 0
      %8002 = vmatpush1.bf16.msra.mxu0 %v5900
      %8003 = vmatprep.subr.bf16.mxu0 0
      %8004 = vmatpush1.bf16.msra.mxu0 %v5901
      %8005 = vmatprep.subr.bf16.mxu0 0
      %8006 = vmatpush1.bf16.msra.mxu0 %v5902
      %8007 = vmatprep.mubr.bf16.mxu0 %v861
      %8008 = vmatmul.mubr.bf16.gmra.mrb[0].mxu0 %v860
      %v8009 = vpop.f32.mrb[0].mxu0
      %v8010 = vadd.f32 %v7970, %v8009
      %v8011 = vpop.f32.mrb[0].mxu0
      %v8012 = vpop.f32.mrb[0].mxu0
      %v8013 = vpop.f32.mrb[0].mxu0
      %8014 = vdwg.mxu0
      %8015 = vmatprep.subr.bf16.mxu0 0
      %8016 = vmatpush1.bf16.msra.mxu0 %v5903
      %8017 = vmatprep.subr.bf16.mxu0 0
      %8018 = vmatpush1.bf16.msra.mxu0 %v5904
      %8019 = vmatprep.subr.bf16.mxu0 0
      %8020 = vmatpush1.bf16.msra.mxu0 %v5905
      %8021 = vmatprep.subr.bf16.mxu0 0
      %8022 = vmatpush1.bf16.msra.mxu0 %v5906
      %8023 = vmatprep.subr.bf16.mxu0 0
      %8024 = vmatpush1.bf16.msra.mxu0 %v5907
      %8025 = vmatprep.subr.bf16.mxu0 0
      %8026 = vmatpush1.bf16.msra.mxu0 %v5908
      %8027 = vmatprep.subr.bf16.mxu0 0
      %8028 = vmatpush1.bf16.msra.mxu0 %v5909
      %8029 = vmatprep.subr.bf16.mxu0 0
      %8030 = vmatpush1.bf16.msra.mxu0 %v5910
      %8031 = vmatprep.subr.bf16.mxu0 0
      %8032 = vmatpush1.bf16.msra.mxu0 %v5911
      %8033 = vmatprep.subr.bf16.mxu0 0
      %8034 = vmatpush1.bf16.msra.mxu0 %v5912
      %8035 = vmatprep.subr.bf16.mxu0 0
      %8036 = vmatpush1.bf16.msra.mxu0 %v5913
      %8037 = vmatprep.subr.bf16.mxu0 0
      %8038 = vmatpush1.bf16.msra.mxu0 %v5914
      %8039 = vmatprep.subr.bf16.mxu0 0
      %8040 = vmatpush1.bf16.msra.mxu0 %v5915
      %8041 = vmatprep.subr.bf16.mxu0 0
      %8042 = vmatpush1.bf16.msra.mxu0 %v5916
      %8043 = vmatprep.subr.bf16.mxu0 0
      %8044 = vmatpush1.bf16.msra.mxu0 %v5917
      %8045 = vmatprep.subr.bf16.mxu0 0
      %8046 = vmatpush1.bf16.msra.mxu0 %v5918
      %8047 = vmatprep.mubr.bf16.mxu0 %v863
      %8048 = vmatmul.mubr.bf16.gmra.mrb[0].mxu0 %v862
      %v8049 = vpop.f32.mrb[0].mxu0
      %v8050 = vadd.f32 %v8010, %v8049
      %v8051 = vpop.f32.mrb[0].mxu0
      %v8052 = vpop.f32.mrb[0].mxu0
      %v8053 = vpop.f32.mrb[0].mxu0
      %8054 = vdwg.mxu0
      %8055 = vmatprep.subr.bf16.mxu0 0
      %8056 = vmatpush1.bf16.msra.mxu0 %v5919
      %8057 = vmatprep.subr.bf16.mxu0 0
      %8058 = vmatpush1.bf16.msra.mxu0 %v5920
      %8059 = vmatprep.subr.bf16.mxu0 0
      %8060 = vmatpush1.bf16.msra.mxu0 %v5921
      %8061 = vmatprep.subr.bf16.mxu0 0
      %8062 = vmatpush1.bf16.msra.mxu0 %v5922
      %8063 = vmatprep.subr.bf16.mxu0 0
      %8064 = vmatpush1.bf16.msra.mxu0 %v5923
      %8065 = vmatprep.subr.bf16.mxu0 0
      %8066 = vmatpush1.bf16.msra.mxu0 %v5924
      %8067 = vmatprep.subr.bf16.mxu0 0
      %8068 = vmatpush1.bf16.msra.mxu0 %v5925
      %8069 = vmatprep.subr.bf16.mxu0 0
      %8070 = vmatpush1.bf16.msra.mxu0 %v5926
      %8071 = vmatprep.subr.bf16.mxu0 0
      %8072 = vmatpush1.bf16.msra.mxu0 %v5927
      %8073 = vmatprep.subr.bf16.mxu0 0
      %8074 = vmatpush1.bf16.msra.mxu0 %v5928
      %8075 = vmatprep.subr.bf16.mxu0 0
      %8076 = vmatpush1.bf16.msra.mxu0 %v5929
      %8077 = vmatprep.subr.bf16.mxu0 0
      %8078 = vmatpush1.bf16.msra.mxu0 %v5930
      %8079 = vmatprep.subr.bf16.mxu0 0
      %8080 = vmatpush1.bf16.msra.mxu0 %v5931
      %8081 = vmatprep.subr.bf16.mxu0 0
      %8082 = vmatpush1.bf16.msra.mxu0 %v5932
      %8083 = vmatprep.subr.bf16.mxu0 0
      %8084 = vmatpush1.bf16.msra.mxu0 %v5933
      %8085 = vmatprep.subr.bf16.mxu0 0
      %8086 = vmatpush1.bf16.msra.mxu0 %v5934
      %8087 = vmatprep.mubr.bf16.mxu0 %v865
      %8088 = vmatmul.mubr.bf16.gmra.mrb[0].mxu0 %v864
      %v8089 = vpop.f32.mrb[0].mxu0
      %v8090 = vadd.f32 %v8050, %v8089
      %v8091 = vpop.f32.mrb[0].mxu0
      %v8092 = vpop.f32.mrb[0].mxu0
      %v8093 = vpop.f32.mrb[0].mxu0
      %8094 = vdwg.mxu0
      %8095 = vmatprep.subr.bf16.mxu0 0
      %8096 = vmatpush1.bf16.msra.mxu0 %v5935
      %8097 = vmatprep.subr.bf16.mxu0 0
      %8098 = vmatpush1.bf16.msra.mxu0 %v5936
      %8099 = vmatprep.subr.bf16.mxu0 0
      %8100 = vmatpush1.bf16.msra.mxu0 %v5937
      %8101 = vmatprep.subr.bf16.mxu0 0
      %8102 = vmatpush1.bf16.msra.mxu0 %v5938
      %8103 = vmatprep.subr.bf16.mxu0 0
      %8104 = vmatpush1.bf16.msra.mxu0 %v5939
      %8105 = vmatprep.subr.bf16.mxu0 0
      %8106 = vmatpush1.bf16.msra.mxu0 %v5940
      %8107 = vmatprep.subr.bf16.mxu0 0
      %8108 = vmatpush1.bf16.msra.mxu0 %v5941
      %8109 = vmatprep.subr.bf16.mxu0 0
      %8110 = vmatpush1.bf16.msra.mxu0 %v5942
      %8111 = vmatprep.subr.bf16.mxu0 0
      %8112 = vmatpush1.bf16.msra.mxu0 %v5943
      %8113 = vmatprep.subr.bf16.mxu0 0
      %8114 = vmatpush1.bf16.msra.mxu0 %v5944
      %8115 = vmatprep.subr.bf16.mxu0 0
      %8116 = vmatpush1.bf16.msra.mxu0 %v5945
      %8117 = vmatprep.subr.bf16.mxu0 0
      %8118 = vmatpush1.bf16.msra.mxu0 %v5946
      %8119 = vmatprep.subr.bf16.mxu0 0
      %8120 = vmatpush1.bf16.msra.mxu0 %v5947
      %8121 = vmatprep.subr.bf16.mxu0 0
      %8122 = vmatpush1.bf16.msra.mxu0 %v5948
      %8123 = vmatprep.subr.bf16.mxu0 0
      %8124 = vmatpush1.bf16.msra.mxu0 %v5949
      %8125 = vmatprep.subr.bf16.mxu0 0
      %8126 = vmatpush1.bf16.msra.mxu0 %v5950
      %8127 = vmatprep.mubr.bf16.mxu0 %v867
      %8128 = vmatmul.mubr.bf16.gmra.mrb[0].mxu0 %v866
      %v8129 = vpop.f32.mrb[0].mxu0
      %v8130 = vadd.f32 %v8090, %v8129
      %v8131 = vpop.f32.mrb[0].mxu0
      %v8132 = vpop.f32.mrb[0].mxu0
      %v8133 = vpop.f32.mrb[0].mxu0
      %8134 = vdwg.mxu0
      %8135 = vmatprep.subr.bf16.mxu0 0
      %8136 = vmatpush1.bf16.msra.mxu0 %v5951
      %8137 = vmatprep.subr.bf16.mxu0 0
      %8138 = vmatpush1.bf16.msra.mxu0 %v5952
      %8139 = vmatprep.subr.bf16.mxu0 0
      %8140 = vmatpush1.bf16.msra.mxu0 %v5953
      %8141 = vmatprep.subr.bf16.mxu0 0
      %8142 = vmatpush1.bf16.msra.mxu0 %v5954
      %8143 = vmatprep.subr.bf16.mxu0 0
      %8144 = vmatpush1.bf16.msra.mxu0 %v5955
      %8145 = vmatprep.subr.bf16.mxu0 0
      %8146 = vmatpush1.bf16.msra.mxu0 %v5956
      %8147 = vmatprep.subr.bf16.mxu0 0
      %8148 = vmatpush1.bf16.msra.mxu0 %v5957
      %8149 = vmatprep.subr.bf16.mxu0 0
      %8150 = vmatpush1.bf16.msra.mxu0 %v5958
      %8151 = vmatprep.subr.bf16.mxu0 0
      %8152 = vmatpush1.bf16.msra.mxu0 %v5959
      %8153 = vmatprep.subr.bf16.mxu0 0
      %8154 = vmatpush1.bf16.msra.mxu0 %v5960
      %8155 = vmatprep.subr.bf16.mxu0 0
      %8156 = vmatpush1.bf16.msra.mxu0 %v5961
      %8157 = vmatprep.subr.bf16.mxu0 0
      %8158 = vmatpush1.bf16.msra.mxu0 %v5962
      %8159 = vmatprep.subr.bf16.mxu0 0
      %8160 = vmatpush1.bf16.msra.mxu0 %v5963
      %8161 = vmatprep.subr.bf16.mxu0 0
      %8162 = vmatpush1.bf16.msra.mxu0 %v5964
      %8163 = vmatprep.subr.bf16.mxu0 0
      %8164 = vmatpush1.bf16.msra.mxu0 %v5965
      %8165 = vmatprep.subr.bf16.mxu0 0
      %8166 = vmatpush1.bf16.msra.mxu0 %v5966
      %8167 = vmatprep.mubr.bf16.mxu0 %v869
      %8168 = vmatmul.mubr.bf16.gmra.mrb[0].mxu0 %v868
      %v8169 = vpop.f32.mrb[0].mxu0
      %v8170 = vadd.f32 %v8130, %v8169
      %v8171 = vpop.f32.mrb[0].mxu0
      %v8172 = vpop.f32.mrb[0].mxu0
      %v8173 = vpop.f32.mrb[0].mxu0
      %8174 = vdwg.mxu0
      %8175 = vmatprep.subr.bf16.mxu0 0
      %8176 = vmatpush1.bf16.msra.mxu0 %v5967
      %8177 = vmatprep.subr.bf16.mxu0 0
      %8178 = vmatpush1.bf16.msra.mxu0 %v5968
      %8179 = vmatprep.subr.bf16.mxu0 0
      %8180 = vmatpush1.bf16.msra.mxu0 %v5969
      %8181 = vmatprep.subr.bf16.mxu0 0
      %8182 = vmatpush1.bf16.msra.mxu0 %v5970
      %8183 = vmatprep.subr.bf16.mxu0 0
      %8184 = vmatpush1.bf16.msra.mxu0 %v5971
      %8185 = vmatprep.subr.bf16.mxu0 0
      %8186 = vmatpush1.bf16.msra.mxu0 %v5972
      %8187 = vmatprep.subr.bf16.mxu0 0
      %8188 = vmatpush1.bf16.msra.mxu0 %v5973
      %8189 = vmatprep.subr.bf16.mxu0 0
      %8190 = vmatpush1.bf16.msra.mxu0 %v5974
      %8191 = vmatprep.subr.bf16.mxu0 0
      %8192 = vmatpush1.bf16.msra.mxu0 %v5975
      %8193 = vmatprep.subr.bf16.mxu0 0
      %8194 = vmatpush1.bf16.msra.mxu0 %v5976
      %8195 = vmatprep.subr.bf16.mxu0 0
      %8196 = vmatpush1.bf16.msra.mxu0 %v5977
      %8197 = vmatprep.subr.bf16.mxu0 0
      %8198 = vmatpush1.bf16.msra.mxu0 %v5978
      %8199 = vmatprep.subr.bf16.mxu0 0
      %8200 = vmatpush1.bf16.msra.mxu0 %v5979
      %8201 = vmatprep.subr.bf16.mxu0 0
      %8202 = vmatpush1.bf16.msra.mxu0 %v5980
      %8203 = vmatprep.subr.bf16.mxu0 0
      %8204 = vmatpush1.bf16.msra.mxu0 %v5981
      %8205 = vmatprep.subr.bf16.mxu0 0
      %8206 = vmatpush1.bf16.msra.mxu0 %v5982
      %8207 = vmatprep.mubr.bf16.mxu0 %v871
      %8208 = vmatmul.mubr.bf16.gmra.mrb[0].mxu0 %v870
      %v8209 = vpop.f32.mrb[0].mxu0
      %v8210 = vadd.f32 %v8170, %v8209
      %v8211 = vpop.f32.mrb[0].mxu0
      %v8212 = vpop.f32.mrb[0].mxu0
      %v8213 = vpop.f32.mrb[0].mxu0
      %8214 = vdwg.mxu0
      %8215 = vmatprep.subr.bf16.mxu0 0
      %8216 = vmatpush1.bf16.msra.mxu0 %v5983
      %8217 = vmatprep.subr.bf16.mxu0 0
      %8218 = vmatpush1.bf16.msra.mxu0 %v5984
      %8219 = vmatprep.subr.bf16.mxu0 0
      %8220 = vmatpush1.bf16.msra.mxu0 %v5985
      %8221 = vmatprep.subr.bf16.mxu0 0
      %8222 = vmatpush1.bf16.msra.mxu0 %v5986
      %8223 = vmatprep.subr.bf16.mxu0 0
      %8224 = vmatpush1.bf16.msra.mxu0 %v5987
      %8225 = vmatprep.subr.bf16.mxu0 0
      %8226 = vmatpush1.bf16.msra.mxu0 %v5988
      %8227 = vmatprep.subr.bf16.mxu0 0
      %8228 = vmatpush1.bf16.msra.mxu0 %v5989
      %8229 = vmatprep.subr.bf16.mxu0 0
      %8230 = vmatpush1.bf16.msra.mxu0 %v5990
      %8231 = vmatprep.subr.bf16.mxu0 0
      %8232 = vmatpush1.bf16.msra.mxu0 %v5991
      %8233 = vmatprep.subr.bf16.mxu0 0
      %8234 = vmatpush1.bf16.msra.mxu0 %v5992
      %8235 = vmatprep.subr.bf16.mxu0 0
      %8236 = vmatpush1.bf16.msra.mxu0 %v5993
      %8237 = vmatprep.subr.bf16.mxu0 0
      %8238 = vmatpush1.bf16.msra.mxu0 %v5994
      %8239 = vmatprep.subr.bf16.mxu0 0
      %8240 = vmatpush1.bf16.msra.mxu0 %v5995
      %8241 = vmatprep.subr.bf16.mxu0 0
      %8242 = vmatpush1.bf16.msra.mxu0 %v5996
      %8243 = vmatprep.subr.bf16.mxu0 0
      %8244 = vmatpush1.bf16.msra.mxu0 %v5997
      %8245 = vmatprep.subr.bf16.mxu0 0
      %8246 = vmatpush1.bf16.msra.mxu0 %v5998
      %8247 = vmatprep.mubr.bf16.mxu0 %v873
      %8248 = vmatmul.mubr.bf16.gmra.mrb[0].mxu0 %v872
      %v8249 = vpop.f32.mrb[0].mxu0
      %v8250 = vadd.f32 %v8210, %v8249
      %v8251 = vpop.f32.mrb[0].mxu0
      %v8252 = vpop.f32.mrb[0].mxu0
      %v8253 = vpop.f32.mrb[0].mxu0
      %8254 = vdwg.mxu0
      %8255 = vmatprep.subr.bf16.mxu0 0
      %8256 = vmatpush1.bf16.msra.mxu0 %v5999
      %8257 = vmatprep.subr.bf16.mxu0 0
      %8258 = vmatpush1.bf16.msra.mxu0 %v6000
      %8259 = vmatprep.subr.bf16.mxu0 0
      %8260 = vmatpush1.bf16.msra.mxu0 %v6001
      %8261 = vmatprep.subr.bf16.mxu0 0
      %8262 = vmatpush1.bf16.msra.mxu0 %v6002
      %8263 = vmatprep.subr.bf16.mxu0 0
      %8264 = vmatpush1.bf16.msra.mxu0 %v6003
      %8265 = vmatprep.subr.bf16.mxu0 0
      %8266 = vmatpush1.bf16.msra.mxu0 %v6004
      %8267 = vmatprep.subr.bf16.mxu0 0
      %8268 = vmatpush1.bf16.msra.mxu0 %v6005
      %8269 = vmatprep.subr.bf16.mxu0 0
      %8270 = vmatpush1.bf16.msra.mxu0 %v6006
      %8271 = vmatprep.subr.bf16.mxu0 0
      %8272 = vmatpush1.bf16.msra.mxu0 %v6007
      %8273 = vmatprep.subr.bf16.mxu0 0
      %8274 = vmatpush1.bf16.msra.mxu0 %v6008
      %8275 = vmatprep.subr.bf16.mxu0 0
      %8276 = vmatpush1.bf16.msra.mxu0 %v6009
      %8277 = vmatprep.subr.bf16.mxu0 0
      %8278 = vmatpush1.bf16.msra.mxu0 %v6010
      %8279 = vmatprep.subr.bf16.mxu0 0
      %8280 = vmatpush1.bf16.msra.mxu0 %v6011
      %8281 = vmatprep.subr.bf16.mxu0 0
      %8282 = vmatpush1.bf16.msra.mxu0 %v6012
      %8283 = vmatprep.subr.bf16.mxu0 0
      %8284 = vmatpush1.bf16.msra.mxu0 %v6013
      %8285 = vmatprep.subr.bf16.mxu0 0
      %8286 = vmatpush1.bf16.msra.mxu0 %v6014
      %8287 = vmatprep.mubr.bf16.mxu0 %v875
      %8288 = vmatmul.mubr.bf16.gmra.mrb[0].mxu0 %v874
      %v8289 = vpop.f32.mrb[0].mxu0
      %v8290 = vadd.f32 %v8250, %v8289
      %v8291 = vpop.f32.mrb[0].mxu0
      %v8292 = vpop.f32.mrb[0].mxu0
      %v8293 = vpop.f32.mrb[0].mxu0
      %8294 = vdwg.mxu0
      %8295 = vmatprep.subr.bf16.mxu0 0
      %8296 = vmatpush1.bf16.msra.mxu0 %v6015
      %8297 = vmatprep.subr.bf16.mxu0 0
      %8298 = vmatpush1.bf16.msra.mxu0 %v6016
      %8299 = vmatprep.subr.bf16.mxu0 0
      %8300 = vmatpush1.bf16.msra.mxu0 %v6017
      %8301 = vmatprep.subr.bf16.mxu0 0
      %8302 = vmatpush1.bf16.msra.mxu0 %v6018
      %8303 = vmatprep.subr.bf16.mxu0 0
      %8304 = vmatpush1.bf16.msra.mxu0 %v6019
      %8305 = vmatprep.subr.bf16.mxu0 0
      %8306 = vmatpush1.bf16.msra.mxu0 %v6020
      %8307 = vmatprep.subr.bf16.mxu0 0
      %8308 = vmatpush1.bf16.msra.mxu0 %v6021
      %8309 = vmatprep.subr.bf16.mxu0 0
      %8310 = vmatpush1.bf16.msra.mxu0 %v6022
      %8311 = vmatprep.subr.bf16.mxu0 0
      %8312 = vmatpush1.bf16.msra.mxu0 %v6023
      %8313 = vmatprep.subr.bf16.mxu0 0
      %8314 = vmatpush1.bf16.msra.mxu0 %v6024
      %8315 = vmatprep.subr.bf16.mxu0 0
      %8316 = vmatpush1.bf16.msra.mxu0 %v6025
      %8317 = vmatprep.subr.bf16.mxu0 0
      %8318 = vmatpush1.bf16.msra.mxu0 %v6026
      %8319 = vmatprep.subr.bf16.mxu0 0
      %8320 = vmatpush1.bf16.msra.mxu0 %v6027
      %8321 = vmatprep.subr.bf16.mxu0 0
      %8322 = vmatpush1.bf16.msra.mxu0 %v6028
      %8323 = vmatprep.subr.bf16.mxu0 0
      %8324 = vmatpush1.bf16.msra.mxu0 %v6029
      %8325 = vmatprep.subr.bf16.mxu0 0
      %8326 = vmatpush1.bf16.msra.mxu0 %v6030
      %8327 = vmatprep.mubr.bf16.mxu0 %v877
      %8328 = vmatmul.mubr.bf16.gmra.mrb[0].mxu0 %v876
      %v8329 = vpop.f32.mrb[0].mxu0
      %v8330 = vadd.f32 %v8290, %v8329
      %v8331 = vpop.f32.mrb[0].mxu0
      %v8332 = vpop.f32.mrb[0].mxu0
      %v8333 = vpop.f32.mrb[0].mxu0
      %8334 = vdwg.mxu0
      %8335 = vmatprep.subr.bf16.mxu0 0
      %8336 = vmatpush1.bf16.msra.mxu0 %v6031
      %8337 = vmatprep.subr.bf16.mxu0 0
      %8338 = vmatpush1.bf16.msra.mxu0 %v6032
      %8339 = vmatprep.subr.bf16.mxu0 0
      %8340 = vmatpush1.bf16.msra.mxu0 %v6033
      %8341 = vmatprep.subr.bf16.mxu0 0
      %8342 = vmatpush1.bf16.msra.mxu0 %v6034
      %8343 = vmatprep.subr.bf16.mxu0 0
      %8344 = vmatpush1.bf16.msra.mxu0 %v6035
      %8345 = vmatprep.subr.bf16.mxu0 0
      %8346 = vmatpush1.bf16.msra.mxu0 %v6036
      %8347 = vmatprep.subr.bf16.mxu0 0
      %8348 = vmatpush1.bf16.msra.mxu0 %v6037
      %8349 = vmatprep.subr.bf16.mxu0 0
      %8350 = vmatpush1.bf16.msra.mxu0 %v6038
      %8351 = vmatprep.subr.bf16.mxu0 0
      %8352 = vmatpush1.bf16.msra.mxu0 %v6039
      %8353 = vmatprep.subr.bf16.mxu0 0
      %8354 = vmatpush1.bf16.msra.mxu0 %v6040
      %8355 = vmatprep.subr.bf16.mxu0 0
      %8356 = vmatpush1.bf16.msra.mxu0 %v6041
      %8357 = vmatprep.subr.bf16.mxu0 0
      %8358 = vmatpush1.bf16.msra.mxu0 %v6042
      %8359 = vmatprep.subr.bf16.mxu0 0
      %8360 = vmatpush1.bf16.msra.mxu0 %v6043
      %8361 = vmatprep.subr.bf16.mxu0 0
      %8362 = vmatpush1.bf16.msra.mxu0 %v6044
      %8363 = vmatprep.subr.bf16.mxu0 0
      %8364 = vmatpush1.bf16.msra.mxu0 %v6045
      %8365 = vmatprep.subr.bf16.mxu0 0
      %8366 = vmatpush1.bf16.msra.mxu0 %v6046
      %8367 = vmatprep.mubr.bf16.mxu0 %v879
      %8368 = vmatmul.mubr.bf16.gmra.mrb[0].mxu0 %v878
      %v8369 = vpop.f32.mrb[0].mxu0
      %v8370 = vadd.f32 %v8330, %v8369
      %v8371 = vpop.f32.mrb[0].mxu0
      %v8372 = vpop.f32.mrb[0].mxu0
      %v8373 = vpop.f32.mrb[0].mxu0
      %8374 = vdwg.mxu0
      %8375 = vmatprep.subr.bf16.mxu0 0
      %8376 = vmatpush1.bf16.msra.mxu0 %v6047
      %8377 = vmatprep.subr.bf16.mxu0 0
      %8378 = vmatpush1.bf16.msra.mxu0 %v6048
      %8379 = vmatprep.subr.bf16.mxu0 0
      %8380 = vmatpush1.bf16.msra.mxu0 %v6049
      %8381 = vmatprep.subr.bf16.mxu0 0
      %8382 = vmatpush1.bf16.msra.mxu0 %v6050
      %8383 = vmatprep.subr.bf16.mxu0 0
      %8384 = vmatpush1.bf16.msra.mxu0 %v6051
      %8385 = vmatprep.subr.bf16.mxu0 0
      %8386 = vmatpush1.bf16.msra.mxu0 %v6052
      %8387 = vmatprep.subr.bf16.mxu0 0
      %8388 = vmatpush1.bf16.msra.mxu0 %v6053
      %8389 = vmatprep.subr.bf16.mxu0 0
      %8390 = vmatpush1.bf16.msra.mxu0 %v6054
      %8391 = vmatprep.subr.bf16.mxu0 0
      %8392 = vmatpush1.bf16.msra.mxu0 %v6055
      %8393 = vmatprep.subr.bf16.mxu0 0
      %8394 = vmatpush1.bf16.msra.mxu0 %v6056
      %8395 = vmatprep.subr.bf16.mxu0 0
      %8396 = vmatpush1.bf16.msra.mxu0 %v6057
      %8397 = vmatprep.subr.bf16.mxu0 0
      %8398 = vmatpush1.bf16.msra.mxu0 %v6058
      %8399 = vmatprep.subr.bf16.mxu0 0
      %8400 = vmatpush1.bf16.msra.mxu0 %v6059
      %8401 = vmatprep.subr.bf16.mxu0 0
      %8402 = vmatpush1.bf16.msra.mxu0 %v6060
      %8403 = vmatprep.subr.bf16.mxu0 0
      %8404 = vmatpush1.bf16.msra.mxu0 %v6061
      %8405 = vmatprep.subr.bf16.mxu0 0
      %8406 = vmatpush1.bf16.msra.mxu0 %v6062
      %8407 = vmatprep.mubr.bf16.mxu0 %v881
      %8408 = vmatmul.mubr.bf16.gmra.mrb[0].mxu0 %v880
      %v8409 = vpop.f32.mrb[0].mxu0
      %v8410 = vadd.f32 %v8370, %v8409
      %v8411 = vpop.f32.mrb[0].mxu0
      %v8412 = vpop.f32.mrb[0].mxu0
      %v8413 = vpop.f32.mrb[0].mxu0
      %8414 = vdwg.mxu0
      %8415 = vmatprep.subr.bf16.mxu0 0
      %8416 = vmatpush1.bf16.msra.mxu0 %v6063
      %8417 = vmatprep.subr.bf16.mxu0 0
      %8418 = vmatpush1.bf16.msra.mxu0 %v6064
      %8419 = vmatprep.subr.bf16.mxu0 0
      %8420 = vmatpush1.bf16.msra.mxu0 %v6065
      %8421 = vmatprep.subr.bf16.mxu0 0
      %8422 = vmatpush1.bf16.msra.mxu0 %v6066
      %8423 = vmatprep.subr.bf16.mxu0 0
      %8424 = vmatpush1.bf16.msra.mxu0 %v6067
      %8425 = vmatprep.subr.bf16.mxu0 0
      %8426 = vmatpush1.bf16.msra.mxu0 %v6068
      %8427 = vmatprep.subr.bf16.mxu0 0
      %8428 = vmatpush1.bf16.msra.mxu0 %v6069
      %8429 = vmatprep.subr.bf16.mxu0 0
      %8430 = vmatpush1.bf16.msra.mxu0 %v6070
      %8431 = vmatprep.subr.bf16.mxu0 0
      %8432 = vmatpush1.bf16.msra.mxu0 %v6071
      %8433 = vmatprep.subr.bf16.mxu0 0
      %8434 = vmatpush1.bf16.msra.mxu0 %v6072
      %8435 = vmatprep.subr.bf16.mxu0 0
      %8436 = vmatpush1.bf16.msra.mxu0 %v6073
      %8437 = vmatprep.subr.bf16.mxu0 0
      %8438 = vmatpush1.bf16.msra.mxu0 %v6074
      %8439 = vmatprep.subr.bf16.mxu0 0
      %8440 = vmatpush1.bf16.msra.mxu0 %v6075
      %8441 = vmatprep.subr.bf16.mxu0 0
      %8442 = vmatpush1.bf16.msra.mxu0 %v6076
      %8443 = vmatprep.subr.bf16.mxu0 0
      %8444 = vmatpush1.bf16.msra.mxu0 %v6077
      %8445 = vmatprep.subr.bf16.mxu0 0
      %8446 = vmatpush1.bf16.msra.mxu0 %v6078
      %8447 = vmatprep.mubr.bf16.mxu0 %v883
      %8448 = vmatmul.mubr.bf16.gmra.mrb[0].mxu0 %v882
      %v8449 = vpop.f32.mrb[0].mxu0
      %v8450 = vadd.f32 %v8410, %v8449
      %v8451 = vpop.f32.mrb[0].mxu0
      %v8452 = vpop.f32.mrb[0].mxu0
      %v8453 = vpop.f32.mrb[0].mxu0
      %8454 = vdwg.mxu0
      %8455 = vmatprep.subr.bf16.mxu0 0
      %8456 = vmatpush1.bf16.msra.mxu0 %v6079
      %8457 = vmatprep.subr.bf16.mxu0 0
      %8458 = vmatpush1.bf16.msra.mxu0 %v6080
      %8459 = vmatprep.subr.bf16.mxu0 0
      %8460 = vmatpush1.bf16.msra.mxu0 %v6081
      %8461 = vmatprep.subr.bf16.mxu0 0
      %8462 = vmatpush1.bf16.msra.mxu0 %v6082
      %8463 = vmatprep.subr.bf16.mxu0 0
      %8464 = vmatpush1.bf16.msra.mxu0 %v6083
      %8465 = vmatprep.subr.bf16.mxu0 0
      %8466 = vmatpush1.bf16.msra.mxu0 %v6084
      %8467 = vmatprep.subr.bf16.mxu0 0
      %8468 = vmatpush1.bf16.msra.mxu0 %v6085
      %8469 = vmatprep.subr.bf16.mxu0 0
      %8470 = vmatpush1.bf16.msra.mxu0 %v6086
      %8471 = vmatprep.subr.bf16.mxu0 0
      %8472 = vmatpush1.bf16.msra.mxu0 %v6087
      %8473 = vmatprep.subr.bf16.mxu0 0
      %8474 = vmatpush1.bf16.msra.mxu0 %v6088
      %8475 = vmatprep.subr.bf16.mxu0 0
      %8476 = vmatpush1.bf16.msra.mxu0 %v6089
      %8477 = vmatprep.subr.bf16.mxu0 0
      %8478 = vmatpush1.bf16.msra.mxu0 %v6090
      %8479 = vmatprep.subr.bf16.mxu0 0
      %8480 = vmatpush1.bf16.msra.mxu0 %v6091
      %8481 = vmatprep.subr.bf16.mxu0 0
      %8482 = vmatpush1.bf16.msra.mxu0 %v6092
      %8483 = vmatprep.subr.bf16.mxu0 0
      %8484 = vmatpush1.bf16.msra.mxu0 %v6093
      %8485 = vmatprep.subr.bf16.mxu0 0
      %8486 = vmatpush1.bf16.msra.mxu0 %v6094
      %8487 = vmatprep.mubr.bf16.mxu0 %v885
      %8488 = vmatmul.mubr.bf16.gmra.mrb[0].mxu0 %v884
      %v8489 = vpop.f32.mrb[0].mxu0
      %v8490 = vadd.f32 %v8450, %v8489
      %v8491 = vpop.f32.mrb[0].mxu0
      %v8492 = vpop.f32.mrb[0].mxu0
      %v8493 = vpop.f32.mrb[0].mxu0
      %8494 = vdwg.mxu0
      %8495 = vmatprep.subr.bf16.mxu0 0
      %8496 = vmatpush1.bf16.msra.mxu0 %v6095
      %8497 = vmatprep.subr.bf16.mxu0 0
      %8498 = vmatpush1.bf16.msra.mxu0 %v6096
      %8499 = vmatprep.subr.bf16.mxu0 0
      %8500 = vmatpush1.bf16.msra.mxu0 %v6097
      %8501 = vmatprep.subr.bf16.mxu0 0
      %8502 = vmatpush1.bf16.msra.mxu0 %v6098
      %8503 = vmatprep.subr.bf16.mxu0 0
      %8504 = vmatpush1.bf16.msra.mxu0 %v6099
      %8505 = vmatprep.subr.bf16.mxu0 0
      %8506 = vmatpush1.bf16.msra.mxu0 %v6100
      %8507 = vmatprep.subr.bf16.mxu0 0
      %8508 = vmatpush1.bf16.msra.mxu0 %v6101
      %8509 = vmatprep.subr.bf16.mxu0 0
      %8510 = vmatpush1.bf16.msra.mxu0 %v6102
      %8511 = vmatprep.subr.bf16.mxu0 0
      %8512 = vmatpush1.bf16.msra.mxu0 %v6103
      %8513 = vmatprep.subr.bf16.mxu0 0
      %8514 = vmatpush1.bf16.msra.mxu0 %v6104
      %8515 = vmatprep.subr.bf16.mxu0 0
      %8516 = vmatpush1.bf16.msra.mxu0 %v6105
      %8517 = vmatprep.subr.bf16.mxu0 0
      %8518 = vmatpush1.bf16.msra.mxu0 %v6106
      %8519 = vmatprep.subr.bf16.mxu0 0
      %8520 = vmatpush1.bf16.msra.mxu0 %v6107
      %8521 = vmatprep.subr.bf16.mxu0 0
      %8522 = vmatpush1.bf16.msra.mxu0 %v6108
      %8523 = vmatprep.subr.bf16.mxu0 0
      %8524 = vmatpush1.bf16.msra.mxu0 %v6109
      %8525 = vmatprep.subr.bf16.mxu0 0
      %8526 = vmatpush1.bf16.msra.mxu0 %v6110
      %8527 = vmatprep.mubr.bf16.mxu0 %v887
      %8528 = vmatmul.mubr.bf16.gmra.mrb[0].mxu0 %v886
      %v8529 = vpop.f32.mrb[0].mxu0
      %v8530 = vadd.f32 %v8490, %v8529
      %v8531 = vpop.f32.mrb[0].mxu0
      %v8532 = vpop.f32.mrb[0].mxu0
      %v8533 = vpop.f32.mrb[0].mxu0
      %8534 = vdwg.mxu0
      %8535 = vmatprep.subr.bf16.mxu0 0
      %8536 = vmatpush1.bf16.msra.mxu0 %v6111
      %8537 = vmatprep.subr.bf16.mxu0 0
      %8538 = vmatpush1.bf16.msra.mxu0 %v6112
      %8539 = vmatprep.subr.bf16.mxu0 0
      %8540 = vmatpush1.bf16.msra.mxu0 %v6113
      %8541 = vmatprep.subr.bf16.mxu0 0
      %8542 = vmatpush1.bf16.msra.mxu0 %v6114
      %8543 = vmatprep.subr.bf16.mxu0 0
      %8544 = vmatpush1.bf16.msra.mxu0 %v6115
      %8545 = vmatprep.subr.bf16.mxu0 0
      %8546 = vmatpush1.bf16.msra.mxu0 %v6116
      %8547 = vmatprep.subr.bf16.mxu0 0
      %8548 = vmatpush1.bf16.msra.mxu0 %v6117
      %8549 = vmatprep.subr.bf16.mxu0 0
      %8550 = vmatpush1.bf16.msra.mxu0 %v6118
      %8551 = vmatprep.subr.bf16.mxu0 0
      %8552 = vmatpush1.bf16.msra.mxu0 %v6119
      %8553 = vmatprep.subr.bf16.mxu0 0
      %8554 = vmatpush1.bf16.msra.mxu0 %v6120
      %8555 = vmatprep.subr.bf16.mxu0 0
      %8556 = vmatpush1.bf16.msra.mxu0 %v6121
      %8557 = vmatprep.subr.bf16.mxu0 0
      %8558 = vmatpush1.bf16.msra.mxu0 %v6122
      %8559 = vmatprep.subr.bf16.mxu0 0
      %8560 = vmatpush1.bf16.msra.mxu0 %v6123
      %8561 = vmatprep.subr.bf16.mxu0 0
      %8562 = vmatpush1.bf16.msra.mxu0 %v6124
      %8563 = vmatprep.subr.bf16.mxu0 0
      %8564 = vmatpush1.bf16.msra.mxu0 %v6125
      %8565 = vmatprep.subr.bf16.mxu0 0
      %8566 = vmatpush1.bf16.msra.mxu0 %v6126
      %8567 = vmatprep.mubr.bf16.mxu0 %v889
      %8568 = vmatmul.mubr.bf16.gmra.mrb[0].mxu0 %v888
      %v8569 = vpop.f32.mrb[0].mxu0
      %v8570 = vadd.f32 %v8530, %v8569
      %v8571 = vpop.f32.mrb[0].mxu0
      %v8572 = vpop.f32.mrb[0].mxu0
      %v8573 = vpop.f32.mrb[0].mxu0
      %8574 = vdwg.mxu0
      %8575 = vmatprep.subr.bf16.mxu0 0
      %8576 = vmatpush1.bf16.msra.mxu0 %v6127
      %8577 = vmatprep.subr.bf16.mxu0 0
      %8578 = vmatpush1.bf16.msra.mxu0 %v6128
      %8579 = vmatprep.subr.bf16.mxu0 0
      %8580 = vmatpush1.bf16.msra.mxu0 %v6129
      %8581 = vmatprep.subr.bf16.mxu0 0
      %8582 = vmatpush1.bf16.msra.mxu0 %v6130
      %8583 = vmatprep.subr.bf16.mxu0 0
      %8584 = vmatpush1.bf16.msra.mxu0 %v6131
      %8585 = vmatprep.subr.bf16.mxu0 0
      %8586 = vmatpush1.bf16.msra.mxu0 %v6132
      %8587 = vmatprep.subr.bf16.mxu0 0
      %8588 = vmatpush1.bf16.msra.mxu0 %v6133
      %8589 = vmatprep.subr.bf16.mxu0 0
      %8590 = vmatpush1.bf16.msra.mxu0 %v6134
      %8591 = vmatprep.subr.bf16.mxu0 0
      %8592 = vmatpush1.bf16.msra.mxu0 %v6135
      %8593 = vmatprep.subr.bf16.mxu0 0
      %8594 = vmatpush1.bf16.msra.mxu0 %v6136
      %8595 = vmatprep.subr.bf16.mxu0 0
      %8596 = vmatpush1.bf16.msra.mxu0 %v6137
      %8597 = vmatprep.subr.bf16.mxu0 0
      %8598 = vmatpush1.bf16.msra.mxu0 %v6138
      %8599 = vmatprep.subr.bf16.mxu0 0
      %8600 = vmatpush1.bf16.msra.mxu0 %v6139
      %8601 = vmatprep.subr.bf16.mxu0 0
      %8602 = vmatpush1.bf16.msra.mxu0 %v6140
      %8603 = vmatprep.subr.bf16.mxu0 0
      %8604 = vmatpush1.bf16.msra.mxu0 %v6141
      %8605 = vmatprep.subr.bf16.mxu0 0
      %8606 = vmatpush1.bf16.msra.mxu0 %v6142
      %8607 = vmatprep.mubr.bf16.mxu0 %v891
      %8608 = vmatmul.mubr.bf16.gmra.mrb[0].mxu0 %v890
      %v8609 = vpop.f32.mrb[0].mxu0
      %v8610 = vadd.f32 %v8570, %v8609
      %v8611 = vpop.f32.mrb[0].mxu0
      %v8612 = vpop.f32.mrb[0].mxu0
      %v8613 = vpop.f32.mrb[0].mxu0
      %8614 = vdwg.mxu0
      %8615 = vmatprep.subr.bf16.mxu0 0
      %8616 = vmatpush1.bf16.msra.mxu0 %v6143
      %8617 = vmatprep.subr.bf16.mxu0 0
      %8618 = vmatpush1.bf16.msra.mxu0 %v6144
      %8619 = vmatprep.subr.bf16.mxu0 0
      %8620 = vmatpush1.bf16.msra.mxu0 %v6145
      %8621 = vmatprep.subr.bf16.mxu0 0
      %8622 = vmatpush1.bf16.msra.mxu0 %v6146
      %8623 = vmatprep.subr.bf16.mxu0 0
      %8624 = vmatpush1.bf16.msra.mxu0 %v6147
      %8625 = vmatprep.subr.bf16.mxu0 0
      %8626 = vmatpush1.bf16.msra.mxu0 %v6148
      %8627 = vmatprep.subr.bf16.mxu0 0
      %8628 = vmatpush1.bf16.msra.mxu0 %v6149
      %8629 = vmatprep.subr.bf16.mxu0 0
      %8630 = vmatpush1.bf16.msra.mxu0 %v6150
      %8631 = vmatprep.subr.bf16.mxu0 0
      %8632 = vmatpush1.bf16.msra.mxu0 %v6151
      %8633 = vmatprep.subr.bf16.mxu0 0
      %8634 = vmatpush1.bf16.msra.mxu0 %v6152
      %8635 = vmatprep.subr.bf16.mxu0 0
      %8636 = vmatpush1.bf16.msra.mxu0 %v6153
      %8637 = vmatprep.subr.bf16.mxu0 0
      %8638 = vmatpush1.bf16.msra.mxu0 %v6154
      %8639 = vmatprep.subr.bf16.mxu0 0
      %8640 = vmatpush1.bf16.msra.mxu0 %v6155
      %8641 = vmatprep.subr.bf16.mxu0 0
      %8642 = vmatpush1.bf16.msra.mxu0 %v6156
      %8643 = vmatprep.subr.bf16.mxu0 0
      %8644 = vmatpush1.bf16.msra.mxu0 %v6157
      %8645 = vmatprep.subr.bf16.mxu0 0
      %8646 = vmatpush1.bf16.msra.mxu0 %v6158
      %8647 = vmatprep.mubr.bf16.mxu0 %v893
      %8648 = vmatmul.mubr.bf16.gmra.mrb[0].mxu0 %v892
      %v8649 = vpop.f32.mrb[0].mxu0
      %v8650 = vadd.f32 %v8610, %v8649
      %v8651 = vpop.f32.mrb[0].mxu0
      %v8652 = vpop.f32.mrb[0].mxu0
      %v8653 = vpop.f32.mrb[0].mxu0
      %8654 = vdwg.mxu0
      %8655 = vmatprep.subr.bf16.mxu0 0
      %8656 = vmatpush1.bf16.msra.mxu0 %v6159
      %8657 = vmatprep.subr.bf16.mxu0 0
      %8658 = vmatpush1.bf16.msra.mxu0 %v6160
      %8659 = vmatprep.subr.bf16.mxu0 0
      %8660 = vmatpush1.bf16.msra.mxu0 %v6161
      %8661 = vmatprep.subr.bf16.mxu0 0
      %8662 = vmatpush1.bf16.msra.mxu0 %v6162
      %8663 = vmatprep.subr.bf16.mxu0 0
      %8664 = vmatpush1.bf16.msra.mxu0 %v6163
      %8665 = vmatprep.subr.bf16.mxu0 0
      %8666 = vmatpush1.bf16.msra.mxu0 %v6164
      %8667 = vmatprep.subr.bf16.mxu0 0
      %8668 = vmatpush1.bf16.msra.mxu0 %v6165
      %8669 = vmatprep.subr.bf16.mxu0 0
      %8670 = vmatpush1.bf16.msra.mxu0 %v6166
      %8671 = vmatprep.subr.bf16.mxu0 0
      %8672 = vmatpush1.bf16.msra.mxu0 %v6167
      %8673 = vmatprep.subr.bf16.mxu0 0
      %8674 = vmatpush1.bf16.msra.mxu0 %v6168
      %8675 = vmatprep.subr.bf16.mxu0 0
      %8676 = vmatpush1.bf16.msra.mxu0 %v6169
      %8677 = vmatprep.subr.bf16.mxu0 0
      %8678 = vmatpush1.bf16.msra.mxu0 %v6170
      %8679 = vmatprep.subr.bf16.mxu0 0
      %8680 = vmatpush1.bf16.msra.mxu0 %v6171
      %8681 = vmatprep.subr.bf16.mxu0 0
      %8682 = vmatpush1.bf16.msra.mxu0 %v6172
      %8683 = vmatprep.subr.bf16.mxu0 0
      %8684 = vmatpush1.bf16.msra.mxu0 %v6173
      %8685 = vmatprep.subr.bf16.mxu0 0
      %8686 = vmatpush1.bf16.msra.mxu0 %v6174
      %8687 = vmatprep.mubr.bf16.mxu0 %v895
      %8688 = vmatmul.mubr.bf16.gmra.mrb[0].mxu0 %v894
      %v8689 = vpop.f32.mrb[0].mxu0
      %v8690 = vadd.f32 %v8650, %v8689
      %v8691 = vpop.f32.mrb[0].mxu0
      %v8692 = vpop.f32.mrb[0].mxu0
      %v8693 = vpop.f32.mrb[0].mxu0
      %8694 = vdwg.mxu0
      %8695 = vmatprep.subr.bf16.mxu0 0
      %8696 = vmatpush1.bf16.msra.mxu0 %v6175
      %8697 = vmatprep.subr.bf16.mxu0 0
      %8698 = vmatpush1.bf16.msra.mxu0 %v6176
      %8699 = vmatprep.subr.bf16.mxu0 0
      %8700 = vmatpush1.bf16.msra.mxu0 %v6177
      %8701 = vmatprep.subr.bf16.mxu0 0
      %8702 = vmatpush1.bf16.msra.mxu0 %v6178
      %8703 = vmatprep.subr.bf16.mxu0 0
      %8704 = vmatpush1.bf16.msra.mxu0 %v6179
      %8705 = vmatprep.subr.bf16.mxu0 0
      %8706 = vmatpush1.bf16.msra.mxu0 %v6180
      %8707 = vmatprep.subr.bf16.mxu0 0
      %8708 = vmatpush1.bf16.msra.mxu0 %v6181
      %8709 = vmatprep.subr.bf16.mxu0 0
      %8710 = vmatpush1.bf16.msra.mxu0 %v6182
      %8711 = vmatprep.subr.bf16.mxu0 0
      %8712 = vmatpush1.bf16.msra.mxu0 %v6183
      %8713 = vmatprep.subr.bf16.mxu0 0
      %8714 = vmatpush1.bf16.msra.mxu0 %v6184
      %8715 = vmatprep.subr.bf16.mxu0 0
      %8716 = vmatpush1.bf16.msra.mxu0 %v6185
      %8717 = vmatprep.subr.bf16.mxu0 0
      %8718 = vmatpush1.bf16.msra.mxu0 %v6186
      %8719 = vmatprep.subr.bf16.mxu0 0
      %8720 = vmatpush1.bf16.msra.mxu0 %v6187
      %8721 = vmatprep.subr.bf16.mxu0 0
      %8722 = vmatpush1.bf16.msra.mxu0 %v6188
      %8723 = vmatprep.subr.bf16.mxu0 0
      %8724 = vmatpush1.bf16.msra.mxu0 %v6189
      %8725 = vmatprep.subr.bf16.mxu0 0
      %8726 = vmatpush1.bf16.msra.mxu0 %v6190
      %8727 = vmatprep.mubr.bf16.mxu0 %v897
      %8728 = vmatmul.mubr.bf16.gmra.mrb[0].mxu0 %v896
      %v8729 = vpop.f32.mrb[0].mxu0
      %v8730 = vadd.f32 %v8690, %v8729
      %v8731 = vpop.f32.mrb[0].mxu0
      %v8732 = vpop.f32.mrb[0].mxu0
      %v8733 = vpop.f32.mrb[0].mxu0
      %8734 = vdwg.mxu0
      %8735 = vmatprep.subr.bf16.mxu0 0
      %8736 = vmatpush1.bf16.msra.mxu0 %v6191
      %8737 = vmatprep.subr.bf16.mxu0 0
      %8738 = vmatpush1.bf16.msra.mxu0 %v6192
      %8739 = vmatprep.subr.bf16.mxu0 0
      %8740 = vmatpush1.bf16.msra.mxu0 %v6193
      %8741 = vmatprep.subr.bf16.mxu0 0
      %8742 = vmatpush1.bf16.msra.mxu0 %v6194
      %8743 = vmatprep.subr.bf16.mxu0 0
      %8744 = vmatpush1.bf16.msra.mxu0 %v6195
      %8745 = vmatprep.subr.bf16.mxu0 0
      %8746 = vmatpush1.bf16.msra.mxu0 %v6196
      %8747 = vmatprep.subr.bf16.mxu0 0
      %8748 = vmatpush1.bf16.msra.mxu0 %v6197
      %8749 = vmatprep.subr.bf16.mxu0 0
      %8750 = vmatpush1.bf16.msra.mxu0 %v6198
      %8751 = vmatprep.subr.bf16.mxu0 0
      %8752 = vmatpush1.bf16.msra.mxu0 %v6199
      %8753 = vmatprep.subr.bf16.mxu0 0
      %8754 = vmatpush1.bf16.msra.mxu0 %v6200
      %8755 = vmatprep.subr.bf16.mxu0 0
      %8756 = vmatpush1.bf16.msra.mxu0 %v6201
      %8757 = vmatprep.subr.bf16.mxu0 0
      %8758 = vmatpush1.bf16.msra.mxu0 %v6202
      %8759 = vmatprep.subr.bf16.mxu0 0
      %8760 = vmatpush1.bf16.msra.mxu0 %v6203
      %8761 = vmatprep.subr.bf16.mxu0 0
      %8762 = vmatpush1.bf16.msra.mxu0 %v6204
      %8763 = vmatprep.subr.bf16.mxu0 0
      %8764 = vmatpush1.bf16.msra.mxu0 %v6205
      %8765 = vmatprep.subr.bf16.mxu0 0
      %8766 = vmatpush1.bf16.msra.mxu0 %v6206
      %8767 = vmatprep.mubr.bf16.mxu0 %v899
      %8768 = vmatmul.mubr.bf16.gmra.mrb[0].mxu0 %v898
      %v8769 = vpop.f32.mrb[0].mxu0
      %v8770 = vadd.f32 %v8730, %v8769
      %v8771 = vpop.f32.mrb[0].mxu0
      %v8772 = vpop.f32.mrb[0].mxu0
      %v8773 = vpop.f32.mrb[0].mxu0
      %8774 = vdwg.mxu0
      %8775 = vmatprep.subr.bf16.mxu0 0
      %8776 = vmatpush1.bf16.msra.mxu0 %v6207
      %8777 = vmatprep.subr.bf16.mxu0 0
      %8778 = vmatpush1.bf16.msra.mxu0 %v6208
      %8779 = vmatprep.subr.bf16.mxu0 0
      %8780 = vmatpush1.bf16.msra.mxu0 %v6209
      %8781 = vmatprep.subr.bf16.mxu0 0
      %8782 = vmatpush1.bf16.msra.mxu0 %v6210
      %8783 = vmatprep.subr.bf16.mxu0 0
      %8784 = vmatpush1.bf16.msra.mxu0 %v6211
      %8785 = vmatprep.subr.bf16.mxu0 0
      %8786 = vmatpush1.bf16.msra.mxu0 %v6212
      %8787 = vmatprep.subr.bf16.mxu0 0
      %8788 = vmatpush1.bf16.msra.mxu0 %v6213
      %8789 = vmatprep.subr.bf16.mxu0 0
      %8790 = vmatpush1.bf16.msra.mxu0 %v6214
      %8791 = vmatprep.subr.bf16.mxu0 0
      %8792 = vmatpush1.bf16.msra.mxu0 %v6215
      %8793 = vmatprep.subr.bf16.mxu0 0
      %8794 = vmatpush1.bf16.msra.mxu0 %v6216
      %8795 = vmatprep.subr.bf16.mxu0 0
      %8796 = vmatpush1.bf16.msra.mxu0 %v6217
      %8797 = vmatprep.subr.bf16.mxu0 0
      %8798 = vmatpush1.bf16.msra.mxu0 %v6218
      %8799 = vmatprep.subr.bf16.mxu0 0
      %8800 = vmatpush1.bf16.msra.mxu0 %v6219
      %8801 = vmatprep.subr.bf16.mxu0 0
      %8802 = vmatpush1.bf16.msra.mxu0 %v6220
      %8803 = vmatprep.subr.bf16.mxu0 0
      %8804 = vmatpush1.bf16.msra.mxu0 %v6221
      %8805 = vmatprep.subr.bf16.mxu0 0
      %8806 = vmatpush1.bf16.msra.mxu0 %v6222
      %8807 = vmatprep.mubr.bf16.mxu0 %v901
      %8808 = vmatmul.mubr.bf16.gmra.mrb[0].mxu0 %v900
      %v8809 = vpop.f32.mrb[0].mxu0
      %v8810 = vadd.f32 %v8770, %v8809
      %v8811 = vpop.f32.mrb[0].mxu0
      %v8812 = vpop.f32.mrb[0].mxu0
      %v8813 = vpop.f32.mrb[0].mxu0
      %8814 = vdwg.mxu0
      %8815 = vmatprep.subr.bf16.mxu0 0
      %8816 = vmatpush1.bf16.msra.mxu0 %v6223
      %8817 = vmatprep.subr.bf16.mxu0 0
      %8818 = vmatpush1.bf16.msra.mxu0 %v6224
      %8819 = vmatprep.subr.bf16.mxu0 0
      %8820 = vmatpush1.bf16.msra.mxu0 %v6225
      %8821 = vmatprep.subr.bf16.mxu0 0
      %8822 = vmatpush1.bf16.msra.mxu0 %v6226
      %8823 = vmatprep.subr.bf16.mxu0 0
      %8824 = vmatpush1.bf16.msra.mxu0 %v6227
      %8825 = vmatprep.subr.bf16.mxu0 0
      %8826 = vmatpush1.bf16.msra.mxu0 %v6228
      %8827 = vmatprep.subr.bf16.mxu0 0
      %8828 = vmatpush1.bf16.msra.mxu0 %v6229
      %8829 = vmatprep.subr.bf16.mxu0 0
      %8830 = vmatpush1.bf16.msra.mxu0 %v6230
      %8831 = vmatprep.subr.bf16.mxu0 0
      %8832 = vmatpush1.bf16.msra.mxu0 %v6231
      %8833 = vmatprep.subr.bf16.mxu0 0
      %8834 = vmatpush1.bf16.msra.mxu0 %v6232
      %8835 = vmatprep.subr.bf16.mxu0 0
      %8836 = vmatpush1.bf16.msra.mxu0 %v6233
      %8837 = vmatprep.subr.bf16.mxu0 0
      %8838 = vmatpush1.bf16.msra.mxu0 %v6234
      %8839 = vmatprep.subr.bf16.mxu0 0
      %8840 = vmatpush1.bf16.msra.mxu0 %v6235
      %8841 = vmatprep.subr.bf16.mxu0 0
      %8842 = vmatpush1.bf16.msra.mxu0 %v6236
      %8843 = vmatprep.subr.bf16.mxu0 0
      %8844 = vmatpush1.bf16.msra.mxu0 %v6237
      %8845 = vmatprep.subr.bf16.mxu0 0
      %8846 = vmatpush1.bf16.msra.mxu0 %v6238
      %8847 = vmatprep.mubr.bf16.mxu0 %v903
      %8848 = vmatmul.mubr.bf16.gmra.mrb[0].mxu0 %v902
      %v8849 = vpop.f32.mrb[0].mxu0
      %v8850 = vadd.f32 %v8810, %v8849
      %v8851 = vpop.f32.mrb[0].mxu0
      %v8852 = vpop.f32.mrb[0].mxu0
      %v8853 = vpop.f32.mrb[0].mxu0
      %8854 = vdwg.mxu0
      %8855 = vmatprep.subr.bf16.mxu0 0
      %8856 = vmatpush1.bf16.msra.mxu0 %v6239
      %8857 = vmatprep.subr.bf16.mxu0 0
      %8858 = vmatpush1.bf16.msra.mxu0 %v6240
      %8859 = vmatprep.subr.bf16.mxu0 0
      %8860 = vmatpush1.bf16.msra.mxu0 %v6241
      %8861 = vmatprep.subr.bf16.mxu0 0
      %8862 = vmatpush1.bf16.msra.mxu0 %v6242
      %8863 = vmatprep.subr.bf16.mxu0 0
      %8864 = vmatpush1.bf16.msra.mxu0 %v6243
      %8865 = vmatprep.subr.bf16.mxu0 0
      %8866 = vmatpush1.bf16.msra.mxu0 %v6244
      %8867 = vmatprep.subr.bf16.mxu0 0
      %8868 = vmatpush1.bf16.msra.mxu0 %v6245
      %8869 = vmatprep.subr.bf16.mxu0 0
      %8870 = vmatpush1.bf16.msra.mxu0 %v6246
      %8871 = vmatprep.subr.bf16.mxu0 0
      %8872 = vmatpush1.bf16.msra.mxu0 %v6247
      %8873 = vmatprep.subr.bf16.mxu0 0
      %8874 = vmatpush1.bf16.msra.mxu0 %v6248
      %8875 = vmatprep.subr.bf16.mxu0 0
      %8876 = vmatpush1.bf16.msra.mxu0 %v6249
      %8877 = vmatprep.subr.bf16.mxu0 0
      %8878 = vmatpush1.bf16.msra.mxu0 %v6250
      %8879 = vmatprep.subr.bf16.mxu0 0
      %8880 = vmatpush1.bf16.msra.mxu0 %v6251
      %8881 = vmatprep.subr.bf16.mxu0 0
      %8882 = vmatpush1.bf16.msra.mxu0 %v6252
      %8883 = vmatprep.subr.bf16.mxu0 0
      %8884 = vmatpush1.bf16.msra.mxu0 %v6253
      %8885 = vmatprep.subr.bf16.mxu0 0
      %8886 = vmatpush1.bf16.msra.mxu0 %v6254
      %8887 = vmatprep.mubr.bf16.mxu0 %v905
      %8888 = vmatmul.mubr.bf16.gmra.mrb[0].mxu0 %v904
      %v8889 = vpop.f32.mrb[0].mxu0
      %v8890 = vadd.f32 %v8850, %v8889
      %v8891 = vpop.f32.mrb[0].mxu0
      %v8892 = vpop.f32.mrb[0].mxu0
      %v8893 = vpop.f32.mrb[0].mxu0
      %8894 = vdwg.mxu0
      %8895 = vmatprep.subr.bf16.mxu0 0
      %8896 = vmatpush1.bf16.msra.mxu0 %v6255
      %8897 = vmatprep.subr.bf16.mxu0 0
      %8898 = vmatpush1.bf16.msra.mxu0 %v6256
      %8899 = vmatprep.subr.bf16.mxu0 0
      %8900 = vmatpush1.bf16.msra.mxu0 %v6257
      %8901 = vmatprep.subr.bf16.mxu0 0
      %8902 = vmatpush1.bf16.msra.mxu0 %v6258
      %8903 = vmatprep.subr.bf16.mxu0 0
      %8904 = vmatpush1.bf16.msra.mxu0 %v6259
      %8905 = vmatprep.subr.bf16.mxu0 0
      %8906 = vmatpush1.bf16.msra.mxu0 %v6260
      %8907 = vmatprep.subr.bf16.mxu0 0
      %8908 = vmatpush1.bf16.msra.mxu0 %v6261
      %8909 = vmatprep.subr.bf16.mxu0 0
      %8910 = vmatpush1.bf16.msra.mxu0 %v6262
      %8911 = vmatprep.subr.bf16.mxu0 0
      %8912 = vmatpush1.bf16.msra.mxu0 %v6263
      %8913 = vmatprep.subr.bf16.mxu0 0
      %8914 = vmatpush1.bf16.msra.mxu0 %v6264
      %8915 = vmatprep.subr.bf16.mxu0 0
      %8916 = vmatpush1.bf16.msra.mxu0 %v6265
      %8917 = vmatprep.subr.bf16.mxu0 0
      %8918 = vmatpush1.bf16.msra.mxu0 %v6266
      %8919 = vmatprep.subr.bf16.mxu0 0
      %8920 = vmatpush1.bf16.msra.mxu0 %v6267
      %8921 = vmatprep.subr.bf16.mxu0 0
      %8922 = vmatpush1.bf16.msra.mxu0 %v6268
      %8923 = vmatprep.subr.bf16.mxu0 0
      %8924 = vmatpush1.bf16.msra.mxu0 %v6269
      %8925 = vmatprep.subr.bf16.mxu0 0
      %8926 = vmatpush1.bf16.msra.mxu0 %v6270
      %8927 = vmatprep.mubr.bf16.mxu0 %v907
      %8928 = vmatmul.mubr.bf16.gmra.mrb[0].mxu0 %v906
      %v8929 = vpop.f32.mrb[0].mxu0
      %v8930 = vadd.f32 %v8890, %v8929
      %v8931 = vpop.f32.mrb[0].mxu0
      %v8932 = vpop.f32.mrb[0].mxu0
      %v8933 = vpop.f32.mrb[0].mxu0
      %8934 = vdwg.mxu0
      %8935 = vmatprep.subr.bf16.mxu0 0
      %8936 = vmatpush1.bf16.msra.mxu0 %v6271
      %8937 = vmatprep.subr.bf16.mxu0 0
      %8938 = vmatpush1.bf16.msra.mxu0 %v6272
      %8939 = vmatprep.subr.bf16.mxu0 0
      %8940 = vmatpush1.bf16.msra.mxu0 %v6273
      %8941 = vmatprep.subr.bf16.mxu0 0
      %8942 = vmatpush1.bf16.msra.mxu0 %v6274
      %8943 = vmatprep.subr.bf16.mxu0 0
      %8944 = vmatpush1.bf16.msra.mxu0 %v6275
      %8945 = vmatprep.subr.bf16.mxu0 0
      %8946 = vmatpush1.bf16.msra.mxu0 %v6276
      %8947 = vmatprep.subr.bf16.mxu0 0
      %8948 = vmatpush1.bf16.msra.mxu0 %v6277
      %8949 = vmatprep.subr.bf16.mxu0 0
      %8950 = vmatpush1.bf16.msra.mxu0 %v6278
      %8951 = vmatprep.subr.bf16.mxu0 0
      %8952 = vmatpush1.bf16.msra.mxu0 %v6279
      %8953 = vmatprep.subr.bf16.mxu0 0
      %8954 = vmatpush1.bf16.msra.mxu0 %v6280
      %8955 = vmatprep.subr.bf16.mxu0 0
      %8956 = vmatpush1.bf16.msra.mxu0 %v6281
      %8957 = vmatprep.subr.bf16.mxu0 0
      %8958 = vmatpush1.bf16.msra.mxu0 %v6282
      %8959 = vmatprep.subr.bf16.mxu0 0
      %8960 = vmatpush1.bf16.msra.mxu0 %v6283
      %8961 = vmatprep.subr.bf16.mxu0 0
      %8962 = vmatpush1.bf16.msra.mxu0 %v6284
      %8963 = vmatprep.subr.bf16.mxu0 0
      %8964 = vmatpush1.bf16.msra.mxu0 %v6285
      %8965 = vmatprep.subr.bf16.mxu0 0
      %8966 = vmatpush1.bf16.msra.mxu0 %v6286
      %8967 = vmatprep.mubr.bf16.mxu0 %v909
      %8968 = vmatmul.mubr.bf16.gmra.mrb[0].mxu0 %v908
      %v8969 = vpop.f32.mrb[0].mxu0
      %v8970 = vadd.f32 %v8930, %v8969
      %v8971 = vpop.f32.mrb[0].mxu0
      %v8972 = vpop.f32.mrb[0].mxu0
      %v8973 = vpop.f32.mrb[0].mxu0
      %8974 = vdwg.mxu0
      %v8975 = vadd.f32 %v910, %v8970
      %vm8976 = vcmask 261120
      %8977 = vst.msk [vmem:[#allocation2] sm:$0xff] %vm8976, %v8975
      %p8978 = scmp.eq.s32.totalorder %s15, 1
      // Predicated region
      $region41: #{baseline_ff_forward.1} parent=35 // pred_check
        %p8979 = pneg %p8978
      $region42: #{baseline_ff_forward.1} parent=35 // pred_check_branch
        %8981 = sbr.rel (%p8979) target = $region44
      $region43: #{baseline_ff_forward.1} parent=35 // pred_region
        %v8982 = vld [vmem:[%s3] sm:$0xf]
        %v8983 = vld [vmem:[#allocation2] sm:$0xff]
        %v8984 = vlaneseq
        %v8985 = vshrl.u32 %v8984, 7
        %v8986 = vsub.s32 0, %v8985
        %v8987 = vrot.slane %v8982, %v8986
        %v8988 = vadd.f32 %v8983, %v8987
        %v8989 = vmax.f32 %v8988, 0.0
        %v8990 = vpack.c.bf16 %v8989, %v8989
        %v8991 = vld [vmem:[%s2] sm:$0xf]
        %v8992 = vld [vmem:[%s2 + $0x4] sm:$0xf]
        %v8993 = vld [vmem:[%s2 + $0x8] sm:$0xf]
        %v8994 = vld [vmem:[%s2 + $0xc] sm:$0xf]
        %v8995 = vlaneseq
        %v8996 = vshrl.u32 %v8995, 7
        %v8997 = vsub.s32 1, %v8996
        %v8998 = vrot.slane %v8982, %v8997
        %v9003 = vunpack.c.l.b16 %v8991
        %v9004 = vunpack.c.l.b16 %v8992
        %v9005 = vunpack.c.l.b16 %v8993
        %v9006 = vunpack.c.l.b16 %v8994
        %v9007 = vpack.c.b16 %v9004, %v9003
        %v9008 = vpack.c.b16 %v9006, %v9005
        %v9012 = vsel %vm8976, %v8990, 0
        %9014 = vmatprep.subr.bf16.mxu0 0
        %9015 = vmatpush1.bf16.msra.mxu0 %v9007
        %9016 = vmatprep.subr.bf16.mxu0 0
        %9017 = vmatpush1.bf16.msra.mxu0 %v9008
        %9018 = vmatprep.subr.bf16.mxu0 0
        %9019 = vmatpush1.bf16.msra.mxu0 0
        %9020 = vmatprep.subr.bf16.mxu0 0
        %9021 = vmatpush1.bf16.msra.mxu0 0
        %9022 = vmatprep.subr.bf16.mxu0 0
        %9023 = vmatpush1.bf16.msra.mxu0 0
        %9024 = vmatprep.subr.bf16.mxu0 0
        %9025 = vmatpush1.bf16.msra.mxu0 0
        %9026 = vmatprep.subr.bf16.mxu0 0
        %9027 = vmatpush1.bf16.msra.mxu0 0
        %9028 = vmatprep.subr.bf16.mxu0 0
        %9029 = vmatpush1.bf16.msra.mxu0 0
        %9030 = vmatprep.subr.bf16.mxu0 0
        %9031 = vmatpush1.bf16.msra.mxu0 0
        %9032 = vmatprep.subr.bf16.mxu0 0
        %9033 = vmatpush1.bf16.msra.mxu0 0
        %9034 = vmatprep.subr.bf16.mxu0 0
        %9035 = vmatpush1.bf16.msra.mxu0 0
        %9036 = vmatprep.subr.bf16.mxu0 0
        %9037 = vmatpush1.bf16.msra.mxu0 0
        %9038 = vmatprep.subr.bf16.mxu0 0
        %9039 = vmatpush1.bf16.msra.mxu0 0
        %9040 = vmatprep.subr.bf16.mxu0 0
        %9041 = vmatpush1.bf16.msra.mxu0 0
        %9042 = vmatprep.subr.bf16.mxu0 0
        %9043 = vmatpush1.bf16.msra.mxu0 0
        %9044 = vmatprep.subr.bf16.mxu0 0
        %9045 = vmatpush1.bf16.msra.mxu0 0
        %9046 = vmatprep.mubr.bf16.mxu0 0
        %9047 = vmatmul.mubr.bf16.gmra.mrb[0].mxu0 %v9012
        %v9048 = vpop.f32.mrb[0].mxu0
        %v9049 = vadd.f32 %v8998, %v9048
        %v9050 = vpop.f32.mrb[0].mxu0
        %v9051 = vpop.f32.mrb[0].mxu0
        %v9052 = vpop.f32.mrb[0].mxu0
        %9053 = vdwg.mxu0
        %v9054 = vmax.f32 %v9049, 0.0
        %v9055 = vlaneseq
        %v9056 = vshrl.u32 %v9055, 7
        %v9057 = vsub.s32 2, %v9056
        %v9058 = vrot.slane %v8982, %v9057
        %v9059 = vmul.f32 %v9054, %v9058
        %v9060 = vsel %vm8976, %v9059, 0.0
        %9061 = vadd.xlane.f32.xlu0 %v9060
        %v9062 = vpop.xlane.xlu0 %9061
        %v9063 = vlaneseq
        %v9064 = vshrl.u32 %v9063, 7
        %v9065 = vsub.s32 3, %v9064
        %v9066 = vrot.slane %v8982, %v9065
        %v9067 = vadd.f32 %v9062, %v9066
        %vm9068 = vcmask 7168
        %9069 = vst.msk [vmem:[%s4] sm:$0xff] %vm9068, %v9067
      $region44: #{baseline_ff_forward.1} parent=35 // pred_fallthru
        _
      // Predicated region
      $region45: #{baseline_ff_forward.1} parent=35 // pred_check
        %p9070 = pneg %p122
      $region46: #{baseline_ff_forward.1} parent=35 // pred_check_branch
        %9072 = sbr.rel (%p9070) target = $region48
      $region47: #{baseline_ff_forward.1} parent=35 // pred_region
        _
      $region48: #{baseline_ff_forward.1} parent=35 // pred_fallthru
        _
      // Predicated region
      $region49: #{baseline_ff_forward.1} parent=35 // pred_check
        %p9073 = pneg %p122
      $region50: #{baseline_ff_forward.1} parent=35 // pred_check_branch
        %9075 = sbr.rel (%p9073) target = $region52
      $region51: #{baseline_ff_forward.1} parent=35 // pred_region
        _
      $region52: #{baseline_ff_forward.1} parent=35 // pred_fallthru
        _
    $region36: #{baseline_ff_forward.1} parent=5 // pred_fallthru
      _
    %p9076 = scmp.le.s32.totalorder 2, %s10
    // Predicated region
    $region53: #{baseline_ff_forward.1} parent=5 // pred_check
      %p9077 = pneg %p9076
    $region54: #{baseline_ff_forward.1} parent=5 // pred_check_branch
      %9079 = sbr.rel (%p9077) target = $region56
    $region55: #{baseline_ff_forward.1} parent=5 // pred_region
      %s9080 = ssub.s32 %s10, 2
    $region56: #{baseline_ff_forward.1} parent=5 // pred_fallthru
      _
  $region6: #{baseline_ff_forward.1} parent=0 // loop_footer
    %s14 = sadd.s32 1, %s10
  $region7: #{baseline_ff_forward.1} parent=0 // loop_footer_branch
    %9 = sbr.rel target = $region3
  $region8: #{baseline_ff_forward.1} parent=0 // loop_exit
    _

</llo_original>
